<compile_context>
chip_gen: v6e
topology: v6e:2x2x1
jax: 0.10.0
libtpu: 0.0.40
codegen_flags: <defaults>
</compile_context>

<pallas_src>
import jax
import jax.numpy as jnp
from jax import lax
from jax.experimental import pallas as pl
from jax.experimental.pallas import tpu as pltpu

EPS = 1e-5


# --------------------------------------------------------------------------
# In-kernel helpers
# --------------------------------------------------------------------------
def _zero_halo(pad_ref):
    """Zero only the 1-pixel halo frame of a (BT, H+2, W+2, C) bf16 scratch.

    The interior is fully overwritten by the caller every grid step, so no
    full memset is needed and correctness never depends on carried scratch
    state (safe under megacore "parallel" sharding).
    """
    BT, Hp, Wp, C = pad_ref.shape
    zrow = jnp.zeros((BT, 1, Wp, C), jnp.bfloat16)
    zcol = jnp.zeros((BT, Hp, 1, C), jnp.bfloat16)
    pad_ref[:, 0:1, :, :] = zrow
    pad_ref[:, Hp - 1:Hp, :, :] = zrow
    pad_ref[:, :, 0:1, :] = zcol
    pad_ref[:, :, Wp - 1:Wp, :] = zcol


def _conv3x3_taps(pad_ref, w_ref, M):
    """3x3 'same' conv as 9 accumulated bf16 MXU dots (no im2col slab).

    pad_ref: (BT, H+2, W+2, Cin) bf16 zero-haloed activations.
    w_ref:   (9, Cin, Cout) bf16 tap-major weights.
    Returns the f32 (M, Cout) accumulator, M = BT*H*W.
    """
    BT, Hp, Wp, Cin = pad_ref.shape
    H, W = Hp - 2, Wp - 2
    Cout = w_ref.shape[-1]
    acc = jnp.zeros((M, Cout), jnp.float32)
    for ky in range(3):
        for kx in range(3):
            patch = pad_ref[:, ky:ky + H, kx:kx + W, :].reshape(M, Cin)
            acc = acc + jnp.dot(patch, w_ref[ky * 3 + kx],
                                preferred_element_type=jnp.float32)
    return acc


def _tile_stats(acc, st_ref):
    """Per-tile centered BN statistics: st[0] = sum, st[1] = sum((x - mean)^2)."""
    m = acc.shape[0]
    tsum = jnp.sum(acc, axis=0, keepdims=True)
    d = acc - tsum * (1.0 / float(m))
    st_ref[0:1, :] = tsum
    st_ref[1:2, :] = jnp.sum(d * d, axis=0, keepdims=True)


# --------------------------------------------------------------------------
# Kernels
# --------------------------------------------------------------------------
def _conv1_stats_kernel(x_ref, w1_ref, y1_ref, st1_ref, xpad_ref):
    BT, H, W, Cin = x_ref.shape
    Cout = y1_ref.shape[-1]
    M = BT * H * W

    _zero_halo(xpad_ref)
    xpad_ref[:, 1:1 + H, 1:1 + W, :] = x_ref[...].astype(jnp.bfloat16)

    acc = _conv3x3_taps(xpad_ref, w1_ref, M)                 # (M, Cout) f32
    y1_ref[...] = acc.astype(jnp.bfloat16).reshape(BT, H, W, Cout)
    _tile_stats(acc, st1_ref)


def _bn1_relu_conv2_stats_kernel(y1_ref, s1_ref, b1_ref, w2_ref,
                                 y2_ref, st2_ref, zpad_ref):
    BT, H, W, C = y1_ref.shape
    Cout = y2_ref.shape[-1]
    M = BT * H * W

    _zero_halo(zpad_ref)
    # bn1 affine (batch-stat scale/shift precomputed in the wrapper) + relu, f32.
    z = jnp.maximum(y1_ref[...].astype(jnp.float32) * s1_ref[...] + b1_ref[...],
                    0.0)
    zpad_ref[:, 1:1 + H, 1:1 + W, :] = z.astype(jnp.bfloat16)

    acc = _conv3x3_taps(zpad_ref, w2_ref, M)                 # (M, Cout) f32
    y2_ref[...] = acc.astype(jnp.bfloat16).reshape(BT, H, W, Cout)
    _tile_stats(acc, st2_ref)


def _bn2_residual_relu_kernel(y2_ref, x_ref, s2_ref, b2_ref, out_ref):
    # Fully lane-dense elementwise pass on the W-folded (..., W*C) layout:
    # unmasked loads/stores, f32 residual add for exactness.
    y2 = y2_ref[...].astype(jnp.float32)
    out_ref[...] = jnp.maximum(y2 * s2_ref[...] + b2_ref[...] + x_ref[...], 0.0)


# --------------------------------------------------------------------------
# Wrapper-side helpers
# --------------------------------------------------------------------------
def _vmem_cap_bytes():
    try:
        cap = getattr(pltpu.get_tpu_info(), "vmem_capacity_bytes", None)
        if cap:
            return int(cap)
    except Exception:
        pass
    return 64 << 20      # conservative default (v7x physical VMEM per core)


def _compiler_params(need_bytes, cap, sem):
    # Generation-aware clamp: ~48 MiB on 64-MiB parts (v7x), ~96 MiB on
    # 128-MiB parts (v5e/v6e), never below 16 MiB.
    hi = max(int(cap * 3 // 4), 32 << 20)
    return pltpu.CompilerParams(
        dimension_semantics=sem,
        vmem_limit_bytes=int(min(max(need_bytes, 16 << 20), hi)))


def _auto_batch_tile(N, H, W, C, cap):
    """Largest divisor of N whose per-step VMEM footprint fits ~1/3 of the
    physical capacity while keeping >= 2 grid steps (pipelining / megacore)."""
    Hp, Wp = H + 2, W + 2
    per_img = (Hp * Wp * C * 2              # bf16 padded scratch
               + 2 * H * W * C * (4 + 2)    # double-buffered f32-in / bf16-out blocks
               + 4 * H * W * C * 4)         # f32 accumulator + per-tap temporaries
    budget = max(cap // 3, 8 << 20)
    bt = 1
    for cand in range(1, N + 1):
        if N % cand:
            continue
        if cand * per_img <= budget and (N // cand) >= 2:
            bt = cand
    return bt


def _bn_affine(st, gamma, beta, n_tile, n_total):
    """Chan/Welford combine of per-tile (sum, centered M2) -> BN scale/shift."""
    f32 = jnp.float32
    tile_mean = st[:, 0, :] / f32(n_tile)                      # (G, C)
    mean = jnp.mean(tile_mean, axis=0)                         # equal tile sizes
    m2 = jnp.sum(st[:, 1, :], axis=0) + f32(n_tile) * jnp.sum(
        jnp.square(tile_mean - mean[None, :]), axis=0)
    var = jnp.maximum(m2 / f32(n_total), 0.0)                  # biased, as training BN uses
    scale = gamma.astype(f32) * lax.rsqrt(var + EPS)
    shift = beta.astype(f32) - mean * scale
    return scale, shift


# --------------------------------------------------------------------------
# Forward pass
# --------------------------------------------------------------------------
def basic_block_forward_nhwc(x_nhwc, w1, b1, g1, be1, w2, b2, g2, be2, *,
                             batch_tile=None):
    """BasicBlock forward (stride=1, downsample=None, training-mode BN).

    NHWC-native hot path: x_nhwc (N, H, W, C) float32 -> (N, H, W, C) float32.
    """
    N, H, W, Cin = x_nhwc.shape
    Cout = w1.shape[0]
    assert Cin == Cout, "identity add requires in_channels == out_channels"
    C = Cout
    WC = W * C
    Hp, Wp = H + 2, W + 2
    f32, bf16 = jnp.float32, jnp.bfloat16

    x_nhwc = x_nhwc.astype(f32)

    # (Cout, Cin, 3, 3) -> (9, Cin, Cout): tap-major bf16 weights for the MXU.
    w1_taps = jnp.transpose(w1, (2, 3, 1, 0)).reshape(9, Cin, Cout).astype(bf16)
    w2_taps = jnp.transpose(w2, (2, 3, 1, 0)).reshape(9, Cout, Cout).astype(bf16)

    # Conv biases are exactly cancelled by the batch-stat mean subtraction of
    # the training-mode BN that follows each conv -> not used in the kernels.
    del b1, b2

    cap = _vmem_cap_bytes()
    if batch_tile is None:
        batch_tile = _auto_batch_tile(N, H, W, C, cap)
    BT = batch_tile
    assert N % BT == 0
    G = N // BT
    n_tile = BT * H * W
    n_total = N * H * W

    # ---------------- pass 1: conv1 + partial BN1 statistics ----------------
    need1 = (2 * (BT * H * W * Cin * 4 + BT * H * W * Cout * 2
                  + 2 * Cout * 4 + 9 * Cin * Cout * 2)
             + BT * Hp * Wp * Cin * 2
             + 6 * BT * H * W * max(Cin, Cout) * 4 + (4 << 20))
    y1, st1 = pl.pallas_call(
        _conv1_stats_kernel,
        grid=(G,),
        in_specs=[
            pl.BlockSpec((BT, H, W, Cin), lambda g: (g, 0, 0, 0)),
            pl.BlockSpec((9, Cin, Cout), lambda g: (0, 0, 0)),
        ],
        out_specs=[
            pl.BlockSpec((BT, H, W, Cout), lambda g: (g, 0, 0, 0)),
            pl.BlockSpec((None, 2, Cout), lambda g: (g, 0, 0)),
        ],
        out_shape=[
            jax.ShapeDtypeStruct((N, H, W, Cout), bf16),
            jax.ShapeDtypeStruct((G, 2, Cout), f32),
        ],
        scratch_shapes=[pltpu.VMEM((BT, Hp, Wp, Cin), bf16)],
        compiler_params=_compiler_params(need1, cap, ("parallel",)),
        cost_estimate=pl.CostEstimate(
            flops=2 * N * H * W * 9 * Cin * Cout, transcendentals=0,
            bytes_accessed=(N * H * W * Cin * 4 + 9 * Cin * Cout * 2
                            + N * H * W * Cout * 2 + G * 2 * Cout * 4)),
    )(x_nhwc, w1_taps)

    scale1, shift1 = _bn_affine(st1, g1, be1, n_tile, n_total)

    # -------- pass 2: bn1 + relu + conv2 + partial BN2 statistics -----------
    need2 = (2 * (2 * BT * H * W * Cout * 2 + 2 * Cout * 4 + 2 * Cout * 8
                  + 9 * Cout * Cout * 2)
             + BT * Hp * Wp * Cout * 2
             + 6 * BT * H * W * Cout * 4 + (4 << 20))
    y2, st2 = pl.pallas_call(
        _bn1_relu_conv2_stats_kernel,
        grid=(G,),
        in_specs=[
            pl.BlockSpec((BT, H, W, Cout), lambda g: (g, 0, 0, 0)),
            pl.BlockSpec((1, Cout), lambda g: (0, 0)),
            pl.BlockSpec((1, Cout), lambda g: (0, 0)),
            pl.BlockSpec((9, Cout, Cout), lambda g: (0, 0, 0)),
        ],
        out_specs=[
            pl.BlockSpec((BT, H, W, Cout), lambda g: (g, 0, 0, 0)),
            pl.BlockSpec((None, 2, Cout), lambda g: (g, 0, 0)),
        ],
        out_shape=[
            jax.ShapeDtypeStruct((N, H, W, Cout), bf16),
            jax.ShapeDtypeStruct((G, 2, Cout), f32),
        ],
        scratch_shapes=[pltpu.VMEM((BT, Hp, Wp, Cout), bf16)],
        compiler_params=_compiler_params(need2, cap, ("parallel",)),
        cost_estimate=pl.CostEstimate(
            flops=2 * N * H * W * 9 * Cout * Cout, transcendentals=0,
            bytes_accessed=(2 * N * H * W * Cout * 2 + 9 * Cout * Cout * 2
                            + G * 2 * Cout * 4)),
    )(y1, scale1.reshape(1, Cout), shift1.reshape(1, Cout), w2_taps)

    scale2, shift2 = _bn_affine(st2, g2, be2, n_tile, n_total)

    # ------------- pass 3: bn2 + residual add + final relu ------------------
    # Lane-dense W-folded layout (..., W*C).  The reshapes below preserve the
    # row-major linear order, so XLA treats them as bitcasts (no HBM copy).
    x_lane = x_nhwc.reshape(N, H, WC)
    y2_lane = y2.reshape(N, H, WC)
    s2_wc = jnp.tile(scale2, W).reshape(1, WC)
    b2_wc = jnp.tile(shift2, W).reshape(1, WC)

    TH = 8 if (H % 8 == 0 and H > 8) else H    # row-band tile -> >= 2 steps/image
    GH = H // TH
    need3 = 2 * (TH * WC * (2 + 4 + 4) + 2 * WC * 4) + (4 << 20)
    out_lane = pl.pallas_call(
        _bn2_residual_relu_kernel,
        grid=(N, GH),
        in_specs=[
            pl.BlockSpec((1, TH, WC), lambda n, h: (n, h, 0)),
            pl.BlockSpec((1, TH, WC), lambda n, h: (n, h, 0)),
            pl.BlockSpec((1, WC), lambda n, h: (0, 0)),
            pl.BlockSpec((1, WC), lambda n, h: (0, 0)),
        ],
        out_specs=pl.BlockSpec((1, TH, WC), lambda n, h: (n, h, 0)),
        out_shape=jax.ShapeDtypeStruct((N, H, WC), f32),
        compiler_params=_compiler_params(need3, cap, ("parallel", "parallel")),
        cost_estimate=pl.CostEstimate(
            flops=3 * N * H * WC, transcendentals=0,
            bytes_accessed=N * H * WC * (2 + 4 + 4) + 4 * WC * 4),
    )(y2_lane, x_lane, s2_wc, b2_wc)

    return out_lane.reshape(N, H, W, C)


def basic_block_forward(x_nchw, w1, b1, g1, be1, w2, b2, g2, be2, *,
                        batch_tile=None):
    """NCHW adapter matching the PyTorch module layout.

    The two full-tensor transposes are glue outside the kernels; prefer the
    NHWC entry point (basic_block_forward_nhwc) in a real pipeline.
    """
    x_nhwc = jnp.transpose(x_nchw, (0, 2, 3, 1))
    out = basic_block_forward_nhwc(x_nhwc, w1, b1, g1, be1, w2, b2, g2, be2,
                                   batch_tile=batch_tile)
    return jnp.transpose(out, (0, 3, 1, 2))


# --------------------------------------------------------------------------
# Reference + test
# --------------------------------------------------------------------------
def _reference_forward(x, w1, b1, g1, be1, w2, b2, g2, be2):
    """Pure-JAX NCHW f32 reference matching the PyTorch module (training BN)."""
    dn = ('NCHW', 'OIHW', 'NCHW')

    def conv(a, w, b):
        y = lax.conv_general_dilated(a, w, (1, 1), 'SAME', dimension_numbers=dn)
        return y + b[None, :, None, None]

    def bn(a, g, be):
        m = jnp.mean(a, axis=(0, 2, 3), keepdims=True)
        v = jnp.var(a, axis=(0, 2, 3), keepdims=True)
        return (a - m) * lax.rsqrt(v + EPS) * g[None, :, None, None] \
            + be[None, :, None, None]

    out = jnp.maximum(bn(conv(x, w1, b1), g1, be1), 0.0)
    out = bn(conv(out, w2, b2), g2, be2)
    return jnp.maximum(out + x, 0.0)


if __name__ == "__main__":
    # Module-consistent small shapes: in_channels == out_channels, stride=1,
    # downsample=None.  W*C = 128 makes the pass-3 lane-dense layout exact.
    N, C, H, W = 2, 8, 16, 16

    key = jax.random.PRNGKey(0)
    ks = jax.random.split(key, 9)
    x_nchw = jax.random.normal(ks[0], (N, C, H, W), jnp.float32)

    w1 = jax.random.normal(ks[1], (C, C, 3, 3), jnp.float32) * 0.1
    b1 = jax.random.normal(ks[2], (C,), jnp.float32) * 0.1
    w2 = jax.random.normal(ks[3], (C, C, 3, 3), jnp.float32) * 0.1
    b2 = jax.random.normal(ks[4], (C,), jnp.float32) * 0.1
    g1 = 1.0 + 0.1 * jax.random.normal(ks[5], (C,), jnp.float32)
    be1 = 0.1 * jax.random.normal(ks[6], (C,), jnp.float32)
    g2 = 1.0 + 0.1 * jax.random.normal(ks[7], (C,), jnp.float32)
    be2 = 0.1 * jax.random.normal(ks[8], (C,), jnp.float32)

    # NHWC is the kernel-native layout; the transpose here is test glue only.
    x_nhwc = jnp.transpose(x_nchw, (0, 2, 3, 1))

    fwd = jax.jit(basic_block_forward_nhwc)
    out_nhwc = jax.block_until_ready(
        fwd(x_nhwc, w1, b1, g1, be1, w2, b2, g2, be2))

    ref_nchw = jax.block_until_ready(
        _reference_forward(x_nchw, w1, b1, g1, be1, w2, b2, g2, be2))
    ref_nhwc = jnp.transpose(ref_nchw, (0, 2, 3, 1))

    assert out_nhwc.shape == (N, H, W, C)
    # bf16 MXU inputs + bf16 inter-pass activations vs a pure-f32 reference
    # -> few-percent tolerance (documented numerics contract).
    assert jnp.allclose(out_nhwc, ref_nhwc, atol=7.5e-2, rtol=7.5e-2), \
        "mismatch vs JAX reference"

    print("KERNEL_OK")
</pallas_src>

<mosaic_0001>
module attributes {stable_mosaic.version = 11 : i64} {
  func.func @_conv1_stats_kernel(%arg0: i32, %arg1: memref<1x16x16x8xf32, #tpu.memory_space<vmem>>, %arg2: memref<9x8x8xbf16, #tpu.memory_space<vmem>>, %arg3: memref<1x16x16x8xbf16, #tpu.memory_space<vmem>>, %arg4: memref<1x2x8xf32, #tpu.memory_space<vmem>>, %arg5: memref<1x18x18x8xbf16, #tpu.memory_space<vmem>>) attributes {dimension_semantics = [#tpu.dimension_semantics<parallel>], iteration_bounds = array<i64: 2>, scalar_prefetch = 0 : i64, scratch_operands = 1 : i64, tpu.core_type = #tpu.core_type<tc>, window_params = [{transform_indices = @transform_0, window_bounds = array<i64: 1, 16, 16, 8>}, {pipeline_mode = #tpu.pipeline_mode<synchronous>, transform_indices = @transform_1, window_bounds = array<i64: 9, 8, 8>}, {transform_indices = @transform_2, window_bounds = array<i64: 1, 16, 16, 8>}, {transform_indices = @transform_3, window_bounds = array<i64: 1, 2, 8>}]} {
    %cst = arith.constant 0.000000e+00 : bf16
    %0 = vector.broadcast %cst : bf16 to vector<1x1x18x8xbf16>
    %cst_0 = arith.constant 0.000000e+00 : bf16
    %1 = vector.broadcast %cst_0 : bf16 to vector<1x18x1x8xbf16>
    %c0 = arith.constant 0 : index
    %c0_1 = arith.constant 0 : index
    %c0_2 = arith.constant 0 : index
    %c0_3 = arith.constant 0 : index
    %2 = vector.load %arg5[%c0, %c0_1, %c0_2, %c0_3] : memref<1x18x18x8xbf16, #tpu.memory_space<vmem>>, vector<1x1x18x8xbf16>
    tpu.vector_store %arg5[%c0, %c0_1, %c0_2, %c0_3], %0 {strides = array<i32>} : memref<1x18x18x8xbf16, #tpu.memory_space<vmem>>, vector<1x1x18x8xbf16>,
    %c0_4 = arith.constant 0 : index
    %c17 = arith.constant 17 : index
    %c0_5 = arith.constant 0 : index
    %c0_6 = arith.constant 0 : index
    %3 = vector.load %arg5[%c0_4, %c17, %c0_5, %c0_6] : memref<1x18x18x8xbf16, #tpu.memory_space<vmem>>, vector<1x1x18x8xbf16>
    tpu.vector_store %arg5[%c0_4, %c17, %c0_5, %c0_6], %0 {strides = array<i32>} : memref<1x18x18x8xbf16, #tpu.memory_space<vmem>>, vector<1x1x18x8xbf16>,
    %c0_7 = arith.constant 0 : index
    %c0_8 = arith.constant 0 : index
    %c0_9 = arith.constant 0 : index
    %c0_10 = arith.constant 0 : index
    %4 = vector.load %arg5[%c0_7, %c0_8, %c0_9, %c0_10] : memref<1x18x18x8xbf16, #tpu.memory_space<vmem>>, vector<1x18x1x8xbf16>
    tpu.vector_store %arg5[%c0_7, %c0_8, %c0_9, %c0_10], %1 {strides = array<i32>} : memref<1x18x18x8xbf16, #tpu.memory_space<vmem>>, vector<1x18x1x8xbf16>,
    %c0_11 = arith.constant 0 : index
    %c0_12 = arith.constant 0 : index
    %c17_13 = arith.constant 17 : index
    %c0_14 = arith.constant 0 : index
    %5 = vector.load %arg5[%c0_11, %c0_12, %c17_13, %c0_14] : memref<1x18x18x8xbf16, #tpu.memory_space<vmem>>, vector<1x18x1x8xbf16>
    tpu.vector_store %arg5[%c0_11, %c0_12, %c17_13, %c0_14], %1 {strides = array<i32>} : memref<1x18x18x8xbf16, #tpu.memory_space<vmem>>, vector<1x18x1x8xbf16>,
    %c0_15 = arith.constant 0 : index
    %c0_16 = arith.constant 0 : index
    %c0_17 = arith.constant 0 : index
    %c0_18 = arith.constant 0 : index
    %6 = vector.load %arg1[%c0_15, %c0_16, %c0_17, %c0_18] : memref<1x16x16x8xf32, #tpu.memory_space<vmem>>, vector<1x16x16x8xf32>
    %7 = arith.truncf %6 : vector<1x16x16x8xf32> to vector<1x16x16x8xbf16>
    %c0_19 = arith.constant 0 : index
    %c1 = arith.constant 1 : index
    %c1_20 = arith.constant 1 : index
    %c0_21 = arith.constant 0 : index
    %8 = vector.load %arg5[%c0_19, %c1, %c1_20, %c0_21] : memref<1x18x18x8xbf16, #tpu.memory_space<vmem>>, vector<1x16x16x8xbf16>
    tpu.vector_store %arg5[%c0_19, %c1, %c1_20, %c0_21], %7 {strides = array<i32>} : memref<1x18x18x8xbf16, #tpu.memory_space<vmem>>, vector<1x16x16x8xbf16>,
    %cst_22 = arith.constant 0.000000e+00 : f32
    %9 = vector.broadcast %cst_22 : f32 to vector<256x8xf32>
    %c0_23 = arith.constant 0 : index
    %c0_24 = arith.constant 0 : index
    %c0_25 = arith.constant 0 : index
    %c0_26 = arith.constant 0 : index
    %10 = vector.load %arg5[%c0_23, %c0_24, %c0_25, %c0_26] : memref<1x18x18x8xbf16, #tpu.memory_space<vmem>>, vector<1x16x16x8xbf16>
    %11 = vector.shape_cast %10 : vector<1x16x16x8xbf16> to vector<256x8xbf16>
    %c0_27 = arith.constant 0 : index
    %c0_28 = arith.constant 0 : index
    %c0_29 = arith.constant 0 : index
    %12 = vector.load %arg2[%c0_27, %c0_28, %c0_29] : memref<9x8x8xbf16, #tpu.memory_space<vmem>>, vector<1x8x8xbf16>
    %13 = vector.shape_cast %12 : vector<1x8x8xbf16> to vector<8x8xbf16>
    %cst_30 = arith.constant dense<0.000000e+00> : vector<256x8xf32>
    %14 = tpu.matmul %11, %13, %cst_30 {dimension_numbers = #tpu.dot_dimension_numbers<[1], [0], [0], [1], [0, 0, 1, 1], [], []>} : vector<256x8xbf16>, vector<8x8xbf16>, vector<256x8xf32> -> vector<256x8xf32>
    %15 = arith.addf %9, %14 : vector<256x8xf32>
    %c0_31 = arith.constant 0 : index
    %c0_32 = arith.constant 0 : index
    %c1_33 = arith.constant 1 : index
    %c0_34 = arith.constant 0 : index
    %16 = vector.load %arg5[%c0_31, %c0_32, %c1_33, %c0_34] : memref<1x18x18x8xbf16, #tpu.memory_space<vmem>>, vector<1x16x16x8xbf16>
    %17 = vector.shape_cast %16 : vector<1x16x16x8xbf16> to vector<256x8xbf16>
    %c1_35 = arith.constant 1 : index
    %c0_36 = arith.constant 0 : index
    %c0_37 = arith.constant 0 : index
    %18 = vector.load %arg2[%c1_35, %c0_36, %c0_37] : memref<9x8x8xbf16, #tpu.memory_space<vmem>>, vector<1x8x8xbf16>
    %19 = vector.shape_cast %18 : vector<1x8x8xbf16> to vector<8x8xbf16>
    %cst_38 = arith.constant dense<0.000000e+00> : vector<256x8xf32>
    %20 = tpu.matmul %17, %19, %cst_38 {dimension_numbers = #tpu.dot_dimension_numbers<[1], [0], [0], [1], [0, 0, 1, 1], [], []>} : vector<256x8xbf16>, vector<8x8xbf16>, vector<256x8xf32> -> vector<256x8xf32>
    %21 = arith.addf %15, %20 : vector<256x8xf32>
    %c0_39 = arith.constant 0 : index
    %c0_40 = arith.constant 0 : index
    %c2 = arith.constant 2 : index
    %c0_41 = arith.constant 0 : index
    %22 = vector.load %arg5[%c0_39, %c0_40, %c2, %c0_41] : memref<1x18x18x8xbf16, #tpu.memory_space<vmem>>, vector<1x16x16x8xbf16>
    %23 = vector.shape_cast %22 : vector<1x16x16x8xbf16> to vector<256x8xbf16>
    %c2_42 = arith.constant 2 : index
    %c0_43 = arith.constant 0 : index
    %c0_44 = arith.constant 0 : index
    %24 = vector.load %arg2[%c2_42, %c0_43, %c0_44] : memref<9x8x8xbf16, #tpu.memory_space<vmem>>, vector<1x8x8xbf16>
    %25 = vector.shape_cast %24 : vector<1x8x8xbf16> to vector<8x8xbf16>
    %cst_45 = arith.constant dense<0.000000e+00> : vector<256x8xf32>
    %26 = tpu.matmul %23, %25, %cst_45 {dimension_numbers = #tpu.dot_dimension_numbers<[1], [0], [0], [1], [0, 0, 1, 1], [], []>} : vector<256x8xbf16>, vector<8x8xbf16>, vector<256x8xf32> -> vector<256x8xf32>
    %27 = arith.addf %21, %26 : vector<256x8xf32>
    %c0_46 = arith.constant 0 : index
    %c1_47 = arith.constant 1 : index
    %c0_48 = arith.constant 0 : index
    %c0_49 = arith.constant 0 : index
    %28 = vector.load %arg5[%c0_46, %c1_47, %c0_48, %c0_49] : memref<1x18x18x8xbf16, #tpu.memory_space<vmem>>, vector<1x16x16x8xbf16>
    %29 = vector.shape_cast %28 : vector<1x16x16x8xbf16> to vector<256x8xbf16>
    %c3 = arith.constant 3 : index
    %c0_50 = arith.constant 0 : index
    %c0_51 = arith.constant 0 : index
    %30 = vector.load %arg2[%c3, %c0_50, %c0_51] : memref<9x8x8xbf16, #tpu.memory_space<vmem>>, vector<1x8x8xbf16>
    %31 = vector.shape_cast %30 : vector<1x8x8xbf16> to vector<8x8xbf16>
    %cst_52 = arith.constant dense<0.000000e+00> : vector<256x8xf32>
    %32 = tpu.matmul %29, %31, %cst_52 {dimension_numbers = #tpu.dot_dimension_numbers<[1], [0], [0], [1], [0, 0, 1, 1], [], []>} : vector<256x8xbf16>, vector<8x8xbf16>, vector<256x8xf32> -> vector<256x8xf32>
    %33 = arith.addf %27, %32 : vector<256x8xf32>
    %c0_53 = arith.constant 0 : index
    %c1_54 = arith.constant 1 : index
    %c1_55 = arith.constant 1 : index
    %c0_56 = arith.constant 0 : index
    %34 = vector.load %arg5[%c0_53, %c1_54, %c1_55, %c0_56] : memref<1x18x18x8xbf16, #tpu.memory_space<vmem>>, vector<1x16x16x8xbf16>
    %35 = vector.shape_cast %34 : vector<1x16x16x8xbf16> to vector<256x8xbf16>
    %c4 = arith.constant 4 : index
    %c0_57 = arith.constant 0 : index
    %c0_58 = arith.constant 0 : index
    %36 = vector.load %arg2[%c4, %c0_57, %c0_58] : memref<9x8x8xbf16, #tpu.memory_space<vmem>>, vector<1x8x8xbf16>
    %37 = vector.shape_cast %36 : vector<1x8x8xbf16> to vector<8x8xbf16>
    %cst_59 = arith.constant dense<0.000000e+00> : vector<256x8xf32>
    %38 = tpu.matmul %35, %37, %cst_59 {dimension_numbers = #tpu.dot_dimension_numbers<[1], [0], [0], [1], [0, 0, 1, 1], [], []>} : vector<256x8xbf16>, vector<8x8xbf16>, vector<256x8xf32> -> vector<256x8xf32>
    %39 = arith.addf %33, %38 : vector<256x8xf32>
    %c0_60 = arith.constant 0 : index
    %c1_61 = arith.constant 1 : index
    %c2_62 = arith.constant 2 : index
    %c0_63 = arith.constant 0 : index
    %40 = vector.load %arg5[%c0_60, %c1_61, %c2_62, %c0_63] : memref<1x18x18x8xbf16, #tpu.memory_space<vmem>>, vector<1x16x16x8xbf16>
    %41 = vector.shape_cast %40 : vector<1x16x16x8xbf16> to vector<256x8xbf16>
    %c5 = arith.constant 5 : index
    %c0_64 = arith.constant 0 : index
    %c0_65 = arith.constant 0 : index
    %42 = vector.load %arg2[%c5, %c0_64, %c0_65] : memref<9x8x8xbf16, #tpu.memory_space<vmem>>, vector<1x8x8xbf16>
    %43 = vector.shape_cast %42 : vector<1x8x8xbf16> to vector<8x8xbf16>
    %cst_66 = arith.constant dense<0.000000e+00> : vector<256x8xf32>
    %44 = tpu.matmul %41, %43, %cst_66 {dimension_numbers = #tpu.dot_dimension_numbers<[1], [0], [0], [1], [0, 0, 1, 1], [], []>} : vector<256x8xbf16>, vector<8x8xbf16>, vector<256x8xf32> -> vector<256x8xf32>
    %45 = arith.addf %39, %44 : vector<256x8xf32>
    %c0_67 = arith.constant 0 : index
    %c2_68 = arith.constant 2 : index
    %c0_69 = arith.constant 0 : index
    %c0_70 = arith.constant 0 : index
    %46 = vector.load %arg5[%c0_67, %c2_68, %c0_69, %c0_70] : memref<1x18x18x8xbf16, #tpu.memory_space<vmem>>, vector<1x16x16x8xbf16>
    %47 = vector.shape_cast %46 : vector<1x16x16x8xbf16> to vector<256x8xbf16>
    %c6 = arith.constant 6 : index
    %c0_71 = arith.constant 0 : index
    %c0_72 = arith.constant 0 : index
    %48 = vector.load %arg2[%c6, %c0_71, %c0_72] : memref<9x8x8xbf16, #tpu.memory_space<vmem>>, vector<1x8x8xbf16>
    %49 = vector.shape_cast %48 : vector<1x8x8xbf16> to vector<8x8xbf16>
    %cst_73 = arith.constant dense<0.000000e+00> : vector<256x8xf32>
    %50 = tpu.matmul %47, %49, %cst_73 {dimension_numbers = #tpu.dot_dimension_numbers<[1], [0], [0], [1], [0, 0, 1, 1], [], []>} : vector<256x8xbf16>, vector<8x8xbf16>, vector<256x8xf32> -> vector<256x8xf32>
    %51 = arith.addf %45, %50 : vector<256x8xf32>
    %c0_74 = arith.constant 0 : index
    %c2_75 = arith.constant 2 : index
    %c1_76 = arith.constant 1 : index
    %c0_77 = arith.constant 0 : index
    %52 = vector.load %arg5[%c0_74, %c2_75, %c1_76, %c0_77] : memref<1x18x18x8xbf16, #tpu.memory_space<vmem>>, vector<1x16x16x8xbf16>
    %53 = vector.shape_cast %52 : vector<1x16x16x8xbf16> to vector<256x8xbf16>
    %c7 = arith.constant 7 : index
    %c0_78 = arith.constant 0 : index
    %c0_79 = arith.constant 0 : index
    %54 = vector.load %arg2[%c7, %c0_78, %c0_79] : memref<9x8x8xbf16, #tpu.memory_space<vmem>>, vector<1x8x8xbf16>
    %55 = vector.shape_cast %54 : vector<1x8x8xbf16> to vector<8x8xbf16>
    %cst_80 = arith.constant dense<0.000000e+00> : vector<256x8xf32>
    %56 = tpu.matmul %53, %55, %cst_80 {dimension_numbers = #tpu.dot_dimension_numbers<[1], [0], [0], [1], [0, 0, 1, 1], [], []>} : vector<256x8xbf16>, vector<8x8xbf16>, vector<256x8xf32> -> vector<256x8xf32>
    %57 = arith.addf %51, %56 : vector<256x8xf32>
    %c0_81 = arith.constant 0 : index
    %c2_82 = arith.constant 2 : index
    %c2_83 = arith.constant 2 : index
    %c0_84 = arith.constant 0 : index
    %58 = vector.load %arg5[%c0_81, %c2_82, %c2_83, %c0_84] : memref<1x18x18x8xbf16, #tpu.memory_space<vmem>>, vector<1x16x16x8xbf16>
    %59 = vector.shape_cast %58 : vector<1x16x16x8xbf16> to vector<256x8xbf16>
    %c8 = arith.constant 8 : index
    %c0_85 = arith.constant 0 : index
    %c0_86 = arith.constant 0 : index
    %60 = vector.load %arg2[%c8, %c0_85, %c0_86] : memref<9x8x8xbf16, #tpu.memory_space<vmem>>, vector<1x8x8xbf16>
    %61 = vector.shape_cast %60 : vector<1x8x8xbf16> to vector<8x8xbf16>
    %cst_87 = arith.constant dense<0.000000e+00> : vector<256x8xf32>
    %62 = tpu.matmul %59, %61, %cst_87 {dimension_numbers = #tpu.dot_dimension_numbers<[1], [0], [0], [1], [0, 0, 1, 1], [], []>} : vector<256x8xbf16>, vector<8x8xbf16>, vector<256x8xf32> -> vector<256x8xf32>
    %63 = arith.addf %57, %62 : vector<256x8xf32>
    %64 = arith.truncf %63 : vector<256x8xf32> to vector<256x8xbf16>
    %65 = vector.shape_cast %64 : vector<256x8xbf16> to vector<1x16x16x8xbf16>
    %c0_88 = arith.constant 0 : index
    %c0_89 = arith.constant 0 : index
    %c0_90 = arith.constant 0 : index
    %c0_91 = arith.constant 0 : index
    %66 = vector.load %arg3[%c0_88, %c0_89, %c0_90, %c0_91] : memref<1x16x16x8xbf16, #tpu.memory_space<vmem>>, vector<1x16x16x8xbf16>
    tpu.vector_store %arg3[%c0_88, %c0_89, %c0_90, %c0_91], %65 {strides = array<i32>} : memref<1x16x16x8xbf16, #tpu.memory_space<vmem>>, vector<1x16x16x8xbf16>,
    %cst_92 = arith.constant dense<0.000000e+00> : vector<8xf32>
    %67 = vector.multi_reduction <add>, %63, %cst_92 [0] : vector<256x8xf32> to vector<8xf32>
    %68 = vector.shape_cast %67 : vector<8xf32> to vector<1x8xf32>
    %cst_93 = arith.constant 3.906250e-03 : f32
    %69 = vector.broadcast %cst_93 : f32 to vector<1x8xf32>
    %70 = arith.mulf %68, %69 : vector<1x8xf32>
    %71 = vector.broadcast %70 : vector<1x8xf32> to vector<256x8xf32>
    %72 = arith.subf %63, %71 : vector<256x8xf32>
    %c0_94 = arith.constant 0 : index
    %c0_95 = arith.constant 0 : index
    %c0_96 = arith.constant 0 : index
    %73 = vector.load %arg4[%c0_94, %c0_95, %c0_96] : memref<1x2x8xf32, #tpu.memory_space<vmem>>, vector<1x1x8xf32>
    %74 = vector.shape_cast %73 : vector<1x1x8xf32> to vector<1x8xf32>
    %75 = vector.shape_cast %68 : vector<1x8xf32> to vector<1x1x8xf32>
    tpu.vector_store %arg4[%c0_94, %c0_95, %c0_96], %75 {strides = array<i32>} : memref<1x2x8xf32, #tpu.memory_space<vmem>>, vector<1x1x8xf32>,
    %76 = arith.mulf %72, %72 : vector<256x8xf32>
    %cst_97 = arith.constant dense<0.000000e+00> : vector<8xf32>
    %77 = vector.multi_reduction <add>, %76, %cst_97 [0] : vector<256x8xf32> to vector<8xf32>
    %78 = vector.shape_cast %77 : vector<8xf32> to vector<1x8xf32>
    %c0_98 = arith.constant 0 : index
    %c1_99 = arith.constant 1 : index
    %c0_100 = arith.constant 0 : index
    %79 = vector.load %arg4[%c0_98, %c1_99, %c0_100] : memref<1x2x8xf32, #tpu.memory_space<vmem>>, vector<1x1x8xf32>
    %80 = vector.shape_cast %79 : vector<1x1x8xf32> to vector<1x8xf32>
    %81 = vector.shape_cast %78 : vector<1x8xf32> to vector<1x1x8xf32>
    tpu.vector_store %arg4[%c0_98, %c1_99, %c0_100], %81 {strides = array<i32>} : memref<1x2x8xf32, #tpu.memory_space<vmem>>, vector<1x1x8xf32>,
    return
  }
  func.func @transform_0(%arg0: i32) -> (i32, i32, i32, i32) {
    %c0_i32 = arith.constant 0 : i32
    %c0_i32_0 = arith.constant 0 : i32
    %c0_i32_1 = arith.constant 0 : i32
    %c0_i32_2 = arith.constant 0 : i32
    return %arg0, %c0_i32, %c0_i32_0, %c0_i32_1 : i32, i32, i32, i32
  }
  func.func @transform_1(%arg0: i32) -> (i32, i32, i32) {
    %c0_i32 = arith.constant 0 : i32
    %c0_i32_0 = arith.constant 0 : i32
    %c0_i32_1 = arith.constant 0 : i32
    %c0_i32_2 = arith.constant 0 : i32
    return %c0_i32, %c0_i32_0, %c0_i32_1 : i32, i32, i32
  }
  func.func @transform_2(%arg0: i32) -> (i32, i32, i32, i32) {
    %c0_i32 = arith.constant 0 : i32
    %c0_i32_0 = arith.constant 0 : i32
    %c0_i32_1 = arith.constant 0 : i32
    %c0_i32_2 = arith.constant 0 : i32
    return %arg0, %c0_i32, %c0_i32_0, %c0_i32_1 : i32, i32, i32, i32
  }
  func.func @transform_3(%arg0: i32) -> (i32, i32, i32) {
    %c0_i32 = arith.constant 0 : i32
    %c0_i32_0 = arith.constant 0 : i32
    %c0_i32_1 = arith.constant 0 : i32
    return %arg0, %c0_i32, %c0_i32_0 : i32, i32, i32
  }
}

module attributes {stable_mosaic.version = 11 : i64} {
  func.func @_bn1_relu_conv2_stats_kernel(%arg0: i32, %arg1: memref<1x16x16x8xbf16, #tpu.memory_space<vmem>>, %arg2: memref<1x8xf32, #tpu.memory_space<vmem>>, %arg3: memref<1x8xf32, #tpu.memory_space<vmem>>, %arg4: memref<9x8x8xbf16, #tpu.memory_space<vmem>>, %arg5: memref<1x16x16x8xbf16, #tpu.memory_space<vmem>>, %arg6: memref<1x2x8xf32, #tpu.memory_space<vmem>>, %arg7: memref<1x18x18x8xbf16, #tpu.memory_space<vmem>>) attributes {dimension_semantics = [#tpu.dimension_semantics<parallel>], iteration_bounds = array<i64: 2>, scalar_prefetch = 0 : i64, scratch_operands = 1 : i64, tpu.core_type = #tpu.core_type<tc>, window_params = [{transform_indices = @transform_0, window_bounds = array<i64: 1, 16, 16, 8>}, {pipeline_mode = #tpu.pipeline_mode<synchronous>, transform_indices = @transform_1, window_bounds = array<i64: 1, 8>}, {pipeline_mode = #tpu.pipeline_mode<synchronous>, transform_indices = @transform_2, window_bounds = array<i64: 1, 8>}, {pipeline_mode = #tpu.pipeline_mode<synchronous>, transform_indices = @transform_3, window_bounds = array<i64: 9, 8, 8>}, {transform_indices = @transform_4, window_bounds = array<i64: 1, 16, 16, 8>}, {transform_indices = @transform_5, window_bounds = array<i64: 1, 2, 8>}]} {
    %cst = arith.constant 0.000000e+00 : bf16
    %0 = vector.broadcast %cst : bf16 to vector<1x1x18x8xbf16>
    %cst_0 = arith.constant 0.000000e+00 : bf16
    %1 = vector.broadcast %cst_0 : bf16 to vector<1x18x1x8xbf16>
    %c0 = arith.constant 0 : index
    %c0_1 = arith.constant 0 : index
    %c0_2 = arith.constant 0 : index
    %c0_3 = arith.constant 0 : index
    %2 = vector.load %arg7[%c0, %c0_1, %c0_2, %c0_3] : memref<1x18x18x8xbf16, #tpu.memory_space<vmem>>, vector<1x1x18x8xbf16>
    tpu.vector_store %arg7[%c0, %c0_1, %c0_2, %c0_3], %0 {strides = array<i32>} : memref<1x18x18x8xbf16, #tpu.memory_space<vmem>>, vector<1x1x18x8xbf16>,
    %c0_4 = arith.constant 0 : index
    %c17 = arith.constant 17 : index
    %c0_5 = arith.constant 0 : index
    %c0_6 = arith.constant 0 : index
    %3 = vector.load %arg7[%c0_4, %c17, %c0_5, %c0_6] : memref<1x18x18x8xbf16, #tpu.memory_space<vmem>>, vector<1x1x18x8xbf16>
    tpu.vector_store %arg7[%c0_4, %c17, %c0_5, %c0_6], %0 {strides = array<i32>} : memref<1x18x18x8xbf16, #tpu.memory_space<vmem>>, vector<1x1x18x8xbf16>,
    %c0_7 = arith.constant 0 : index
    %c0_8 = arith.constant 0 : index
    %c0_9 = arith.constant 0 : index
    %c0_10 = arith.constant 0 : index
    %4 = vector.load %arg7[%c0_7, %c0_8, %c0_9, %c0_10] : memref<1x18x18x8xbf16, #tpu.memory_space<vmem>>, vector<1x18x1x8xbf16>
    tpu.vector_store %arg7[%c0_7, %c0_8, %c0_9, %c0_10], %1 {strides = array<i32>} : memref<1x18x18x8xbf16, #tpu.memory_space<vmem>>, vector<1x18x1x8xbf16>,
    %c0_11 = arith.constant 0 : index
    %c0_12 = arith.constant 0 : index
    %c17_13 = arith.constant 17 : index
    %c0_14 = arith.constant 0 : index
    %5 = vector.load %arg7[%c0_11, %c0_12, %c17_13, %c0_14] : memref<1x18x18x8xbf16, #tpu.memory_space<vmem>>, vector<1x18x1x8xbf16>
    tpu.vector_store %arg7[%c0_11, %c0_12, %c17_13, %c0_14], %1 {strides = array<i32>} : memref<1x18x18x8xbf16, #tpu.memory_space<vmem>>, vector<1x18x1x8xbf16>,
    %c0_15 = arith.constant 0 : index
    %c0_16 = arith.constant 0 : index
    %c0_17 = arith.constant 0 : index
    %c0_18 = arith.constant 0 : index
    %6 = vector.load %arg1[%c0_15, %c0_16, %c0_17, %c0_18] : memref<1x16x16x8xbf16, #tpu.memory_space<vmem>>, vector<1x16x16x8xbf16>
    %7 = arith.extf %6 : vector<1x16x16x8xbf16> to vector<1x16x16x8xf32>
    %c0_19 = arith.constant 0 : index
    %c0_20 = arith.constant 0 : index
    %8 = vector.load %arg2[%c0_19, %c0_20] : memref<1x8xf32, #tpu.memory_space<vmem>>, vector<1x8xf32>
    %9 = vector.shape_cast %8 : vector<1x8xf32> to vector<1x1x1x8xf32>
    %10 = vector.broadcast %9 : vector<1x1x1x8xf32> to vector<1x16x16x8xf32>
    %11 = arith.mulf %7, %10 : vector<1x16x16x8xf32>
    %c0_21 = arith.constant 0 : index
    %c0_22 = arith.constant 0 : index
    %12 = vector.load %arg3[%c0_21, %c0_22] : memref<1x8xf32, #tpu.memory_space<vmem>>, vector<1x8xf32>
    %13 = vector.shape_cast %12 : vector<1x8xf32> to vector<1x1x1x8xf32>
    %14 = vector.broadcast %13 : vector<1x1x1x8xf32> to vector<1x16x16x8xf32>
    %15 = arith.addf %11, %14 : vector<1x16x16x8xf32>
    %cst_23 = arith.constant 0.000000e+00 : f32
    %16 = vector.broadcast %cst_23 : f32 to vector<1x16x16x8xf32>
    %17 = arith.maximumf %15, %16 : vector<1x16x16x8xf32>
    %18 = arith.truncf %17 : vector<1x16x16x8xf32> to vector<1x16x16x8xbf16>
    %c0_24 = arith.constant 0 : index
    %c1 = arith.constant 1 : index
    %c1_25 = arith.constant 1 : index
    %c0_26 = arith.constant 0 : index
    %19 = vector.load %arg7[%c0_24, %c1, %c1_25, %c0_26] : memref<1x18x18x8xbf16, #tpu.memory_space<vmem>>, vector<1x16x16x8xbf16>
    tpu.vector_store %arg7[%c0_24, %c1, %c1_25, %c0_26], %18 {strides = array<i32>} : memref<1x18x18x8xbf16, #tpu.memory_space<vmem>>, vector<1x16x16x8xbf16>,
    %cst_27 = arith.constant 0.000000e+00 : f32
    %20 = vector.broadcast %cst_27 : f32 to vector<256x8xf32>
    %c0_28 = arith.constant 0 : index
    %c0_29 = arith.constant 0 : index
    %c0_30 = arith.constant 0 : index
    %c0_31 = arith.constant 0 : index
    %21 = vector.load %arg7[%c0_28, %c0_29, %c0_30, %c0_31] : memref<1x18x18x8xbf16, #tpu.memory_space<vmem>>, vector<1x16x16x8xbf16>
    %22 = vector.shape_cast %21 : vector<1x16x16x8xbf16> to vector<256x8xbf16>
    %c0_32 = arith.constant 0 : index
    %c0_33 = arith.constant 0 : index
    %c0_34 = arith.constant 0 : index
    %23 = vector.load %arg4[%c0_32, %c0_33, %c0_34] : memref<9x8x8xbf16, #tpu.memory_space<vmem>>, vector<1x8x8xbf16>
    %24 = vector.shape_cast %23 : vector<1x8x8xbf16> to vector<8x8xbf16>
    %cst_35 = arith.constant dense<0.000000e+00> : vector<256x8xf32>
    %25 = tpu.matmul %22, %24, %cst_35 {dimension_numbers = #tpu.dot_dimension_numbers<[1], [0], [0], [1], [0, 0, 1, 1], [], []>} : vector<256x8xbf16>, vector<8x8xbf16>, vector<256x8xf32> -> vector<256x8xf32>
    %26 = arith.addf %20, %25 : vector<256x8xf32>
    %c0_36 = arith.constant 0 : index
    %c0_37 = arith.constant 0 : index
    %c1_38 = arith.constant 1 : index
    %c0_39 = arith.constant 0 : index
    %27 = vector.load %arg7[%c0_36, %c0_37, %c1_38, %c0_39] : memref<1x18x18x8xbf16, #tpu.memory_space<vmem>>, vector<1x16x16x8xbf16>
    %28 = vector.shape_cast %27 : vector<1x16x16x8xbf16> to vector<256x8xbf16>
    %c1_40 = arith.constant 1 : index
    %c0_41 = arith.constant 0 : index
    %c0_42 = arith.constant 0 : index
    %29 = vector.load %arg4[%c1_40, %c0_41, %c0_42] : memref<9x8x8xbf16, #tpu.memory_space<vmem>>, vector<1x8x8xbf16>
    %30 = vector.shape_cast %29 : vector<1x8x8xbf16> to vector<8x8xbf16>
    %cst_43 = arith.constant dense<0.000000e+00> : vector<256x8xf32>
    %31 = tpu.matmul %28, %30, %cst_43 {dimension_numbers = #tpu.dot_dimension_numbers<[1], [0], [0], [1], [0, 0, 1, 1], [], []>} : vector<256x8xbf16>, vector<8x8xbf16>, vector<256x8xf32> -> vector<256x8xf32>
    %32 = arith.addf %26, %31 : vector<256x8xf32>
    %c0_44 = arith.constant 0 : index
    %c0_45 = arith.constant 0 : index
    %c2 = arith.constant 2 : index
    %c0_46 = arith.constant 0 : index
    %33 = vector.load %arg7[%c0_44, %c0_45, %c2, %c0_46] : memref<1x18x18x8xbf16, #tpu.memory_space<vmem>>, vector<1x16x16x8xbf16>
    %34 = vector.shape_cast %33 : vector<1x16x16x8xbf16> to vector<256x8xbf16>
    %c2_47 = arith.constant 2 : index
    %c0_48 = arith.constant 0 : index
    %c0_49 = arith.constant 0 : index
    %35 = vector.load %arg4[%c2_47, %c0_48, %c0_49] : memref<9x8x8xbf16, #tpu.memory_space<vmem>>, vector<1x8x8xbf16>
    %36 = vector.shape_cast %35 : vector<1x8x8xbf16> to vector<8x8xbf16>
    %cst_50 = arith.constant dense<0.000000e+00> : vector<256x8xf32>
    %37 = tpu.matmul %34, %36, %cst_50 {dimension_numbers = #tpu.dot_dimension_numbers<[1], [0], [0], [1], [0, 0, 1, 1], [], []>} : vector<256x8xbf16>, vector<8x8xbf16>, vector<256x8xf32> -> vector<256x8xf32>
    %38 = arith.addf %32, %37 : vector<256x8xf32>
    %c0_51 = arith.constant 0 : index
    %c1_52 = arith.constant 1 : index
    %c0_53 = arith.constant 0 : index
    %c0_54 = arith.constant 0 : index
    %39 = vector.load %arg7[%c0_51, %c1_52, %c0_53, %c0_54] : memref<1x18x18x8xbf16, #tpu.memory_space<vmem>>, vector<1x16x16x8xbf16>
    %40 = vector.shape_cast %39 : vector<1x16x16x8xbf16> to vector<256x8xbf16>
    %c3 = arith.constant 3 : index
    %c0_55 = arith.constant 0 : index
    %c0_56 = arith.constant 0 : index
    %41 = vector.load %arg4[%c3, %c0_55, %c0_56] : memref<9x8x8xbf16, #tpu.memory_space<vmem>>, vector<1x8x8xbf16>
    %42 = vector.shape_cast %41 : vector<1x8x8xbf16> to vector<8x8xbf16>
    %cst_57 = arith.constant dense<0.000000e+00> : vector<256x8xf32>
    %43 = tpu.matmul %40, %42, %cst_57 {dimension_numbers = #tpu.dot_dimension_numbers<[1], [0], [0], [1], [0, 0, 1, 1], [], []>} : vector<256x8xbf16>, vector<8x8xbf16>, vector<256x8xf32> -> vector<256x8xf32>
    %44 = arith.addf %38, %43 : vector<256x8xf32>
    %c0_58 = arith.constant 0 : index
    %c1_59 = arith.constant 1 : index
    %c1_60 = arith.constant 1 : index
    %c0_61 = arith.constant 0 : index
    %45 = vector.load %arg7[%c0_58, %c1_59, %c1_60, %c0_61] : memref<1x18x18x8xbf16, #tpu.memory_space<vmem>>, vector<1x16x16x8xbf16>
    %46 = vector.shape_cast %45 : vector<1x16x16x8xbf16> to vector<256x8xbf16>
    %c4 = arith.constant 4 : index
    %c0_62 = arith.constant 0 : index
    %c0_63 = arith.constant 0 : index
    %47 = vector.load %arg4[%c4, %c0_62, %c0_63] : memref<9x8x8xbf16, #tpu.memory_space<vmem>>, vector<1x8x8xbf16>
    %48 = vector.shape_cast %47 : vector<1x8x8xbf16> to vector<8x8xbf16>
    %cst_64 = arith.constant dense<0.000000e+00> : vector<256x8xf32>
    %49 = tpu.matmul %46, %48, %cst_64 {dimension_numbers = #tpu.dot_dimension_numbers<[1], [0], [0], [1], [0, 0, 1, 1], [], []>} : vector<256x8xbf16>, vector<8x8xbf16>, vector<256x8xf32> -> vector<256x8xf32>
    %50 = arith.addf %44, %49 : vector<256x8xf32>
    %c0_65 = arith.constant 0 : index
    %c1_66 = arith.constant 1 : index
    %c2_67 = arith.constant 2 : index
    %c0_68 = arith.constant 0 : index
    %51 = vector.load %arg7[%c0_65, %c1_66, %c2_67, %c0_68] : memref<1x18x18x8xbf16, #tpu.memory_space<vmem>>, vector<1x16x16x8xbf16>
    %52 = vector.shape_cast %51 : vector<1x16x16x8xbf16> to vector<256x8xbf16>
    %c5 = arith.constant 5 : index
    %c0_69 = arith.constant 0 : index
    %c0_70 = arith.constant 0 : index
    %53 = vector.load %arg4[%c5, %c0_69, %c0_70] : memref<9x8x8xbf16, #tpu.memory_space<vmem>>, vector<1x8x8xbf16>
    %54 = vector.shape_cast %53 : vector<1x8x8xbf16> to vector<8x8xbf16>
    %cst_71 = arith.constant dense<0.000000e+00> : vector<256x8xf32>
    %55 = tpu.matmul %52, %54, %cst_71 {dimension_numbers = #tpu.dot_dimension_numbers<[1], [0], [0], [1], [0, 0, 1, 1], [], []>} : vector<256x8xbf16>, vector<8x8xbf16>, vector<256x8xf32> -> vector<256x8xf32>
    %56 = arith.addf %50, %55 : vector<256x8xf32>
    %c0_72 = arith.constant 0 : index
    %c2_73 = arith.constant 2 : index
    %c0_74 = arith.constant 0 : index
    %c0_75 = arith.constant 0 : index
    %57 = vector.load %arg7[%c0_72, %c2_73, %c0_74, %c0_75] : memref<1x18x18x8xbf16, #tpu.memory_space<vmem>>, vector<1x16x16x8xbf16>
    %58 = vector.shape_cast %57 : vector<1x16x16x8xbf16> to vector<256x8xbf16>
    %c6 = arith.constant 6 : index
    %c0_76 = arith.constant 0 : index
    %c0_77 = arith.constant 0 : index
    %59 = vector.load %arg4[%c6, %c0_76, %c0_77] : memref<9x8x8xbf16, #tpu.memory_space<vmem>>, vector<1x8x8xbf16>
    %60 = vector.shape_cast %59 : vector<1x8x8xbf16> to vector<8x8xbf16>
    %cst_78 = arith.constant dense<0.000000e+00> : vector<256x8xf32>
    %61 = tpu.matmul %58, %60, %cst_78 {dimension_numbers = #tpu.dot_dimension_numbers<[1], [0], [0], [1], [0, 0, 1, 1], [], []>} : vector<256x8xbf16>, vector<8x8xbf16>, vector<256x8xf32> -> vector<256x8xf32>
    %62 = arith.addf %56, %61 : vector<256x8xf32>
    %c0_79 = arith.constant 0 : index
    %c2_80 = arith.constant 2 : index
    %c1_81 = arith.constant 1 : index
    %c0_82 = arith.constant 0 : index
    %63 = vector.load %arg7[%c0_79, %c2_80, %c1_81, %c0_82] : memref<1x18x18x8xbf16, #tpu.memory_space<vmem>>, vector<1x16x16x8xbf16>
    %64 = vector.shape_cast %63 : vector<1x16x16x8xbf16> to vector<256x8xbf16>
    %c7 = arith.constant 7 : index
    %c0_83 = arith.constant 0 : index
    %c0_84 = arith.constant 0 : index
    %65 = vector.load %arg4[%c7, %c0_83, %c0_84] : memref<9x8x8xbf16, #tpu.memory_space<vmem>>, vector<1x8x8xbf16>
    %66 = vector.shape_cast %65 : vector<1x8x8xbf16> to vector<8x8xbf16>
    %cst_85 = arith.constant dense<0.000000e+00> : vector<256x8xf32>
    %67 = tpu.matmul %64, %66, %cst_85 {dimension_numbers = #tpu.dot_dimension_numbers<[1], [0], [0], [1], [0, 0, 1, 1], [], []>} : vector<256x8xbf16>, vector<8x8xbf16>, vector<256x8xf32> -> vector<256x8xf32>
    %68 = arith.addf %62, %67 : vector<256x8xf32>
    %c0_86 = arith.constant 0 : index
    %c2_87 = arith.constant 2 : index
    %c2_88 = arith.constant 2 : index
    %c0_89 = arith.constant 0 : index
    %69 = vector.load %arg7[%c0_86, %c2_87, %c2_88, %c0_89] : memref<1x18x18x8xbf16, #tpu.memory_space<vmem>>, vector<1x16x16x8xbf16>
    %70 = vector.shape_cast %69 : vector<1x16x16x8xbf16> to vector<256x8xbf16>
    %c8 = arith.constant 8 : index
    %c0_90 = arith.constant 0 : index
    %c0_91 = arith.constant 0 : index
    %71 = vector.load %arg4[%c8, %c0_90, %c0_91] : memref<9x8x8xbf16, #tpu.memory_space<vmem>>, vector<1x8x8xbf16>
    %72 = vector.shape_cast %71 : vector<1x8x8xbf16> to vector<8x8xbf16>
    %cst_92 = arith.constant dense<0.000000e+00> : vector<256x8xf32>
    %73 = tpu.matmul %70, %72, %cst_92 {dimension_numbers = #tpu.dot_dimension_numbers<[1], [0], [0], [1], [0, 0, 1, 1], [], []>} : vector<256x8xbf16>, vector<8x8xbf16>, vector<256x8xf32> -> vector<256x8xf32>
    %74 = arith.addf %68, %73 : vector<256x8xf32>
    %75 = arith.truncf %74 : vector<256x8xf32> to vector<256x8xbf16>
    %76 = vector.shape_cast %75 : vector<256x8xbf16> to vector<1x16x16x8xbf16>
    %c0_93 = arith.constant 0 : index
    %c0_94 = arith.constant 0 : index
    %c0_95 = arith.constant 0 : index
    %c0_96 = arith.constant 0 : index
    %77 = vector.load %arg5[%c0_93, %c0_94, %c0_95, %c0_96] : memref<1x16x16x8xbf16, #tpu.memory_space<vmem>>, vector<1x16x16x8xbf16>
    tpu.vector_store %arg5[%c0_93, %c0_94, %c0_95, %c0_96], %76 {strides = array<i32>} : memref<1x16x16x8xbf16, #tpu.memory_space<vmem>>, vector<1x16x16x8xbf16>,
    %cst_97 = arith.constant dense<0.000000e+00> : vector<8xf32>
    %78 = vector.multi_reduction <add>, %74, %cst_97 [0] : vector<256x8xf32> to vector<8xf32>
    %79 = vector.shape_cast %78 : vector<8xf32> to vector<1x8xf32>
    %cst_98 = arith.constant 3.906250e-03 : f32
    %80 = vector.broadcast %cst_98 : f32 to vector<1x8xf32>
    %81 = arith.mulf %79, %80 : vector<1x8xf32>
    %82 = vector.broadcast %81 : vector<1x8xf32> to vector<256x8xf32>
    %83 = arith.subf %74, %82 : vector<256x8xf32>
    %c0_99 = arith.constant 0 : index
    %c0_100 = arith.constant 0 : index
    %c0_101 = arith.constant 0 : index
    %84 = vector.load %arg6[%c0_99, %c0_100, %c0_101] : memref<1x2x8xf32, #tpu.memory_space<vmem>>, vector<1x1x8xf32>
    %85 = vector.shape_cast %84 : vector<1x1x8xf32> to vector<1x8xf32>
    %86 = vector.shape_cast %79 : vector<1x8xf32> to vector<1x1x8xf32>
    tpu.vector_store %arg6[%c0_99, %c0_100, %c0_101], %86 {strides = array<i32>} : memref<1x2x8xf32, #tpu.memory_space<vmem>>, vector<1x1x8xf32>,
    %87 = arith.mulf %83, %83 : vector<256x8xf32>
    %cst_102 = arith.constant dense<0.000000e+00> : vector<8xf32>
    %88 = vector.multi_reduction <add>, %87, %cst_102 [0] : vector<256x8xf32> to vector<8xf32>
    %89 = vector.shape_cast %88 : vector<8xf32> to vector<1x8xf32>
    %c0_103 = arith.constant 0 : index
    %c1_104 = arith.constant 1 : index
    %c0_105 = arith.constant 0 : index
    %90 = vector.load %arg6[%c0_103, %c1_104, %c0_105] : memref<1x2x8xf32, #tpu.memory_space<vmem>>, vector<1x1x8xf32>
    %91 = vector.shape_cast %90 : vector<1x1x8xf32> to vector<1x8xf32>
    %92 = vector.shape_cast %89 : vector<1x8xf32> to vector<1x1x8xf32>
    tpu.vector_store %arg6[%c0_103, %c1_104, %c0_105], %92 {strides = array<i32>} : memref<1x2x8xf32, #tpu.memory_space<vmem>>, vector<1x1x8xf32>,
    return
  }
  func.func @transform_0(%arg0: i32) -> (i32, i32, i32, i32) {
    %c0_i32 = arith.constant 0 : i32
    %c0_i32_0 = arith.constant 0 : i32
    %c0_i32_1 = arith.constant 0 : i32
    %c0_i32_2 = arith.constant 0 : i32
    return %arg0, %c0_i32, %c0_i32_0, %c0_i32_1 : i32, i32, i32, i32
  }
  func.func @transform_1(%arg0: i32) -> (i32, i32) {
    %c0_i32 = arith.constant 0 : i32
    %c0_i32_0 = arith.constant 0 : i32
    %c0_i32_1 = arith.constant 0 : i32
    return %c0_i32, %c0_i32_0 : i32, i32
  }
  func.func @transform_2(%arg0: i32) -> (i32, i32) {
    %c0_i32 = arith.constant 0 : i32
    %c0_i32_0 = arith.constant 0 : i32
    %c0_i32_1 = arith.constant 0 : i32
    return %c0_i32, %c0_i32_0 : i32, i32
  }
  func.func @transform_3(%arg0: i32) -> (i32, i32, i32) {
    %c0_i32 = arith.constant 0 : i32
    %c0_i32_0 = arith.constant 0 : i32
    %c0_i32_1 = arith.constant 0 : i32
    %c0_i32_2 = arith.constant 0 : i32
    return %c0_i32, %c0_i32_0, %c0_i32_1 : i32, i32, i32
  }
  func.func @transform_4(%arg0: i32) -> (i32, i32, i32, i32) {
    %c0_i32 = arith.constant 0 : i32
    %c0_i32_0 = arith.constant 0 : i32
    %c0_i32_1 = arith.constant 0 : i32
    %c0_i32_2 = arith.constant 0 : i32
    return %arg0, %c0_i32, %c0_i32_0, %c0_i32_1 : i32, i32, i32, i32
  }
  func.func @transform_5(%arg0: i32) -> (i32, i32, i32) {
    %c0_i32 = arith.constant 0 : i32
    %c0_i32_0 = arith.constant 0 : i32
    %c0_i32_1 = arith.constant 0 : i32
    return %arg0, %c0_i32, %c0_i32_0 : i32, i32, i32
  }
}

module attributes {stable_mosaic.version = 11 : i64} {
  func.func @_bn2_residual_relu_kernel(%arg0: i32, %arg1: i32, %arg2: memref<1x8x128xbf16, #tpu.memory_space<vmem>>, %arg3: memref<1x8x128xf32, #tpu.memory_space<vmem>>, %arg4: memref<1x128xf32, #tpu.memory_space<vmem>>, %arg5: memref<1x128xf32, #tpu.memory_space<vmem>>, %arg6: memref<1x8x128xf32, #tpu.memory_space<vmem>>) attributes {dimension_semantics = [#tpu.dimension_semantics<parallel>, #tpu.dimension_semantics<parallel>], iteration_bounds = array<i64: 2, 2>, scalar_prefetch = 0 : i64, scratch_operands = 0 : i64, tpu.core_type = #tpu.core_type<tc>, window_params = [{transform_indices = @transform_0, window_bounds = array<i64: 1, 8, 128>}, {transform_indices = @transform_1, window_bounds = array<i64: 1, 8, 128>}, {pipeline_mode = #tpu.pipeline_mode<synchronous>, transform_indices = @transform_2, window_bounds = array<i64: 1, 128>}, {pipeline_mode = #tpu.pipeline_mode<synchronous>, transform_indices = @transform_3, window_bounds = array<i64: 1, 128>}, {transform_indices = @transform_4, window_bounds = array<i64: 1, 8, 128>}]} {
    %c0 = arith.constant 0 : index
    %c0_0 = arith.constant 0 : index
    %c0_1 = arith.constant 0 : index
    %0 = vector.load %arg2[%c0, %c0_0, %c0_1] : memref<1x8x128xbf16, #tpu.memory_space<vmem>>, vector<1x8x128xbf16>
    %1 = arith.extf %0 : vector<1x8x128xbf16> to vector<1x8x128xf32>
    %c0_2 = arith.constant 0 : index
    %c0_3 = arith.constant 0 : index
    %2 = vector.load %arg4[%c0_2, %c0_3] : memref<1x128xf32, #tpu.memory_space<vmem>>, vector<1x128xf32>
    %3 = vector.shape_cast %2 : vector<1x128xf32> to vector<1x1x128xf32>
    %4 = vector.broadcast %3 : vector<1x1x128xf32> to vector<1x8x128xf32>
    %5 = arith.mulf %1, %4 : vector<1x8x128xf32>
    %c0_4 = arith.constant 0 : index
    %c0_5 = arith.constant 0 : index
    %6 = vector.load %arg5[%c0_4, %c0_5] : memref<1x128xf32, #tpu.memory_space<vmem>>, vector<1x128xf32>
    %7 = vector.shape_cast %6 : vector<1x128xf32> to vector<1x1x128xf32>
    %8 = vector.broadcast %7 : vector<1x1x128xf32> to vector<1x8x128xf32>
    %9 = arith.addf %5, %8 : vector<1x8x128xf32>
    %c0_6 = arith.constant 0 : index
    %c0_7 = arith.constant 0 : index
    %c0_8 = arith.constant 0 : index
    %10 = vector.load %arg3[%c0_6, %c0_7, %c0_8] : memref<1x8x128xf32, #tpu.memory_space<vmem>>, vector<1x8x128xf32>
    %11 = arith.addf %9, %10 : vector<1x8x128xf32>
    %cst = arith.constant 0.000000e+00 : f32
    %12 = vector.broadcast %cst : f32 to vector<1x8x128xf32>
    %13 = arith.maximumf %11, %12 : vector<1x8x128xf32>
    %c0_9 = arith.constant 0 : index
    %c0_10 = arith.constant 0 : index
    %c0_11 = arith.constant 0 : index
    %14 = vector.load %arg6[%c0_9, %c0_10, %c0_11] : memref<1x8x128xf32, #tpu.memory_space<vmem>>, vector<1x8x128xf32>
    tpu.vector_store %arg6[%c0_9, %c0_10, %c0_11], %13 {strides = array<i32>} : memref<1x8x128xf32, #tpu.memory_space<vmem>>, vector<1x8x128xf32>,
    return
  }
  func.func @transform_0(%arg0: i32, %arg1: i32) -> (i32, i32, i32) {
    %c0_i32 = arith.constant 0 : i32
    %c0_i32_0 = arith.constant 0 : i32
    return %arg0, %arg1, %c0_i32 : i32, i32, i32
  }
  func.func @transform_1(%arg0: i32, %arg1: i32) -> (i32, i32, i32) {
    %c0_i32 = arith.constant 0 : i32
    %c0_i32_0 = arith.constant 0 : i32
    return %arg0, %arg1, %c0_i32 : i32, i32, i32
  }
  func.func @transform_2(%arg0: i32, %arg1: i32) -> (i32, i32) {
    %c0_i32 = arith.constant 0 : i32
    %c0_i32_0 = arith.constant 0 : i32
    %c0_i32_1 = arith.constant 0 : i32
    return %c0_i32, %c0_i32_0 : i32, i32
  }
  func.func @transform_3(%arg0: i32, %arg1: i32) -> (i32, i32) {
    %c0_i32 = arith.constant 0 : i32
    %c0_i32_0 = arith.constant 0 : i32
    %c0_i32_1 = arith.constant 0 : i32
    return %c0_i32, %c0_i32_0 : i32, i32
  }
  func.func @transform_4(%arg0: i32, %arg1: i32) -> (i32, i32, i32) {
    %c0_i32 = arith.constant 0 : i32
    %c0_i32_0 = arith.constant 0 : i32
    return %arg0, %arg1, %c0_i32 : i32, i32, i32
  }
}

</mosaic_0001>

<llo_original>
// kernel: tile.13
$region0: #{tile.13}
  #allocation0 [shape = 's32[1]{0}', space=sflag, size = 0x4, scoped, tag = 'scoped memory for tile.13']
  %s0 = inlined_call_operand.vmem [shape: f32[8], index: 0, kind: input, shape index: {}]
  %s1 = inlined_call_operand.vmem [shape: f32[16,8], index: 1, kind: output, shape index: {}]
  // Predicated region
  $region2: #{tile.13} parent=0 // pred_check
    _
  $region3: #{tile.13} parent=0 // pred_check_branch
    %3 = sbr.rel (0) target = $region5
  $region4: #{tile.13} parent=0 // pred_region
    _
  $region5: #{tile.13} parent=0 // pred_fallthru
    _
  %v4 = vld [vmem:[%s0] ss:$0 sm:$0xff]
  %5 = vst [vmem:[%s1] sm:$0xff] %v4
  %s6 = scalar_lea.vmem %s1, 8
  %7 = vst [vmem:[%s6] sm:$0xff] %v4

// kernel: tile.14
$region0: #{tile.14}
  %s0 = inlined_call_operand.vmem [shape: f32[16,8], index: 0, kind: input, shape index: {}]
  %s1 = inlined_call_operand.vmem [shape: f32[1,128], index: 1, kind: output, shape index: {}]
  $region1: #{tile.14} parent=0
    #allocation0 [shape = 'u8[4096]{0}', space=vmem, size = 0x1000, scoped, tag = 'scoped mem for output reshape']
    %v2 = vld [vmem:[%s0] sm:$0x1]
    %vm3 = vcmask 64512
    %4 = vst.msk [vmem:[#allocation0] sm:$0x1] %vm3, %v2
    %s5 = scalar_lea.vmem %s0, 15
    %v6 = vld [vmem:[%s5] sm:$0x1]
    %7 = vrot.lane.b32.xlu0 %v6, 120
    %v8 = vpop.permute.xlu0 %7
    %vm9 = vcmask 1048512
    %10 = vst.msk [vmem:[#allocation0] sm:$0x1] %vm9, %v8
    %s11 = scalar_lea.vmem %s0, 14
    %v12 = vld [vmem:[%s11] sm:$0x1]
    %13 = vrot.lane.b32.xlu0 %v12, 112
    %v14 = vpop.permute.xlu0 %13
    %vm15 = vcmask 982912
    %16 = vst.msk [vmem:[#allocation0] sm:$0x1] %vm15, %v14
    %s17 = scalar_lea.vmem %s0, 13
    %v18 = vld [vmem:[%s17] sm:$0x1]
    %19 = vrot.lane.b32.xlu0 %v18, 104
    %v20 = vpop.permute.xlu0 %19
    %vm21 = vcmask 917312
    %22 = vst.msk [vmem:[#allocation0] sm:$0x1] %vm21, %v20
    %s23 = scalar_lea.vmem %s0, 12
    %v24 = vld [vmem:[%s23] sm:$0x1]
    %25 = vrot.lane.b32.xlu0 %v24, 96
    %v26 = vpop.permute.xlu0 %25
    %vm27 = vcmask 851712
    %28 = vst.msk [vmem:[#allocation0] sm:$0x1] %vm27, %v26
    %s29 = scalar_lea.vmem %s0, 11
    %v30 = vld [vmem:[%s29] sm:$0x1]
    %31 = vrot.lane.b32.xlu0 %v30, 88
    %v32 = vpop.permute.xlu0 %31
    %vm33 = vcmask 786112
    %34 = vst.msk [vmem:[#allocation0] sm:$0x1] %vm33, %v32
    %s35 = scalar_lea.vmem %s0, 10
    %v36 = vld [vmem:[%s35] sm:$0x1]
    %37 = vrot.lane.b32.xlu0 %v36, 80
    %v38 = vpop.permute.xlu0 %37
    %vm39 = vcmask 720512
    %40 = vst.msk [vmem:[#allocation0] sm:$0x1] %vm39, %v38
    %s41 = scalar_lea.vmem %s0, 9
    %v42 = vld [vmem:[%s41] sm:$0x1]
    %43 = vrot.lane.b32.xlu0 %v42, 72
    %v44 = vpop.permute.xlu0 %43
    %vm45 = vcmask 654912
    %46 = vst.msk [vmem:[#allocation0] sm:$0x1] %vm45, %v44
    %s47 = scalar_lea.vmem %s0, 8
    %v48 = vld [vmem:[%s47] sm:$0x1]
    %49 = vrot.lane.b32.xlu0 %v48, 64
    %v50 = vpop.permute.xlu0 %49
    %vm51 = vcmask 589312
    %52 = vst.msk [vmem:[#allocation0] sm:$0x1] %vm51, %v50
    %s53 = scalar_lea.vmem %s0, 7
    %v54 = vld [vmem:[%s53] sm:$0x1]
    %55 = vrot.lane.b32.xlu0 %v54, 56
    %v56 = vpop.permute.xlu0 %55
    %vm57 = vcmask 523712
    %58 = vst.msk [vmem:[#allocation0] sm:$0x1] %vm57, %v56
    %s59 = scalar_lea.vmem %s0, 6
    %v60 = vld [vmem:[%s59] sm:$0x1]
    %61 = vrot.lane.b32.xlu0 %v60, 48
    %v62 = vpop.permute.xlu0 %61
    %vm63 = vcmask 458112
    %64 = vst.msk [vmem:[#allocation0] sm:$0x1] %vm63, %v62
    %s65 = scalar_lea.vmem %s0, 5
    %v66 = vld [vmem:[%s65] sm:$0x1]
    %67 = vrot.lane.b32.xlu0 %v66, 40
    %v68 = vpop.permute.xlu0 %67
    %vm69 = vcmask 392512
    %70 = vst.msk [vmem:[#allocation0] sm:$0x1] %vm69, %v68
    %s71 = scalar_lea.vmem %s0, 4
    %v72 = vld [vmem:[%s71] sm:$0x1]
    %73 = vrot.lane.b32.xlu0 %v72, 32
    %v74 = vpop.permute.xlu0 %73
    %vm75 = vcmask 326912
    %76 = vst.msk [vmem:[#allocation0] sm:$0x1] %vm75, %v74
    %s77 = scalar_lea.vmem %s0, 3
    %v78 = vld [vmem:[%s77] sm:$0x1]
    %79 = vrot.lane.b32.xlu0 %v78, 24
    %v80 = vpop.permute.xlu0 %79
    %vm81 = vcmask 261312
    %82 = vst.msk [vmem:[#allocation0] sm:$0x1] %vm81, %v80
    %s83 = scalar_lea.vmem %s0, 2
    %v84 = vld [vmem:[%s83] sm:$0x1]
    %85 = vrot.lane.b32.xlu0 %v84, 16
    %v86 = vpop.permute.xlu0 %85
    %vm87 = vcmask 195712
    %88 = vst.msk [vmem:[#allocation0] sm:$0x1] %vm87, %v86
    %s89 = scalar_lea.vmem %s0, 1
    %v90 = vld [vmem:[%s89] sm:$0x1]
    %91 = vrot.lane.b32.xlu0 %v90, 8
    %v92 = vpop.permute.xlu0 %91
    %vm93 = vcmask 130112
    %94 = vst.msk [vmem:[#allocation0] sm:$0x1] %vm93, %v92
    %s96 = sshll.u32 1, 1
    %s97 = ssub.s32 %s96, 1
    %v99 = vld [vmem:[#allocation0] sm:%s97]
    %s100 = sshll.u32 1, 1
    %s101 = ssub.s32 %s100, 1
    %102 = vst [vmem:[%s1] sm:%s101] %v99

// kernel: basic_block_forward_nhwc.5
$region0: #{basic_block_forward_nhwc.5}
  #allocation0 [shape = 'u32[]', space=smem, size = 0x4, offset = 0x4, fixed_abs, tag = 'smem constant byte address 0x4 - core index']
  #allocation1 [shape = 'u32[144,128]{1,0:T(1,128)}', space=vmem, size = 0x12000, scoped, tag = 'internal scratch']
  %s0 = inlined_call_operand.vmem [shape: bf16[2,16,128], index: 0, kind: input, shape index: {}]
  %s1 = inlined_call_operand.vmem [shape: f32[2,16,128], index: 1, kind: input, shape index: {}]
  %s2 = inlined_call_operand.vmem [shape: f32[1,128], index: 2, kind: input, shape index: {}]
  %s3 = inlined_call_operand.vmem [shape: f32[1,128], index: 3, kind: input, shape index: {}]
  %s4 = inlined_call_operand.vmem [shape: f32[2,16,128], index: 4, kind: output, shape index: {}]
  %s5 = sld [smem:[#allocation0]]
  $region49: #{basic_block_forward_nhwc.5} parent=0
    _
  %s7 = ssub.s32 1, %s5
  %s8 = scalar_select 0, %s7, %s5
  loop: start=0, step=1, limit=6
  $region2: #{basic_block_forward_nhwc.5} parent=0 // loop_pre_header
    _
  $region3: #{basic_block_forward_nhwc.5} parent=0 // loop_header
    %s10 = sphi 0, %s14
    %p11 = scmp.ge.s32.totalorder %s10, 6
    %s17 = sphi 0, %s29
    %s18 = sphi 0, %s25
    %s19 = sphi 0, %s17
    %s20 = sphi 0, %s18
    %s21 = sphi 0, %s19
    %s22 = sphi 0, %s20
    %s34 = sphi 0, %s36
    %s37 = sphi 0, %s34
    %s38 = sphi 0, %s37
    %s54 = sphi 0, %s38
    %s62 = sphi 0, %s64
    %s65 = sphi 0, %s62
    %s66 = sphi 0, %s65
    %s82 = sphi 0, %s66
    %s86 = sphi 0, %s86
    %s88 = sphi 0, %s86
    %s89 = sphi 0, %s88
    %s103 = sphi 0, %s89
    %s107 = sphi 0, %s107
    %s109 = sphi 0, %s107
    %s110 = sphi 0, %s109
    %s124 = sphi 0, %s110
    %s132 = sphi 0, %s134
    %s135 = sphi 0, %s132
    %s136 = sphi 0, %s135
    %s152 = sphi 0, %s136
  $region4: #{basic_block_forward_nhwc.5} parent=0 // loop_header_branch
    %13 = sbr.rel (%p11) target = $region8
  $region5: #{basic_block_forward_nhwc.5} parent=0 // loop_body
    %s15 = ssub.s32 %s10, 1
    %s16 = ssub.s32 %s10, 2
    %s23 = sadd.s32 1, %s18
    %p24 = scmp.ge.s32.totalorder %s23, 2
    %s25 = scalar_select %p24, 0, %s23
    %s26 = sadd.s32 1, %s17
    %s27 = scalar_select %p24, %s26, %s17
    %p28 = scmp.ge.s32.totalorder %s27, 2
    %s29 = scalar_select %p28, 0, %s27
    %s30 = ssub.s32 %s17, %s29
    %s31 = ssub.s32 %s18, %s25
    %s32 = sor.u32 %s30, %s31
    %p33 = scmp.eq.s32.totalorder %s32, 0
    %s35 = sadd.s32 %s34, 1
    %s36 = scalar_select %p33, %s34, %s35
    %p39 = pneg %p33
    %p40 = scmp.eq.s32.totalorder %s10, 3
    %p41 = por %p39, %p40
    %p42 = scmp.ne.s32.totalorder %s34, %s37
    %p43 = scmp.eq.s32.totalorder %s10, 0
    %p44 = por %p42, %p43
    %p45 = scmp.ne.s32.totalorder %s34, %s37
    %p46 = scmp.eq.s32.totalorder %s15, 3
    %p47 = por %p45, %p46
    %p48 = scmp.ne.s32.totalorder %s37, %s38
    %p49 = scmp.eq.s32.totalorder %s15, 0
    %p50 = por %p48, %p49
    %p51 = scmp.ne.s32.totalorder %s37, %s38
    %p52 = scmp.eq.s32.totalorder %s16, 3
    %p53 = por %p51, %p52
    %p55 = scmp.ne.s32.totalorder %s38, %s54
    %p56 = scmp.eq.s32.totalorder %s16, 0
    %p57 = por %p55, %p56
    %s58 = ssub.s32 %s17, %s29
    %s59 = ssub.s32 %s18, %s25
    %s60 = sor.u32 %s58, %s59
    %p61 = scmp.eq.s32.totalorder %s60, 0
    %s63 = sadd.s32 %s62, 1
    %s64 = scalar_select %p61, %s62, %s63
    %p67 = pneg %p61
    %p68 = scmp.eq.s32.totalorder %s10, 3
    %p69 = por %p67, %p68
    %p70 = scmp.ne.s32.totalorder %s62, %s65
    %p71 = scmp.eq.s32.totalorder %s10, 0
    %p72 = por %p70, %p71
    %p73 = scmp.ne.s32.totalorder %s62, %s65
    %p74 = scmp.eq.s32.totalorder %s15, 3
    %p75 = por %p73, %p74
    %p76 = scmp.ne.s32.totalorder %s65, %s66
    %p77 = scmp.eq.s32.totalorder %s15, 0
    %p78 = por %p76, %p77
    %p79 = scmp.ne.s32.totalorder %s65, %s66
    %p80 = scmp.eq.s32.totalorder %s16, 3
    %p81 = por %p79, %p80
    %p83 = scmp.ne.s32.totalorder %s66, %s82
    %p84 = scmp.eq.s32.totalorder %s16, 0
    %p85 = por %p83, %p84
    %s87 = sadd.s32 %s86, 1
    %p90 = scmp.eq.s32.totalorder %s10, 3
    %p91 = scmp.ne.s32.totalorder %s86, %s88
    %p92 = scmp.eq.s32.totalorder %s10, 0
    %p93 = por %p91, %p92
    %p94 = scmp.ne.s32.totalorder %s86, %s88
    %p95 = scmp.eq.s32.totalorder %s15, 3
    %p96 = por %p94, %p95
    %p97 = scmp.ne.s32.totalorder %s88, %s89
    %p98 = scmp.eq.s32.totalorder %s15, 0
    %p99 = por %p97, %p98
    %p100 = scmp.ne.s32.totalorder %s88, %s89
    %p101 = scmp.eq.s32.totalorder %s16, 3
    %p102 = por %p100, %p101
    %p104 = scmp.ne.s32.totalorder %s89, %s103
    %p105 = scmp.eq.s32.totalorder %s16, 0
    %p106 = por %p104, %p105
    %s108 = sadd.s32 %s107, 1
    %p111 = scmp.eq.s32.totalorder %s10, 3
    %p112 = scmp.ne.s32.totalorder %s107, %s109
    %p113 = scmp.eq.s32.totalorder %s10, 0
    %p114 = por %p112, %p113
    %p115 = scmp.ne.s32.totalorder %s107, %s109
    %p116 = scmp.eq.s32.totalorder %s15, 3
    %p117 = por %p115, %p116
    %p118 = scmp.ne.s32.totalorder %s109, %s110
    %p119 = scmp.eq.s32.totalorder %s15, 0
    %p120 = por %p118, %p119
    %p121 = scmp.ne.s32.totalorder %s109, %s110
    %p122 = scmp.eq.s32.totalorder %s16, 3
    %p123 = por %p121, %p122
    %p125 = scmp.ne.s32.totalorder %s110, %s124
    %p126 = scmp.eq.s32.totalorder %s16, 0
    %p127 = por %p125, %p126
    %s128 = ssub.s32 %s17, %s29
    %s129 = ssub.s32 %s18, %s25
    %s130 = sor.u32 %s128, %s129
    %p131 = scmp.eq.s32.totalorder %s130, 0
    %s133 = sadd.s32 %s132, 1
    %s134 = scalar_select %p131, %s132, %s133
    %p137 = pneg %p131
    %p138 = scmp.eq.s32.totalorder %s10, 3
    %p139 = por %p137, %p138
    %p140 = scmp.ne.s32.totalorder %s132, %s135
    %p141 = scmp.eq.s32.totalorder %s10, 0
    %p142 = por %p140, %p141
    %p143 = scmp.ne.s32.totalorder %s132, %s135
    %p144 = scmp.eq.s32.totalorder %s15, 3
    %p145 = por %p143, %p144
    %p146 = scmp.ne.s32.totalorder %s135, %s136
    %p147 = scmp.eq.s32.totalorder %s15, 0
    %p148 = por %p146, %p147
    %p149 = scmp.ne.s32.totalorder %s135, %s136
    %p150 = scmp.eq.s32.totalorder %s16, 3
    %p151 = por %p149, %p150
    %p153 = scmp.ne.s32.totalorder %s136, %s152
    %p154 = scmp.eq.s32.totalorder %s16, 0
    %p155 = por %p153, %p154
    %p156 = scmp.le.s32.totalorder 1, %s10
    %p157 = scmp.lt.s32.totalorder %s10, 5
    %p158 = pnand %p156, %p157
    %p159 = pneg %p158
    // Predicated region
    $region9: #{basic_block_forward_nhwc.5} parent=5 // pred_check
      _
    $region10: #{basic_block_forward_nhwc.5} parent=5 // pred_check_branch
      %161 = sbr.rel (%p158) target = $region12
    $region11: #{basic_block_forward_nhwc.5} parent=5 // pred_region
      %s162 = ssub.s32 %s10, 1
      // Predicated region
      $region13: #{basic_block_forward_nhwc.5} parent=11 // pred_check
        %p163 = pneg %p99
      $region14: #{basic_block_forward_nhwc.5} parent=11 // pred_check_branch
        %165 = sbr.rel (%p163) target = $region16
      $region15: #{basic_block_forward_nhwc.5} parent=11 // pred_region
        _
      $region16: #{basic_block_forward_nhwc.5} parent=11 // pred_fallthru
        _
      // Predicated region
      $region17: #{basic_block_forward_nhwc.5} parent=11 // pred_check
        %p166 = pneg %p120
      $region18: #{basic_block_forward_nhwc.5} parent=11 // pred_check_branch
        %168 = sbr.rel (%p166) target = $region20
      $region19: #{basic_block_forward_nhwc.5} parent=11 // pred_region
        _
      $region20: #{basic_block_forward_nhwc.5} parent=11 // pred_fallthru
        _
    $region12: #{basic_block_forward_nhwc.5} parent=5 // pred_fallthru
      _
    %p169 = scmp.lt.s32.totalorder %s10, 4
    // Predicated region
    $region21: #{basic_block_forward_nhwc.5} parent=5 // pred_check
      %p170 = pneg %p169
    $region22: #{basic_block_forward_nhwc.5} parent=5 // pred_check_branch
      %172 = sbr.rel (%p170) target = $region24
    $region23: #{basic_block_forward_nhwc.5} parent=5 // pred_region
      // Predicated region
      $region25: #{basic_block_forward_nhwc.5} parent=23 // pred_check
        %p173 = pneg %p44
      $region26: #{basic_block_forward_nhwc.5} parent=23 // pred_check_branch
        %175 = sbr.rel (%p173) target = $region28
      $region27: #{basic_block_forward_nhwc.5} parent=23 // pred_region
        %p176 = scmp.lt.s32.totalorder %s17, 1
        %s177 = scalar_select %p176, %s17, 1
        %p178 = scmp.lt.s32.totalorder %s18, 1
        %s179 = scalar_select %p178, %s18, 1
        %s180 = smul.addr %s177, 2
        %s181 = sadd.s32 %s179, %s180
        %s182 = smul.addr %s181, 4
        %s183 = scalar_lea.vmem %s0, %s182
      $region28: #{basic_block_forward_nhwc.5} parent=23 // pred_fallthru
        _
      // Predicated region
      $region29: #{basic_block_forward_nhwc.5} parent=23 // pred_check
        %p184 = pneg %p72
      $region30: #{basic_block_forward_nhwc.5} parent=23 // pred_check_branch
        %186 = sbr.rel (%p184) target = $region32
      $region31: #{basic_block_forward_nhwc.5} parent=23 // pred_region
        %p187 = scmp.lt.s32.totalorder %s17, 1
        %s188 = scalar_select %p187, %s17, 1
        %p189 = scmp.lt.s32.totalorder %s18, 1
        %s190 = scalar_select %p189, %s18, 1
        %s191 = smul.addr %s188, 2
        %s192 = sadd.s32 %s190, %s191
        %s193 = smul.addr %s192, 8
        %s194 = scalar_lea.vmem %s1, %s193
      $region32: #{basic_block_forward_nhwc.5} parent=23 // pred_fallthru
        _
    $region24: #{basic_block_forward_nhwc.5} parent=5 // pred_fallthru
      _
    %p195 = scmp.le.s32.totalorder 1, %s10
    %p196 = scmp.lt.s32.totalorder %s10, 5
    %p197 = pnand %p195, %p196
    %p198 = pneg %p197
    // Predicated region
    $region33: #{basic_block_forward_nhwc.5} parent=5 // pred_check
      _
    $region34: #{basic_block_forward_nhwc.5} parent=5 // pred_check_branch
      %200 = sbr.rel (%p197) target = $region36
    $region35: #{basic_block_forward_nhwc.5} parent=5 // pred_region
      %s201 = ssub.s32 %s10, 1
      %p202 = scmp.lt.s32.totalorder %s19, 1
      %s203 = scalar_select %p202, %s19, 1
      %p204 = scmp.lt.s32.totalorder %s20, 1
      %s205 = scalar_select %p204, %s20, 1
      %s206 = smul.addr %s203, 2
      %s207 = sadd.s32 %s205, %s206
      %s208 = smul.addr %s207, 4
      %s209 = scalar_lea.vmem %s0, %s208
      %p210 = pneg %p50
      %p211 = pneg %p47
      %p212 = scmp.lt.s32.totalorder %s19, 1
      %s213 = scalar_select %p212, %s19, 1
      %p214 = scmp.lt.s32.totalorder %s20, 1
      %s215 = scalar_select %p214, %s20, 1
      %s216 = smul.addr %s213, 2
      %s217 = sadd.s32 %s215, %s216
      %s218 = smul.addr %s217, 8
      %s219 = scalar_lea.vmem %s1, %s218
      %p220 = pneg %p78
      %p221 = pneg %p75
      %p222 = pneg %p99
      %p223 = pneg %p96
      %p224 = pneg %p120
      %p225 = pneg %p117
      %p226 = pneg %p148
      %p227 = pneg %p145
      %p228 = scmp.lt.s32.totalorder %s19, 1
      %s229 = scalar_select %p228, %s19, 1
      %p230 = scmp.lt.s32.totalorder %s20, 1
      %s231 = scalar_select %p230, %s20, 1
      %s232 = smul.addr %s229, 2
      %s233 = sadd.s32 %s231, %s232
      %s234 = smul.addr %s233, 8
      %s235 = scalar_lea.vmem %s4, %s234
      %p236 = scmp.lt.s32.totalorder %s19, 1
      %s237 = scalar_select %p236, %s19, 1
      %p238 = scmp.lt.s32.totalorder %s20, 1
      %s239 = scalar_select %p238, %s20, 1
      %s240 = smul.addr %s237, 2
      %s241 = sadd.s32 %s239, %s240
      %s242 = smul.addr %s241, 4
      %s243 = scalar_lea.vmem %s0, %s242
      %p244 = scmp.lt.s32.totalorder %s19, 1
      %s245 = scalar_select %p244, %s19, 1
      %p246 = scmp.lt.s32.totalorder %s20, 1
      %s247 = scalar_select %p246, %s20, 1
      %s248 = smul.addr %s245, 2
      %s249 = sadd.s32 %s247, %s248
      %s250 = smul.addr %s249, 8
      %s251 = scalar_lea.vmem %s1, %s250
      %p252 = scmp.lt.s32.totalorder %s19, 1
      %s253 = scalar_select %p252, %s19, 1
      %p254 = scmp.lt.s32.totalorder %s20, 1
      %s255 = scalar_select %p254, %s20, 1
      %s256 = smul.addr %s253, 2
      %s257 = sadd.s32 %s255, %s256
      %s258 = smul.addr %s257, 8
      %s259 = scalar_lea.vmem %s4, %s258
      %v260 = vld [vmem:[%s243] sm:$0xf]
      %v261 = vunpack.c.l.bf16 %v260
      %v262 = vld [vmem:[%s2] sm:$0x1]
      %v264 = vlaneseq
      %v265 = vshrl.u32 %v264, 7
      %v266 = vsub.s32 0, %v265
      %v267 = vrot.slane %v262, %v266
      %v269 = vmul.f32 %v261, %v267
      %v270 = vld [vmem:[%s3] sm:$0x1]
      %v272 = vlaneseq
      %v273 = vshrl.u32 %v272, 7
      %v274 = vsub.s32 0, %v273
      %v275 = vrot.slane %v270, %v274
      %v277 = vadd.f32 %v269, %v275
      %v278 = vld [vmem:[%s251] sm:$0xff]
      %v279 = vadd.f32 %v277, %v278
      %v280 = vmax.f32 %v279, 0.0
      %281 = vst [vmem:[%s259] sm:$0xff] %v280
      %p282 = scmp.lt.s32.totalorder %s19, 1
      %s283 = scalar_select %p282, %s19, 1
      %p284 = scmp.lt.s32.totalorder %s20, 1
      %s285 = scalar_select %p284, %s20, 1
      %s286 = smul.addr %s283, 2
      %s287 = sadd.s32 %s285, %s286
      %s288 = smul.addr %s287, 8
      %s289 = scalar_lea.vmem %s4, %s288
      // Predicated region
      $region37: #{basic_block_forward_nhwc.5} parent=35 // pred_check
        %p290 = pneg %p145
      $region38: #{basic_block_forward_nhwc.5} parent=35 // pred_check_branch
        %292 = sbr.rel (%p290) target = $region40
      $region39: #{basic_block_forward_nhwc.5} parent=35 // pred_region
        _
      $region40: #{basic_block_forward_nhwc.5} parent=35 // pred_fallthru
        _
    $region36: #{basic_block_forward_nhwc.5} parent=5 // pred_fallthru
      _
    %p293 = scmp.le.s32.totalorder 2, %s10
    // Predicated region
    $region41: #{basic_block_forward_nhwc.5} parent=5 // pred_check
      %p294 = pneg %p293
    $region42: #{basic_block_forward_nhwc.5} parent=5 // pred_check_branch
      %296 = sbr.rel (%p294) target = $region44
    $region43: #{basic_block_forward_nhwc.5} parent=5 // pred_region
      %s297 = ssub.s32 %s10, 2
      // Predicated region
      $region45: #{basic_block_forward_nhwc.5} parent=43 // pred_check
        %p298 = pneg %p151
      $region46: #{basic_block_forward_nhwc.5} parent=43 // pred_check_branch
        %300 = sbr.rel (%p298) target = $region48
      $region47: #{basic_block_forward_nhwc.5} parent=43 // pred_region
        %p301 = scmp.lt.s32.totalorder %s21, 1
        %s302 = scalar_select %p301, %s21, 1
        %p303 = scmp.lt.s32.totalorder %s22, 1
        %s304 = scalar_select %p303, %s22, 1
        %s305 = smul.addr %s302, 2
        %s306 = sadd.s32 %s304, %s305
        %s307 = smul.addr %s306, 8
        %s308 = scalar_lea.vmem %s4, %s307
      $region48: #{basic_block_forward_nhwc.5} parent=43 // pred_fallthru
        _
    $region44: #{basic_block_forward_nhwc.5} parent=5 // pred_fallthru
      _
  $region6: #{basic_block_forward_nhwc.5} parent=0 // loop_footer
    %s14 = sadd.s32 1, %s10
  $region7: #{basic_block_forward_nhwc.5} parent=0 // loop_footer_branch
    %9 = sbr.rel target = $region3
  $region8: #{basic_block_forward_nhwc.5} parent=0 // loop_exit
    _

// kernel: basic_block_forward_nhwc.3
$region0: #{basic_block_forward_nhwc.3}
  #allocation0 [shape = 'u32[]', space=smem, size = 0x4, offset = 0x4, fixed_abs, tag = 'smem constant byte address 0x4 - core index']
  #allocation1 [shape = 'u32[144,128]{1,0:T(1,128)}', space=vmem, size = 0x12000, scoped, tag = 'internal scratch']
  #allocation2 [shape = 'bf16[1,18,18,8]{3,2,1,0:T(8,128)(2,1)}', space=vmem, size = 0x1b000, scoped, tag = 'scratch operand']
  %s0 = inlined_call_operand.vmem [shape: f32[2,16,16,8], index: 0, kind: input, shape index: {}]
  %s1 = inlined_call_operand.vmem [shape: bf16[9,8,8], index: 1, kind: input, shape index: {}]
  %s2 = inlined_call_operand.vmem [shape: bf16[2,16,16,8], index: 2, kind: output, shape index: {0}]
  %s3 = inlined_call_operand.vmem [shape: f32[2,2,8], index: 3, kind: output, shape index: {1}]
  %4 = xla_tuple %s2, %s3
  %s5 = sld [smem:[#allocation0]]
  $region49: #{basic_block_forward_nhwc.3} parent=0
    _
  %s7 = ssub.s32 1, %s5
  %s8 = scalar_select 0, %s7, %s5
  loop: start=0, step=1, limit=4
  $region2: #{basic_block_forward_nhwc.3} parent=0 // loop_pre_header
    _
  $region3: #{basic_block_forward_nhwc.3} parent=0 // loop_header
    %s10 = sphi 0, %s14
    %p11 = scmp.ge.s32.totalorder %s10, 4
    %s20 = sphi 0, %s22
    %s23 = sphi 0, %s20
    %s24 = sphi 0, %s23
    %s40 = sphi 0, %s24
    %s44 = sphi 0, %s44
    %s46 = sphi 0, %s44
    %s47 = sphi 0, %s46
    %s61 = sphi 0, %s47
    %s67 = sphi 0, %s69
    %s70 = sphi 0, %s67
    %s71 = sphi 0, %s70
    %s87 = sphi 0, %s71
    %s93 = sphi 0, %s95
    %s96 = sphi 0, %s93
    %s97 = sphi 0, %s96
    %s113 = sphi 0, %s97
  $region4: #{basic_block_forward_nhwc.3} parent=0 // loop_header_branch
    %13 = sbr.rel (%p11) target = $region8
  $region5: #{basic_block_forward_nhwc.3} parent=0 // loop_body
    %s15 = ssub.s32 %s10, 1
    %s16 = ssub.s32 %s10, 2
    %s17 = sadd.s32 %s10, 1
    %s18 = ssub.s32 %s10, %s17
    %p19 = scmp.eq.s32.totalorder %s18, 0
    %s21 = sadd.s32 %s20, 1
    %s22 = scalar_select %p19, %s20, %s21
    %p25 = pneg %p19
    %p26 = scmp.eq.s32.totalorder %s10, 1
    %p27 = por %p25, %p26
    %p28 = scmp.ne.s32.totalorder %s20, %s23
    %p29 = scmp.eq.s32.totalorder %s10, 0
    %p30 = por %p28, %p29
    %p31 = scmp.ne.s32.totalorder %s20, %s23
    %p32 = scmp.eq.s32.totalorder %s15, 1
    %p33 = por %p31, %p32
    %p34 = scmp.ne.s32.totalorder %s23, %s24
    %p35 = scmp.eq.s32.totalorder %s15, 0
    %p36 = por %p34, %p35
    %p37 = scmp.ne.s32.totalorder %s23, %s24
    %p38 = scmp.eq.s32.totalorder %s16, 1
    %p39 = por %p37, %p38
    %p41 = scmp.ne.s32.totalorder %s24, %s40
    %p42 = scmp.eq.s32.totalorder %s16, 0
    %p43 = por %p41, %p42
    %s45 = sadd.s32 %s44, 1
    %p48 = scmp.eq.s32.totalorder %s10, 1
    %p49 = scmp.ne.s32.totalorder %s44, %s46
    %p50 = scmp.eq.s32.totalorder %s10, 0
    %p51 = por %p49, %p50
    %p52 = scmp.ne.s32.totalorder %s44, %s46
    %p53 = scmp.eq.s32.totalorder %s15, 1
    %p54 = por %p52, %p53
    %p55 = scmp.ne.s32.totalorder %s46, %s47
    %p56 = scmp.eq.s32.totalorder %s15, 0
    %p57 = por %p55, %p56
    %p58 = scmp.ne.s32.totalorder %s46, %s47
    %p59 = scmp.eq.s32.totalorder %s16, 1
    %p60 = por %p58, %p59
    %p62 = scmp.ne.s32.totalorder %s47, %s61
    %p63 = scmp.eq.s32.totalorder %s16, 0
    %p64 = por %p62, %p63
    %s65 = ssub.s32 %s10, %s17
    %p66 = scmp.eq.s32.totalorder %s65, 0
    %s68 = sadd.s32 %s67, 1
    %s69 = scalar_select %p66, %s67, %s68
    %p72 = pneg %p66
    %p73 = scmp.eq.s32.totalorder %s10, 1
    %p74 = por %p72, %p73
    %p75 = scmp.ne.s32.totalorder %s67, %s70
    %p76 = scmp.eq.s32.totalorder %s10, 0
    %p77 = por %p75, %p76
    %p78 = scmp.ne.s32.totalorder %s67, %s70
    %p79 = scmp.eq.s32.totalorder %s15, 1
    %p80 = por %p78, %p79
    %p81 = scmp.ne.s32.totalorder %s70, %s71
    %p82 = scmp.eq.s32.totalorder %s15, 0
    %p83 = por %p81, %p82
    %p84 = scmp.ne.s32.totalorder %s70, %s71
    %p85 = scmp.eq.s32.totalorder %s16, 1
    %p86 = por %p84, %p85
    %p88 = scmp.ne.s32.totalorder %s71, %s87
    %p89 = scmp.eq.s32.totalorder %s16, 0
    %p90 = por %p88, %p89
    %s91 = ssub.s32 %s10, %s17
    %p92 = scmp.eq.s32.totalorder %s91, 0
    %s94 = sadd.s32 %s93, 1
    %s95 = scalar_select %p92, %s93, %s94
    %p98 = pneg %p92
    %p99 = scmp.eq.s32.totalorder %s10, 1
    %p100 = por %p98, %p99
    %p101 = scmp.ne.s32.totalorder %s93, %s96
    %p102 = scmp.eq.s32.totalorder %s10, 0
    %p103 = por %p101, %p102
    %p104 = scmp.ne.s32.totalorder %s93, %s96
    %p105 = scmp.eq.s32.totalorder %s15, 1
    %p106 = por %p104, %p105
    %p107 = scmp.ne.s32.totalorder %s96, %s97
    %p108 = scmp.eq.s32.totalorder %s15, 0
    %p109 = por %p107, %p108
    %p110 = scmp.ne.s32.totalorder %s96, %s97
    %p111 = scmp.eq.s32.totalorder %s16, 1
    %p112 = por %p110, %p111
    %p114 = scmp.ne.s32.totalorder %s97, %s113
    %p115 = scmp.eq.s32.totalorder %s16, 0
    %p116 = por %p114, %p115
    %p117 = scmp.le.s32.totalorder 1, %s10
    %p118 = scmp.lt.s32.totalorder %s10, 3
    %p119 = pnand %p117, %p118
    %p120 = pneg %p119
    // Predicated region
    $region9: #{basic_block_forward_nhwc.3} parent=5 // pred_check
      _
    $region10: #{basic_block_forward_nhwc.3} parent=5 // pred_check_branch
      %122 = sbr.rel (%p119) target = $region12
    $region11: #{basic_block_forward_nhwc.3} parent=5 // pred_region
      %s123 = ssub.s32 %s10, 1
      // Predicated region
      $region13: #{basic_block_forward_nhwc.3} parent=11 // pred_check
        %p124 = pneg %p57
      $region14: #{basic_block_forward_nhwc.3} parent=11 // pred_check_branch
        %126 = sbr.rel (%p124) target = $region16
      $region15: #{basic_block_forward_nhwc.3} parent=11 // pred_region
        _
      $region16: #{basic_block_forward_nhwc.3} parent=11 // pred_fallthru
        _
    $region12: #{basic_block_forward_nhwc.3} parent=5 // pred_fallthru
      _
    %p127 = scmp.lt.s32.totalorder %s10, 2
    // Predicated region
    $region17: #{basic_block_forward_nhwc.3} parent=5 // pred_check
      %p128 = pneg %p127
    $region18: #{basic_block_forward_nhwc.3} parent=5 // pred_check_branch
      %130 = sbr.rel (%p128) target = $region20
    $region19: #{basic_block_forward_nhwc.3} parent=5 // pred_region
      // Predicated region
      $region21: #{basic_block_forward_nhwc.3} parent=19 // pred_check
        %p131 = pneg %p30
      $region22: #{basic_block_forward_nhwc.3} parent=19 // pred_check_branch
        %133 = sbr.rel (%p131) target = $region24
      $region23: #{basic_block_forward_nhwc.3} parent=19 // pred_region
        %p134 = scmp.lt.s32.totalorder %s10, 1
        %s135 = scalar_select %p134, %s10, 1
        %s136 = smul.addr %s135, 32
        %s137 = smul.addr %s136, 8
        %s138 = scalar_lea.vmem %s0, %s137
      $region24: #{basic_block_forward_nhwc.3} parent=19 // pred_fallthru
        _
    $region20: #{basic_block_forward_nhwc.3} parent=5 // pred_fallthru
      _
    %p139 = scmp.le.s32.totalorder 1, %s10
    %p140 = scmp.lt.s32.totalorder %s10, 3
    %p141 = pnand %p139, %p140
    %p142 = pneg %p141
    // Predicated region
    $region25: #{basic_block_forward_nhwc.3} parent=5 // pred_check
      _
    $region26: #{basic_block_forward_nhwc.3} parent=5 // pred_check_branch
      %144 = sbr.rel (%p141) target = $region28
    $region27: #{basic_block_forward_nhwc.3} parent=5 // pred_region
      %s145 = ssub.s32 %s10, 1
      %p146 = scmp.lt.s32.totalorder %s15, 1
      %s147 = scalar_select %p146, %s15, 1
      %s148 = smul.addr %s147, 32
      %s149 = smul.addr %s148, 8
      %s150 = scalar_lea.vmem %s0, %s149
      %p151 = pneg %p36
      %p152 = pneg %p33
      %p153 = pneg %p57
      %p154 = pneg %p54
      %p155 = pneg %p83
      %p156 = pneg %p80
      %p157 = scmp.lt.s32.totalorder %s15, 1
      %s158 = scalar_select %p157, %s15, 1
      %s159 = smul.addr %s158, 32
      %s160 = smul.addr %s159, 4
      %s161 = scalar_lea.vmem %s2, %s160
      %p162 = pneg %p109
      %p163 = pneg %p106
      %p164 = scmp.lt.s32.totalorder %s15, 1
      %s165 = scalar_select %p164, %s15, 1
      %s166 = smul.addr %s165, 2
      %s167 = scalar_lea.vmem %s3, %s166
      %p168 = scmp.lt.s32.totalorder %s15, 1
      %s169 = scalar_select %p168, %s15, 1
      %s170 = smul.addr %s169, 32
      %s171 = smul.addr %s170, 8
      %s172 = scalar_lea.vmem %s0, %s171
      %p173 = scmp.lt.s32.totalorder %s15, 1
      %s174 = scalar_select %p173, %s15, 1
      %s175 = smul.addr %s174, 32
      %s176 = smul.addr %s175, 4
      %s177 = scalar_lea.vmem %s2, %s176
      %p178 = scmp.lt.s32.totalorder %s15, 1
      %s179 = scalar_select %p178, %s15, 1
      %s180 = smul.addr %s179, 2
      %s181 = scalar_lea.vmem %s3, %s180
      %vm183 = vcmask 60416
      %184 = vst.msk [vmem:[#allocation2] sm:$0xf] %vm183, 0
      %185 = vst.msk [vmem:[#allocation2 + $0x4] sm:$0xf] %vm183, 0
      %vm186 = vcmask 57344
      %187 = vst.msk [vmem:[#allocation2 + $0x8] sm:$0x1] %vm186, 0
      %s188 = scalar_lea.vmem [#allocation2], 204
      %189 = vst.msk [vmem:[%s188] sm:$0xf] %vm183, 0
      %190 = vst.msk [vmem:[%s188 + $0x4] sm:$0xf] %vm183, 0
      %191 = vst.msk [vmem:[%s188 + $0x8] sm:$0x1] %vm186, 0
      %vm192 = vcmask 57344
      %vm193 = vsmask.f32 256
      %vm194 = vmand %vm192, %vm193
      %v195 = vld [vmem:[#allocation2] sm:$0x1]
      %v196 = vsel %vm194, 0, %v195
      %197 = vst [vmem:[#allocation2] sm:$0x1] %v196
      %v198 = vld [vmem:[#allocation2 + $0xc] sm:$0x1]
      %v199 = vsel %vm194, 0, %v198
      %200 = vst [vmem:[#allocation2 + $0xc] sm:$0x1] %v199
      %v201 = vld [vmem:[#allocation2 + $0x18] sm:$0x1]
      %v202 = vsel %vm194, 0, %v201
      %203 = vst [vmem:[#allocation2 + $0x18] sm:$0x1] %v202
      %v204 = vld [vmem:[#allocation2 + $0x24] sm:$0x1]
      %v205 = vsel %vm194, 0, %v204
      %206 = vst [vmem:[#allocation2 + $0x24] sm:$0x1] %v205
      %v207 = vld [vmem:[#allocation2 + $0x30] sm:$0x1]
      %v208 = vsel %vm194, 0, %v207
      %209 = vst [vmem:[#allocation2 + $0x30] sm:$0x1] %v208
      %v210 = vld [vmem:[#allocation2 + $0x3c] sm:$0x1]
      %v211 = vsel %vm194, 0, %v210
      %212 = vst [vmem:[#allocation2 + $0x3c] sm:$0x1] %v211
      %v213 = vld [vmem:[#allocation2 + $0x48] sm:$0x1]
      %v214 = vsel %vm194, 0, %v213
      %215 = vst [vmem:[#allocation2 + $0x48] sm:$0x1] %v214
      %v216 = vld [vmem:[#allocation2 + $0x54] sm:$0x1]
      %v217 = vsel %vm194, 0, %v216
      %218 = vst [vmem:[#allocation2 + $0x54] sm:$0x1] %v217
      %v219 = vld [vmem:[#allocation2 + $0x60] sm:$0x1]
      %v220 = vsel %vm194, 0, %v219
      %221 = vst [vmem:[#allocation2 + $0x60] sm:$0x1] %v220
      %v222 = vld [vmem:[#allocation2 + $0x6c] sm:$0x1]
      %v223 = vsel %vm194, 0, %v222
      %224 = vst [vmem:[#allocation2 + $0x6c] sm:$0x1] %v223
      %v225 = vld [vmem:[#allocation2 + $0x78] sm:$0x1]
      %v226 = vsel %vm194, 0, %v225
      %227 = vst [vmem:[#allocation2 + $0x78] sm:$0x1] %v226
      %v228 = vld [vmem:[#allocation2 + $0x84] sm:$0x1]
      %v229 = vsel %vm194, 0, %v228
      %230 = vst [vmem:[#allocation2 + $0x84] sm:$0x1] %v229
      %v231 = vld [vmem:[#allocation2 + $0x90] sm:$0x1]
      %v232 = vsel %vm194, 0, %v231
      %233 = vst [vmem:[#allocation2 + $0x90] sm:$0x1] %v232
      %v234 = vld [vmem:[#allocation2 + $0x9c] sm:$0x1]
      %v235 = vsel %vm194, 0, %v234
      %236 = vst [vmem:[#allocation2 + $0x9c] sm:$0x1] %v235
      %v237 = vld [vmem:[#allocation2 + $0xa8] sm:$0x1]
      %v238 = vsel %vm194, 0, %v237
      %239 = vst [vmem:[#allocation2 + $0xa8] sm:$0x1] %v238
      %v240 = vld [vmem:[#allocation2 + $0xb4] sm:$0x1]
      %v241 = vsel %vm194, 0, %v240
      %242 = vst [vmem:[#allocation2 + $0xb4] sm:$0x1] %v241
      %v243 = vld [vmem:[#allocation2 + $0xc0] sm:$0x1]
      %v244 = vsel %vm194, 0, %v243
      %245 = vst [vmem:[#allocation2 + $0xc0] sm:$0x1] %v244
      %v246 = vld [vmem:[#allocation2 + $0xcc] sm:$0x1]
      %v247 = vsel %vm194, 0, %v246
      %248 = vst [vmem:[#allocation2 + $0xcc] sm:$0x1] %v247
      %vm249 = vsmask.f32 7938
      %vm250 = vmand %vm192, %vm249
      %v251 = vld [vmem:[#allocation2 + $0x8] sm:$0x1]
      %v252 = vsel %vm250, 0, %v251
      %253 = vst [vmem:[#allocation2 + $0x8] sm:$0x1] %v252
      %v254 = vld [vmem:[#allocation2 + $0x14] sm:$0x1]
      %v255 = vsel %vm250, 0, %v254
      %256 = vst [vmem:[#allocation2 + $0x14] sm:$0x1] %v255
      %v257 = vld [vmem:[#allocation2 + $0x20] sm:$0x1]
      %v258 = vsel %vm250, 0, %v257
      %259 = vst [vmem:[#allocation2 + $0x20] sm:$0x1] %v258
      %v260 = vld [vmem:[#allocation2 + $0x2c] sm:$0x1]
      %v261 = vsel %vm250, 0, %v260
      %262 = vst [vmem:[#allocation2 + $0x2c] sm:$0x1] %v261
      %v263 = vld [vmem:[#allocation2 + $0x38] sm:$0x1]
      %v264 = vsel %vm250, 0, %v263
      %265 = vst [vmem:[#allocation2 + $0x38] sm:$0x1] %v264
      %v266 = vld [vmem:[#allocation2 + $0x44] sm:$0x1]
      %v267 = vsel %vm250, 0, %v266
      %268 = vst [vmem:[#allocation2 + $0x44] sm:$0x1] %v267
      %v269 = vld [vmem:[#allocation2 + $0x50] sm:$0x1]
      %v270 = vsel %vm250, 0, %v269
      %271 = vst [vmem:[#allocation2 + $0x50] sm:$0x1] %v270
      %v272 = vld [vmem:[#allocation2 + $0x5c] sm:$0x1]
      %v273 = vsel %vm250, 0, %v272
      %274 = vst [vmem:[#allocation2 + $0x5c] sm:$0x1] %v273
      %v275 = vld [vmem:[#allocation2 + $0x68] sm:$0x1]
      %v276 = vsel %vm250, 0, %v275
      %277 = vst [vmem:[#allocation2 + $0x68] sm:$0x1] %v276
      %v278 = vld [vmem:[#allocation2 + $0x74] sm:$0x1]
      %v279 = vsel %vm250, 0, %v278
      %280 = vst [vmem:[#allocation2 + $0x74] sm:$0x1] %v279
      %v281 = vld [vmem:[#allocation2 + $0x80] sm:$0x1]
      %v282 = vsel %vm250, 0, %v281
      %283 = vst [vmem:[#allocation2 + $0x80] sm:$0x1] %v282
      %v284 = vld [vmem:[#allocation2 + $0x8c] sm:$0x1]
      %v285 = vsel %vm250, 0, %v284
      %286 = vst [vmem:[#allocation2 + $0x8c] sm:$0x1] %v285
      %v287 = vld [vmem:[#allocation2 + $0x98] sm:$0x1]
      %v288 = vsel %vm250, 0, %v287
      %289 = vst [vmem:[#allocation2 + $0x98] sm:$0x1] %v288
      %v290 = vld [vmem:[#allocation2 + $0xa4] sm:$0x1]
      %v291 = vsel %vm250, 0, %v290
      %292 = vst [vmem:[#allocation2 + $0xa4] sm:$0x1] %v291
      %v293 = vld [vmem:[#allocation2 + $0xb0] sm:$0x1]
      %v294 = vsel %vm250, 0, %v293
      %295 = vst [vmem:[#allocation2 + $0xb0] sm:$0x1] %v294
      %v296 = vld [vmem:[#allocation2 + $0xbc] sm:$0x1]
      %v297 = vsel %vm250, 0, %v296
      %298 = vst [vmem:[#allocation2 + $0xbc] sm:$0x1] %v297
      %v299 = vld [vmem:[#allocation2 + $0xc8] sm:$0x1]
      %v300 = vsel %vm250, 0, %v299
      %301 = vst [vmem:[#allocation2 + $0xc8] sm:$0x1] %v300
      %v302 = vld [vmem:[#allocation2 + $0xd4] sm:$0x1]
      %v303 = vsel %vm250, 0, %v302
      %304 = vst [vmem:[#allocation2 + $0xd4] sm:$0x1] %v303
      %v305 = vld [vmem:[%s172] sm:$0xff]
      %v306 = vld [vmem:[%s172 + $0x8] sm:$0xff]
      %v307 = vld [vmem:[%s172 + $0x10] sm:$0xff]
      %v308 = vld [vmem:[%s172 + $0x18] sm:$0xff]
      %v309 = vld [vmem:[%s172 + $0x20] sm:$0xff]
      %v310 = vld [vmem:[%s172 + $0x28] sm:$0xff]
      %v311 = vld [vmem:[%s172 + $0x30] sm:$0xff]
      %v312 = vld [vmem:[%s172 + $0x38] sm:$0xff]
      %v313 = vld [vmem:[%s172 + $0x40] sm:$0xff]
      %v314 = vld [vmem:[%s172 + $0x48] sm:$0xff]
      %v315 = vld [vmem:[%s172 + $0x50] sm:$0xff]
      %v316 = vld [vmem:[%s172 + $0x58] sm:$0xff]
      %v317 = vld [vmem:[%s172 + $0x60] sm:$0xff]
      %v318 = vld [vmem:[%s172 + $0x68] sm:$0xff]
      %v319 = vld [vmem:[%s172 + $0x70] sm:$0xff]
      %v320 = vld [vmem:[%s172 + $0x78] sm:$0xff]
      %v321 = vld [vmem:[%s172 + $0x80] sm:$0xff]
      %v322 = vld [vmem:[%s172 + $0x88] sm:$0xff]
      %v323 = vld [vmem:[%s172 + $0x90] sm:$0xff]
      %v324 = vld [vmem:[%s172 + $0x98] sm:$0xff]
      %v325 = vld [vmem:[%s172 + $0xa0] sm:$0xff]
      %v326 = vld [vmem:[%s172 + $0xa8] sm:$0xff]
      %v327 = vld [vmem:[%s172 + $0xb0] sm:$0xff]
      %v328 = vld [vmem:[%s172 + $0xb8] sm:$0xff]
      %v329 = vld [vmem:[%s172 + $0xc0] sm:$0xff]
      %v330 = vld [vmem:[%s172 + $0xc8] sm:$0xff]
      %v331 = vld [vmem:[%s172 + $0xd0] sm:$0xff]
      %v332 = vld [vmem:[%s172 + $0xd8] sm:$0xff]
      %v333 = vld [vmem:[%s172 + $0xe0] sm:$0xff]
      %v334 = vld [vmem:[%s172 + $0xe8] sm:$0xff]
      %v335 = vld [vmem:[%s172 + $0xf0] sm:$0xff]
      %v336 = vld [vmem:[%s172 + $0xf8] sm:$0xff]
      %v337 = vpack.c.bf16 %v306, %v305
      %v338 = vpack.c.bf16 %v308, %v307
      %v339 = vpack.c.bf16 %v310, %v309
      %v340 = vpack.c.bf16 %v312, %v311
      %v341 = vpack.c.bf16 %v314, %v313
      %v342 = vpack.c.bf16 %v316, %v315
      %v343 = vpack.c.bf16 %v318, %v317
      %v344 = vpack.c.bf16 %v320, %v319
      %v345 = vpack.c.bf16 %v322, %v321
      %v346 = vpack.c.bf16 %v324, %v323
      %v347 = vpack.c.bf16 %v326, %v325
      %v348 = vpack.c.bf16 %v328, %v327
      %v349 = vpack.c.bf16 %v330, %v329
      %v350 = vpack.c.bf16 %v332, %v331
      %v351 = vpack.c.bf16 %v334, %v333
      %v352 = vpack.c.bf16 %v336, %v335
      %v369 = vunpack.c.l.b16 %v337
      %v370 = vunpack.c.h.b16 %v337
      %v371 = vunpack.c.l.b16 %v338
      %v372 = vunpack.c.h.b16 %v338
      %v373 = vunpack.c.l.b16 %v339
      %v374 = vunpack.c.h.b16 %v339
      %v375 = vunpack.c.l.b16 %v340
      %v376 = vunpack.c.h.b16 %v340
      %v377 = vunpack.c.l.b16 %v341
      %v378 = vunpack.c.h.b16 %v341
      %v379 = vunpack.c.l.b16 %v342
      %v380 = vunpack.c.h.b16 %v342
      %v381 = vunpack.c.l.b16 %v343
      %v382 = vunpack.c.h.b16 %v343
      %v383 = vunpack.c.l.b16 %v344
      %v384 = vunpack.c.h.b16 %v344
      %v385 = vunpack.c.l.b16 %v345
      %v386 = vunpack.c.h.b16 %v345
      %v387 = vunpack.c.l.b16 %v346
      %v388 = vunpack.c.h.b16 %v346
      %v389 = vunpack.c.l.b16 %v347
      %v390 = vunpack.c.h.b16 %v347
      %v391 = vunpack.c.l.b16 %v348
      %v392 = vunpack.c.h.b16 %v348
      %v393 = vunpack.c.l.b16 %v349
      %v394 = vunpack.c.h.b16 %v349
      %v395 = vunpack.c.l.b16 %v350
      %v396 = vunpack.c.h.b16 %v350
      %v397 = vunpack.c.l.b16 %v351
      %v398 = vunpack.c.h.b16 %v351
      %v399 = vunpack.c.l.b16 %v352
      %v400 = vunpack.c.h.b16 %v352
      %v401 = vpack.c.b16 %v369, %v369
      %v402 = vpack.c.b16 %v370, %v370
      %v403 = vpack.c.b16 %v371, %v371
      %v404 = vpack.c.b16 %v372, %v372
      %v405 = vpack.c.b16 %v373, %v373
      %v406 = vpack.c.b16 %v374, %v374
      %v407 = vpack.c.b16 %v375, %v375
      %v408 = vpack.c.b16 %v376, %v376
      %v409 = vpack.c.b16 %v377, %v377
      %v410 = vpack.c.b16 %v378, %v378
      %v411 = vpack.c.b16 %v379, %v379
      %v412 = vpack.c.b16 %v380, %v380
      %v413 = vpack.c.b16 %v381, %v381
      %v414 = vpack.c.b16 %v382, %v382
      %v415 = vpack.c.b16 %v383, %v383
      %v416 = vpack.c.b16 %v384, %v384
      %v417 = vpack.c.b16 %v385, %v385
      %v418 = vpack.c.b16 %v386, %v386
      %v419 = vpack.c.b16 %v387, %v387
      %v420 = vpack.c.b16 %v388, %v388
      %v421 = vpack.c.b16 %v389, %v389
      %v422 = vpack.c.b16 %v390, %v390
      %v423 = vpack.c.b16 %v391, %v391
      %v424 = vpack.c.b16 %v392, %v392
      %v425 = vpack.c.b16 %v393, %v393
      %v426 = vpack.c.b16 %v394, %v394
      %v427 = vpack.c.b16 %v395, %v395
      %v428 = vpack.c.b16 %v396, %v396
      %v429 = vpack.c.b16 %v397, %v397
      %v430 = vpack.c.b16 %v398, %v398
      %v431 = vpack.c.b16 %v399, %v399
      %v432 = vpack.c.b16 %v400, %v400
      %vm433 = vsmask.f32 4368
      %vm434 = vmor %vm193, %vm433
      %v436 = vshrl.u32 %v401, 16
      %v438 = vrot.slane %v436, 7
      %v439 = vshll.u32 %v401, 16
      %v441 = vor.u32 %v438, %v439
      %v442 = vrot.slane %v438, 4
      %v444 = vshrl.u32 %v402, 16
      %v446 = vrot.slane %v444, 7
      %v447 = vshll.u32 %v402, 16
      %v449 = vor.u32 %v446, %v447
      %v450 = vsel %vm434, %v442, %v449
      %v451 = vrot.slane %v446, 4
      %v453 = vshrl.u32 %v403, 16
      %v455 = vrot.slane %v453, 7
      %v456 = vshll.u32 %v403, 16
      %v458 = vor.u32 %v455, %v456
      %v459 = vrot.slane %v455, 4
      %v461 = vshrl.u32 %v404, 16
      %v463 = vrot.slane %v461, 7
      %v464 = vshll.u32 %v404, 16
      %v466 = vor.u32 %v463, %v464
      %v467 = vsel %vm434, %v459, %v466
      %v468 = vrot.slane %v463, 4
      %v470 = vshrl.u32 %v405, 16
      %v472 = vrot.slane %v470, 7
      %v473 = vshll.u32 %v405, 16
      %v475 = vor.u32 %v472, %v473
      %v476 = vrot.slane %v472, 4
      %v478 = vshrl.u32 %v406, 16
      %v480 = vrot.slane %v478, 7
      %v481 = vshll.u32 %v406, 16
      %v483 = vor.u32 %v480, %v481
      %v484 = vsel %vm434, %v476, %v483
      %v485 = vrot.slane %v480, 4
      %v487 = vshrl.u32 %v407, 16
      %v489 = vrot.slane %v487, 7
      %v490 = vshll.u32 %v407, 16
      %v492 = vor.u32 %v489, %v490
      %v493 = vrot.slane %v489, 4
      %v495 = vshrl.u32 %v408, 16
      %v497 = vrot.slane %v495, 7
      %v498 = vshll.u32 %v408, 16
      %v500 = vor.u32 %v497, %v498
      %v501 = vsel %vm434, %v493, %v500
      %v502 = vrot.slane %v497, 4
      %v504 = vshrl.u32 %v409, 16
      %v506 = vrot.slane %v504, 7
      %v507 = vshll.u32 %v409, 16
      %v509 = vor.u32 %v506, %v507
      %v510 = vrot.slane %v506, 4
      %v512 = vshrl.u32 %v410, 16
      %v514 = vrot.slane %v512, 7
      %v515 = vshll.u32 %v410, 16
      %v517 = vor.u32 %v514, %v515
      %v518 = vsel %vm434, %v510, %v517
      %v519 = vrot.slane %v514, 4
      %v521 = vshrl.u32 %v411, 16
      %v523 = vrot.slane %v521, 7
      %v524 = vshll.u32 %v411, 16
      %v526 = vor.u32 %v523, %v524
      %v527 = vrot.slane %v523, 4
      %v529 = vshrl.u32 %v412, 16
      %v531 = vrot.slane %v529, 7
      %v532 = vshll.u32 %v412, 16
      %v534 = vor.u32 %v531, %v532
      %v535 = vsel %vm434, %v527, %v534
      %v536 = vrot.slane %v531, 4
      %v538 = vshrl.u32 %v413, 16
      %v540 = vrot.slane %v538, 7
      %v541 = vshll.u32 %v413, 16
      %v543 = vor.u32 %v540, %v541
      %v544 = vrot.slane %v540, 4
      %v546 = vshrl.u32 %v414, 16
      %v548 = vrot.slane %v546, 7
      %v549 = vshll.u32 %v414, 16
      %v551 = vor.u32 %v548, %v549
      %v552 = vsel %vm434, %v544, %v551
      %v553 = vrot.slane %v548, 4
      %v555 = vshrl.u32 %v415, 16
      %v557 = vrot.slane %v555, 7
      %v558 = vshll.u32 %v415, 16
      %v560 = vor.u32 %v557, %v558
      %v561 = vrot.slane %v557, 4
      %v563 = vshrl.u32 %v416, 16
      %v565 = vrot.slane %v563, 7
      %v566 = vshll.u32 %v416, 16
      %v568 = vor.u32 %v565, %v566
      %v569 = vsel %vm434, %v561, %v568
      %v570 = vrot.slane %v565, 4
      %v572 = vshrl.u32 %v417, 16
      %v574 = vrot.slane %v572, 7
      %v575 = vshll.u32 %v417, 16
      %v577 = vor.u32 %v574, %v575
      %v578 = vrot.slane %v574, 4
      %v580 = vshrl.u32 %v418, 16
      %v582 = vrot.slane %v580, 7
      %v583 = vshll.u32 %v418, 16
      %v585 = vor.u32 %v582, %v583
      %v586 = vsel %vm434, %v578, %v585
      %v587 = vrot.slane %v582, 4
      %v589 = vshrl.u32 %v419, 16
      %v591 = vrot.slane %v589, 7
      %v592 = vshll.u32 %v419, 16
      %v594 = vor.u32 %v591, %v592
      %v595 = vrot.slane %v591, 4
      %v597 = vshrl.u32 %v420, 16
      %v599 = vrot.slane %v597, 7
      %v600 = vshll.u32 %v420, 16
      %v602 = vor.u32 %v599, %v600
      %v603 = vsel %vm434, %v595, %v602
      %v604 = vrot.slane %v599, 4
      %v606 = vshrl.u32 %v421, 16
      %v608 = vrot.slane %v606, 7
      %v609 = vshll.u32 %v421, 16
      %v611 = vor.u32 %v608, %v609
      %v612 = vrot.slane %v608, 4
      %v614 = vshrl.u32 %v422, 16
      %v616 = vrot.slane %v614, 7
      %v617 = vshll.u32 %v422, 16
      %v619 = vor.u32 %v616, %v617
      %v620 = vsel %vm434, %v612, %v619
      %v621 = vrot.slane %v616, 4
      %v623 = vshrl.u32 %v423, 16
      %v625 = vrot.slane %v623, 7
      %v626 = vshll.u32 %v423, 16
      %v628 = vor.u32 %v625, %v626
      %v629 = vrot.slane %v625, 4
      %v631 = vshrl.u32 %v424, 16
      %v633 = vrot.slane %v631, 7
      %v634 = vshll.u32 %v424, 16
      %v636 = vor.u32 %v633, %v634
      %v637 = vsel %vm434, %v629, %v636
      %v638 = vrot.slane %v633, 4
      %v640 = vshrl.u32 %v425, 16
      %v642 = vrot.slane %v640, 7
      %v643 = vshll.u32 %v425, 16
      %v645 = vor.u32 %v642, %v643
      %v646 = vrot.slane %v642, 4
      %v648 = vshrl.u32 %v426, 16
      %v650 = vrot.slane %v648, 7
      %v651 = vshll.u32 %v426, 16
      %v653 = vor.u32 %v650, %v651
      %v654 = vsel %vm434, %v646, %v653
      %v655 = vrot.slane %v650, 4
      %v657 = vshrl.u32 %v427, 16
      %v659 = vrot.slane %v657, 7
      %v660 = vshll.u32 %v427, 16
      %v662 = vor.u32 %v659, %v660
      %v663 = vrot.slane %v659, 4
      %v665 = vshrl.u32 %v428, 16
      %v667 = vrot.slane %v665, 7
      %v668 = vshll.u32 %v428, 16
      %v670 = vor.u32 %v667, %v668
      %v671 = vsel %vm434, %v663, %v670
      %v672 = vrot.slane %v667, 4
      %v674 = vshrl.u32 %v429, 16
      %v676 = vrot.slane %v674, 7
      %v677 = vshll.u32 %v429, 16
      %v679 = vor.u32 %v676, %v677
      %v680 = vrot.slane %v676, 4
      %v682 = vshrl.u32 %v430, 16
      %v684 = vrot.slane %v682, 7
      %v685 = vshll.u32 %v430, 16
      %v687 = vor.u32 %v684, %v685
      %v688 = vsel %vm434, %v680, %v687
      %v689 = vrot.slane %v684, 4
      %v691 = vshrl.u32 %v431, 16
      %v693 = vrot.slane %v691, 7
      %v694 = vshll.u32 %v431, 16
      %v696 = vor.u32 %v693, %v694
      %v697 = vrot.slane %v693, 4
      %v699 = vshrl.u32 %v432, 16
      %v701 = vrot.slane %v699, 7
      %v702 = vshll.u32 %v432, 16
      %v704 = vor.u32 %v701, %v702
      %v705 = vsel %vm434, %v697, %v704
      %v706 = vrot.slane %v701, 4
      %s755 = scalar_lea.vmem [#allocation2], 12
      %vm756 = vcmask 60416
      %vm757 = vmand %vm756, %vm249
      %v758 = vld [vmem:[%s755] sm:$0xf]
      %v759 = vsel %vm757, %v441, %v758
      %760 = vst [vmem:[%s755] sm:$0xf] %v759
      %761 = vst.msk [vmem:[%s755 + $0x4] sm:$0xf] %vm183, %v450
      %v762 = vld [vmem:[%s755 + $0x8] sm:$0x1]
      %v763 = vsel %vm194, %v451, %v762
      %764 = vst [vmem:[%s755 + $0x8] sm:$0x1] %v763
      %v765 = vld [vmem:[%s755 + $0xc] sm:$0xf]
      %v766 = vsel %vm757, %v458, %v765
      %767 = vst [vmem:[%s755 + $0xc] sm:$0xf] %v766
      %768 = vst.msk [vmem:[%s755 + $0x10] sm:$0xf] %vm183, %v467
      %v769 = vld [vmem:[%s755 + $0x14] sm:$0x1]
      %v770 = vsel %vm194, %v468, %v769
      %771 = vst [vmem:[%s755 + $0x14] sm:$0x1] %v770
      %v772 = vld [vmem:[%s755 + $0x18] sm:$0xf]
      %v773 = vsel %vm757, %v475, %v772
      %774 = vst [vmem:[%s755 + $0x18] sm:$0xf] %v773
      %775 = vst.msk [vmem:[%s755 + $0x1c] sm:$0xf] %vm183, %v484
      %v776 = vld [vmem:[%s755 + $0x20] sm:$0x1]
      %v777 = vsel %vm194, %v485, %v776
      %778 = vst [vmem:[%s755 + $0x20] sm:$0x1] %v777
      %v779 = vld [vmem:[%s755 + $0x24] sm:$0xf]
      %v780 = vsel %vm757, %v492, %v779
      %781 = vst [vmem:[%s755 + $0x24] sm:$0xf] %v780
      %782 = vst.msk [vmem:[%s755 + $0x28] sm:$0xf] %vm183, %v501
      %v783 = vld [vmem:[%s755 + $0x2c] sm:$0x1]
      %v784 = vsel %vm194, %v502, %v783
      %785 = vst [vmem:[%s755 + $0x2c] sm:$0x1] %v784
      %v786 = vld [vmem:[%s755 + $0x30] sm:$0xf]
      %v787 = vsel %vm757, %v509, %v786
      %788 = vst [vmem:[%s755 + $0x30] sm:$0xf] %v787
      %789 = vst.msk [vmem:[%s755 + $0x34] sm:$0xf] %vm183, %v518
      %v790 = vld [vmem:[%s755 + $0x38] sm:$0x1]
      %v791 = vsel %vm194, %v519, %v790
      %792 = vst [vmem:[%s755 + $0x38] sm:$0x1] %v791
      %v793 = vld [vmem:[%s755 + $0x3c] sm:$0xf]
      %v794 = vsel %vm757, %v526, %v793
      %795 = vst [vmem:[%s755 + $0x3c] sm:$0xf] %v794
      %796 = vst.msk [vmem:[%s755 + $0x40] sm:$0xf] %vm183, %v535
      %v797 = vld [vmem:[%s755 + $0x44] sm:$0x1]
      %v798 = vsel %vm194, %v536, %v797
      %799 = vst [vmem:[%s755 + $0x44] sm:$0x1] %v798
      %v800 = vld [vmem:[%s755 + $0x48] sm:$0xf]
      %v801 = vsel %vm757, %v543, %v800
      %802 = vst [vmem:[%s755 + $0x48] sm:$0xf] %v801
      %803 = vst.msk [vmem:[%s755 + $0x4c] sm:$0xf] %vm183, %v552
      %v804 = vld [vmem:[%s755 + $0x50] sm:$0x1]
      %v805 = vsel %vm194, %v553, %v804
      %806 = vst [vmem:[%s755 + $0x50] sm:$0x1] %v805
      %v807 = vld [vmem:[%s755 + $0x54] sm:$0xf]
      %v808 = vsel %vm757, %v560, %v807
      %809 = vst [vmem:[%s755 + $0x54] sm:$0xf] %v808
      %810 = vst.msk [vmem:[%s755 + $0x58] sm:$0xf] %vm183, %v569
      %v811 = vld [vmem:[%s755 + $0x5c] sm:$0x1]
      %v812 = vsel %vm194, %v570, %v811
      %813 = vst [vmem:[%s755 + $0x5c] sm:$0x1] %v812
      %v814 = vld [vmem:[%s755 + $0x60] sm:$0xf]
      %v815 = vsel %vm757, %v577, %v814
      %816 = vst [vmem:[%s755 + $0x60] sm:$0xf] %v815
      %817 = vst.msk [vmem:[%s755 + $0x64] sm:$0xf] %vm183, %v586
      %v818 = vld [vmem:[%s755 + $0x68] sm:$0x1]
      %v819 = vsel %vm194, %v587, %v818
      %820 = vst [vmem:[%s755 + $0x68] sm:$0x1] %v819
      %v821 = vld [vmem:[%s755 + $0x6c] sm:$0xf]
      %v822 = vsel %vm757, %v594, %v821
      %823 = vst [vmem:[%s755 + $0x6c] sm:$0xf] %v822
      %824 = vst.msk [vmem:[%s755 + $0x70] sm:$0xf] %vm183, %v603
      %v825 = vld [vmem:[%s755 + $0x74] sm:$0x1]
      %v826 = vsel %vm194, %v604, %v825
      %827 = vst [vmem:[%s755 + $0x74] sm:$0x1] %v826
      %v828 = vld [vmem:[%s755 + $0x78] sm:$0xf]
      %v829 = vsel %vm757, %v611, %v828
      %830 = vst [vmem:[%s755 + $0x78] sm:$0xf] %v829
      %831 = vst.msk [vmem:[%s755 + $0x7c] sm:$0xf] %vm183, %v620
      %v832 = vld [vmem:[%s755 + $0x80] sm:$0x1]
      %v833 = vsel %vm194, %v621, %v832
      %834 = vst [vmem:[%s755 + $0x80] sm:$0x1] %v833
      %v835 = vld [vmem:[%s755 + $0x84] sm:$0xf]
      %v836 = vsel %vm757, %v628, %v835
      %837 = vst [vmem:[%s755 + $0x84] sm:$0xf] %v836
      %838 = vst.msk [vmem:[%s755 + $0x88] sm:$0xf] %vm183, %v637
      %v839 = vld [vmem:[%s755 + $0x8c] sm:$0x1]
      %v840 = vsel %vm194, %v638, %v839
      %841 = vst [vmem:[%s755 + $0x8c] sm:$0x1] %v840
      %v842 = vld [vmem:[%s755 + $0x90] sm:$0xf]
      %v843 = vsel %vm757, %v645, %v842
      %844 = vst [vmem:[%s755 + $0x90] sm:$0xf] %v843
      %845 = vst.msk [vmem:[%s755 + $0x94] sm:$0xf] %vm183, %v654
      %v846 = vld [vmem:[%s755 + $0x98] sm:$0x1]
      %v847 = vsel %vm194, %v655, %v846
      %848 = vst [vmem:[%s755 + $0x98] sm:$0x1] %v847
      %v849 = vld [vmem:[%s755 + $0x9c] sm:$0xf]
      %v850 = vsel %vm757, %v662, %v849
      %851 = vst [vmem:[%s755 + $0x9c] sm:$0xf] %v850
      %852 = vst.msk [vmem:[%s755 + $0xa0] sm:$0xf] %vm183, %v671
      %v853 = vld [vmem:[%s755 + $0xa4] sm:$0x1]
      %v854 = vsel %vm194, %v672, %v853
      %855 = vst [vmem:[%s755 + $0xa4] sm:$0x1] %v854
      %v856 = vld [vmem:[%s755 + $0xa8] sm:$0xf]
      %v857 = vsel %vm757, %v679, %v856
      %858 = vst [vmem:[%s755 + $0xa8] sm:$0xf] %v857
      %859 = vst.msk [vmem:[%s755 + $0xac] sm:$0xf] %vm183, %v688
      %v860 = vld [vmem:[%s755 + $0xb0] sm:$0x1]
      %v861 = vsel %vm194, %v689, %v860
      %862 = vst [vmem:[%s755 + $0xb0] sm:$0x1] %v861
      %v863 = vld [vmem:[%s755 + $0xb4] sm:$0xf]
      %v864 = vsel %vm757, %v696, %v863
      %865 = vst [vmem:[%s755 + $0xb4] sm:$0xf] %v864
      %866 = vst.msk [vmem:[%s755 + $0xb8] sm:$0xf] %vm183, %v705
      %v867 = vld [vmem:[%s755 + $0xbc] sm:$0x1]
      %v868 = vsel %vm194, %v706, %v867
      %869 = vst [vmem:[%s755 + $0xbc] sm:$0x1] %v868
      %v870 = vld [vmem:[#allocation2] sm:$0xf]
      %v871 = vld [vmem:[#allocation2 + $0x4] sm:$0xf]
      %v872 = vld [vmem:[#allocation2 + $0xc] sm:$0xf]
      %v873 = vld [vmem:[#allocation2 + $0x10] sm:$0xf]
      %v874 = vld [vmem:[#allocation2 + $0x18] sm:$0xf]
      %v875 = vld [vmem:[#allocation2 + $0x1c] sm:$0xf]
      %v876 = vld [vmem:[#allocation2 + $0x24] sm:$0xf]
      %v877 = vld [vmem:[#allocation2 + $0x28] sm:$0xf]
      %v878 = vld [vmem:[#allocation2 + $0x30] sm:$0xf]
      %v879 = vld [vmem:[#allocation2 + $0x34] sm:$0xf]
      %v880 = vld [vmem:[#allocation2 + $0x3c] sm:$0xf]
      %v881 = vld [vmem:[#allocation2 + $0x40] sm:$0xf]
      %v882 = vld [vmem:[#allocation2 + $0x48] sm:$0xf]
      %v883 = vld [vmem:[#allocation2 + $0x4c] sm:$0xf]
      %v884 = vld [vmem:[#allocation2 + $0x54] sm:$0xf]
      %v885 = vld [vmem:[#allocation2 + $0x58] sm:$0xf]
      %v886 = vld [vmem:[#allocation2 + $0x60] sm:$0xf]
      %v887 = vld [vmem:[#allocation2 + $0x64] sm:$0xf]
      %v888 = vld [vmem:[#allocation2 + $0x6c] sm:$0xf]
      %v889 = vld [vmem:[#allocation2 + $0x70] sm:$0xf]
      %v890 = vld [vmem:[#allocation2 + $0x78] sm:$0xf]
      %v891 = vld [vmem:[#allocation2 + $0x7c] sm:$0xf]
      %v892 = vld [vmem:[#allocation2 + $0x84] sm:$0xf]
      %v893 = vld [vmem:[#allocation2 + $0x88] sm:$0xf]
      %v894 = vld [vmem:[#allocation2 + $0x90] sm:$0xf]
      %v895 = vld [vmem:[#allocation2 + $0x94] sm:$0xf]
      %v896 = vld [vmem:[#allocation2 + $0x9c] sm:$0xf]
      %v897 = vld [vmem:[#allocation2 + $0xa0] sm:$0xf]
      %v898 = vld [vmem:[#allocation2 + $0xa8] sm:$0xf]
      %v899 = vld [vmem:[#allocation2 + $0xac] sm:$0xf]
      %v900 = vld [vmem:[#allocation2 + $0xb4] sm:$0xf]
      %v901 = vld [vmem:[#allocation2 + $0xb8] sm:$0xf]
      %v902 = vld [vmem:[%s1] sm:$0xf]
      %v903 = vld [vmem:[#allocation2 + $0x8] sm:$0x1]
      %v904 = vld [vmem:[#allocation2 + $0x14] sm:$0x1]
      %v905 = vld [vmem:[#allocation2 + $0x20] sm:$0x1]
      %v906 = vld [vmem:[#allocation2 + $0x2c] sm:$0x1]
      %v907 = vld [vmem:[#allocation2 + $0x38] sm:$0x1]
      %v908 = vld [vmem:[#allocation2 + $0x44] sm:$0x1]
      %v909 = vld [vmem:[#allocation2 + $0x50] sm:$0x1]
      %v910 = vld [vmem:[#allocation2 + $0x5c] sm:$0x1]
      %v911 = vld [vmem:[#allocation2 + $0x68] sm:$0x1]
      %v912 = vld [vmem:[#allocation2 + $0x74] sm:$0x1]
      %v913 = vld [vmem:[#allocation2 + $0x80] sm:$0x1]
      %v914 = vld [vmem:[#allocation2 + $0x8c] sm:$0x1]
      %v915 = vld [vmem:[#allocation2 + $0x98] sm:$0x1]
      %v916 = vld [vmem:[#allocation2 + $0xa4] sm:$0x1]
      %v917 = vld [vmem:[#allocation2 + $0xb0] sm:$0x1]
      %v918 = vld [vmem:[#allocation2 + $0xbc] sm:$0x1]
      %vm919 = vsmask.f32 3328
      %vm920 = vsmask.f32 7440
      %vm921 = vmor %vm919, %vm920
      %v923 = vshrl.u32 %v870, 16
      %v925 = vrot.slane %v923, 4
      %v926 = vshll.u32 %v870, 16
      %v928 = vrot.slane %v926, 5
      %v929 = vor.u32 %v925, %v928
      %v930 = vrot.slane %v929, 4
      %v932 = vshll.u32 %v871, 16
      %v934 = vrot.slane %v932, 5
      %v935 = vsel %vm921, %v930, %v934
      %v936 = vshrl.u32 %v871, 16
      %v938 = vrot.slane %v936, 4
      %v939 = vor.u32 %v938, %v934
      %v940 = vrot.slane %v939, 4
      %v942 = vshll.u32 %v903, 16
      %v944 = vrot.slane %v942, 5
      %v945 = vsel %vm921, %v940, %v944
      %v947 = vshrl.u32 %v872, 16
      %v949 = vrot.slane %v947, 4
      %v950 = vshll.u32 %v872, 16
      %v952 = vrot.slane %v950, 5
      %v953 = vor.u32 %v949, %v952
      %v954 = vrot.slane %v953, 4
      %v956 = vshll.u32 %v873, 16
      %v958 = vrot.slane %v956, 5
      %v959 = vsel %vm921, %v954, %v958
      %v960 = vshrl.u32 %v873, 16
      %v962 = vrot.slane %v960, 4
      %v963 = vor.u32 %v962, %v958
      %v964 = vrot.slane %v963, 4
      %v966 = vshll.u32 %v904, 16
      %v968 = vrot.slane %v966, 5
      %v969 = vsel %vm921, %v964, %v968
      %v971 = vshrl.u32 %v874, 16
      %v973 = vrot.slane %v971, 4
      %v974 = vshll.u32 %v874, 16
      %v976 = vrot.slane %v974, 5
      %v977 = vor.u32 %v973, %v976
      %v978 = vrot.slane %v977, 4
      %v980 = vshll.u32 %v875, 16
      %v982 = vrot.slane %v980, 5
      %v983 = vsel %vm921, %v978, %v982
      %v984 = vshrl.u32 %v875, 16
      %v986 = vrot.slane %v984, 4
      %v987 = vor.u32 %v986, %v982
      %v988 = vrot.slane %v987, 4
      %v990 = vshll.u32 %v905, 16
      %v992 = vrot.slane %v990, 5
      %v993 = vsel %vm921, %v988, %v992
      %v995 = vshrl.u32 %v876, 16
      %v997 = vrot.slane %v995, 4
      %v998 = vshll.u32 %v876, 16
      %v1000 = vrot.slane %v998, 5
      %v1001 = vor.u32 %v997, %v1000
      %v1002 = vrot.slane %v1001, 4
      %v1004 = vshll.u32 %v877, 16
      %v1006 = vrot.slane %v1004, 5
      %v1007 = vsel %vm921, %v1002, %v1006
      %v1008 = vshrl.u32 %v877, 16
      %v1010 = vrot.slane %v1008, 4
      %v1011 = vor.u32 %v1010, %v1006
      %v1012 = vrot.slane %v1011, 4
      %v1014 = vshll.u32 %v906, 16
      %v1016 = vrot.slane %v1014, 5
      %v1017 = vsel %vm921, %v1012, %v1016
      %v1019 = vshrl.u32 %v878, 16
      %v1021 = vrot.slane %v1019, 4
      %v1022 = vshll.u32 %v878, 16
      %v1024 = vrot.slane %v1022, 5
      %v1025 = vor.u32 %v1021, %v1024
      %v1026 = vrot.slane %v1025, 4
      %v1028 = vshll.u32 %v879, 16
      %v1030 = vrot.slane %v1028, 5
      %v1031 = vsel %vm921, %v1026, %v1030
      %v1032 = vshrl.u32 %v879, 16
      %v1034 = vrot.slane %v1032, 4
      %v1035 = vor.u32 %v1034, %v1030
      %v1036 = vrot.slane %v1035, 4
      %v1038 = vshll.u32 %v907, 16
      %v1040 = vrot.slane %v1038, 5
      %v1041 = vsel %vm921, %v1036, %v1040
      %v1043 = vshrl.u32 %v880, 16
      %v1045 = vrot.slane %v1043, 4
      %v1046 = vshll.u32 %v880, 16
      %v1048 = vrot.slane %v1046, 5
      %v1049 = vor.u32 %v1045, %v1048
      %v1050 = vrot.slane %v1049, 4
      %v1052 = vshll.u32 %v881, 16
      %v1054 = vrot.slane %v1052, 5
      %v1055 = vsel %vm921, %v1050, %v1054
      %v1056 = vshrl.u32 %v881, 16
      %v1058 = vrot.slane %v1056, 4
      %v1059 = vor.u32 %v1058, %v1054
      %v1060 = vrot.slane %v1059, 4
      %v1062 = vshll.u32 %v908, 16
      %v1064 = vrot.slane %v1062, 5
      %v1065 = vsel %vm921, %v1060, %v1064
      %v1067 = vshrl.u32 %v882, 16
      %v1069 = vrot.slane %v1067, 4
      %v1070 = vshll.u32 %v882, 16
      %v1072 = vrot.slane %v1070, 5
      %v1073 = vor.u32 %v1069, %v1072
      %v1074 = vrot.slane %v1073, 4
      %v1076 = vshll.u32 %v883, 16
      %v1078 = vrot.slane %v1076, 5
      %v1079 = vsel %vm921, %v1074, %v1078
      %v1080 = vshrl.u32 %v883, 16
      %v1082 = vrot.slane %v1080, 4
      %v1083 = vor.u32 %v1082, %v1078
      %v1084 = vrot.slane %v1083, 4
      %v1086 = vshll.u32 %v909, 16
      %v1088 = vrot.slane %v1086, 5
      %v1089 = vsel %vm921, %v1084, %v1088
      %v1091 = vshrl.u32 %v884, 16
      %v1093 = vrot.slane %v1091, 4
      %v1094 = vshll.u32 %v884, 16
      %v1096 = vrot.slane %v1094, 5
      %v1097 = vor.u32 %v1093, %v1096
      %v1098 = vrot.slane %v1097, 4
      %v1100 = vshll.u32 %v885, 16
      %v1102 = vrot.slane %v1100, 5
      %v1103 = vsel %vm921, %v1098, %v1102
      %v1104 = vshrl.u32 %v885, 16
      %v1106 = vrot.slane %v1104, 4
      %v1107 = vor.u32 %v1106, %v1102
      %v1108 = vrot.slane %v1107, 4
      %v1110 = vshll.u32 %v910, 16
      %v1112 = vrot.slane %v1110, 5
      %v1113 = vsel %vm921, %v1108, %v1112
      %v1115 = vshrl.u32 %v886, 16
      %v1117 = vrot.slane %v1115, 4
      %v1118 = vshll.u32 %v886, 16
      %v1120 = vrot.slane %v1118, 5
      %v1121 = vor.u32 %v1117, %v1120
      %v1122 = vrot.slane %v1121, 4
      %v1124 = vshll.u32 %v887, 16
      %v1126 = vrot.slane %v1124, 5
      %v1127 = vsel %vm921, %v1122, %v1126
      %v1128 = vshrl.u32 %v887, 16
      %v1130 = vrot.slane %v1128, 4
      %v1131 = vor.u32 %v1130, %v1126
      %v1132 = vrot.slane %v1131, 4
      %v1134 = vshll.u32 %v911, 16
      %v1136 = vrot.slane %v1134, 5
      %v1137 = vsel %vm921, %v1132, %v1136
      %v1139 = vshrl.u32 %v888, 16
      %v1141 = vrot.slane %v1139, 4
      %v1142 = vshll.u32 %v888, 16
      %v1144 = vrot.slane %v1142, 5
      %v1145 = vor.u32 %v1141, %v1144
      %v1146 = vrot.slane %v1145, 4
      %v1148 = vshll.u32 %v889, 16
      %v1150 = vrot.slane %v1148, 5
      %v1151 = vsel %vm921, %v1146, %v1150
      %v1152 = vshrl.u32 %v889, 16
      %v1154 = vrot.slane %v1152, 4
      %v1155 = vor.u32 %v1154, %v1150
      %v1156 = vrot.slane %v1155, 4
      %v1158 = vshll.u32 %v912, 16
      %v1160 = vrot.slane %v1158, 5
      %v1161 = vsel %vm921, %v1156, %v1160
      %v1163 = vshrl.u32 %v890, 16
      %v1165 = vrot.slane %v1163, 4
      %v1166 = vshll.u32 %v890, 16
      %v1168 = vrot.slane %v1166, 5
      %v1169 = vor.u32 %v1165, %v1168
      %v1170 = vrot.slane %v1169, 4
      %v1172 = vshll.u32 %v891, 16
      %v1174 = vrot.slane %v1172, 5
      %v1175 = vsel %vm921, %v1170, %v1174
      %v1176 = vshrl.u32 %v891, 16
      %v1178 = vrot.slane %v1176, 4
      %v1179 = vor.u32 %v1178, %v1174
      %v1180 = vrot.slane %v1179, 4
      %v1182 = vshll.u32 %v913, 16
      %v1184 = vrot.slane %v1182, 5
      %v1185 = vsel %vm921, %v1180, %v1184
      %v1187 = vshrl.u32 %v892, 16
      %v1189 = vrot.slane %v1187, 4
      %v1190 = vshll.u32 %v892, 16
      %v1192 = vrot.slane %v1190, 5
      %v1193 = vor.u32 %v1189, %v1192
      %v1194 = vrot.slane %v1193, 4
      %v1196 = vshll.u32 %v893, 16
      %v1198 = vrot.slane %v1196, 5
      %v1199 = vsel %vm921, %v1194, %v1198
      %v1200 = vshrl.u32 %v893, 16
      %v1202 = vrot.slane %v1200, 4
      %v1203 = vor.u32 %v1202, %v1198
      %v1204 = vrot.slane %v1203, 4
      %v1206 = vshll.u32 %v914, 16
      %v1208 = vrot.slane %v1206, 5
      %v1209 = vsel %vm921, %v1204, %v1208
      %v1211 = vshrl.u32 %v894, 16
      %v1213 = vrot.slane %v1211, 4
      %v1214 = vshll.u32 %v894, 16
      %v1216 = vrot.slane %v1214, 5
      %v1217 = vor.u32 %v1213, %v1216
      %v1218 = vrot.slane %v1217, 4
      %v1220 = vshll.u32 %v895, 16
      %v1222 = vrot.slane %v1220, 5
      %v1223 = vsel %vm921, %v1218, %v1222
      %v1224 = vshrl.u32 %v895, 16
      %v1226 = vrot.slane %v1224, 4
      %v1227 = vor.u32 %v1226, %v1222
      %v1228 = vrot.slane %v1227, 4
      %v1230 = vshll.u32 %v915, 16
      %v1232 = vrot.slane %v1230, 5
      %v1233 = vsel %vm921, %v1228, %v1232
      %v1235 = vshrl.u32 %v896, 16
      %v1237 = vrot.slane %v1235, 4
      %v1238 = vshll.u32 %v896, 16
      %v1240 = vrot.slane %v1238, 5
      %v1241 = vor.u32 %v1237, %v1240
      %v1242 = vrot.slane %v1241, 4
      %v1244 = vshll.u32 %v897, 16
      %v1246 = vrot.slane %v1244, 5
      %v1247 = vsel %vm921, %v1242, %v1246
      %v1248 = vshrl.u32 %v897, 16
      %v1250 = vrot.slane %v1248, 4
      %v1251 = vor.u32 %v1250, %v1246
      %v1252 = vrot.slane %v1251, 4
      %v1254 = vshll.u32 %v916, 16
      %v1256 = vrot.slane %v1254, 5
      %v1257 = vsel %vm921, %v1252, %v1256
      %v1259 = vshrl.u32 %v898, 16
      %v1261 = vrot.slane %v1259, 4
      %v1262 = vshll.u32 %v898, 16
      %v1264 = vrot.slane %v1262, 5
      %v1265 = vor.u32 %v1261, %v1264
      %v1266 = vrot.slane %v1265, 4
      %v1268 = vshll.u32 %v899, 16
      %v1270 = vrot.slane %v1268, 5
      %v1271 = vsel %vm921, %v1266, %v1270
      %v1272 = vshrl.u32 %v899, 16
      %v1274 = vrot.slane %v1272, 4
      %v1275 = vor.u32 %v1274, %v1270
      %v1276 = vrot.slane %v1275, 4
      %v1278 = vshll.u32 %v917, 16
      %v1280 = vrot.slane %v1278, 5
      %v1281 = vsel %vm921, %v1276, %v1280
      %v1283 = vshrl.u32 %v900, 16
      %v1285 = vrot.slane %v1283, 4
      %v1286 = vshll.u32 %v900, 16
      %v1288 = vrot.slane %v1286, 5
      %v1289 = vor.u32 %v1285, %v1288
      %v1290 = vrot.slane %v1289, 4
      %v1292 = vshll.u32 %v901, 16
      %v1294 = vrot.slane %v1292, 5
      %v1295 = vsel %vm921, %v1290, %v1294
      %v1296 = vshrl.u32 %v901, 16
      %v1298 = vrot.slane %v1296, 4
      %v1299 = vor.u32 %v1298, %v1294
      %v1300 = vrot.slane %v1299, 4
      %v1302 = vshll.u32 %v918, 16
      %v1304 = vrot.slane %v1302, 5
      %v1305 = vsel %vm921, %v1300, %v1304
      %s1306 = scalar_lea.vmem %s1, 4
      %v1307 = vld [vmem:[%s1306] sm:$0xf]
      %v1308 = vunpack.c.l.b16 %v935
      %v1309 = vunpack.c.l.b16 %v945
      %v1310 = vunpack.c.l.b16 %v959
      %v1311 = vunpack.c.l.b16 %v969
      %v1312 = vunpack.c.l.b16 %v983
      %v1313 = vunpack.c.l.b16 %v993
      %v1314 = vunpack.c.l.b16 %v1007
      %v1315 = vunpack.c.l.b16 %v1017
      %v1316 = vunpack.c.l.b16 %v1031
      %v1317 = vunpack.c.l.b16 %v1041
      %v1318 = vunpack.c.l.b16 %v1055
      %v1319 = vunpack.c.l.b16 %v1065
      %v1320 = vunpack.c.l.b16 %v1079
      %v1321 = vunpack.c.l.b16 %v1089
      %v1322 = vunpack.c.l.b16 %v1103
      %v1323 = vunpack.c.l.b16 %v1113
      %v1324 = vunpack.c.l.b16 %v1127
      %v1325 = vunpack.c.l.b16 %v1137
      %v1326 = vunpack.c.l.b16 %v1151
      %v1327 = vunpack.c.l.b16 %v1161
      %v1328 = vunpack.c.l.b16 %v1175
      %v1329 = vunpack.c.l.b16 %v1185
      %v1330 = vunpack.c.l.b16 %v1199
      %v1331 = vunpack.c.l.b16 %v1209
      %v1332 = vunpack.c.l.b16 %v1223
      %v1333 = vunpack.c.l.b16 %v1233
      %v1334 = vunpack.c.l.b16 %v1247
      %v1335 = vunpack.c.l.b16 %v1257
      %v1336 = vunpack.c.l.b16 %v1271
      %v1337 = vunpack.c.l.b16 %v1281
      %v1338 = vunpack.c.l.b16 %v1295
      %v1339 = vunpack.c.l.b16 %v1305
      %v1340 = vpack.c.b16 %v1309, %v1308
      %v1341 = vpack.c.b16 %v1311, %v1310
      %v1342 = vpack.c.b16 %v1313, %v1312
      %v1343 = vpack.c.b16 %v1315, %v1314
      %v1344 = vpack.c.b16 %v1317, %v1316
      %v1345 = vpack.c.b16 %v1319, %v1318
      %v1346 = vpack.c.b16 %v1321, %v1320
      %v1347 = vpack.c.b16 %v1323, %v1322
      %v1348 = vpack.c.b16 %v1325, %v1324
      %v1349 = vpack.c.b16 %v1327, %v1326
      %v1350 = vpack.c.b16 %v1329, %v1328
      %v1351 = vpack.c.b16 %v1331, %v1330
      %v1352 = vpack.c.b16 %v1333, %v1332
      %v1353 = vpack.c.b16 %v1335, %v1334
      %v1354 = vpack.c.b16 %v1337, %v1336
      %v1355 = vpack.c.b16 %v1339, %v1338
      %vm1356 = vcmask 64512
      %v1358 = vsel %vm1356, %v1340, 0
      %v1361 = vsel %vm1356, %v1341, 0
      %v1364 = vsel %vm1356, %v1342, 0
      %v1367 = vsel %vm1356, %v1343, 0
      %v1370 = vsel %vm1356, %v1344, 0
      %v1373 = vsel %vm1356, %v1345, 0
      %v1376 = vsel %vm1356, %v1346, 0
      %v1379 = vsel %vm1356, %v1347, 0
      %v1382 = vsel %vm1356, %v1348, 0
      %v1385 = vsel %vm1356, %v1349, 0
      %v1388 = vsel %vm1356, %v1350, 0
      %v1391 = vsel %vm1356, %v1351, 0
      %v1394 = vsel %vm1356, %v1352, 0
      %v1397 = vsel %vm1356, %v1353, 0
      %v1400 = vsel %vm1356, %v1354, 0
      %v1403 = vsel %vm1356, %v1355, 0
      %vm1405 = vcmask 1043456
      %v1407 = vsel %vm1405, %v1307, 0
      %1409 = vmatprep.subr.bf16.mxu0 0
      %1410 = vmatpush1.bf16.msra.mxu0 0
      %1411 = vmatprep.subr.bf16.mxu0 0
      %1412 = vmatpush1.bf16.msra.mxu0 0
      %1413 = vmatprep.subr.bf16.mxu0 0
      %1414 = vmatpush1.bf16.msra.mxu0 0
      %1415 = vmatprep.subr.bf16.mxu0 0
      %1416 = vmatpush1.bf16.msra.mxu0 0
      %1417 = vmatprep.subr.bf16.mxu0 0
      %1418 = vmatpush1.bf16.msra.mxu0 0
      %1419 = vmatprep.subr.bf16.mxu0 0
      %1420 = vmatpush1.bf16.msra.mxu0 0
      %1421 = vmatprep.subr.bf16.mxu0 0
      %1422 = vmatpush1.bf16.msra.mxu0 0
      %1423 = vmatprep.subr.bf16.mxu0 0
      %1424 = vmatpush1.bf16.msra.mxu0 %v1407
      %1425 = vmatprep.subr.bf16.mxu0 0
      %1426 = vmatpush2.bf16.msra.mxu0 0
      %1427 = vmatprep.subr.bf16.mxu0 0
      %1428 = vmatpush2.bf16.msra.mxu0 0
      %1429 = vmatprep.subr.bf16.mxu0 0
      %1430 = vmatpush2.bf16.msra.mxu0 0
      %1431 = vmatprep.subr.bf16.mxu0 0
      %1432 = vmatpush2.bf16.msra.mxu0 0
      %1433 = vmatprep.subr.bf16.mxu0 0
      %1434 = vmatpush2.bf16.msra.mxu0 0
      %1435 = vmatprep.subr.bf16.mxu0 0
      %1436 = vmatpush2.bf16.msra.mxu0 0
      %1437 = vmatprep.subr.bf16.mxu0 0
      %1438 = vmatpush2.bf16.msra.mxu0 0
      %1439 = vmatprep.subr.bf16.mxu0 0
      %1440 = vmatpush2.bf16.msra.mxu0 0
      %1441 = vmatprep.mubr.bf16.mxu0 0
      %1442 = vmatmul.mubr.bf16.gmra.mxu0 %v1358
      %v1443 = vpop.f32.mrf.mxu0
      %v1444 = vadd.f32 0.0, %v1443
      %v1445 = vpop.f32.mrf.mxu0
      %v1446 = vpop.f32.mrf.mxu0
      %v1447 = vadd.f32 0.0, %v1446
      %v1448 = vpop.f32.mrf.mxu0
      %1449 = vmatprep.mubr.bf16.mxu0 0
      %1450 = vmatmul.mubr.bf16.gmra.mxu0 %v1361
      %v1451 = vpop.f32.mrf.mxu0
      %v1452 = vadd.f32 0.0, %v1451
      %v1453 = vpop.f32.mrf.mxu0
      %v1454 = vpop.f32.mrf.mxu0
      %v1455 = vadd.f32 0.0, %v1454
      %v1456 = vpop.f32.mrf.mxu0
      %1457 = vmatprep.mubr.bf16.mxu0 0
      %1458 = vmatmul.mubr.bf16.gmra.mxu0 %v1364
      %v1459 = vpop.f32.mrf.mxu0
      %v1460 = vadd.f32 0.0, %v1459
      %v1461 = vpop.f32.mrf.mxu0
      %v1462 = vpop.f32.mrf.mxu0
      %v1463 = vadd.f32 0.0, %v1462
      %v1464 = vpop.f32.mrf.mxu0
      %1465 = vmatprep.mubr.bf16.mxu0 0
      %1466 = vmatmul.mubr.bf16.gmra.mxu0 %v1367
      %v1467 = vpop.f32.mrf.mxu0
      %v1468 = vadd.f32 0.0, %v1467
      %v1469 = vpop.f32.mrf.mxu0
      %v1470 = vpop.f32.mrf.mxu0
      %v1471 = vadd.f32 0.0, %v1470
      %v1472 = vpop.f32.mrf.mxu0
      %1473 = vmatprep.mubr.bf16.mxu0 0
      %1474 = vmatmul.mubr.bf16.gmra.mxu0 %v1370
      %v1475 = vpop.f32.mrf.mxu0
      %v1476 = vadd.f32 0.0, %v1475
      %v1477 = vpop.f32.mrf.mxu0
      %v1478 = vpop.f32.mrf.mxu0
      %v1479 = vadd.f32 0.0, %v1478
      %v1480 = vpop.f32.mrf.mxu0
      %1481 = vmatprep.mubr.bf16.mxu0 0
      %1482 = vmatmul.mubr.bf16.gmra.mxu0 %v1373
      %v1483 = vpop.f32.mrf.mxu0
      %v1484 = vadd.f32 0.0, %v1483
      %v1485 = vpop.f32.mrf.mxu0
      %v1486 = vpop.f32.mrf.mxu0
      %v1487 = vadd.f32 0.0, %v1486
      %v1488 = vpop.f32.mrf.mxu0
      %1489 = vmatprep.mubr.bf16.mxu0 0
      %1490 = vmatmul.mubr.bf16.gmra.mxu0 %v1376
      %v1491 = vpop.f32.mrf.mxu0
      %v1492 = vadd.f32 0.0, %v1491
      %v1493 = vpop.f32.mrf.mxu0
      %v1494 = vpop.f32.mrf.mxu0
      %v1495 = vadd.f32 0.0, %v1494
      %v1496 = vpop.f32.mrf.mxu0
      %1497 = vmatprep.mubr.bf16.mxu0 0
      %1498 = vmatmul.mubr.bf16.gmra.mxu0 %v1379
      %v1499 = vpop.f32.mrf.mxu0
      %v1500 = vadd.f32 0.0, %v1499
      %v1501 = vpop.f32.mrf.mxu0
      %v1502 = vpop.f32.mrf.mxu0
      %v1503 = vadd.f32 0.0, %v1502
      %v1504 = vpop.f32.mrf.mxu0
      %1505 = vmatprep.mubr.bf16.mxu0 0
      %1506 = vmatmul.mubr.bf16.gmra.mxu0 %v1382
      %v1507 = vpop.f32.mrf.mxu0
      %v1508 = vadd.f32 0.0, %v1507
      %v1509 = vpop.f32.mrf.mxu0
      %v1510 = vpop.f32.mrf.mxu0
      %v1511 = vadd.f32 0.0, %v1510
      %v1512 = vpop.f32.mrf.mxu0
      %1513 = vmatprep.mubr.bf16.mxu0 0
      %1514 = vmatmul.mubr.bf16.gmra.mxu0 %v1385
      %v1515 = vpop.f32.mrf.mxu0
      %v1516 = vadd.f32 0.0, %v1515
      %v1517 = vpop.f32.mrf.mxu0
      %v1518 = vpop.f32.mrf.mxu0
      %v1519 = vadd.f32 0.0, %v1518
      %v1520 = vpop.f32.mrf.mxu0
      %1521 = vmatprep.mubr.bf16.mxu0 0
      %1522 = vmatmul.mubr.bf16.gmra.mxu0 %v1388
      %v1523 = vpop.f32.mrf.mxu0
      %v1524 = vadd.f32 0.0, %v1523
      %v1525 = vpop.f32.mrf.mxu0
      %v1526 = vpop.f32.mrf.mxu0
      %v1527 = vadd.f32 0.0, %v1526
      %v1528 = vpop.f32.mrf.mxu0
      %1529 = vmatprep.mubr.bf16.mxu0 0
      %1530 = vmatmul.mubr.bf16.gmra.mxu0 %v1391
      %v1531 = vpop.f32.mrf.mxu0
      %v1532 = vadd.f32 0.0, %v1531
      %v1533 = vpop.f32.mrf.mxu0
      %v1534 = vpop.f32.mrf.mxu0
      %v1535 = vadd.f32 0.0, %v1534
      %v1536 = vpop.f32.mrf.mxu0
      %1537 = vmatprep.mubr.bf16.mxu0 0
      %1538 = vmatmul.mubr.bf16.gmra.mxu0 %v1394
      %v1539 = vpop.f32.mrf.mxu0
      %v1540 = vadd.f32 0.0, %v1539
      %v1541 = vpop.f32.mrf.mxu0
      %v1542 = vpop.f32.mrf.mxu0
      %v1543 = vadd.f32 0.0, %v1542
      %v1544 = vpop.f32.mrf.mxu0
      %1545 = vmatprep.mubr.bf16.mxu0 0
      %1546 = vmatmul.mubr.bf16.gmra.mxu0 %v1397
      %v1547 = vpop.f32.mrf.mxu0
      %v1548 = vadd.f32 0.0, %v1547
      %v1549 = vpop.f32.mrf.mxu0
      %v1550 = vpop.f32.mrf.mxu0
      %v1551 = vadd.f32 0.0, %v1550
      %v1552 = vpop.f32.mrf.mxu0
      %1553 = vmatprep.mubr.bf16.mxu0 0
      %1554 = vmatmul.mubr.bf16.gmra.mxu0 %v1400
      %v1555 = vpop.f32.mrf.mxu0
      %v1556 = vadd.f32 0.0, %v1555
      %v1557 = vpop.f32.mrf.mxu0
      %v1558 = vpop.f32.mrf.mxu0
      %v1559 = vadd.f32 0.0, %v1558
      %v1560 = vpop.f32.mrf.mxu0
      %1561 = vmatprep.mubr.bf16.mxu0 0
      %1562 = vmatmul.mubr.bf16.gmra.mxu0 %v1403
      %v1563 = vpop.f32.mrf.mxu0
      %v1564 = vadd.f32 0.0, %v1563
      %v1565 = vpop.f32.mrf.mxu0
      %v1566 = vpop.f32.mrf.mxu0
      %v1567 = vadd.f32 0.0, %v1566
      %v1568 = vpop.f32.mrf.mxu0
      %1569 = vdwg.mxu0
      %v1602 = vunpack.c.l.b16 %v870
      %v1603 = vunpack.c.l.b16 %v871
      %v1604 = vunpack.c.l.b16 %v872
      %v1605 = vunpack.c.l.b16 %v873
      %v1606 = vunpack.c.l.b16 %v874
      %v1607 = vunpack.c.l.b16 %v875
      %v1608 = vunpack.c.l.b16 %v876
      %v1609 = vunpack.c.l.b16 %v877
      %v1610 = vunpack.c.l.b16 %v878
      %v1611 = vunpack.c.l.b16 %v879
      %v1612 = vunpack.c.l.b16 %v880
      %v1613 = vunpack.c.l.b16 %v881
      %v1614 = vunpack.c.l.b16 %v882
      %v1615 = vunpack.c.l.b16 %v883
      %v1616 = vunpack.c.l.b16 %v884
      %v1617 = vunpack.c.l.b16 %v885
      %v1618 = vunpack.c.l.b16 %v886
      %v1619 = vunpack.c.l.b16 %v887
      %v1620 = vunpack.c.l.b16 %v888
      %v1621 = vunpack.c.l.b16 %v889
      %v1622 = vunpack.c.l.b16 %v890
      %v1623 = vunpack.c.l.b16 %v891
      %v1624 = vunpack.c.l.b16 %v892
      %v1625 = vunpack.c.l.b16 %v893
      %v1626 = vunpack.c.l.b16 %v894
      %v1627 = vunpack.c.l.b16 %v895
      %v1628 = vunpack.c.l.b16 %v896
      %v1629 = vunpack.c.l.b16 %v897
      %v1630 = vunpack.c.l.b16 %v898
      %v1631 = vunpack.c.l.b16 %v899
      %v1632 = vunpack.c.l.b16 %v900
      %v1633 = vunpack.c.l.b16 %v901
      %v1634 = vpack.c.b16 %v1603, %v1602
      %v1635 = vpack.c.b16 %v1605, %v1604
      %v1636 = vpack.c.b16 %v1607, %v1606
      %v1637 = vpack.c.b16 %v1609, %v1608
      %v1638 = vpack.c.b16 %v1611, %v1610
      %v1639 = vpack.c.b16 %v1613, %v1612
      %v1640 = vpack.c.b16 %v1615, %v1614
      %v1641 = vpack.c.b16 %v1617, %v1616
      %v1642 = vpack.c.b16 %v1619, %v1618
      %v1643 = vpack.c.b16 %v1621, %v1620
      %v1644 = vpack.c.b16 %v1623, %v1622
      %v1645 = vpack.c.b16 %v1625, %v1624
      %v1646 = vpack.c.b16 %v1627, %v1626
      %v1647 = vpack.c.b16 %v1629, %v1628
      %v1648 = vpack.c.b16 %v1631, %v1630
      %v1649 = vpack.c.b16 %v1633, %v1632
      %v1651 = vsel %vm1356, %v1634, 0
      %v1654 = vsel %vm1356, %v1635, 0
      %v1657 = vsel %vm1356, %v1636, 0
      %v1660 = vsel %vm1356, %v1637, 0
      %v1663 = vsel %vm1356, %v1638, 0
      %v1666 = vsel %vm1356, %v1639, 0
      %v1669 = vsel %vm1356, %v1640, 0
      %v1672 = vsel %vm1356, %v1641, 0
      %v1675 = vsel %vm1356, %v1642, 0
      %v1678 = vsel %vm1356, %v1643, 0
      %v1681 = vsel %vm1356, %v1644, 0
      %v1684 = vsel %vm1356, %v1645, 0
      %v1687 = vsel %vm1356, %v1646, 0
      %v1690 = vsel %vm1356, %v1647, 0
      %v1693 = vsel %vm1356, %v1648, 0
      %v1696 = vsel %vm1356, %v1649, 0
      %v1699 = vsel %vm1405, %v902, 0
      %1701 = vmatprep.subr.bf16.mxu0 0
      %1702 = vmatpush1.bf16.msra.mxu0 0
      %1703 = vmatprep.subr.bf16.mxu0 0
      %1704 = vmatpush1.bf16.msra.mxu0 0
      %1705 = vmatprep.subr.bf16.mxu0 0
      %1706 = vmatpush1.bf16.msra.mxu0 0
      %1707 = vmatprep.subr.bf16.mxu0 0
      %1708 = vmatpush1.bf16.msra.mxu0 0
      %1709 = vmatprep.subr.bf16.mxu0 0
      %1710 = vmatpush1.bf16.msra.mxu0 0
      %1711 = vmatprep.subr.bf16.mxu0 0
      %1712 = vmatpush1.bf16.msra.mxu0 0
      %1713 = vmatprep.subr.bf16.mxu0 0
      %1714 = vmatpush1.bf16.msra.mxu0 0
      %1715 = vmatprep.subr.bf16.mxu0 0
      %1716 = vmatpush1.bf16.msra.mxu0 %v1699
      %1717 = vmatprep.subr.bf16.mxu0 0
      %1718 = vmatpush2.bf16.msra.mxu0 0
      %1719 = vmatprep.subr.bf16.mxu0 0
      %1720 = vmatpush2.bf16.msra.mxu0 0
      %1721 = vmatprep.subr.bf16.mxu0 0
      %1722 = vmatpush2.bf16.msra.mxu0 0
      %1723 = vmatprep.subr.bf16.mxu0 0
      %1724 = vmatpush2.bf16.msra.mxu0 0
      %1725 = vmatprep.subr.bf16.mxu0 0
      %1726 = vmatpush2.bf16.msra.mxu0 0
      %1727 = vmatprep.subr.bf16.mxu0 0
      %1728 = vmatpush2.bf16.msra.mxu0 0
      %1729 = vmatprep.subr.bf16.mxu0 0
      %1730 = vmatpush2.bf16.msra.mxu0 0
      %1731 = vmatprep.subr.bf16.mxu0 0
      %1732 = vmatpush2.bf16.msra.mxu0 0
      %1733 = vmatprep.mubr.bf16.mxu0 0
      %1734 = vmatmul.mubr.bf16.gmra.mxu0 %v1651
      %v1735 = vpop.f32.mrf.mxu0
      %v1736 = vadd.f32 %v1444, %v1735
      %v1737 = vpop.f32.mrf.mxu0
      %v1738 = vpop.f32.mrf.mxu0
      %v1739 = vadd.f32 %v1447, %v1738
      %v1740 = vpop.f32.mrf.mxu0
      %1741 = vmatprep.mubr.bf16.mxu0 0
      %1742 = vmatmul.mubr.bf16.gmra.mxu0 %v1654
      %v1743 = vpop.f32.mrf.mxu0
      %v1744 = vadd.f32 %v1452, %v1743
      %v1745 = vpop.f32.mrf.mxu0
      %v1746 = vpop.f32.mrf.mxu0
      %v1747 = vadd.f32 %v1455, %v1746
      %v1748 = vpop.f32.mrf.mxu0
      %1749 = vmatprep.mubr.bf16.mxu0 0
      %1750 = vmatmul.mubr.bf16.gmra.mxu0 %v1657
      %v1751 = vpop.f32.mrf.mxu0
      %v1752 = vadd.f32 %v1460, %v1751
      %v1753 = vpop.f32.mrf.mxu0
      %v1754 = vpop.f32.mrf.mxu0
      %v1755 = vadd.f32 %v1463, %v1754
      %v1756 = vpop.f32.mrf.mxu0
      %1757 = vmatprep.mubr.bf16.mxu0 0
      %1758 = vmatmul.mubr.bf16.gmra.mxu0 %v1660
      %v1759 = vpop.f32.mrf.mxu0
      %v1760 = vadd.f32 %v1468, %v1759
      %v1761 = vpop.f32.mrf.mxu0
      %v1762 = vpop.f32.mrf.mxu0
      %v1763 = vadd.f32 %v1471, %v1762
      %v1764 = vpop.f32.mrf.mxu0
      %1765 = vmatprep.mubr.bf16.mxu0 0
      %1766 = vmatmul.mubr.bf16.gmra.mxu0 %v1663
      %v1767 = vpop.f32.mrf.mxu0
      %v1768 = vadd.f32 %v1476, %v1767
      %v1769 = vpop.f32.mrf.mxu0
      %v1770 = vpop.f32.mrf.mxu0
      %v1771 = vadd.f32 %v1479, %v1770
      %v1772 = vpop.f32.mrf.mxu0
      %1773 = vmatprep.mubr.bf16.mxu0 0
      %1774 = vmatmul.mubr.bf16.gmra.mxu0 %v1666
      %v1775 = vpop.f32.mrf.mxu0
      %v1776 = vadd.f32 %v1484, %v1775
      %v1777 = vpop.f32.mrf.mxu0
      %v1778 = vpop.f32.mrf.mxu0
      %v1779 = vadd.f32 %v1487, %v1778
      %v1780 = vpop.f32.mrf.mxu0
      %1781 = vmatprep.mubr.bf16.mxu0 0
      %1782 = vmatmul.mubr.bf16.gmra.mxu0 %v1669
      %v1783 = vpop.f32.mrf.mxu0
      %v1784 = vadd.f32 %v1492, %v1783
      %v1785 = vpop.f32.mrf.mxu0
      %v1786 = vpop.f32.mrf.mxu0
      %v1787 = vadd.f32 %v1495, %v1786
      %v1788 = vpop.f32.mrf.mxu0
      %1789 = vmatprep.mubr.bf16.mxu0 0
      %1790 = vmatmul.mubr.bf16.gmra.mxu0 %v1672
      %v1791 = vpop.f32.mrf.mxu0
      %v1792 = vadd.f32 %v1500, %v1791
      %v1793 = vpop.f32.mrf.mxu0
      %v1794 = vpop.f32.mrf.mxu0
      %v1795 = vadd.f32 %v1503, %v1794
      %v1796 = vpop.f32.mrf.mxu0
      %1797 = vmatprep.mubr.bf16.mxu0 0
      %1798 = vmatmul.mubr.bf16.gmra.mxu0 %v1675
      %v1799 = vpop.f32.mrf.mxu0
      %v1800 = vadd.f32 %v1508, %v1799
      %v1801 = vpop.f32.mrf.mxu0
      %v1802 = vpop.f32.mrf.mxu0
      %v1803 = vadd.f32 %v1511, %v1802
      %v1804 = vpop.f32.mrf.mxu0
      %1805 = vmatprep.mubr.bf16.mxu0 0
      %1806 = vmatmul.mubr.bf16.gmra.mxu0 %v1678
      %v1807 = vpop.f32.mrf.mxu0
      %v1808 = vadd.f32 %v1516, %v1807
      %v1809 = vpop.f32.mrf.mxu0
      %v1810 = vpop.f32.mrf.mxu0
      %v1811 = vadd.f32 %v1519, %v1810
      %v1812 = vpop.f32.mrf.mxu0
      %1813 = vmatprep.mubr.bf16.mxu0 0
      %1814 = vmatmul.mubr.bf16.gmra.mxu0 %v1681
      %v1815 = vpop.f32.mrf.mxu0
      %v1816 = vadd.f32 %v1524, %v1815
      %v1817 = vpop.f32.mrf.mxu0
      %v1818 = vpop.f32.mrf.mxu0
      %v1819 = vadd.f32 %v1527, %v1818
      %v1820 = vpop.f32.mrf.mxu0
      %1821 = vmatprep.mubr.bf16.mxu0 0
      %1822 = vmatmul.mubr.bf16.gmra.mxu0 %v1684
      %v1823 = vpop.f32.mrf.mxu0
      %v1824 = vadd.f32 %v1532, %v1823
      %v1825 = vpop.f32.mrf.mxu0
      %v1826 = vpop.f32.mrf.mxu0
      %v1827 = vadd.f32 %v1535, %v1826
      %v1828 = vpop.f32.mrf.mxu0
      %1829 = vmatprep.mubr.bf16.mxu0 0
      %1830 = vmatmul.mubr.bf16.gmra.mxu0 %v1687
      %v1831 = vpop.f32.mrf.mxu0
      %v1832 = vadd.f32 %v1540, %v1831
      %v1833 = vpop.f32.mrf.mxu0
      %v1834 = vpop.f32.mrf.mxu0
      %v1835 = vadd.f32 %v1543, %v1834
      %v1836 = vpop.f32.mrf.mxu0
      %1837 = vmatprep.mubr.bf16.mxu0 0
      %1838 = vmatmul.mubr.bf16.gmra.mxu0 %v1690
      %v1839 = vpop.f32.mrf.mxu0
      %v1840 = vadd.f32 %v1548, %v1839
      %v1841 = vpop.f32.mrf.mxu0
      %v1842 = vpop.f32.mrf.mxu0
      %v1843 = vadd.f32 %v1551, %v1842
      %v1844 = vpop.f32.mrf.mxu0
      %1845 = vmatprep.mubr.bf16.mxu0 0
      %1846 = vmatmul.mubr.bf16.gmra.mxu0 %v1693
      %v1847 = vpop.f32.mrf.mxu0
      %v1848 = vadd.f32 %v1556, %v1847
      %v1849 = vpop.f32.mrf.mxu0
      %v1850 = vpop.f32.mrf.mxu0
      %v1851 = vadd.f32 %v1559, %v1850
      %v1852 = vpop.f32.mrf.mxu0
      %1853 = vmatprep.mubr.bf16.mxu0 0
      %1854 = vmatmul.mubr.bf16.gmra.mxu0 %v1696
      %v1855 = vpop.f32.mrf.mxu0
      %v1856 = vadd.f32 %v1564, %v1855
      %v1857 = vpop.f32.mrf.mxu0
      %v1858 = vpop.f32.mrf.mxu0
      %v1859 = vadd.f32 %v1567, %v1858
      %v1860 = vpop.f32.mrf.mxu0
      %1861 = vdwg.mxu0
      %v1862 = vld [vmem:[#allocation2] sm:$0xe]
      %v1863 = vld [vmem:[#allocation2 + $0xc] sm:$0xe]
      %v1864 = vld [vmem:[#allocation2 + $0x18] sm:$0xe]
      %v1865 = vld [vmem:[#allocation2 + $0x24] sm:$0xe]
      %v1866 = vld [vmem:[#allocation2 + $0x30] sm:$0xe]
      %v1867 = vld [vmem:[#allocation2 + $0x3c] sm:$0xe]
      %v1868 = vld [vmem:[#allocation2 + $0x48] sm:$0xe]
      %v1869 = vld [vmem:[#allocation2 + $0x54] sm:$0xe]
      %v1870 = vld [vmem:[#allocation2 + $0x60] sm:$0xe]
      %v1871 = vld [vmem:[#allocation2 + $0x6c] sm:$0xe]
      %v1872 = vld [vmem:[#allocation2 + $0x78] sm:$0xe]
      %v1873 = vld [vmem:[#allocation2 + $0x84] sm:$0xe]
      %v1874 = vld [vmem:[#allocation2 + $0x90] sm:$0xe]
      %v1875 = vld [vmem:[#allocation2 + $0x9c] sm:$0xe]
      %v1876 = vld [vmem:[#allocation2 + $0xa8] sm:$0xe]
      %v1877 = vld [vmem:[#allocation2 + $0xb4] sm:$0xe]
      %vm1910 = vcmask 1042432
      %vm1911 = vcmask 1046532
      %vm1912 = vmor %vm1910, %vm1911
      %v1913 = vrot.slane %v1862, 5
      %v1914 = vrot.slane %v1913, 4
      %v1915 = vrot.slane %v871, 5
      %v1916 = vsel %vm1912, %v1914, %v1915
      %v1917 = vrot.slane %v1915, 4
      %v1918 = vrot.slane %v903, 5
      %v1919 = vsel %vm1912, %v1917, %v1918
      %v1920 = vrot.slane %v1863, 5
      %v1921 = vrot.slane %v1920, 4
      %v1922 = vrot.slane %v873, 5
      %v1923 = vsel %vm1912, %v1921, %v1922
      %v1924 = vrot.slane %v1922, 4
      %v1925 = vrot.slane %v904, 5
      %v1926 = vsel %vm1912, %v1924, %v1925
      %v1927 = vrot.slane %v1864, 5
      %v1928 = vrot.slane %v1927, 4
      %v1929 = vrot.slane %v875, 5
      %v1930 = vsel %vm1912, %v1928, %v1929
      %v1931 = vrot.slane %v1929, 4
      %v1932 = vrot.slane %v905, 5
      %v1933 = vsel %vm1912, %v1931, %v1932
      %v1934 = vrot.slane %v1865, 5
      %v1935 = vrot.slane %v1934, 4
      %v1936 = vrot.slane %v877, 5
      %v1937 = vsel %vm1912, %v1935, %v1936
      %v1938 = vrot.slane %v1936, 4
      %v1939 = vrot.slane %v906, 5
      %v1940 = vsel %vm1912, %v1938, %v1939
      %v1941 = vrot.slane %v1866, 5
      %v1942 = vrot.slane %v1941, 4
      %v1943 = vrot.slane %v879, 5
      %v1944 = vsel %vm1912, %v1942, %v1943
      %v1945 = vrot.slane %v1943, 4
      %v1946 = vrot.slane %v907, 5
      %v1947 = vsel %vm1912, %v1945, %v1946
      %v1948 = vrot.slane %v1867, 5
      %v1949 = vrot.slane %v1948, 4
      %v1950 = vrot.slane %v881, 5
      %v1951 = vsel %vm1912, %v1949, %v1950
      %v1952 = vrot.slane %v1950, 4
      %v1953 = vrot.slane %v908, 5
      %v1954 = vsel %vm1912, %v1952, %v1953
      %v1955 = vrot.slane %v1868, 5
      %v1956 = vrot.slane %v1955, 4
      %v1957 = vrot.slane %v883, 5
      %v1958 = vsel %vm1912, %v1956, %v1957
      %v1959 = vrot.slane %v1957, 4
      %v1960 = vrot.slane %v909, 5
      %v1961 = vsel %vm1912, %v1959, %v1960
      %v1962 = vrot.slane %v1869, 5
      %v1963 = vrot.slane %v1962, 4
      %v1964 = vrot.slane %v885, 5
      %v1965 = vsel %vm1912, %v1963, %v1964
      %v1966 = vrot.slane %v1964, 4
      %v1967 = vrot.slane %v910, 5
      %v1968 = vsel %vm1912, %v1966, %v1967
      %v1969 = vrot.slane %v1870, 5
      %v1970 = vrot.slane %v1969, 4
      %v1971 = vrot.slane %v887, 5
      %v1972 = vsel %vm1912, %v1970, %v1971
      %v1973 = vrot.slane %v1971, 4
      %v1974 = vrot.slane %v911, 5
      %v1975 = vsel %vm1912, %v1973, %v1974
      %v1976 = vrot.slane %v1871, 5
      %v1977 = vrot.slane %v1976, 4
      %v1978 = vrot.slane %v889, 5
      %v1979 = vsel %vm1912, %v1977, %v1978
      %v1980 = vrot.slane %v1978, 4
      %v1981 = vrot.slane %v912, 5
      %v1982 = vsel %vm1912, %v1980, %v1981
      %v1983 = vrot.slane %v1872, 5
      %v1984 = vrot.slane %v1983, 4
      %v1985 = vrot.slane %v891, 5
      %v1986 = vsel %vm1912, %v1984, %v1985
      %v1987 = vrot.slane %v1985, 4
      %v1988 = vrot.slane %v913, 5
      %v1989 = vsel %vm1912, %v1987, %v1988
      %v1990 = vrot.slane %v1873, 5
      %v1991 = vrot.slane %v1990, 4
      %v1992 = vrot.slane %v893, 5
      %v1993 = vsel %vm1912, %v1991, %v1992
      %v1994 = vrot.slane %v1992, 4
      %v1995 = vrot.slane %v914, 5
      %v1996 = vsel %vm1912, %v1994, %v1995
      %v1997 = vrot.slane %v1874, 5
      %v1998 = vrot.slane %v1997, 4
      %v1999 = vrot.slane %v895, 5
      %v2000 = vsel %vm1912, %v1998, %v1999
      %v2001 = vrot.slane %v1999, 4
      %v2002 = vrot.slane %v915, 5
      %v2003 = vsel %vm1912, %v2001, %v2002
      %v2004 = vrot.slane %v1875, 5
      %v2005 = vrot.slane %v2004, 4
      %v2006 = vrot.slane %v897, 5
      %v2007 = vsel %vm1912, %v2005, %v2006
      %v2008 = vrot.slane %v2006, 4
      %v2009 = vrot.slane %v916, 5
      %v2010 = vsel %vm1912, %v2008, %v2009
      %v2011 = vrot.slane %v1876, 5
      %v2012 = vrot.slane %v2011, 4
      %v2013 = vrot.slane %v899, 5
      %v2014 = vsel %vm1912, %v2012, %v2013
      %v2015 = vrot.slane %v2013, 4
      %v2016 = vrot.slane %v917, 5
      %v2017 = vsel %vm1912, %v2015, %v2016
      %v2018 = vrot.slane %v1877, 5
      %v2019 = vrot.slane %v2018, 4
      %v2020 = vrot.slane %v901, 5
      %v2021 = vsel %vm1912, %v2019, %v2020
      %v2022 = vrot.slane %v2020, 4
      %v2023 = vrot.slane %v918, 5
      %v2024 = vsel %vm1912, %v2022, %v2023
      %s2025 = scalar_lea.vmem %s1, 8
      %v2026 = vld [vmem:[%s2025] sm:$0xf]
      %v2027 = vunpack.c.l.b16 %v1916
      %v2028 = vunpack.c.l.b16 %v1919
      %v2029 = vunpack.c.l.b16 %v1923
      %v2030 = vunpack.c.l.b16 %v1926
      %v2031 = vunpack.c.l.b16 %v1930
      %v2032 = vunpack.c.l.b16 %v1933
      %v2033 = vunpack.c.l.b16 %v1937
      %v2034 = vunpack.c.l.b16 %v1940
      %v2035 = vunpack.c.l.b16 %v1944
      %v2036 = vunpack.c.l.b16 %v1947
      %v2037 = vunpack.c.l.b16 %v1951
      %v2038 = vunpack.c.l.b16 %v1954
      %v2039 = vunpack.c.l.b16 %v1958
      %v2040 = vunpack.c.l.b16 %v1961
      %v2041 = vunpack.c.l.b16 %v1965
      %v2042 = vunpack.c.l.b16 %v1968
      %v2043 = vunpack.c.l.b16 %v1972
      %v2044 = vunpack.c.l.b16 %v1975
      %v2045 = vunpack.c.l.b16 %v1979
      %v2046 = vunpack.c.l.b16 %v1982
      %v2047 = vunpack.c.l.b16 %v1986
      %v2048 = vunpack.c.l.b16 %v1989
      %v2049 = vunpack.c.l.b16 %v1993
      %v2050 = vunpack.c.l.b16 %v1996
      %v2051 = vunpack.c.l.b16 %v2000
      %v2052 = vunpack.c.l.b16 %v2003
      %v2053 = vunpack.c.l.b16 %v2007
      %v2054 = vunpack.c.l.b16 %v2010
      %v2055 = vunpack.c.l.b16 %v2014
      %v2056 = vunpack.c.l.b16 %v2017
      %v2057 = vunpack.c.l.b16 %v2021
      %v2058 = vunpack.c.l.b16 %v2024
      %v2059 = vpack.c.b16 %v2028, %v2027
      %v2060 = vpack.c.b16 %v2030, %v2029
      %v2061 = vpack.c.b16 %v2032, %v2031
      %v2062 = vpack.c.b16 %v2034, %v2033
      %v2063 = vpack.c.b16 %v2036, %v2035
      %v2064 = vpack.c.b16 %v2038, %v2037
      %v2065 = vpack.c.b16 %v2040, %v2039
      %v2066 = vpack.c.b16 %v2042, %v2041
      %v2067 = vpack.c.b16 %v2044, %v2043
      %v2068 = vpack.c.b16 %v2046, %v2045
      %v2069 = vpack.c.b16 %v2048, %v2047
      %v2070 = vpack.c.b16 %v2050, %v2049
      %v2071 = vpack.c.b16 %v2052, %v2051
      %v2072 = vpack.c.b16 %v2054, %v2053
      %v2073 = vpack.c.b16 %v2056, %v2055
      %v2074 = vpack.c.b16 %v2058, %v2057
      %v2076 = vsel %vm1356, %v2059, 0
      %v2079 = vsel %vm1356, %v2060, 0
      %v2082 = vsel %vm1356, %v2061, 0
      %v2085 = vsel %vm1356, %v2062, 0
      %v2088 = vsel %vm1356, %v2063, 0
      %v2091 = vsel %vm1356, %v2064, 0
      %v2094 = vsel %vm1356, %v2065, 0
      %v2097 = vsel %vm1356, %v2066, 0
      %v2100 = vsel %vm1356, %v2067, 0
      %v2103 = vsel %vm1356, %v2068, 0
      %v2106 = vsel %vm1356, %v2069, 0
      %v2109 = vsel %vm1356, %v2070, 0
      %v2112 = vsel %vm1356, %v2071, 0
      %v2115 = vsel %vm1356, %v2072, 0
      %v2118 = vsel %vm1356, %v2073, 0
      %v2121 = vsel %vm1356, %v2074, 0
      %v2124 = vsel %vm1405, %v2026, 0
      %2126 = vmatprep.subr.bf16.mxu0 0
      %2127 = vmatpush1.bf16.msra.mxu0 0
      %2128 = vmatprep.subr.bf16.mxu0 0
      %2129 = vmatpush1.bf16.msra.mxu0 0
      %2130 = vmatprep.subr.bf16.mxu0 0
      %2131 = vmatpush1.bf16.msra.mxu0 0
      %2132 = vmatprep.subr.bf16.mxu0 0
      %2133 = vmatpush1.bf16.msra.mxu0 0
      %2134 = vmatprep.subr.bf16.mxu0 0
      %2135 = vmatpush1.bf16.msra.mxu0 0
      %2136 = vmatprep.subr.bf16.mxu0 0
      %2137 = vmatpush1.bf16.msra.mxu0 0
      %2138 = vmatprep.subr.bf16.mxu0 0
      %2139 = vmatpush1.bf16.msra.mxu0 0
      %2140 = vmatprep.subr.bf16.mxu0 0
      %2141 = vmatpush1.bf16.msra.mxu0 %v2124
      %2142 = vmatprep.subr.bf16.mxu0 0
      %2143 = vmatpush2.bf16.msra.mxu0 0
      %2144 = vmatprep.subr.bf16.mxu0 0
      %2145 = vmatpush2.bf16.msra.mxu0 0
      %2146 = vmatprep.subr.bf16.mxu0 0
      %2147 = vmatpush2.bf16.msra.mxu0 0
      %2148 = vmatprep.subr.bf16.mxu0 0
      %2149 = vmatpush2.bf16.msra.mxu0 0
      %2150 = vmatprep.subr.bf16.mxu0 0
      %2151 = vmatpush2.bf16.msra.mxu0 0
      %2152 = vmatprep.subr.bf16.mxu0 0
      %2153 = vmatpush2.bf16.msra.mxu0 0
      %2154 = vmatprep.subr.bf16.mxu0 0
      %2155 = vmatpush2.bf16.msra.mxu0 0
      %2156 = vmatprep.subr.bf16.mxu0 0
      %2157 = vmatpush2.bf16.msra.mxu0 0
      %2158 = vmatprep.mubr.bf16.mxu0 0
      %2159 = vmatmul.mubr.bf16.gmra.mxu0 %v2076
      %v2160 = vpop.f32.mrf.mxu0
      %v2161 = vadd.f32 0.0, %v2160
      %v2162 = vpop.f32.mrf.mxu0
      %v2163 = vpop.f32.mrf.mxu0
      %v2164 = vadd.f32 0.0, %v2163
      %v2165 = vpop.f32.mrf.mxu0
      %2166 = vmatprep.mubr.bf16.mxu0 0
      %2167 = vmatmul.mubr.bf16.gmra.mxu0 %v2079
      %v2168 = vpop.f32.mrf.mxu0
      %v2169 = vadd.f32 0.0, %v2168
      %v2170 = vpop.f32.mrf.mxu0
      %v2171 = vpop.f32.mrf.mxu0
      %v2172 = vadd.f32 0.0, %v2171
      %v2173 = vpop.f32.mrf.mxu0
      %2174 = vmatprep.mubr.bf16.mxu0 0
      %2175 = vmatmul.mubr.bf16.gmra.mxu0 %v2082
      %v2176 = vpop.f32.mrf.mxu0
      %v2177 = vadd.f32 0.0, %v2176
      %v2178 = vpop.f32.mrf.mxu0
      %v2179 = vpop.f32.mrf.mxu0
      %v2180 = vadd.f32 0.0, %v2179
      %v2181 = vpop.f32.mrf.mxu0
      %2182 = vmatprep.mubr.bf16.mxu0 0
      %2183 = vmatmul.mubr.bf16.gmra.mxu0 %v2085
      %v2184 = vpop.f32.mrf.mxu0
      %v2185 = vadd.f32 0.0, %v2184
      %v2186 = vpop.f32.mrf.mxu0
      %v2187 = vpop.f32.mrf.mxu0
      %v2188 = vadd.f32 0.0, %v2187
      %v2189 = vpop.f32.mrf.mxu0
      %2190 = vmatprep.mubr.bf16.mxu0 0
      %2191 = vmatmul.mubr.bf16.gmra.mxu0 %v2088
      %v2192 = vpop.f32.mrf.mxu0
      %v2193 = vadd.f32 0.0, %v2192
      %v2194 = vpop.f32.mrf.mxu0
      %v2195 = vpop.f32.mrf.mxu0
      %v2196 = vadd.f32 0.0, %v2195
      %v2197 = vpop.f32.mrf.mxu0
      %2198 = vmatprep.mubr.bf16.mxu0 0
      %2199 = vmatmul.mubr.bf16.gmra.mxu0 %v2091
      %v2200 = vpop.f32.mrf.mxu0
      %v2201 = vadd.f32 0.0, %v2200
      %v2202 = vpop.f32.mrf.mxu0
      %v2203 = vpop.f32.mrf.mxu0
      %v2204 = vadd.f32 0.0, %v2203
      %v2205 = vpop.f32.mrf.mxu0
      %2206 = vmatprep.mubr.bf16.mxu0 0
      %2207 = vmatmul.mubr.bf16.gmra.mxu0 %v2094
      %v2208 = vpop.f32.mrf.mxu0
      %v2209 = vadd.f32 0.0, %v2208
      %v2210 = vpop.f32.mrf.mxu0
      %v2211 = vpop.f32.mrf.mxu0
      %v2212 = vadd.f32 0.0, %v2211
      %v2213 = vpop.f32.mrf.mxu0
      %2214 = vmatprep.mubr.bf16.mxu0 0
      %2215 = vmatmul.mubr.bf16.gmra.mxu0 %v2097
      %v2216 = vpop.f32.mrf.mxu0
      %v2217 = vadd.f32 0.0, %v2216
      %v2218 = vpop.f32.mrf.mxu0
      %v2219 = vpop.f32.mrf.mxu0
      %v2220 = vadd.f32 0.0, %v2219
      %v2221 = vpop.f32.mrf.mxu0
      %2222 = vmatprep.mubr.bf16.mxu0 0
      %2223 = vmatmul.mubr.bf16.gmra.mxu0 %v2100
      %v2224 = vpop.f32.mrf.mxu0
      %v2225 = vadd.f32 0.0, %v2224
      %v2226 = vpop.f32.mrf.mxu0
      %v2227 = vpop.f32.mrf.mxu0
      %v2228 = vadd.f32 0.0, %v2227
      %v2229 = vpop.f32.mrf.mxu0
      %2230 = vmatprep.mubr.bf16.mxu0 0
      %2231 = vmatmul.mubr.bf16.gmra.mxu0 %v2103
      %v2232 = vpop.f32.mrf.mxu0
      %v2233 = vadd.f32 0.0, %v2232
      %v2234 = vpop.f32.mrf.mxu0
      %v2235 = vpop.f32.mrf.mxu0
      %v2236 = vadd.f32 0.0, %v2235
      %v2237 = vpop.f32.mrf.mxu0
      %2238 = vmatprep.mubr.bf16.mxu0 0
      %2239 = vmatmul.mubr.bf16.gmra.mxu0 %v2106
      %v2240 = vpop.f32.mrf.mxu0
      %v2241 = vadd.f32 0.0, %v2240
      %v2242 = vpop.f32.mrf.mxu0
      %v2243 = vpop.f32.mrf.mxu0
      %v2244 = vadd.f32 0.0, %v2243
      %v2245 = vpop.f32.mrf.mxu0
      %2246 = vmatprep.mubr.bf16.mxu0 0
      %2247 = vmatmul.mubr.bf16.gmra.mxu0 %v2109
      %v2248 = vpop.f32.mrf.mxu0
      %v2249 = vadd.f32 0.0, %v2248
      %v2250 = vpop.f32.mrf.mxu0
      %v2251 = vpop.f32.mrf.mxu0
      %v2252 = vadd.f32 0.0, %v2251
      %v2253 = vpop.f32.mrf.mxu0
      %2254 = vmatprep.mubr.bf16.mxu0 0
      %2255 = vmatmul.mubr.bf16.gmra.mxu0 %v2112
      %v2256 = vpop.f32.mrf.mxu0
      %v2257 = vadd.f32 0.0, %v2256
      %v2258 = vpop.f32.mrf.mxu0
      %v2259 = vpop.f32.mrf.mxu0
      %v2260 = vadd.f32 0.0, %v2259
      %v2261 = vpop.f32.mrf.mxu0
      %2262 = vmatprep.mubr.bf16.mxu0 0
      %2263 = vmatmul.mubr.bf16.gmra.mxu0 %v2115
      %v2264 = vpop.f32.mrf.mxu0
      %v2265 = vadd.f32 0.0, %v2264
      %v2266 = vpop.f32.mrf.mxu0
      %v2267 = vpop.f32.mrf.mxu0
      %v2268 = vadd.f32 0.0, %v2267
      %v2269 = vpop.f32.mrf.mxu0
      %2270 = vmatprep.mubr.bf16.mxu0 0
      %2271 = vmatmul.mubr.bf16.gmra.mxu0 %v2118
      %v2272 = vpop.f32.mrf.mxu0
      %v2273 = vadd.f32 0.0, %v2272
      %v2274 = vpop.f32.mrf.mxu0
      %v2275 = vpop.f32.mrf.mxu0
      %v2276 = vadd.f32 0.0, %v2275
      %v2277 = vpop.f32.mrf.mxu0
      %2278 = vmatprep.mubr.bf16.mxu0 0
      %2279 = vmatmul.mubr.bf16.gmra.mxu0 %v2121
      %v2280 = vpop.f32.mrf.mxu0
      %v2281 = vadd.f32 0.0, %v2280
      %v2282 = vpop.f32.mrf.mxu0
      %v2283 = vpop.f32.mrf.mxu0
      %v2284 = vadd.f32 0.0, %v2283
      %v2285 = vpop.f32.mrf.mxu0
      %2286 = vdwg.mxu0
      %v2287 = vadd.f32 %v1736, %v2161
      %v2288 = vadd.f32 %v1739, %v2164
      %v2289 = vadd.f32 %v1744, %v2169
      %v2290 = vadd.f32 %v1747, %v2172
      %v2291 = vadd.f32 %v1752, %v2177
      %v2292 = vadd.f32 %v1755, %v2180
      %v2293 = vadd.f32 %v1760, %v2185
      %v2294 = vadd.f32 %v1763, %v2188
      %v2295 = vadd.f32 %v1768, %v2193
      %v2296 = vadd.f32 %v1771, %v2196
      %v2297 = vadd.f32 %v1776, %v2201
      %v2298 = vadd.f32 %v1779, %v2204
      %v2299 = vadd.f32 %v1784, %v2209
      %v2300 = vadd.f32 %v1787, %v2212
      %v2301 = vadd.f32 %v1792, %v2217
      %v2302 = vadd.f32 %v1795, %v2220
      %v2303 = vadd.f32 %v1800, %v2225
      %v2304 = vadd.f32 %v1803, %v2228
      %v2305 = vadd.f32 %v1808, %v2233
      %v2306 = vadd.f32 %v1811, %v2236
      %v2307 = vadd.f32 %v1816, %v2241
      %v2308 = vadd.f32 %v1819, %v2244
      %v2309 = vadd.f32 %v1824, %v2249
      %v2310 = vadd.f32 %v1827, %v2252
      %v2311 = vadd.f32 %v1832, %v2257
      %v2312 = vadd.f32 %v1835, %v2260
      %v2313 = vadd.f32 %v1840, %v2265
      %v2314 = vadd.f32 %v1843, %v2268
      %v2315 = vadd.f32 %v1848, %v2273
      %v2316 = vadd.f32 %v1851, %v2276
      %v2317 = vadd.f32 %v1856, %v2281
      %v2318 = vadd.f32 %v1859, %v2284
      %v2319 = vld [vmem:[%s755] sm:$0xf]
      %v2320 = vld [vmem:[%s755 + $0x4] sm:$0xf]
      %v2321 = vld [vmem:[%s755 + $0xc] sm:$0xf]
      %v2322 = vld [vmem:[%s755 + $0x10] sm:$0xf]
      %v2323 = vld [vmem:[%s755 + $0x18] sm:$0xf]
      %v2324 = vld [vmem:[%s755 + $0x1c] sm:$0xf]
      %v2325 = vld [vmem:[%s755 + $0x24] sm:$0xf]
      %v2326 = vld [vmem:[%s755 + $0x28] sm:$0xf]
      %v2327 = vld [vmem:[%s755 + $0x30] sm:$0xf]
      %v2328 = vld [vmem:[%s755 + $0x34] sm:$0xf]
      %v2329 = vld [vmem:[%s755 + $0x3c] sm:$0xf]
      %v2330 = vld [vmem:[%s755 + $0x40] sm:$0xf]
      %v2331 = vld [vmem:[%s755 + $0x48] sm:$0xf]
      %v2332 = vld [vmem:[%s755 + $0x4c] sm:$0xf]
      %v2333 = vld [vmem:[%s755 + $0x54] sm:$0xf]
      %v2334 = vld [vmem:[%s755 + $0x58] sm:$0xf]
      %v2335 = vld [vmem:[%s755 + $0x60] sm:$0xf]
      %v2336 = vld [vmem:[%s755 + $0x64] sm:$0xf]
      %v2337 = vld [vmem:[%s755 + $0x6c] sm:$0xf]
      %v2338 = vld [vmem:[%s755 + $0x70] sm:$0xf]
      %v2339 = vld [vmem:[%s755 + $0x78] sm:$0xf]
      %v2340 = vld [vmem:[%s755 + $0x7c] sm:$0xf]
      %v2341 = vld [vmem:[%s755 + $0x84] sm:$0xf]
      %v2342 = vld [vmem:[%s755 + $0x88] sm:$0xf]
      %v2343 = vld [vmem:[%s755 + $0x90] sm:$0xf]
      %v2344 = vld [vmem:[%s755 + $0x94] sm:$0xf]
      %v2345 = vld [vmem:[%s755 + $0x9c] sm:$0xf]
      %v2346 = vld [vmem:[%s755 + $0xa0] sm:$0xf]
      %v2347 = vld [vmem:[%s755 + $0xa8] sm:$0xf]
      %v2348 = vld [vmem:[%s755 + $0xac] sm:$0xf]
      %v2349 = vld [vmem:[%s755 + $0xb4] sm:$0xf]
      %v2350 = vld [vmem:[%s755 + $0xb8] sm:$0xf]
      %s2351 = scalar_lea.vmem %s1, 12
      %v2352 = vld [vmem:[%s2351] sm:$0xf]
      %v2385 = vunpack.c.l.b16 %v2319
      %v2386 = vunpack.c.l.b16 %v2320
      %v2387 = vunpack.c.l.b16 %v2321
      %v2388 = vunpack.c.l.b16 %v2322
      %v2389 = vunpack.c.l.b16 %v2323
      %v2390 = vunpack.c.l.b16 %v2324
      %v2391 = vunpack.c.l.b16 %v2325
      %v2392 = vunpack.c.l.b16 %v2326
      %v2393 = vunpack.c.l.b16 %v2327
      %v2394 = vunpack.c.l.b16 %v2328
      %v2395 = vunpack.c.l.b16 %v2329
      %v2396 = vunpack.c.l.b16 %v2330
      %v2397 = vunpack.c.l.b16 %v2331
      %v2398 = vunpack.c.l.b16 %v2332
      %v2399 = vunpack.c.l.b16 %v2333
      %v2400 = vunpack.c.l.b16 %v2334
      %v2401 = vunpack.c.l.b16 %v2335
      %v2402 = vunpack.c.l.b16 %v2336
      %v2403 = vunpack.c.l.b16 %v2337
      %v2404 = vunpack.c.l.b16 %v2338
      %v2405 = vunpack.c.l.b16 %v2339
      %v2406 = vunpack.c.l.b16 %v2340
      %v2407 = vunpack.c.l.b16 %v2341
      %v2408 = vunpack.c.l.b16 %v2342
      %v2409 = vunpack.c.l.b16 %v2343
      %v2410 = vunpack.c.l.b16 %v2344
      %v2411 = vunpack.c.l.b16 %v2345
      %v2412 = vunpack.c.l.b16 %v2346
      %v2413 = vunpack.c.l.b16 %v2347
      %v2414 = vunpack.c.l.b16 %v2348
      %v2415 = vunpack.c.l.b16 %v2349
      %v2416 = vunpack.c.l.b16 %v2350
      %v2417 = vpack.c.b16 %v2386, %v2385
      %v2418 = vpack.c.b16 %v2388, %v2387
      %v2419 = vpack.c.b16 %v2390, %v2389
      %v2420 = vpack.c.b16 %v2392, %v2391
      %v2421 = vpack.c.b16 %v2394, %v2393
      %v2422 = vpack.c.b16 %v2396, %v2395
      %v2423 = vpack.c.b16 %v2398, %v2397
      %v2424 = vpack.c.b16 %v2400, %v2399
      %v2425 = vpack.c.b16 %v2402, %v2401
      %v2426 = vpack.c.b16 %v2404, %v2403
      %v2427 = vpack.c.b16 %v2406, %v2405
      %v2428 = vpack.c.b16 %v2408, %v2407
      %v2429 = vpack.c.b16 %v2410, %v2409
      %v2430 = vpack.c.b16 %v2412, %v2411
      %v2431 = vpack.c.b16 %v2414, %v2413
      %v2432 = vpack.c.b16 %v2416, %v2415
      %v2434 = vsel %vm1356, %v2417, 0
      %v2437 = vsel %vm1356, %v2418, 0
      %v2440 = vsel %vm1356, %v2419, 0
      %v2443 = vsel %vm1356, %v2420, 0
      %v2446 = vsel %vm1356, %v2421, 0
      %v2449 = vsel %vm1356, %v2422, 0
      %v2452 = vsel %vm1356, %v2423, 0
      %v2455 = vsel %vm1356, %v2424, 0
      %v2458 = vsel %vm1356, %v2425, 0
      %v2461 = vsel %vm1356, %v2426, 0
      %v2464 = vsel %vm1356, %v2427, 0
      %v2467 = vsel %vm1356, %v2428, 0
      %v2470 = vsel %vm1356, %v2429, 0
      %v2473 = vsel %vm1356, %v2430, 0
      %v2476 = vsel %vm1356, %v2431, 0
      %v2479 = vsel %vm1356, %v2432, 0
      %v2482 = vsel %vm1405, %v2352, 0
      %2484 = vmatprep.subr.bf16.mxu0 0
      %2485 = vmatpush1.bf16.msra.mxu0 0
      %2486 = vmatprep.subr.bf16.mxu0 0
      %2487 = vmatpush1.bf16.msra.mxu0 0
      %2488 = vmatprep.subr.bf16.mxu0 0
      %2489 = vmatpush1.bf16.msra.mxu0 0
      %2490 = vmatprep.subr.bf16.mxu0 0
      %2491 = vmatpush1.bf16.msra.mxu0 0
      %2492 = vmatprep.subr.bf16.mxu0 0
      %2493 = vmatpush1.bf16.msra.mxu0 0
      %2494 = vmatprep.subr.bf16.mxu0 0
      %2495 = vmatpush1.bf16.msra.mxu0 0
      %2496 = vmatprep.subr.bf16.mxu0 0
      %2497 = vmatpush1.bf16.msra.mxu0 0
      %2498 = vmatprep.subr.bf16.mxu0 0
      %2499 = vmatpush1.bf16.msra.mxu0 %v2482
      %2500 = vmatprep.subr.bf16.mxu0 0
      %2501 = vmatpush2.bf16.msra.mxu0 0
      %2502 = vmatprep.subr.bf16.mxu0 0
      %2503 = vmatpush2.bf16.msra.mxu0 0
      %2504 = vmatprep.subr.bf16.mxu0 0
      %2505 = vmatpush2.bf16.msra.mxu0 0
      %2506 = vmatprep.subr.bf16.mxu0 0
      %2507 = vmatpush2.bf16.msra.mxu0 0
      %2508 = vmatprep.subr.bf16.mxu0 0
      %2509 = vmatpush2.bf16.msra.mxu0 0
      %2510 = vmatprep.subr.bf16.mxu0 0
      %2511 = vmatpush2.bf16.msra.mxu0 0
      %2512 = vmatprep.subr.bf16.mxu0 0
      %2513 = vmatpush2.bf16.msra.mxu0 0
      %2514 = vmatprep.subr.bf16.mxu0 0
      %2515 = vmatpush2.bf16.msra.mxu0 0
      %2516 = vmatprep.mubr.bf16.mxu0 0
      %2517 = vmatmul.mubr.bf16.gmra.mxu0 %v2434
      %v2518 = vpop.f32.mrf.mxu0
      %v2519 = vadd.f32 0.0, %v2518
      %v2520 = vpop.f32.mrf.mxu0
      %v2521 = vpop.f32.mrf.mxu0
      %v2522 = vadd.f32 0.0, %v2521
      %v2523 = vpop.f32.mrf.mxu0
      %2524 = vmatprep.mubr.bf16.mxu0 0
      %2525 = vmatmul.mubr.bf16.gmra.mxu0 %v2437
      %v2526 = vpop.f32.mrf.mxu0
      %v2527 = vadd.f32 0.0, %v2526
      %v2528 = vpop.f32.mrf.mxu0
      %v2529 = vpop.f32.mrf.mxu0
      %v2530 = vadd.f32 0.0, %v2529
      %v2531 = vpop.f32.mrf.mxu0
      %2532 = vmatprep.mubr.bf16.mxu0 0
      %2533 = vmatmul.mubr.bf16.gmra.mxu0 %v2440
      %v2534 = vpop.f32.mrf.mxu0
      %v2535 = vadd.f32 0.0, %v2534
      %v2536 = vpop.f32.mrf.mxu0
      %v2537 = vpop.f32.mrf.mxu0
      %v2538 = vadd.f32 0.0, %v2537
      %v2539 = vpop.f32.mrf.mxu0
      %2540 = vmatprep.mubr.bf16.mxu0 0
      %2541 = vmatmul.mubr.bf16.gmra.mxu0 %v2443
      %v2542 = vpop.f32.mrf.mxu0
      %v2543 = vadd.f32 0.0, %v2542
      %v2544 = vpop.f32.mrf.mxu0
      %v2545 = vpop.f32.mrf.mxu0
      %v2546 = vadd.f32 0.0, %v2545
      %v2547 = vpop.f32.mrf.mxu0
      %2548 = vmatprep.mubr.bf16.mxu0 0
      %2549 = vmatmul.mubr.bf16.gmra.mxu0 %v2446
      %v2550 = vpop.f32.mrf.mxu0
      %v2551 = vadd.f32 0.0, %v2550
      %v2552 = vpop.f32.mrf.mxu0
      %v2553 = vpop.f32.mrf.mxu0
      %v2554 = vadd.f32 0.0, %v2553
      %v2555 = vpop.f32.mrf.mxu0
      %2556 = vmatprep.mubr.bf16.mxu0 0
      %2557 = vmatmul.mubr.bf16.gmra.mxu0 %v2449
      %v2558 = vpop.f32.mrf.mxu0
      %v2559 = vadd.f32 0.0, %v2558
      %v2560 = vpop.f32.mrf.mxu0
      %v2561 = vpop.f32.mrf.mxu0
      %v2562 = vadd.f32 0.0, %v2561
      %v2563 = vpop.f32.mrf.mxu0
      %2564 = vmatprep.mubr.bf16.mxu0 0
      %2565 = vmatmul.mubr.bf16.gmra.mxu0 %v2452
      %v2566 = vpop.f32.mrf.mxu0
      %v2567 = vadd.f32 0.0, %v2566
      %v2568 = vpop.f32.mrf.mxu0
      %v2569 = vpop.f32.mrf.mxu0
      %v2570 = vadd.f32 0.0, %v2569
      %v2571 = vpop.f32.mrf.mxu0
      %2572 = vmatprep.mubr.bf16.mxu0 0
      %2573 = vmatmul.mubr.bf16.gmra.mxu0 %v2455
      %v2574 = vpop.f32.mrf.mxu0
      %v2575 = vadd.f32 0.0, %v2574
      %v2576 = vpop.f32.mrf.mxu0
      %v2577 = vpop.f32.mrf.mxu0
      %v2578 = vadd.f32 0.0, %v2577
      %v2579 = vpop.f32.mrf.mxu0
      %2580 = vmatprep.mubr.bf16.mxu0 0
      %2581 = vmatmul.mubr.bf16.gmra.mxu0 %v2458
      %v2582 = vpop.f32.mrf.mxu0
      %v2583 = vadd.f32 0.0, %v2582
      %v2584 = vpop.f32.mrf.mxu0
      %v2585 = vpop.f32.mrf.mxu0
      %v2586 = vadd.f32 0.0, %v2585
      %v2587 = vpop.f32.mrf.mxu0
      %2588 = vmatprep.mubr.bf16.mxu0 0
      %2589 = vmatmul.mubr.bf16.gmra.mxu0 %v2461
      %v2590 = vpop.f32.mrf.mxu0
      %v2591 = vadd.f32 0.0, %v2590
      %v2592 = vpop.f32.mrf.mxu0
      %v2593 = vpop.f32.mrf.mxu0
      %v2594 = vadd.f32 0.0, %v2593
      %v2595 = vpop.f32.mrf.mxu0
      %2596 = vmatprep.mubr.bf16.mxu0 0
      %2597 = vmatmul.mubr.bf16.gmra.mxu0 %v2464
      %v2598 = vpop.f32.mrf.mxu0
      %v2599 = vadd.f32 0.0, %v2598
      %v2600 = vpop.f32.mrf.mxu0
      %v2601 = vpop.f32.mrf.mxu0
      %v2602 = vadd.f32 0.0, %v2601
      %v2603 = vpop.f32.mrf.mxu0
      %2604 = vmatprep.mubr.bf16.mxu0 0
      %2605 = vmatmul.mubr.bf16.gmra.mxu0 %v2467
      %v2606 = vpop.f32.mrf.mxu0
      %v2607 = vadd.f32 0.0, %v2606
      %v2608 = vpop.f32.mrf.mxu0
      %v2609 = vpop.f32.mrf.mxu0
      %v2610 = vadd.f32 0.0, %v2609
      %v2611 = vpop.f32.mrf.mxu0
      %2612 = vmatprep.mubr.bf16.mxu0 0
      %2613 = vmatmul.mubr.bf16.gmra.mxu0 %v2470
      %v2614 = vpop.f32.mrf.mxu0
      %v2615 = vadd.f32 0.0, %v2614
      %v2616 = vpop.f32.mrf.mxu0
      %v2617 = vpop.f32.mrf.mxu0
      %v2618 = vadd.f32 0.0, %v2617
      %v2619 = vpop.f32.mrf.mxu0
      %2620 = vmatprep.mubr.bf16.mxu0 0
      %2621 = vmatmul.mubr.bf16.gmra.mxu0 %v2473
      %v2622 = vpop.f32.mrf.mxu0
      %v2623 = vadd.f32 0.0, %v2622
      %v2624 = vpop.f32.mrf.mxu0
      %v2625 = vpop.f32.mrf.mxu0
      %v2626 = vadd.f32 0.0, %v2625
      %v2627 = vpop.f32.mrf.mxu0
      %2628 = vmatprep.mubr.bf16.mxu0 0
      %2629 = vmatmul.mubr.bf16.gmra.mxu0 %v2476
      %v2630 = vpop.f32.mrf.mxu0
      %v2631 = vadd.f32 0.0, %v2630
      %v2632 = vpop.f32.mrf.mxu0
      %v2633 = vpop.f32.mrf.mxu0
      %v2634 = vadd.f32 0.0, %v2633
      %v2635 = vpop.f32.mrf.mxu0
      %2636 = vmatprep.mubr.bf16.mxu0 0
      %2637 = vmatmul.mubr.bf16.gmra.mxu0 %v2479
      %v2638 = vpop.f32.mrf.mxu0
      %v2639 = vadd.f32 0.0, %v2638
      %v2640 = vpop.f32.mrf.mxu0
      %v2641 = vpop.f32.mrf.mxu0
      %v2642 = vadd.f32 0.0, %v2641
      %v2643 = vpop.f32.mrf.mxu0
      %2644 = vdwg.mxu0
      %v2645 = vadd.f32 %v2287, %v2519
      %v2646 = vadd.f32 %v2288, %v2522
      %v2647 = vadd.f32 %v2289, %v2527
      %v2648 = vadd.f32 %v2290, %v2530
      %v2649 = vadd.f32 %v2291, %v2535
      %v2650 = vadd.f32 %v2292, %v2538
      %v2651 = vadd.f32 %v2293, %v2543
      %v2652 = vadd.f32 %v2294, %v2546
      %v2653 = vadd.f32 %v2295, %v2551
      %v2654 = vadd.f32 %v2296, %v2554
      %v2655 = vadd.f32 %v2297, %v2559
      %v2656 = vadd.f32 %v2298, %v2562
      %v2657 = vadd.f32 %v2299, %v2567
      %v2658 = vadd.f32 %v2300, %v2570
      %v2659 = vadd.f32 %v2301, %v2575
      %v2660 = vadd.f32 %v2302, %v2578
      %v2661 = vadd.f32 %v2303, %v2583
      %v2662 = vadd.f32 %v2304, %v2586
      %v2663 = vadd.f32 %v2305, %v2591
      %v2664 = vadd.f32 %v2306, %v2594
      %v2665 = vadd.f32 %v2307, %v2599
      %v2666 = vadd.f32 %v2308, %v2602
      %v2667 = vadd.f32 %v2309, %v2607
      %v2668 = vadd.f32 %v2310, %v2610
      %v2669 = vadd.f32 %v2311, %v2615
      %v2670 = vadd.f32 %v2312, %v2618
      %v2671 = vadd.f32 %v2313, %v2623
      %v2672 = vadd.f32 %v2314, %v2626
      %v2673 = vadd.f32 %v2315, %v2631
      %v2674 = vadd.f32 %v2316, %v2634
      %v2675 = vadd.f32 %v2317, %v2639
      %v2676 = vadd.f32 %v2318, %v2642
      %v2677 = vld [vmem:[%s755] sm:$0xf]
      %v2678 = vld [vmem:[%s755 + $0x4] sm:$0xf]
      %v2679 = vld [vmem:[%s755 + $0x8] sm:$0x1]
      %v2680 = vld [vmem:[%s755 + $0xc] sm:$0xf]
      %v2681 = vld [vmem:[%s755 + $0x10] sm:$0xf]
      %v2682 = vld [vmem:[%s755 + $0x14] sm:$0x1]
      %v2683 = vld [vmem:[%s755 + $0x18] sm:$0xf]
      %v2684 = vld [vmem:[%s755 + $0x1c] sm:$0xf]
      %v2685 = vld [vmem:[%s755 + $0x20] sm:$0x1]
      %v2686 = vld [vmem:[%s755 + $0x24] sm:$0xf]
      %v2687 = vld [vmem:[%s755 + $0x28] sm:$0xf]
      %v2688 = vld [vmem:[%s755 + $0x2c] sm:$0x1]
      %v2689 = vld [vmem:[%s755 + $0x30] sm:$0xf]
      %v2690 = vld [vmem:[%s755 + $0x34] sm:$0xf]
      %v2691 = vld [vmem:[%s755 + $0x38] sm:$0x1]
      %v2692 = vld [vmem:[%s755 + $0x3c] sm:$0xf]
      %v2693 = vld [vmem:[%s755 + $0x40] sm:$0xf]
      %v2694 = vld [vmem:[%s755 + $0x44] sm:$0x1]
      %v2695 = vld [vmem:[%s755 + $0x48] sm:$0xf]
      %v2696 = vld [vmem:[%s755 + $0x4c] sm:$0xf]
      %v2697 = vld [vmem:[%s755 + $0x50] sm:$0x1]
      %v2698 = vld [vmem:[%s755 + $0x54] sm:$0xf]
      %v2699 = vld [vmem:[%s755 + $0x58] sm:$0xf]
      %v2700 = vld [vmem:[%s755 + $0x5c] sm:$0x1]
      %v2701 = vld [vmem:[%s755 + $0x60] sm:$0xf]
      %v2702 = vld [vmem:[%s755 + $0x64] sm:$0xf]
      %v2703 = vld [vmem:[%s755 + $0x68] sm:$0x1]
      %v2704 = vld [vmem:[%s755 + $0x6c] sm:$0xf]
      %v2705 = vld [vmem:[%s755 + $0x70] sm:$0xf]
      %v2706 = vld [vmem:[%s755 + $0x74] sm:$0x1]
      %v2707 = vld [vmem:[%s755 + $0x78] sm:$0xf]
      %v2708 = vld [vmem:[%s755 + $0x7c] sm:$0xf]
      %v2709 = vld [vmem:[%s755 + $0x80] sm:$0x1]
      %v2710 = vld [vmem:[%s755 + $0x84] sm:$0xf]
      %v2711 = vld [vmem:[%s755 + $0x88] sm:$0xf]
      %v2712 = vld [vmem:[%s755 + $0x8c] sm:$0x1]
      %v2713 = vld [vmem:[%s755 + $0x90] sm:$0xf]
      %v2714 = vld [vmem:[%s755 + $0x94] sm:$0xf]
      %v2715 = vld [vmem:[%s755 + $0x98] sm:$0x1]
      %v2716 = vld [vmem:[%s755 + $0x9c] sm:$0xf]
      %v2717 = vld [vmem:[%s755 + $0xa0] sm:$0xf]
      %v2718 = vld [vmem:[%s755 + $0xa4] sm:$0x1]
      %v2719 = vld [vmem:[%s755 + $0xa8] sm:$0xf]
      %v2720 = vld [vmem:[%s755 + $0xac] sm:$0xf]
      %v2721 = vld [vmem:[%s755 + $0xb0] sm:$0x1]
      %v2722 = vld [vmem:[%s755 + $0xb4] sm:$0xf]
      %v2723 = vld [vmem:[%s755 + $0xb8] sm:$0xf]
      %v2724 = vld [vmem:[%s755 + $0xbc] sm:$0x1]
      %v2726 = vshrl.u32 %v2677, 16
      %v2728 = vrot.slane %v2726, 4
      %v2729 = vshll.u32 %v2677, 16
      %v2731 = vrot.slane %v2729, 5
      %v2732 = vor.u32 %v2728, %v2731
      %v2733 = vrot.slane %v2732, 4
      %v2735 = vshll.u32 %v2678, 16
      %v2737 = vrot.slane %v2735, 5
      %v2738 = vsel %vm921, %v2733, %v2737
      %v2739 = vshrl.u32 %v2678, 16
      %v2741 = vrot.slane %v2739, 4
      %v2742 = vor.u32 %v2741, %v2737
      %v2743 = vrot.slane %v2742, 4
      %v2745 = vshll.u32 %v2679, 16
      %v2747 = vrot.slane %v2745, 5
      %v2748 = vsel %vm921, %v2743, %v2747
      %v2750 = vshrl.u32 %v2680, 16
      %v2752 = vrot.slane %v2750, 4
      %v2753 = vshll.u32 %v2680, 16
      %v2755 = vrot.slane %v2753, 5
      %v2756 = vor.u32 %v2752, %v2755
      %v2757 = vrot.slane %v2756, 4
      %v2759 = vshll.u32 %v2681, 16
      %v2761 = vrot.slane %v2759, 5
      %v2762 = vsel %vm921, %v2757, %v2761
      %v2763 = vshrl.u32 %v2681, 16
      %v2765 = vrot.slane %v2763, 4
      %v2766 = vor.u32 %v2765, %v2761
      %v2767 = vrot.slane %v2766, 4
      %v2769 = vshll.u32 %v2682, 16
      %v2771 = vrot.slane %v2769, 5
      %v2772 = vsel %vm921, %v2767, %v2771
      %v2774 = vshrl.u32 %v2683, 16
      %v2776 = vrot.slane %v2774, 4
      %v2777 = vshll.u32 %v2683, 16
      %v2779 = vrot.slane %v2777, 5
      %v2780 = vor.u32 %v2776, %v2779
      %v2781 = vrot.slane %v2780, 4
      %v2783 = vshll.u32 %v2684, 16
      %v2785 = vrot.slane %v2783, 5
      %v2786 = vsel %vm921, %v2781, %v2785
      %v2787 = vshrl.u32 %v2684, 16
      %v2789 = vrot.slane %v2787, 4
      %v2790 = vor.u32 %v2789, %v2785
      %v2791 = vrot.slane %v2790, 4
      %v2793 = vshll.u32 %v2685, 16
      %v2795 = vrot.slane %v2793, 5
      %v2796 = vsel %vm921, %v2791, %v2795
      %v2798 = vshrl.u32 %v2686, 16
      %v2800 = vrot.slane %v2798, 4
      %v2801 = vshll.u32 %v2686, 16
      %v2803 = vrot.slane %v2801, 5
      %v2804 = vor.u32 %v2800, %v2803
      %v2805 = vrot.slane %v2804, 4
      %v2807 = vshll.u32 %v2687, 16
      %v2809 = vrot.slane %v2807, 5
      %v2810 = vsel %vm921, %v2805, %v2809
      %v2811 = vshrl.u32 %v2687, 16
      %v2813 = vrot.slane %v2811, 4
      %v2814 = vor.u32 %v2813, %v2809
      %v2815 = vrot.slane %v2814, 4
      %v2817 = vshll.u32 %v2688, 16
      %v2819 = vrot.slane %v2817, 5
      %v2820 = vsel %vm921, %v2815, %v2819
      %v2822 = vshrl.u32 %v2689, 16
      %v2824 = vrot.slane %v2822, 4
      %v2825 = vshll.u32 %v2689, 16
      %v2827 = vrot.slane %v2825, 5
      %v2828 = vor.u32 %v2824, %v2827
      %v2829 = vrot.slane %v2828, 4
      %v2831 = vshll.u32 %v2690, 16
      %v2833 = vrot.slane %v2831, 5
      %v2834 = vsel %vm921, %v2829, %v2833
      %v2835 = vshrl.u32 %v2690, 16
      %v2837 = vrot.slane %v2835, 4
      %v2838 = vor.u32 %v2837, %v2833
      %v2839 = vrot.slane %v2838, 4
      %v2841 = vshll.u32 %v2691, 16
      %v2843 = vrot.slane %v2841, 5
      %v2844 = vsel %vm921, %v2839, %v2843
      %v2846 = vshrl.u32 %v2692, 16
      %v2848 = vrot.slane %v2846, 4
      %v2849 = vshll.u32 %v2692, 16
      %v2851 = vrot.slane %v2849, 5
      %v2852 = vor.u32 %v2848, %v2851
      %v2853 = vrot.slane %v2852, 4
      %v2855 = vshll.u32 %v2693, 16
      %v2857 = vrot.slane %v2855, 5
      %v2858 = vsel %vm921, %v2853, %v2857
      %v2859 = vshrl.u32 %v2693, 16
      %v2861 = vrot.slane %v2859, 4
      %v2862 = vor.u32 %v2861, %v2857
      %v2863 = vrot.slane %v2862, 4
      %v2865 = vshll.u32 %v2694, 16
      %v2867 = vrot.slane %v2865, 5
      %v2868 = vsel %vm921, %v2863, %v2867
      %v2870 = vshrl.u32 %v2695, 16
      %v2872 = vrot.slane %v2870, 4
      %v2873 = vshll.u32 %v2695, 16
      %v2875 = vrot.slane %v2873, 5
      %v2876 = vor.u32 %v2872, %v2875
      %v2877 = vrot.slane %v2876, 4
      %v2879 = vshll.u32 %v2696, 16
      %v2881 = vrot.slane %v2879, 5
      %v2882 = vsel %vm921, %v2877, %v2881
      %v2883 = vshrl.u32 %v2696, 16
      %v2885 = vrot.slane %v2883, 4
      %v2886 = vor.u32 %v2885, %v2881
      %v2887 = vrot.slane %v2886, 4
      %v2889 = vshll.u32 %v2697, 16
      %v2891 = vrot.slane %v2889, 5
      %v2892 = vsel %vm921, %v2887, %v2891
      %v2894 = vshrl.u32 %v2698, 16
      %v2896 = vrot.slane %v2894, 4
      %v2897 = vshll.u32 %v2698, 16
      %v2899 = vrot.slane %v2897, 5
      %v2900 = vor.u32 %v2896, %v2899
      %v2901 = vrot.slane %v2900, 4
      %v2903 = vshll.u32 %v2699, 16
      %v2905 = vrot.slane %v2903, 5
      %v2906 = vsel %vm921, %v2901, %v2905
      %v2907 = vshrl.u32 %v2699, 16
      %v2909 = vrot.slane %v2907, 4
      %v2910 = vor.u32 %v2909, %v2905
      %v2911 = vrot.slane %v2910, 4
      %v2913 = vshll.u32 %v2700, 16
      %v2915 = vrot.slane %v2913, 5
      %v2916 = vsel %vm921, %v2911, %v2915
      %v2918 = vshrl.u32 %v2701, 16
      %v2920 = vrot.slane %v2918, 4
      %v2921 = vshll.u32 %v2701, 16
      %v2923 = vrot.slane %v2921, 5
      %v2924 = vor.u32 %v2920, %v2923
      %v2925 = vrot.slane %v2924, 4
      %v2927 = vshll.u32 %v2702, 16
      %v2929 = vrot.slane %v2927, 5
      %v2930 = vsel %vm921, %v2925, %v2929
      %v2931 = vshrl.u32 %v2702, 16
      %v2933 = vrot.slane %v2931, 4
      %v2934 = vor.u32 %v2933, %v2929
      %v2935 = vrot.slane %v2934, 4
      %v2937 = vshll.u32 %v2703, 16
      %v2939 = vrot.slane %v2937, 5
      %v2940 = vsel %vm921, %v2935, %v2939
      %v2942 = vshrl.u32 %v2704, 16
      %v2944 = vrot.slane %v2942, 4
      %v2945 = vshll.u32 %v2704, 16
      %v2947 = vrot.slane %v2945, 5
      %v2948 = vor.u32 %v2944, %v2947
      %v2949 = vrot.slane %v2948, 4
      %v2951 = vshll.u32 %v2705, 16
      %v2953 = vrot.slane %v2951, 5
      %v2954 = vsel %vm921, %v2949, %v2953
      %v2955 = vshrl.u32 %v2705, 16
      %v2957 = vrot.slane %v2955, 4
      %v2958 = vor.u32 %v2957, %v2953
      %v2959 = vrot.slane %v2958, 4
      %v2961 = vshll.u32 %v2706, 16
      %v2963 = vrot.slane %v2961, 5
      %v2964 = vsel %vm921, %v2959, %v2963
      %v2966 = vshrl.u32 %v2707, 16
      %v2968 = vrot.slane %v2966, 4
      %v2969 = vshll.u32 %v2707, 16
      %v2971 = vrot.slane %v2969, 5
      %v2972 = vor.u32 %v2968, %v2971
      %v2973 = vrot.slane %v2972, 4
      %v2975 = vshll.u32 %v2708, 16
      %v2977 = vrot.slane %v2975, 5
      %v2978 = vsel %vm921, %v2973, %v2977
      %v2979 = vshrl.u32 %v2708, 16
      %v2981 = vrot.slane %v2979, 4
      %v2982 = vor.u32 %v2981, %v2977
      %v2983 = vrot.slane %v2982, 4
      %v2985 = vshll.u32 %v2709, 16
      %v2987 = vrot.slane %v2985, 5
      %v2988 = vsel %vm921, %v2983, %v2987
      %v2990 = vshrl.u32 %v2710, 16
      %v2992 = vrot.slane %v2990, 4
      %v2993 = vshll.u32 %v2710, 16
      %v2995 = vrot.slane %v2993, 5
      %v2996 = vor.u32 %v2992, %v2995
      %v2997 = vrot.slane %v2996, 4
      %v2999 = vshll.u32 %v2711, 16
      %v3001 = vrot.slane %v2999, 5
      %v3002 = vsel %vm921, %v2997, %v3001
      %v3003 = vshrl.u32 %v2711, 16
      %v3005 = vrot.slane %v3003, 4
      %v3006 = vor.u32 %v3005, %v3001
      %v3007 = vrot.slane %v3006, 4
      %v3009 = vshll.u32 %v2712, 16
      %v3011 = vrot.slane %v3009, 5
      %v3012 = vsel %vm921, %v3007, %v3011
      %v3014 = vshrl.u32 %v2713, 16
      %v3016 = vrot.slane %v3014, 4
      %v3017 = vshll.u32 %v2713, 16
      %v3019 = vrot.slane %v3017, 5
      %v3020 = vor.u32 %v3016, %v3019
      %v3021 = vrot.slane %v3020, 4
      %v3023 = vshll.u32 %v2714, 16
      %v3025 = vrot.slane %v3023, 5
      %v3026 = vsel %vm921, %v3021, %v3025
      %v3027 = vshrl.u32 %v2714, 16
      %v3029 = vrot.slane %v3027, 4
      %v3030 = vor.u32 %v3029, %v3025
      %v3031 = vrot.slane %v3030, 4
      %v3033 = vshll.u32 %v2715, 16
      %v3035 = vrot.slane %v3033, 5
      %v3036 = vsel %vm921, %v3031, %v3035
      %v3038 = vshrl.u32 %v2716, 16
      %v3040 = vrot.slane %v3038, 4
      %v3041 = vshll.u32 %v2716, 16
      %v3043 = vrot.slane %v3041, 5
      %v3044 = vor.u32 %v3040, %v3043
      %v3045 = vrot.slane %v3044, 4
      %v3047 = vshll.u32 %v2717, 16
      %v3049 = vrot.slane %v3047, 5
      %v3050 = vsel %vm921, %v3045, %v3049
      %v3051 = vshrl.u32 %v2717, 16
      %v3053 = vrot.slane %v3051, 4
      %v3054 = vor.u32 %v3053, %v3049
      %v3055 = vrot.slane %v3054, 4
      %v3057 = vshll.u32 %v2718, 16
      %v3059 = vrot.slane %v3057, 5
      %v3060 = vsel %vm921, %v3055, %v3059
      %v3062 = vshrl.u32 %v2719, 16
      %v3064 = vrot.slane %v3062, 4
      %v3065 = vshll.u32 %v2719, 16
      %v3067 = vrot.slane %v3065, 5
      %v3068 = vor.u32 %v3064, %v3067
      %v3069 = vrot.slane %v3068, 4
      %v3071 = vshll.u32 %v2720, 16
      %v3073 = vrot.slane %v3071, 5
      %v3074 = vsel %vm921, %v3069, %v3073
      %v3075 = vshrl.u32 %v2720, 16
      %v3077 = vrot.slane %v3075, 4
      %v3078 = vor.u32 %v3077, %v3073
      %v3079 = vrot.slane %v3078, 4
      %v3081 = vshll.u32 %v2721, 16
      %v3083 = vrot.slane %v3081, 5
      %v3084 = vsel %vm921, %v3079, %v3083
      %v3086 = vshrl.u32 %v2722, 16
      %v3088 = vrot.slane %v3086, 4
      %v3089 = vshll.u32 %v2722, 16
      %v3091 = vrot.slane %v3089, 5
      %v3092 = vor.u32 %v3088, %v3091
      %v3093 = vrot.slane %v3092, 4
      %v3095 = vshll.u32 %v2723, 16
      %v3097 = vrot.slane %v3095, 5
      %v3098 = vsel %vm921, %v3093, %v3097
      %v3099 = vshrl.u32 %v2723, 16
      %v3101 = vrot.slane %v3099, 4
      %v3102 = vor.u32 %v3101, %v3097
      %v3103 = vrot.slane %v3102, 4
      %v3105 = vshll.u32 %v2724, 16
      %v3107 = vrot.slane %v3105, 5
      %v3108 = vsel %vm921, %v3103, %v3107
      %s3109 = scalar_lea.vmem %s1, 16
      %v3110 = vld [vmem:[%s3109] sm:$0xf]
      %v3111 = vunpack.c.l.b16 %v2738
      %v3112 = vunpack.c.l.b16 %v2748
      %v3113 = vunpack.c.l.b16 %v2762
      %v3114 = vunpack.c.l.b16 %v2772
      %v3115 = vunpack.c.l.b16 %v2786
      %v3116 = vunpack.c.l.b16 %v2796
      %v3117 = vunpack.c.l.b16 %v2810
      %v3118 = vunpack.c.l.b16 %v2820
      %v3119 = vunpack.c.l.b16 %v2834
      %v3120 = vunpack.c.l.b16 %v2844
      %v3121 = vunpack.c.l.b16 %v2858
      %v3122 = vunpack.c.l.b16 %v2868
      %v3123 = vunpack.c.l.b16 %v2882
      %v3124 = vunpack.c.l.b16 %v2892
      %v3125 = vunpack.c.l.b16 %v2906
      %v3126 = vunpack.c.l.b16 %v2916
      %v3127 = vunpack.c.l.b16 %v2930
      %v3128 = vunpack.c.l.b16 %v2940
      %v3129 = vunpack.c.l.b16 %v2954
      %v3130 = vunpack.c.l.b16 %v2964
      %v3131 = vunpack.c.l.b16 %v2978
      %v3132 = vunpack.c.l.b16 %v2988
      %v3133 = vunpack.c.l.b16 %v3002
      %v3134 = vunpack.c.l.b16 %v3012
      %v3135 = vunpack.c.l.b16 %v3026
      %v3136 = vunpack.c.l.b16 %v3036
      %v3137 = vunpack.c.l.b16 %v3050
      %v3138 = vunpack.c.l.b16 %v3060
      %v3139 = vunpack.c.l.b16 %v3074
      %v3140 = vunpack.c.l.b16 %v3084
      %v3141 = vunpack.c.l.b16 %v3098
      %v3142 = vunpack.c.l.b16 %v3108
      %v3143 = vpack.c.b16 %v3112, %v3111
      %v3144 = vpack.c.b16 %v3114, %v3113
      %v3145 = vpack.c.b16 %v3116, %v3115
      %v3146 = vpack.c.b16 %v3118, %v3117
      %v3147 = vpack.c.b16 %v3120, %v3119
      %v3148 = vpack.c.b16 %v3122, %v3121
      %v3149 = vpack.c.b16 %v3124, %v3123
      %v3150 = vpack.c.b16 %v3126, %v3125
      %v3151 = vpack.c.b16 %v3128, %v3127
      %v3152 = vpack.c.b16 %v3130, %v3129
      %v3153 = vpack.c.b16 %v3132, %v3131
      %v3154 = vpack.c.b16 %v3134, %v3133
      %v3155 = vpack.c.b16 %v3136, %v3135
      %v3156 = vpack.c.b16 %v3138, %v3137
      %v3157 = vpack.c.b16 %v3140, %v3139
      %v3158 = vpack.c.b16 %v3142, %v3141
      %v3160 = vsel %vm1356, %v3143, 0
      %v3163 = vsel %vm1356, %v3144, 0
      %v3166 = vsel %vm1356, %v3145, 0
      %v3169 = vsel %vm1356, %v3146, 0
      %v3172 = vsel %vm1356, %v3147, 0
      %v3175 = vsel %vm1356, %v3148, 0
      %v3178 = vsel %vm1356, %v3149, 0
      %v3181 = vsel %vm1356, %v3150, 0
      %v3184 = vsel %vm1356, %v3151, 0
      %v3187 = vsel %vm1356, %v3152, 0
      %v3190 = vsel %vm1356, %v3153, 0
      %v3193 = vsel %vm1356, %v3154, 0
      %v3196 = vsel %vm1356, %v3155, 0
      %v3199 = vsel %vm1356, %v3156, 0
      %v3202 = vsel %vm1356, %v3157, 0
      %v3205 = vsel %vm1356, %v3158, 0
      %v3208 = vsel %vm1405, %v3110, 0
      %3210 = vmatprep.subr.bf16.mxu0 0
      %3211 = vmatpush1.bf16.msra.mxu0 0
      %3212 = vmatprep.subr.bf16.mxu0 0
      %3213 = vmatpush1.bf16.msra.mxu0 0
      %3214 = vmatprep.subr.bf16.mxu0 0
      %3215 = vmatpush1.bf16.msra.mxu0 0
      %3216 = vmatprep.subr.bf16.mxu0 0
      %3217 = vmatpush1.bf16.msra.mxu0 0
      %3218 = vmatprep.subr.bf16.mxu0 0
      %3219 = vmatpush1.bf16.msra.mxu0 0
      %3220 = vmatprep.subr.bf16.mxu0 0
      %3221 = vmatpush1.bf16.msra.mxu0 0
      %3222 = vmatprep.subr.bf16.mxu0 0
      %3223 = vmatpush1.bf16.msra.mxu0 0
      %3224 = vmatprep.subr.bf16.mxu0 0
      %3225 = vmatpush1.bf16.msra.mxu0 %v3208
      %3226 = vmatprep.subr.bf16.mxu0 0
      %3227 = vmatpush2.bf16.msra.mxu0 0
      %3228 = vmatprep.subr.bf16.mxu0 0
      %3229 = vmatpush2.bf16.msra.mxu0 0
      %3230 = vmatprep.subr.bf16.mxu0 0
      %3231 = vmatpush2.bf16.msra.mxu0 0
      %3232 = vmatprep.subr.bf16.mxu0 0
      %3233 = vmatpush2.bf16.msra.mxu0 0
      %3234 = vmatprep.subr.bf16.mxu0 0
      %3235 = vmatpush2.bf16.msra.mxu0 0
      %3236 = vmatprep.subr.bf16.mxu0 0
      %3237 = vmatpush2.bf16.msra.mxu0 0
      %3238 = vmatprep.subr.bf16.mxu0 0
      %3239 = vmatpush2.bf16.msra.mxu0 0
      %3240 = vmatprep.subr.bf16.mxu0 0
      %3241 = vmatpush2.bf16.msra.mxu0 0
      %3242 = vmatprep.mubr.bf16.mxu0 0
      %3243 = vmatmul.mubr.bf16.gmra.mxu0 %v3160
      %v3244 = vpop.f32.mrf.mxu0
      %v3245 = vadd.f32 0.0, %v3244
      %v3246 = vpop.f32.mrf.mxu0
      %v3247 = vpop.f32.mrf.mxu0
      %v3248 = vadd.f32 0.0, %v3247
      %v3249 = vpop.f32.mrf.mxu0
      %3250 = vmatprep.mubr.bf16.mxu0 0
      %3251 = vmatmul.mubr.bf16.gmra.mxu0 %v3163
      %v3252 = vpop.f32.mrf.mxu0
      %v3253 = vadd.f32 0.0, %v3252
      %v3254 = vpop.f32.mrf.mxu0
      %v3255 = vpop.f32.mrf.mxu0
      %v3256 = vadd.f32 0.0, %v3255
      %v3257 = vpop.f32.mrf.mxu0
      %3258 = vmatprep.mubr.bf16.mxu0 0
      %3259 = vmatmul.mubr.bf16.gmra.mxu0 %v3166
      %v3260 = vpop.f32.mrf.mxu0
      %v3261 = vadd.f32 0.0, %v3260
      %v3262 = vpop.f32.mrf.mxu0
      %v3263 = vpop.f32.mrf.mxu0
      %v3264 = vadd.f32 0.0, %v3263
      %v3265 = vpop.f32.mrf.mxu0
      %3266 = vmatprep.mubr.bf16.mxu0 0
      %3267 = vmatmul.mubr.bf16.gmra.mxu0 %v3169
      %v3268 = vpop.f32.mrf.mxu0
      %v3269 = vadd.f32 0.0, %v3268
      %v3270 = vpop.f32.mrf.mxu0
      %v3271 = vpop.f32.mrf.mxu0
      %v3272 = vadd.f32 0.0, %v3271
      %v3273 = vpop.f32.mrf.mxu0
      %3274 = vmatprep.mubr.bf16.mxu0 0
      %3275 = vmatmul.mubr.bf16.gmra.mxu0 %v3172
      %v3276 = vpop.f32.mrf.mxu0
      %v3277 = vadd.f32 0.0, %v3276
      %v3278 = vpop.f32.mrf.mxu0
      %v3279 = vpop.f32.mrf.mxu0
      %v3280 = vadd.f32 0.0, %v3279
      %v3281 = vpop.f32.mrf.mxu0
      %3282 = vmatprep.mubr.bf16.mxu0 0
      %3283 = vmatmul.mubr.bf16.gmra.mxu0 %v3175
      %v3284 = vpop.f32.mrf.mxu0
      %v3285 = vadd.f32 0.0, %v3284
      %v3286 = vpop.f32.mrf.mxu0
      %v3287 = vpop.f32.mrf.mxu0
      %v3288 = vadd.f32 0.0, %v3287
      %v3289 = vpop.f32.mrf.mxu0
      %3290 = vmatprep.mubr.bf16.mxu0 0
      %3291 = vmatmul.mubr.bf16.gmra.mxu0 %v3178
      %v3292 = vpop.f32.mrf.mxu0
      %v3293 = vadd.f32 0.0, %v3292
      %v3294 = vpop.f32.mrf.mxu0
      %v3295 = vpop.f32.mrf.mxu0
      %v3296 = vadd.f32 0.0, %v3295
      %v3297 = vpop.f32.mrf.mxu0
      %3298 = vmatprep.mubr.bf16.mxu0 0
      %3299 = vmatmul.mubr.bf16.gmra.mxu0 %v3181
      %v3300 = vpop.f32.mrf.mxu0
      %v3301 = vadd.f32 0.0, %v3300
      %v3302 = vpop.f32.mrf.mxu0
      %v3303 = vpop.f32.mrf.mxu0
      %v3304 = vadd.f32 0.0, %v3303
      %v3305 = vpop.f32.mrf.mxu0
      %3306 = vmatprep.mubr.bf16.mxu0 0
      %3307 = vmatmul.mubr.bf16.gmra.mxu0 %v3184
      %v3308 = vpop.f32.mrf.mxu0
      %v3309 = vadd.f32 0.0, %v3308
      %v3310 = vpop.f32.mrf.mxu0
      %v3311 = vpop.f32.mrf.mxu0
      %v3312 = vadd.f32 0.0, %v3311
      %v3313 = vpop.f32.mrf.mxu0
      %3314 = vmatprep.mubr.bf16.mxu0 0
      %3315 = vmatmul.mubr.bf16.gmra.mxu0 %v3187
      %v3316 = vpop.f32.mrf.mxu0
      %v3317 = vadd.f32 0.0, %v3316
      %v3318 = vpop.f32.mrf.mxu0
      %v3319 = vpop.f32.mrf.mxu0
      %v3320 = vadd.f32 0.0, %v3319
      %v3321 = vpop.f32.mrf.mxu0
      %3322 = vmatprep.mubr.bf16.mxu0 0
      %3323 = vmatmul.mubr.bf16.gmra.mxu0 %v3190
      %v3324 = vpop.f32.mrf.mxu0
      %v3325 = vadd.f32 0.0, %v3324
      %v3326 = vpop.f32.mrf.mxu0
      %v3327 = vpop.f32.mrf.mxu0
      %v3328 = vadd.f32 0.0, %v3327
      %v3329 = vpop.f32.mrf.mxu0
      %3330 = vmatprep.mubr.bf16.mxu0 0
      %3331 = vmatmul.mubr.bf16.gmra.mxu0 %v3193
      %v3332 = vpop.f32.mrf.mxu0
      %v3333 = vadd.f32 0.0, %v3332
      %v3334 = vpop.f32.mrf.mxu0
      %v3335 = vpop.f32.mrf.mxu0
      %v3336 = vadd.f32 0.0, %v3335
      %v3337 = vpop.f32.mrf.mxu0
      %3338 = vmatprep.mubr.bf16.mxu0 0
      %3339 = vmatmul.mubr.bf16.gmra.mxu0 %v3196
      %v3340 = vpop.f32.mrf.mxu0
      %v3341 = vadd.f32 0.0, %v3340
      %v3342 = vpop.f32.mrf.mxu0
      %v3343 = vpop.f32.mrf.mxu0
      %v3344 = vadd.f32 0.0, %v3343
      %v3345 = vpop.f32.mrf.mxu0
      %3346 = vmatprep.mubr.bf16.mxu0 0
      %3347 = vmatmul.mubr.bf16.gmra.mxu0 %v3199
      %v3348 = vpop.f32.mrf.mxu0
      %v3349 = vadd.f32 0.0, %v3348
      %v3350 = vpop.f32.mrf.mxu0
      %v3351 = vpop.f32.mrf.mxu0
      %v3352 = vadd.f32 0.0, %v3351
      %v3353 = vpop.f32.mrf.mxu0
      %3354 = vmatprep.mubr.bf16.mxu0 0
      %3355 = vmatmul.mubr.bf16.gmra.mxu0 %v3202
      %v3356 = vpop.f32.mrf.mxu0
      %v3357 = vadd.f32 0.0, %v3356
      %v3358 = vpop.f32.mrf.mxu0
      %v3359 = vpop.f32.mrf.mxu0
      %v3360 = vadd.f32 0.0, %v3359
      %v3361 = vpop.f32.mrf.mxu0
      %3362 = vmatprep.mubr.bf16.mxu0 0
      %3363 = vmatmul.mubr.bf16.gmra.mxu0 %v3205
      %v3364 = vpop.f32.mrf.mxu0
      %v3365 = vadd.f32 0.0, %v3364
      %v3366 = vpop.f32.mrf.mxu0
      %v3367 = vpop.f32.mrf.mxu0
      %v3368 = vadd.f32 0.0, %v3367
      %v3369 = vpop.f32.mrf.mxu0
      %3370 = vdwg.mxu0
      %v3371 = vadd.f32 %v2645, %v3245
      %v3372 = vadd.f32 %v2646, %v3248
      %v3373 = vadd.f32 %v2647, %v3253
      %v3374 = vadd.f32 %v2648, %v3256
      %v3375 = vadd.f32 %v2649, %v3261
      %v3376 = vadd.f32 %v2650, %v3264
      %v3377 = vadd.f32 %v2651, %v3269
      %v3378 = vadd.f32 %v2652, %v3272
      %v3379 = vadd.f32 %v2653, %v3277
      %v3380 = vadd.f32 %v2654, %v3280
      %v3381 = vadd.f32 %v2655, %v3285
      %v3382 = vadd.f32 %v2656, %v3288
      %v3383 = vadd.f32 %v2657, %v3293
      %v3384 = vadd.f32 %v2658, %v3296
      %v3385 = vadd.f32 %v2659, %v3301
      %v3386 = vadd.f32 %v2660, %v3304
      %v3387 = vadd.f32 %v2661, %v3309
      %v3388 = vadd.f32 %v2662, %v3312
      %v3389 = vadd.f32 %v2663, %v3317
      %v3390 = vadd.f32 %v2664, %v3320
      %v3391 = vadd.f32 %v2665, %v3325
      %v3392 = vadd.f32 %v2666, %v3328
      %v3393 = vadd.f32 %v2667, %v3333
      %v3394 = vadd.f32 %v2668, %v3336
      %v3395 = vadd.f32 %v2669, %v3341
      %v3396 = vadd.f32 %v2670, %v3344
      %v3397 = vadd.f32 %v2671, %v3349
      %v3398 = vadd.f32 %v2672, %v3352
      %v3399 = vadd.f32 %v2673, %v3357
      %v3400 = vadd.f32 %v2674, %v3360
      %v3401 = vadd.f32 %v2675, %v3365
      %v3402 = vadd.f32 %v2676, %v3368
      %v3403 = vld [vmem:[%s755] sm:$0xe]
      %v3404 = vld [vmem:[%s755 + $0xc] sm:$0xe]
      %v3405 = vld [vmem:[%s755 + $0x18] sm:$0xe]
      %v3406 = vld [vmem:[%s755 + $0x24] sm:$0xe]
      %v3407 = vld [vmem:[%s755 + $0x30] sm:$0xe]
      %v3408 = vld [vmem:[%s755 + $0x3c] sm:$0xe]
      %v3409 = vld [vmem:[%s755 + $0x48] sm:$0xe]
      %v3410 = vld [vmem:[%s755 + $0x54] sm:$0xe]
      %v3411 = vld [vmem:[%s755 + $0x60] sm:$0xe]
      %v3412 = vld [vmem:[%s755 + $0x6c] sm:$0xe]
      %v3413 = vld [vmem:[%s755 + $0x78] sm:$0xe]
      %v3414 = vld [vmem:[%s755 + $0x84] sm:$0xe]
      %v3415 = vld [vmem:[%s755 + $0x90] sm:$0xe]
      %v3416 = vld [vmem:[%s755 + $0x9c] sm:$0xe]
      %v3417 = vld [vmem:[%s755 + $0xa8] sm:$0xe]
      %v3418 = vld [vmem:[%s755 + $0xb4] sm:$0xe]
      %v3467 = vrot.slane %v3403, 5
      %v3468 = vrot.slane %v3467, 4
      %v3469 = vrot.slane %v2678, 5
      %v3470 = vsel %vm1912, %v3468, %v3469
      %v3471 = vrot.slane %v3469, 4
      %v3472 = vrot.slane %v2679, 5
      %v3473 = vsel %vm1912, %v3471, %v3472
      %v3474 = vrot.slane %v3404, 5
      %v3475 = vrot.slane %v3474, 4
      %v3476 = vrot.slane %v2681, 5
      %v3477 = vsel %vm1912, %v3475, %v3476
      %v3478 = vrot.slane %v3476, 4
      %v3479 = vrot.slane %v2682, 5
      %v3480 = vsel %vm1912, %v3478, %v3479
      %v3481 = vrot.slane %v3405, 5
      %v3482 = vrot.slane %v3481, 4
      %v3483 = vrot.slane %v2684, 5
      %v3484 = vsel %vm1912, %v3482, %v3483
      %v3485 = vrot.slane %v3483, 4
      %v3486 = vrot.slane %v2685, 5
      %v3487 = vsel %vm1912, %v3485, %v3486
      %v3488 = vrot.slane %v3406, 5
      %v3489 = vrot.slane %v3488, 4
      %v3490 = vrot.slane %v2687, 5
      %v3491 = vsel %vm1912, %v3489, %v3490
      %v3492 = vrot.slane %v3490, 4
      %v3493 = vrot.slane %v2688, 5
      %v3494 = vsel %vm1912, %v3492, %v3493
      %v3495 = vrot.slane %v3407, 5
      %v3496 = vrot.slane %v3495, 4
      %v3497 = vrot.slane %v2690, 5
      %v3498 = vsel %vm1912, %v3496, %v3497
      %v3499 = vrot.slane %v3497, 4
      %v3500 = vrot.slane %v2691, 5
      %v3501 = vsel %vm1912, %v3499, %v3500
      %v3502 = vrot.slane %v3408, 5
      %v3503 = vrot.slane %v3502, 4
      %v3504 = vrot.slane %v2693, 5
      %v3505 = vsel %vm1912, %v3503, %v3504
      %v3506 = vrot.slane %v3504, 4
      %v3507 = vrot.slane %v2694, 5
      %v3508 = vsel %vm1912, %v3506, %v3507
      %v3509 = vrot.slane %v3409, 5
      %v3510 = vrot.slane %v3509, 4
      %v3511 = vrot.slane %v2696, 5
      %v3512 = vsel %vm1912, %v3510, %v3511
      %v3513 = vrot.slane %v3511, 4
      %v3514 = vrot.slane %v2697, 5
      %v3515 = vsel %vm1912, %v3513, %v3514
      %v3516 = vrot.slane %v3410, 5
      %v3517 = vrot.slane %v3516, 4
      %v3518 = vrot.slane %v2699, 5
      %v3519 = vsel %vm1912, %v3517, %v3518
      %v3520 = vrot.slane %v3518, 4
      %v3521 = vrot.slane %v2700, 5
      %v3522 = vsel %vm1912, %v3520, %v3521
      %v3523 = vrot.slane %v3411, 5
      %v3524 = vrot.slane %v3523, 4
      %v3525 = vrot.slane %v2702, 5
      %v3526 = vsel %vm1912, %v3524, %v3525
      %v3527 = vrot.slane %v3525, 4
      %v3528 = vrot.slane %v2703, 5
      %v3529 = vsel %vm1912, %v3527, %v3528
      %v3530 = vrot.slane %v3412, 5
      %v3531 = vrot.slane %v3530, 4
      %v3532 = vrot.slane %v2705, 5
      %v3533 = vsel %vm1912, %v3531, %v3532
      %v3534 = vrot.slane %v3532, 4
      %v3535 = vrot.slane %v2706, 5
      %v3536 = vsel %vm1912, %v3534, %v3535
      %v3537 = vrot.slane %v3413, 5
      %v3538 = vrot.slane %v3537, 4
      %v3539 = vrot.slane %v2708, 5
      %v3540 = vsel %vm1912, %v3538, %v3539
      %v3541 = vrot.slane %v3539, 4
      %v3542 = vrot.slane %v2709, 5
      %v3543 = vsel %vm1912, %v3541, %v3542
      %v3544 = vrot.slane %v3414, 5
      %v3545 = vrot.slane %v3544, 4
      %v3546 = vrot.slane %v2711, 5
      %v3547 = vsel %vm1912, %v3545, %v3546
      %v3548 = vrot.slane %v3546, 4
      %v3549 = vrot.slane %v2712, 5
      %v3550 = vsel %vm1912, %v3548, %v3549
      %v3551 = vrot.slane %v3415, 5
      %v3552 = vrot.slane %v3551, 4
      %v3553 = vrot.slane %v2714, 5
      %v3554 = vsel %vm1912, %v3552, %v3553
      %v3555 = vrot.slane %v3553, 4
      %v3556 = vrot.slane %v2715, 5
      %v3557 = vsel %vm1912, %v3555, %v3556
      %v3558 = vrot.slane %v3416, 5
      %v3559 = vrot.slane %v3558, 4
      %v3560 = vrot.slane %v2717, 5
      %v3561 = vsel %vm1912, %v3559, %v3560
      %v3562 = vrot.slane %v3560, 4
      %v3563 = vrot.slane %v2718, 5
      %v3564 = vsel %vm1912, %v3562, %v3563
      %v3565 = vrot.slane %v3417, 5
      %v3566 = vrot.slane %v3565, 4
      %v3567 = vrot.slane %v2720, 5
      %v3568 = vsel %vm1912, %v3566, %v3567
      %v3569 = vrot.slane %v3567, 4
      %v3570 = vrot.slane %v2721, 5
      %v3571 = vsel %vm1912, %v3569, %v3570
      %v3572 = vrot.slane %v3418, 5
      %v3573 = vrot.slane %v3572, 4
      %v3574 = vrot.slane %v2723, 5
      %v3575 = vsel %vm1912, %v3573, %v3574
      %v3576 = vrot.slane %v3574, 4
      %v3577 = vrot.slane %v2724, 5
      %v3578 = vsel %vm1912, %v3576, %v3577
      %s3579 = scalar_lea.vmem %s1, 20
      %v3580 = vld [vmem:[%s3579] sm:$0xf]
      %v3581 = vunpack.c.l.b16 %v3470
      %v3582 = vunpack.c.l.b16 %v3473
      %v3583 = vunpack.c.l.b16 %v3477
      %v3584 = vunpack.c.l.b16 %v3480
      %v3585 = vunpack.c.l.b16 %v3484
      %v3586 = vunpack.c.l.b16 %v3487
      %v3587 = vunpack.c.l.b16 %v3491
      %v3588 = vunpack.c.l.b16 %v3494
      %v3589 = vunpack.c.l.b16 %v3498
      %v3590 = vunpack.c.l.b16 %v3501
      %v3591 = vunpack.c.l.b16 %v3505
      %v3592 = vunpack.c.l.b16 %v3508
      %v3593 = vunpack.c.l.b16 %v3512
      %v3594 = vunpack.c.l.b16 %v3515
      %v3595 = vunpack.c.l.b16 %v3519
      %v3596 = vunpack.c.l.b16 %v3522
      %v3597 = vunpack.c.l.b16 %v3526
      %v3598 = vunpack.c.l.b16 %v3529
      %v3599 = vunpack.c.l.b16 %v3533
      %v3600 = vunpack.c.l.b16 %v3536
      %v3601 = vunpack.c.l.b16 %v3540
      %v3602 = vunpack.c.l.b16 %v3543
      %v3603 = vunpack.c.l.b16 %v3547
      %v3604 = vunpack.c.l.b16 %v3550
      %v3605 = vunpack.c.l.b16 %v3554
      %v3606 = vunpack.c.l.b16 %v3557
      %v3607 = vunpack.c.l.b16 %v3561
      %v3608 = vunpack.c.l.b16 %v3564
      %v3609 = vunpack.c.l.b16 %v3568
      %v3610 = vunpack.c.l.b16 %v3571
      %v3611 = vunpack.c.l.b16 %v3575
      %v3612 = vunpack.c.l.b16 %v3578
      %v3613 = vpack.c.b16 %v3582, %v3581
      %v3614 = vpack.c.b16 %v3584, %v3583
      %v3615 = vpack.c.b16 %v3586, %v3585
      %v3616 = vpack.c.b16 %v3588, %v3587
      %v3617 = vpack.c.b16 %v3590, %v3589
      %v3618 = vpack.c.b16 %v3592, %v3591
      %v3619 = vpack.c.b16 %v3594, %v3593
      %v3620 = vpack.c.b16 %v3596, %v3595
      %v3621 = vpack.c.b16 %v3598, %v3597
      %v3622 = vpack.c.b16 %v3600, %v3599
      %v3623 = vpack.c.b16 %v3602, %v3601
      %v3624 = vpack.c.b16 %v3604, %v3603
      %v3625 = vpack.c.b16 %v3606, %v3605
      %v3626 = vpack.c.b16 %v3608, %v3607
      %v3627 = vpack.c.b16 %v3610, %v3609
      %v3628 = vpack.c.b16 %v3612, %v3611
      %v3630 = vsel %vm1356, %v3613, 0
      %v3633 = vsel %vm1356, %v3614, 0
      %v3636 = vsel %vm1356, %v3615, 0
      %v3639 = vsel %vm1356, %v3616, 0
      %v3642 = vsel %vm1356, %v3617, 0
      %v3645 = vsel %vm1356, %v3618, 0
      %v3648 = vsel %vm1356, %v3619, 0
      %v3651 = vsel %vm1356, %v3620, 0
      %v3654 = vsel %vm1356, %v3621, 0
      %v3657 = vsel %vm1356, %v3622, 0
      %v3660 = vsel %vm1356, %v3623, 0
      %v3663 = vsel %vm1356, %v3624, 0
      %v3666 = vsel %vm1356, %v3625, 0
      %v3669 = vsel %vm1356, %v3626, 0
      %v3672 = vsel %vm1356, %v3627, 0
      %v3675 = vsel %vm1356, %v3628, 0
      %v3678 = vsel %vm1405, %v3580, 0
      %3680 = vmatprep.subr.bf16.mxu0 0
      %3681 = vmatpush1.bf16.msra.mxu0 0
      %3682 = vmatprep.subr.bf16.mxu0 0
      %3683 = vmatpush1.bf16.msra.mxu0 0
      %3684 = vmatprep.subr.bf16.mxu0 0
      %3685 = vmatpush1.bf16.msra.mxu0 0
      %3686 = vmatprep.subr.bf16.mxu0 0
      %3687 = vmatpush1.bf16.msra.mxu0 0
      %3688 = vmatprep.subr.bf16.mxu0 0
      %3689 = vmatpush1.bf16.msra.mxu0 0
      %3690 = vmatprep.subr.bf16.mxu0 0
      %3691 = vmatpush1.bf16.msra.mxu0 0
      %3692 = vmatprep.subr.bf16.mxu0 0
      %3693 = vmatpush1.bf16.msra.mxu0 0
      %3694 = vmatprep.subr.bf16.mxu0 0
      %3695 = vmatpush1.bf16.msra.mxu0 %v3678
      %3696 = vmatprep.subr.bf16.mxu0 0
      %3697 = vmatpush2.bf16.msra.mxu0 0
      %3698 = vmatprep.subr.bf16.mxu0 0
      %3699 = vmatpush2.bf16.msra.mxu0 0
      %3700 = vmatprep.subr.bf16.mxu0 0
      %3701 = vmatpush2.bf16.msra.mxu0 0
      %3702 = vmatprep.subr.bf16.mxu0 0
      %3703 = vmatpush2.bf16.msra.mxu0 0
      %3704 = vmatprep.subr.bf16.mxu0 0
      %3705 = vmatpush2.bf16.msra.mxu0 0
      %3706 = vmatprep.subr.bf16.mxu0 0
      %3707 = vmatpush2.bf16.msra.mxu0 0
      %3708 = vmatprep.subr.bf16.mxu0 0
      %3709 = vmatpush2.bf16.msra.mxu0 0
      %3710 = vmatprep.subr.bf16.mxu0 0
      %3711 = vmatpush2.bf16.msra.mxu0 0
      %3712 = vmatprep.mubr.bf16.mxu0 0
      %3713 = vmatmul.mubr.bf16.gmra.mxu0 %v3630
      %v3714 = vpop.f32.mrf.mxu0
      %v3715 = vadd.f32 0.0, %v3714
      %v3716 = vpop.f32.mrf.mxu0
      %v3717 = vpop.f32.mrf.mxu0
      %v3718 = vadd.f32 0.0, %v3717
      %v3719 = vpop.f32.mrf.mxu0
      %3720 = vmatprep.mubr.bf16.mxu0 0
      %3721 = vmatmul.mubr.bf16.gmra.mxu0 %v3633
      %v3722 = vpop.f32.mrf.mxu0
      %v3723 = vadd.f32 0.0, %v3722
      %v3724 = vpop.f32.mrf.mxu0
      %v3725 = vpop.f32.mrf.mxu0
      %v3726 = vadd.f32 0.0, %v3725
      %v3727 = vpop.f32.mrf.mxu0
      %3728 = vmatprep.mubr.bf16.mxu0 0
      %3729 = vmatmul.mubr.bf16.gmra.mxu0 %v3636
      %v3730 = vpop.f32.mrf.mxu0
      %v3731 = vadd.f32 0.0, %v3730
      %v3732 = vpop.f32.mrf.mxu0
      %v3733 = vpop.f32.mrf.mxu0
      %v3734 = vadd.f32 0.0, %v3733
      %v3735 = vpop.f32.mrf.mxu0
      %3736 = vmatprep.mubr.bf16.mxu0 0
      %3737 = vmatmul.mubr.bf16.gmra.mxu0 %v3639
      %v3738 = vpop.f32.mrf.mxu0
      %v3739 = vadd.f32 0.0, %v3738
      %v3740 = vpop.f32.mrf.mxu0
      %v3741 = vpop.f32.mrf.mxu0
      %v3742 = vadd.f32 0.0, %v3741
      %v3743 = vpop.f32.mrf.mxu0
      %3744 = vmatprep.mubr.bf16.mxu0 0
      %3745 = vmatmul.mubr.bf16.gmra.mxu0 %v3642
      %v3746 = vpop.f32.mrf.mxu0
      %v3747 = vadd.f32 0.0, %v3746
      %v3748 = vpop.f32.mrf.mxu0
      %v3749 = vpop.f32.mrf.mxu0
      %v3750 = vadd.f32 0.0, %v3749
      %v3751 = vpop.f32.mrf.mxu0
      %3752 = vmatprep.mubr.bf16.mxu0 0
      %3753 = vmatmul.mubr.bf16.gmra.mxu0 %v3645
      %v3754 = vpop.f32.mrf.mxu0
      %v3755 = vadd.f32 0.0, %v3754
      %v3756 = vpop.f32.mrf.mxu0
      %v3757 = vpop.f32.mrf.mxu0
      %v3758 = vadd.f32 0.0, %v3757
      %v3759 = vpop.f32.mrf.mxu0
      %3760 = vmatprep.mubr.bf16.mxu0 0
      %3761 = vmatmul.mubr.bf16.gmra.mxu0 %v3648
      %v3762 = vpop.f32.mrf.mxu0
      %v3763 = vadd.f32 0.0, %v3762
      %v3764 = vpop.f32.mrf.mxu0
      %v3765 = vpop.f32.mrf.mxu0
      %v3766 = vadd.f32 0.0, %v3765
      %v3767 = vpop.f32.mrf.mxu0
      %3768 = vmatprep.mubr.bf16.mxu0 0
      %3769 = vmatmul.mubr.bf16.gmra.mxu0 %v3651
      %v3770 = vpop.f32.mrf.mxu0
      %v3771 = vadd.f32 0.0, %v3770
      %v3772 = vpop.f32.mrf.mxu0
      %v3773 = vpop.f32.mrf.mxu0
      %v3774 = vadd.f32 0.0, %v3773
      %v3775 = vpop.f32.mrf.mxu0
      %3776 = vmatprep.mubr.bf16.mxu0 0
      %3777 = vmatmul.mubr.bf16.gmra.mxu0 %v3654
      %v3778 = vpop.f32.mrf.mxu0
      %v3779 = vadd.f32 0.0, %v3778
      %v3780 = vpop.f32.mrf.mxu0
      %v3781 = vpop.f32.mrf.mxu0
      %v3782 = vadd.f32 0.0, %v3781
      %v3783 = vpop.f32.mrf.mxu0
      %3784 = vmatprep.mubr.bf16.mxu0 0
      %3785 = vmatmul.mubr.bf16.gmra.mxu0 %v3657
      %v3786 = vpop.f32.mrf.mxu0
      %v3787 = vadd.f32 0.0, %v3786
      %v3788 = vpop.f32.mrf.mxu0
      %v3789 = vpop.f32.mrf.mxu0
      %v3790 = vadd.f32 0.0, %v3789
      %v3791 = vpop.f32.mrf.mxu0
      %3792 = vmatprep.mubr.bf16.mxu0 0
      %3793 = vmatmul.mubr.bf16.gmra.mxu0 %v3660
      %v3794 = vpop.f32.mrf.mxu0
      %v3795 = vadd.f32 0.0, %v3794
      %v3796 = vpop.f32.mrf.mxu0
      %v3797 = vpop.f32.mrf.mxu0
      %v3798 = vadd.f32 0.0, %v3797
      %v3799 = vpop.f32.mrf.mxu0
      %3800 = vmatprep.mubr.bf16.mxu0 0
      %3801 = vmatmul.mubr.bf16.gmra.mxu0 %v3663
      %v3802 = vpop.f32.mrf.mxu0
      %v3803 = vadd.f32 0.0, %v3802
      %v3804 = vpop.f32.mrf.mxu0
      %v3805 = vpop.f32.mrf.mxu0
      %v3806 = vadd.f32 0.0, %v3805
      %v3807 = vpop.f32.mrf.mxu0
      %3808 = vmatprep.mubr.bf16.mxu0 0
      %3809 = vmatmul.mubr.bf16.gmra.mxu0 %v3666
      %v3810 = vpop.f32.mrf.mxu0
      %v3811 = vadd.f32 0.0, %v3810
      %v3812 = vpop.f32.mrf.mxu0
      %v3813 = vpop.f32.mrf.mxu0
      %v3814 = vadd.f32 0.0, %v3813
      %v3815 = vpop.f32.mrf.mxu0
      %3816 = vmatprep.mubr.bf16.mxu0 0
      %3817 = vmatmul.mubr.bf16.gmra.mxu0 %v3669
      %v3818 = vpop.f32.mrf.mxu0
      %v3819 = vadd.f32 0.0, %v3818
      %v3820 = vpop.f32.mrf.mxu0
      %v3821 = vpop.f32.mrf.mxu0
      %v3822 = vadd.f32 0.0, %v3821
      %v3823 = vpop.f32.mrf.mxu0
      %3824 = vmatprep.mubr.bf16.mxu0 0
      %3825 = vmatmul.mubr.bf16.gmra.mxu0 %v3672
      %v3826 = vpop.f32.mrf.mxu0
      %v3827 = vadd.f32 0.0, %v3826
      %v3828 = vpop.f32.mrf.mxu0
      %v3829 = vpop.f32.mrf.mxu0
      %v3830 = vadd.f32 0.0, %v3829
      %v3831 = vpop.f32.mrf.mxu0
      %3832 = vmatprep.mubr.bf16.mxu0 0
      %3833 = vmatmul.mubr.bf16.gmra.mxu0 %v3675
      %v3834 = vpop.f32.mrf.mxu0
      %v3835 = vadd.f32 0.0, %v3834
      %v3836 = vpop.f32.mrf.mxu0
      %v3837 = vpop.f32.mrf.mxu0
      %v3838 = vadd.f32 0.0, %v3837
      %v3839 = vpop.f32.mrf.mxu0
      %3840 = vdwg.mxu0
      %v3841 = vadd.f32 %v3371, %v3715
      %v3842 = vadd.f32 %v3372, %v3718
      %v3843 = vadd.f32 %v3373, %v3723
      %v3844 = vadd.f32 %v3374, %v3726
      %v3845 = vadd.f32 %v3375, %v3731
      %v3846 = vadd.f32 %v3376, %v3734
      %v3847 = vadd.f32 %v3377, %v3739
      %v3848 = vadd.f32 %v3378, %v3742
      %v3849 = vadd.f32 %v3379, %v3747
      %v3850 = vadd.f32 %v3380, %v3750
      %v3851 = vadd.f32 %v3381, %v3755
      %v3852 = vadd.f32 %v3382, %v3758
      %v3853 = vadd.f32 %v3383, %v3763
      %v3854 = vadd.f32 %v3384, %v3766
      %v3855 = vadd.f32 %v3385, %v3771
      %v3856 = vadd.f32 %v3386, %v3774
      %v3857 = vadd.f32 %v3387, %v3779
      %v3858 = vadd.f32 %v3388, %v3782
      %v3859 = vadd.f32 %v3389, %v3787
      %v3860 = vadd.f32 %v3390, %v3790
      %v3861 = vadd.f32 %v3391, %v3795
      %v3862 = vadd.f32 %v3392, %v3798
      %v3863 = vadd.f32 %v3393, %v3803
      %v3864 = vadd.f32 %v3394, %v3806
      %v3865 = vadd.f32 %v3395, %v3811
      %v3866 = vadd.f32 %v3396, %v3814
      %v3867 = vadd.f32 %v3397, %v3819
      %v3868 = vadd.f32 %v3398, %v3822
      %v3869 = vadd.f32 %v3399, %v3827
      %v3870 = vadd.f32 %v3400, %v3830
      %v3871 = vadd.f32 %v3401, %v3835
      %v3872 = vadd.f32 %v3402, %v3838
      %s3873 = scalar_lea.vmem [#allocation2], 24
      %v3874 = vld [vmem:[%s3873] sm:$0xf]
      %v3875 = vld [vmem:[%s3873 + $0x4] sm:$0xf]
      %v3876 = vld [vmem:[%s3873 + $0xc] sm:$0xf]
      %v3877 = vld [vmem:[%s3873 + $0x10] sm:$0xf]
      %v3878 = vld [vmem:[%s3873 + $0x18] sm:$0xf]
      %v3879 = vld [vmem:[%s3873 + $0x1c] sm:$0xf]
      %v3880 = vld [vmem:[%s3873 + $0x24] sm:$0xf]
      %v3881 = vld [vmem:[%s3873 + $0x28] sm:$0xf]
      %v3882 = vld [vmem:[%s3873 + $0x30] sm:$0xf]
      %v3883 = vld [vmem:[%s3873 + $0x34] sm:$0xf]
      %v3884 = vld [vmem:[%s3873 + $0x3c] sm:$0xf]
      %v3885 = vld [vmem:[%s3873 + $0x40] sm:$0xf]
      %v3886 = vld [vmem:[%s3873 + $0x48] sm:$0xf]
      %v3887 = vld [vmem:[%s3873 + $0x4c] sm:$0xf]
      %v3888 = vld [vmem:[%s3873 + $0x54] sm:$0xf]
      %v3889 = vld [vmem:[%s3873 + $0x58] sm:$0xf]
      %v3890 = vld [vmem:[%s3873 + $0x60] sm:$0xf]
      %v3891 = vld [vmem:[%s3873 + $0x64] sm:$0xf]
      %v3892 = vld [vmem:[%s3873 + $0x6c] sm:$0xf]
      %v3893 = vld [vmem:[%s3873 + $0x70] sm:$0xf]
      %v3894 = vld [vmem:[%s3873 + $0x78] sm:$0xf]
      %v3895 = vld [vmem:[%s3873 + $0x7c] sm:$0xf]
      %v3896 = vld [vmem:[%s3873 + $0x84] sm:$0xf]
      %v3897 = vld [vmem:[%s3873 + $0x88] sm:$0xf]
      %v3898 = vld [vmem:[%s3873 + $0x90] sm:$0xf]
      %v3899 = vld [vmem:[%s3873 + $0x94] sm:$0xf]
      %v3900 = vld [vmem:[%s3873 + $0x9c] sm:$0xf]
      %v3901 = vld [vmem:[%s3873 + $0xa0] sm:$0xf]
      %v3902 = vld [vmem:[%s3873 + $0xa8] sm:$0xf]
      %v3903 = vld [vmem:[%s3873 + $0xac] sm:$0xf]
      %v3904 = vld [vmem:[%s3873 + $0xb4] sm:$0xf]
      %v3905 = vld [vmem:[%s3873 + $0xb8] sm:$0xf]
      %s3906 = scalar_lea.vmem %s1, 24
      %v3907 = vld [vmem:[%s3906] sm:$0xf]
      %v3940 = vunpack.c.l.b16 %v3874
      %v3941 = vunpack.c.l.b16 %v3875
      %v3942 = vunpack.c.l.b16 %v3876
      %v3943 = vunpack.c.l.b16 %v3877
      %v3944 = vunpack.c.l.b16 %v3878
      %v3945 = vunpack.c.l.b16 %v3879
      %v3946 = vunpack.c.l.b16 %v3880
      %v3947 = vunpack.c.l.b16 %v3881
      %v3948 = vunpack.c.l.b16 %v3882
      %v3949 = vunpack.c.l.b16 %v3883
      %v3950 = vunpack.c.l.b16 %v3884
      %v3951 = vunpack.c.l.b16 %v3885
      %v3952 = vunpack.c.l.b16 %v3886
      %v3953 = vunpack.c.l.b16 %v3887
      %v3954 = vunpack.c.l.b16 %v3888
      %v3955 = vunpack.c.l.b16 %v3889
      %v3956 = vunpack.c.l.b16 %v3890
      %v3957 = vunpack.c.l.b16 %v3891
      %v3958 = vunpack.c.l.b16 %v3892
      %v3959 = vunpack.c.l.b16 %v3893
      %v3960 = vunpack.c.l.b16 %v3894
      %v3961 = vunpack.c.l.b16 %v3895
      %v3962 = vunpack.c.l.b16 %v3896
      %v3963 = vunpack.c.l.b16 %v3897
      %v3964 = vunpack.c.l.b16 %v3898
      %v3965 = vunpack.c.l.b16 %v3899
      %v3966 = vunpack.c.l.b16 %v3900
      %v3967 = vunpack.c.l.b16 %v3901
      %v3968 = vunpack.c.l.b16 %v3902
      %v3969 = vunpack.c.l.b16 %v3903
      %v3970 = vunpack.c.l.b16 %v3904
      %v3971 = vunpack.c.l.b16 %v3905
      %v3972 = vpack.c.b16 %v3941, %v3940
      %v3973 = vpack.c.b16 %v3943, %v3942
      %v3974 = vpack.c.b16 %v3945, %v3944
      %v3975 = vpack.c.b16 %v3947, %v3946
      %v3976 = vpack.c.b16 %v3949, %v3948
      %v3977 = vpack.c.b16 %v3951, %v3950
      %v3978 = vpack.c.b16 %v3953, %v3952
      %v3979 = vpack.c.b16 %v3955, %v3954
      %v3980 = vpack.c.b16 %v3957, %v3956
      %v3981 = vpack.c.b16 %v3959, %v3958
      %v3982 = vpack.c.b16 %v3961, %v3960
      %v3983 = vpack.c.b16 %v3963, %v3962
      %v3984 = vpack.c.b16 %v3965, %v3964
      %v3985 = vpack.c.b16 %v3967, %v3966
      %v3986 = vpack.c.b16 %v3969, %v3968
      %v3987 = vpack.c.b16 %v3971, %v3970
      %v3989 = vsel %vm1356, %v3972, 0
      %v3992 = vsel %vm1356, %v3973, 0
      %v3995 = vsel %vm1356, %v3974, 0
      %v3998 = vsel %vm1356, %v3975, 0
      %v4001 = vsel %vm1356, %v3976, 0
      %v4004 = vsel %vm1356, %v3977, 0
      %v4007 = vsel %vm1356, %v3978, 0
      %v4010 = vsel %vm1356, %v3979, 0
      %v4013 = vsel %vm1356, %v3980, 0
      %v4016 = vsel %vm1356, %v3981, 0
      %v4019 = vsel %vm1356, %v3982, 0
      %v4022 = vsel %vm1356, %v3983, 0
      %v4025 = vsel %vm1356, %v3984, 0
      %v4028 = vsel %vm1356, %v3985, 0
      %v4031 = vsel %vm1356, %v3986, 0
      %v4034 = vsel %vm1356, %v3987, 0
      %v4037 = vsel %vm1405, %v3907, 0
      %4039 = vmatprep.subr.bf16.mxu0 0
      %4040 = vmatpush1.bf16.msra.mxu0 0
      %4041 = vmatprep.subr.bf16.mxu0 0
      %4042 = vmatpush1.bf16.msra.mxu0 0
      %4043 = vmatprep.subr.bf16.mxu0 0
      %4044 = vmatpush1.bf16.msra.mxu0 0
      %4045 = vmatprep.subr.bf16.mxu0 0
      %4046 = vmatpush1.bf16.msra.mxu0 0
      %4047 = vmatprep.subr.bf16.mxu0 0
      %4048 = vmatpush1.bf16.msra.mxu0 0
      %4049 = vmatprep.subr.bf16.mxu0 0
      %4050 = vmatpush1.bf16.msra.mxu0 0
      %4051 = vmatprep.subr.bf16.mxu0 0
      %4052 = vmatpush1.bf16.msra.mxu0 0
      %4053 = vmatprep.subr.bf16.mxu0 0
      %4054 = vmatpush1.bf16.msra.mxu0 %v4037
      %4055 = vmatprep.subr.bf16.mxu0 0
      %4056 = vmatpush2.bf16.msra.mxu0 0
      %4057 = vmatprep.subr.bf16.mxu0 0
      %4058 = vmatpush2.bf16.msra.mxu0 0
      %4059 = vmatprep.subr.bf16.mxu0 0
      %4060 = vmatpush2.bf16.msra.mxu0 0
      %4061 = vmatprep.subr.bf16.mxu0 0
      %4062 = vmatpush2.bf16.msra.mxu0 0
      %4063 = vmatprep.subr.bf16.mxu0 0
      %4064 = vmatpush2.bf16.msra.mxu0 0
      %4065 = vmatprep.subr.bf16.mxu0 0
      %4066 = vmatpush2.bf16.msra.mxu0 0
      %4067 = vmatprep.subr.bf16.mxu0 0
      %4068 = vmatpush2.bf16.msra.mxu0 0
      %4069 = vmatprep.subr.bf16.mxu0 0
      %4070 = vmatpush2.bf16.msra.mxu0 0
      %4071 = vmatprep.mubr.bf16.mxu0 0
      %4072 = vmatmul.mubr.bf16.gmra.mxu0 %v3989
      %v4073 = vpop.f32.mrf.mxu0
      %v4074 = vadd.f32 0.0, %v4073
      %v4075 = vpop.f32.mrf.mxu0
      %v4076 = vpop.f32.mrf.mxu0
      %v4077 = vadd.f32 0.0, %v4076
      %v4078 = vpop.f32.mrf.mxu0
      %4079 = vmatprep.mubr.bf16.mxu0 0
      %4080 = vmatmul.mubr.bf16.gmra.mxu0 %v3992
      %v4081 = vpop.f32.mrf.mxu0
      %v4082 = vadd.f32 0.0, %v4081
      %v4083 = vpop.f32.mrf.mxu0
      %v4084 = vpop.f32.mrf.mxu0
      %v4085 = vadd.f32 0.0, %v4084
      %v4086 = vpop.f32.mrf.mxu0
      %4087 = vmatprep.mubr.bf16.mxu0 0
      %4088 = vmatmul.mubr.bf16.gmra.mxu0 %v3995
      %v4089 = vpop.f32.mrf.mxu0
      %v4090 = vadd.f32 0.0, %v4089
      %v4091 = vpop.f32.mrf.mxu0
      %v4092 = vpop.f32.mrf.mxu0
      %v4093 = vadd.f32 0.0, %v4092
      %v4094 = vpop.f32.mrf.mxu0
      %4095 = vmatprep.mubr.bf16.mxu0 0
      %4096 = vmatmul.mubr.bf16.gmra.mxu0 %v3998
      %v4097 = vpop.f32.mrf.mxu0
      %v4098 = vadd.f32 0.0, %v4097
      %v4099 = vpop.f32.mrf.mxu0
      %v4100 = vpop.f32.mrf.mxu0
      %v4101 = vadd.f32 0.0, %v4100
      %v4102 = vpop.f32.mrf.mxu0
      %4103 = vmatprep.mubr.bf16.mxu0 0
      %4104 = vmatmul.mubr.bf16.gmra.mxu0 %v4001
      %v4105 = vpop.f32.mrf.mxu0
      %v4106 = vadd.f32 0.0, %v4105
      %v4107 = vpop.f32.mrf.mxu0
      %v4108 = vpop.f32.mrf.mxu0
      %v4109 = vadd.f32 0.0, %v4108
      %v4110 = vpop.f32.mrf.mxu0
      %4111 = vmatprep.mubr.bf16.mxu0 0
      %4112 = vmatmul.mubr.bf16.gmra.mxu0 %v4004
      %v4113 = vpop.f32.mrf.mxu0
      %v4114 = vadd.f32 0.0, %v4113
      %v4115 = vpop.f32.mrf.mxu0
      %v4116 = vpop.f32.mrf.mxu0
      %v4117 = vadd.f32 0.0, %v4116
      %v4118 = vpop.f32.mrf.mxu0
      %4119 = vmatprep.mubr.bf16.mxu0 0
      %4120 = vmatmul.mubr.bf16.gmra.mxu0 %v4007
      %v4121 = vpop.f32.mrf.mxu0
      %v4122 = vadd.f32 0.0, %v4121
      %v4123 = vpop.f32.mrf.mxu0
      %v4124 = vpop.f32.mrf.mxu0
      %v4125 = vadd.f32 0.0, %v4124
      %v4126 = vpop.f32.mrf.mxu0
      %4127 = vmatprep.mubr.bf16.mxu0 0
      %4128 = vmatmul.mubr.bf16.gmra.mxu0 %v4010
      %v4129 = vpop.f32.mrf.mxu0
      %v4130 = vadd.f32 0.0, %v4129
      %v4131 = vpop.f32.mrf.mxu0
      %v4132 = vpop.f32.mrf.mxu0
      %v4133 = vadd.f32 0.0, %v4132
      %v4134 = vpop.f32.mrf.mxu0
      %4135 = vmatprep.mubr.bf16.mxu0 0
      %4136 = vmatmul.mubr.bf16.gmra.mxu0 %v4013
      %v4137 = vpop.f32.mrf.mxu0
      %v4138 = vadd.f32 0.0, %v4137
      %v4139 = vpop.f32.mrf.mxu0
      %v4140 = vpop.f32.mrf.mxu0
      %v4141 = vadd.f32 0.0, %v4140
      %v4142 = vpop.f32.mrf.mxu0
      %4143 = vmatprep.mubr.bf16.mxu0 0
      %4144 = vmatmul.mubr.bf16.gmra.mxu0 %v4016
      %v4145 = vpop.f32.mrf.mxu0
      %v4146 = vadd.f32 0.0, %v4145
      %v4147 = vpop.f32.mrf.mxu0
      %v4148 = vpop.f32.mrf.mxu0
      %v4149 = vadd.f32 0.0, %v4148
      %v4150 = vpop.f32.mrf.mxu0
      %4151 = vmatprep.mubr.bf16.mxu0 0
      %4152 = vmatmul.mubr.bf16.gmra.mxu0 %v4019
      %v4153 = vpop.f32.mrf.mxu0
      %v4154 = vadd.f32 0.0, %v4153
      %v4155 = vpop.f32.mrf.mxu0
      %v4156 = vpop.f32.mrf.mxu0
      %v4157 = vadd.f32 0.0, %v4156
      %v4158 = vpop.f32.mrf.mxu0
      %4159 = vmatprep.mubr.bf16.mxu0 0
      %4160 = vmatmul.mubr.bf16.gmra.mxu0 %v4022
      %v4161 = vpop.f32.mrf.mxu0
      %v4162 = vadd.f32 0.0, %v4161
      %v4163 = vpop.f32.mrf.mxu0
      %v4164 = vpop.f32.mrf.mxu0
      %v4165 = vadd.f32 0.0, %v4164
      %v4166 = vpop.f32.mrf.mxu0
      %4167 = vmatprep.mubr.bf16.mxu0 0
      %4168 = vmatmul.mubr.bf16.gmra.mxu0 %v4025
      %v4169 = vpop.f32.mrf.mxu0
      %v4170 = vadd.f32 0.0, %v4169
      %v4171 = vpop.f32.mrf.mxu0
      %v4172 = vpop.f32.mrf.mxu0
      %v4173 = vadd.f32 0.0, %v4172
      %v4174 = vpop.f32.mrf.mxu0
      %4175 = vmatprep.mubr.bf16.mxu0 0
      %4176 = vmatmul.mubr.bf16.gmra.mxu0 %v4028
      %v4177 = vpop.f32.mrf.mxu0
      %v4178 = vadd.f32 0.0, %v4177
      %v4179 = vpop.f32.mrf.mxu0
      %v4180 = vpop.f32.mrf.mxu0
      %v4181 = vadd.f32 0.0, %v4180
      %v4182 = vpop.f32.mrf.mxu0
      %4183 = vmatprep.mubr.bf16.mxu0 0
      %4184 = vmatmul.mubr.bf16.gmra.mxu0 %v4031
      %v4185 = vpop.f32.mrf.mxu0
      %v4186 = vadd.f32 0.0, %v4185
      %v4187 = vpop.f32.mrf.mxu0
      %v4188 = vpop.f32.mrf.mxu0
      %v4189 = vadd.f32 0.0, %v4188
      %v4190 = vpop.f32.mrf.mxu0
      %4191 = vmatprep.mubr.bf16.mxu0 0
      %4192 = vmatmul.mubr.bf16.gmra.mxu0 %v4034
      %v4193 = vpop.f32.mrf.mxu0
      %v4194 = vadd.f32 0.0, %v4193
      %v4195 = vpop.f32.mrf.mxu0
      %v4196 = vpop.f32.mrf.mxu0
      %v4197 = vadd.f32 0.0, %v4196
      %v4198 = vpop.f32.mrf.mxu0
      %4199 = vdwg.mxu0
      %v4200 = vadd.f32 %v3841, %v4074
      %v4201 = vadd.f32 %v3842, %v4077
      %v4202 = vadd.f32 %v3843, %v4082
      %v4203 = vadd.f32 %v3844, %v4085
      %v4204 = vadd.f32 %v3845, %v4090
      %v4205 = vadd.f32 %v3846, %v4093
      %v4206 = vadd.f32 %v3847, %v4098
      %v4207 = vadd.f32 %v3848, %v4101
      %v4208 = vadd.f32 %v3849, %v4106
      %v4209 = vadd.f32 %v3850, %v4109
      %v4210 = vadd.f32 %v3851, %v4114
      %v4211 = vadd.f32 %v3852, %v4117
      %v4212 = vadd.f32 %v3853, %v4122
      %v4213 = vadd.f32 %v3854, %v4125
      %v4214 = vadd.f32 %v3855, %v4130
      %v4215 = vadd.f32 %v3856, %v4133
      %v4216 = vadd.f32 %v3857, %v4138
      %v4217 = vadd.f32 %v3858, %v4141
      %v4218 = vadd.f32 %v3859, %v4146
      %v4219 = vadd.f32 %v3860, %v4149
      %v4220 = vadd.f32 %v3861, %v4154
      %v4221 = vadd.f32 %v3862, %v4157
      %v4222 = vadd.f32 %v3863, %v4162
      %v4223 = vadd.f32 %v3864, %v4165
      %v4224 = vadd.f32 %v3865, %v4170
      %v4225 = vadd.f32 %v3866, %v4173
      %v4226 = vadd.f32 %v3867, %v4178
      %v4227 = vadd.f32 %v3868, %v4181
      %v4228 = vadd.f32 %v3869, %v4186
      %v4229 = vadd.f32 %v3870, %v4189
      %v4230 = vadd.f32 %v3871, %v4194
      %v4231 = vadd.f32 %v3872, %v4197
      %v4232 = vld [vmem:[%s3873] sm:$0xf]
      %v4233 = vld [vmem:[%s3873 + $0x4] sm:$0xf]
      %v4234 = vld [vmem:[%s3873 + $0x8] sm:$0x1]
      %v4235 = vld [vmem:[%s3873 + $0xc] sm:$0xf]
      %v4236 = vld [vmem:[%s3873 + $0x10] sm:$0xf]
      %v4237 = vld [vmem:[%s3873 + $0x14] sm:$0x1]
      %v4238 = vld [vmem:[%s3873 + $0x18] sm:$0xf]
      %v4239 = vld [vmem:[%s3873 + $0x1c] sm:$0xf]
      %v4240 = vld [vmem:[%s3873 + $0x20] sm:$0x1]
      %v4241 = vld [vmem:[%s3873 + $0x24] sm:$0xf]
      %v4242 = vld [vmem:[%s3873 + $0x28] sm:$0xf]
      %v4243 = vld [vmem:[%s3873 + $0x2c] sm:$0x1]
      %v4244 = vld [vmem:[%s3873 + $0x30] sm:$0xf]
      %v4245 = vld [vmem:[%s3873 + $0x34] sm:$0xf]
      %v4246 = vld [vmem:[%s3873 + $0x38] sm:$0x1]
      %v4247 = vld [vmem:[%s3873 + $0x3c] sm:$0xf]
      %v4248 = vld [vmem:[%s3873 + $0x40] sm:$0xf]
      %v4249 = vld [vmem:[%s3873 + $0x44] sm:$0x1]
      %v4250 = vld [vmem:[%s3873 + $0x48] sm:$0xf]
      %v4251 = vld [vmem:[%s3873 + $0x4c] sm:$0xf]
      %v4252 = vld [vmem:[%s3873 + $0x50] sm:$0x1]
      %v4253 = vld [vmem:[%s3873 + $0x54] sm:$0xf]
      %v4254 = vld [vmem:[%s3873 + $0x58] sm:$0xf]
      %v4255 = vld [vmem:[%s3873 + $0x5c] sm:$0x1]
      %v4256 = vld [vmem:[%s3873 + $0x60] sm:$0xf]
      %v4257 = vld [vmem:[%s3873 + $0x64] sm:$0xf]
      %v4258 = vld [vmem:[%s3873 + $0x68] sm:$0x1]
      %v4259 = vld [vmem:[%s3873 + $0x6c] sm:$0xf]
      %v4260 = vld [vmem:[%s3873 + $0x70] sm:$0xf]
      %v4261 = vld [vmem:[%s3873 + $0x74] sm:$0x1]
      %v4262 = vld [vmem:[%s3873 + $0x78] sm:$0xf]
      %v4263 = vld [vmem:[%s3873 + $0x7c] sm:$0xf]
      %v4264 = vld [vmem:[%s3873 + $0x80] sm:$0x1]
      %v4265 = vld [vmem:[%s3873 + $0x84] sm:$0xf]
      %v4266 = vld [vmem:[%s3873 + $0x88] sm:$0xf]
      %v4267 = vld [vmem:[%s3873 + $0x8c] sm:$0x1]
      %v4268 = vld [vmem:[%s3873 + $0x90] sm:$0xf]
      %v4269 = vld [vmem:[%s3873 + $0x94] sm:$0xf]
      %v4270 = vld [vmem:[%s3873 + $0x98] sm:$0x1]
      %v4271 = vld [vmem:[%s3873 + $0x9c] sm:$0xf]
      %v4272 = vld [vmem:[%s3873 + $0xa0] sm:$0xf]
      %v4273 = vld [vmem:[%s3873 + $0xa4] sm:$0x1]
      %v4274 = vld [vmem:[%s3873 + $0xa8] sm:$0xf]
      %v4275 = vld [vmem:[%s3873 + $0xac] sm:$0xf]
      %v4276 = vld [vmem:[%s3873 + $0xb0] sm:$0x1]
      %v4277 = vld [vmem:[%s3873 + $0xb4] sm:$0xf]
      %v4278 = vld [vmem:[%s3873 + $0xb8] sm:$0xf]
      %v4279 = vld [vmem:[%s3873 + $0xbc] sm:$0x1]
      %v4281 = vshrl.u32 %v4232, 16
      %v4283 = vrot.slane %v4281, 4
      %v4284 = vshll.u32 %v4232, 16
      %v4286 = vrot.slane %v4284, 5
      %v4287 = vor.u32 %v4283, %v4286
      %v4288 = vrot.slane %v4287, 4
      %v4290 = vshll.u32 %v4233, 16
      %v4292 = vrot.slane %v4290, 5
      %v4293 = vsel %vm921, %v4288, %v4292
      %v4294 = vshrl.u32 %v4233, 16
      %v4296 = vrot.slane %v4294, 4
      %v4297 = vor.u32 %v4296, %v4292
      %v4298 = vrot.slane %v4297, 4
      %v4300 = vshll.u32 %v4234, 16
      %v4302 = vrot.slane %v4300, 5
      %v4303 = vsel %vm921, %v4298, %v4302
      %v4305 = vshrl.u32 %v4235, 16
      %v4307 = vrot.slane %v4305, 4
      %v4308 = vshll.u32 %v4235, 16
      %v4310 = vrot.slane %v4308, 5
      %v4311 = vor.u32 %v4307, %v4310
      %v4312 = vrot.slane %v4311, 4
      %v4314 = vshll.u32 %v4236, 16
      %v4316 = vrot.slane %v4314, 5
      %v4317 = vsel %vm921, %v4312, %v4316
      %v4318 = vshrl.u32 %v4236, 16
      %v4320 = vrot.slane %v4318, 4
      %v4321 = vor.u32 %v4320, %v4316
      %v4322 = vrot.slane %v4321, 4
      %v4324 = vshll.u32 %v4237, 16
      %v4326 = vrot.slane %v4324, 5
      %v4327 = vsel %vm921, %v4322, %v4326
      %v4329 = vshrl.u32 %v4238, 16
      %v4331 = vrot.slane %v4329, 4
      %v4332 = vshll.u32 %v4238, 16
      %v4334 = vrot.slane %v4332, 5
      %v4335 = vor.u32 %v4331, %v4334
      %v4336 = vrot.slane %v4335, 4
      %v4338 = vshll.u32 %v4239, 16
      %v4340 = vrot.slane %v4338, 5
      %v4341 = vsel %vm921, %v4336, %v4340
      %v4342 = vshrl.u32 %v4239, 16
      %v4344 = vrot.slane %v4342, 4
      %v4345 = vor.u32 %v4344, %v4340
      %v4346 = vrot.slane %v4345, 4
      %v4348 = vshll.u32 %v4240, 16
      %v4350 = vrot.slane %v4348, 5
      %v4351 = vsel %vm921, %v4346, %v4350
      %v4353 = vshrl.u32 %v4241, 16
      %v4355 = vrot.slane %v4353, 4
      %v4356 = vshll.u32 %v4241, 16
      %v4358 = vrot.slane %v4356, 5
      %v4359 = vor.u32 %v4355, %v4358
      %v4360 = vrot.slane %v4359, 4
      %v4362 = vshll.u32 %v4242, 16
      %v4364 = vrot.slane %v4362, 5
      %v4365 = vsel %vm921, %v4360, %v4364
      %v4366 = vshrl.u32 %v4242, 16
      %v4368 = vrot.slane %v4366, 4
      %v4369 = vor.u32 %v4368, %v4364
      %v4370 = vrot.slane %v4369, 4
      %v4372 = vshll.u32 %v4243, 16
      %v4374 = vrot.slane %v4372, 5
      %v4375 = vsel %vm921, %v4370, %v4374
      %v4377 = vshrl.u32 %v4244, 16
      %v4379 = vrot.slane %v4377, 4
      %v4380 = vshll.u32 %v4244, 16
      %v4382 = vrot.slane %v4380, 5
      %v4383 = vor.u32 %v4379, %v4382
      %v4384 = vrot.slane %v4383, 4
      %v4386 = vshll.u32 %v4245, 16
      %v4388 = vrot.slane %v4386, 5
      %v4389 = vsel %vm921, %v4384, %v4388
      %v4390 = vshrl.u32 %v4245, 16
      %v4392 = vrot.slane %v4390, 4
      %v4393 = vor.u32 %v4392, %v4388
      %v4394 = vrot.slane %v4393, 4
      %v4396 = vshll.u32 %v4246, 16
      %v4398 = vrot.slane %v4396, 5
      %v4399 = vsel %vm921, %v4394, %v4398
      %v4401 = vshrl.u32 %v4247, 16
      %v4403 = vrot.slane %v4401, 4
      %v4404 = vshll.u32 %v4247, 16
      %v4406 = vrot.slane %v4404, 5
      %v4407 = vor.u32 %v4403, %v4406
      %v4408 = vrot.slane %v4407, 4
      %v4410 = vshll.u32 %v4248, 16
      %v4412 = vrot.slane %v4410, 5
      %v4413 = vsel %vm921, %v4408, %v4412
      %v4414 = vshrl.u32 %v4248, 16
      %v4416 = vrot.slane %v4414, 4
      %v4417 = vor.u32 %v4416, %v4412
      %v4418 = vrot.slane %v4417, 4
      %v4420 = vshll.u32 %v4249, 16
      %v4422 = vrot.slane %v4420, 5
      %v4423 = vsel %vm921, %v4418, %v4422
      %v4425 = vshrl.u32 %v4250, 16
      %v4427 = vrot.slane %v4425, 4
      %v4428 = vshll.u32 %v4250, 16
      %v4430 = vrot.slane %v4428, 5
      %v4431 = vor.u32 %v4427, %v4430
      %v4432 = vrot.slane %v4431, 4
      %v4434 = vshll.u32 %v4251, 16
      %v4436 = vrot.slane %v4434, 5
      %v4437 = vsel %vm921, %v4432, %v4436
      %v4438 = vshrl.u32 %v4251, 16
      %v4440 = vrot.slane %v4438, 4
      %v4441 = vor.u32 %v4440, %v4436
      %v4442 = vrot.slane %v4441, 4
      %v4444 = vshll.u32 %v4252, 16
      %v4446 = vrot.slane %v4444, 5
      %v4447 = vsel %vm921, %v4442, %v4446
      %v4449 = vshrl.u32 %v4253, 16
      %v4451 = vrot.slane %v4449, 4
      %v4452 = vshll.u32 %v4253, 16
      %v4454 = vrot.slane %v4452, 5
      %v4455 = vor.u32 %v4451, %v4454
      %v4456 = vrot.slane %v4455, 4
      %v4458 = vshll.u32 %v4254, 16
      %v4460 = vrot.slane %v4458, 5
      %v4461 = vsel %vm921, %v4456, %v4460
      %v4462 = vshrl.u32 %v4254, 16
      %v4464 = vrot.slane %v4462, 4
      %v4465 = vor.u32 %v4464, %v4460
      %v4466 = vrot.slane %v4465, 4
      %v4468 = vshll.u32 %v4255, 16
      %v4470 = vrot.slane %v4468, 5
      %v4471 = vsel %vm921, %v4466, %v4470
      %v4473 = vshrl.u32 %v4256, 16
      %v4475 = vrot.slane %v4473, 4
      %v4476 = vshll.u32 %v4256, 16
      %v4478 = vrot.slane %v4476, 5
      %v4479 = vor.u32 %v4475, %v4478
      %v4480 = vrot.slane %v4479, 4
      %v4482 = vshll.u32 %v4257, 16
      %v4484 = vrot.slane %v4482, 5
      %v4485 = vsel %vm921, %v4480, %v4484
      %v4486 = vshrl.u32 %v4257, 16
      %v4488 = vrot.slane %v4486, 4
      %v4489 = vor.u32 %v4488, %v4484
      %v4490 = vrot.slane %v4489, 4
      %v4492 = vshll.u32 %v4258, 16
      %v4494 = vrot.slane %v4492, 5
      %v4495 = vsel %vm921, %v4490, %v4494
      %v4497 = vshrl.u32 %v4259, 16
      %v4499 = vrot.slane %v4497, 4
      %v4500 = vshll.u32 %v4259, 16
      %v4502 = vrot.slane %v4500, 5
      %v4503 = vor.u32 %v4499, %v4502
      %v4504 = vrot.slane %v4503, 4
      %v4506 = vshll.u32 %v4260, 16
      %v4508 = vrot.slane %v4506, 5
      %v4509 = vsel %vm921, %v4504, %v4508
      %v4510 = vshrl.u32 %v4260, 16
      %v4512 = vrot.slane %v4510, 4
      %v4513 = vor.u32 %v4512, %v4508
      %v4514 = vrot.slane %v4513, 4
      %v4516 = vshll.u32 %v4261, 16
      %v4518 = vrot.slane %v4516, 5
      %v4519 = vsel %vm921, %v4514, %v4518
      %v4521 = vshrl.u32 %v4262, 16
      %v4523 = vrot.slane %v4521, 4
      %v4524 = vshll.u32 %v4262, 16
      %v4526 = vrot.slane %v4524, 5
      %v4527 = vor.u32 %v4523, %v4526
      %v4528 = vrot.slane %v4527, 4
      %v4530 = vshll.u32 %v4263, 16
      %v4532 = vrot.slane %v4530, 5
      %v4533 = vsel %vm921, %v4528, %v4532
      %v4534 = vshrl.u32 %v4263, 16
      %v4536 = vrot.slane %v4534, 4
      %v4537 = vor.u32 %v4536, %v4532
      %v4538 = vrot.slane %v4537, 4
      %v4540 = vshll.u32 %v4264, 16
      %v4542 = vrot.slane %v4540, 5
      %v4543 = vsel %vm921, %v4538, %v4542
      %v4545 = vshrl.u32 %v4265, 16
      %v4547 = vrot.slane %v4545, 4
      %v4548 = vshll.u32 %v4265, 16
      %v4550 = vrot.slane %v4548, 5
      %v4551 = vor.u32 %v4547, %v4550
      %v4552 = vrot.slane %v4551, 4
      %v4554 = vshll.u32 %v4266, 16
      %v4556 = vrot.slane %v4554, 5
      %v4557 = vsel %vm921, %v4552, %v4556
      %v4558 = vshrl.u32 %v4266, 16
      %v4560 = vrot.slane %v4558, 4
      %v4561 = vor.u32 %v4560, %v4556
      %v4562 = vrot.slane %v4561, 4
      %v4564 = vshll.u32 %v4267, 16
      %v4566 = vrot.slane %v4564, 5
      %v4567 = vsel %vm921, %v4562, %v4566
      %v4569 = vshrl.u32 %v4268, 16
      %v4571 = vrot.slane %v4569, 4
      %v4572 = vshll.u32 %v4268, 16
      %v4574 = vrot.slane %v4572, 5
      %v4575 = vor.u32 %v4571, %v4574
      %v4576 = vrot.slane %v4575, 4
      %v4578 = vshll.u32 %v4269, 16
      %v4580 = vrot.slane %v4578, 5
      %v4581 = vsel %vm921, %v4576, %v4580
      %v4582 = vshrl.u32 %v4269, 16
      %v4584 = vrot.slane %v4582, 4
      %v4585 = vor.u32 %v4584, %v4580
      %v4586 = vrot.slane %v4585, 4
      %v4588 = vshll.u32 %v4270, 16
      %v4590 = vrot.slane %v4588, 5
      %v4591 = vsel %vm921, %v4586, %v4590
      %v4593 = vshrl.u32 %v4271, 16
      %v4595 = vrot.slane %v4593, 4
      %v4596 = vshll.u32 %v4271, 16
      %v4598 = vrot.slane %v4596, 5
      %v4599 = vor.u32 %v4595, %v4598
      %v4600 = vrot.slane %v4599, 4
      %v4602 = vshll.u32 %v4272, 16
      %v4604 = vrot.slane %v4602, 5
      %v4605 = vsel %vm921, %v4600, %v4604
      %v4606 = vshrl.u32 %v4272, 16
      %v4608 = vrot.slane %v4606, 4
      %v4609 = vor.u32 %v4608, %v4604
      %v4610 = vrot.slane %v4609, 4
      %v4612 = vshll.u32 %v4273, 16
      %v4614 = vrot.slane %v4612, 5
      %v4615 = vsel %vm921, %v4610, %v4614
      %v4617 = vshrl.u32 %v4274, 16
      %v4619 = vrot.slane %v4617, 4
      %v4620 = vshll.u32 %v4274, 16
      %v4622 = vrot.slane %v4620, 5
      %v4623 = vor.u32 %v4619, %v4622
      %v4624 = vrot.slane %v4623, 4
      %v4626 = vshll.u32 %v4275, 16
      %v4628 = vrot.slane %v4626, 5
      %v4629 = vsel %vm921, %v4624, %v4628
      %v4630 = vshrl.u32 %v4275, 16
      %v4632 = vrot.slane %v4630, 4
      %v4633 = vor.u32 %v4632, %v4628
      %v4634 = vrot.slane %v4633, 4
      %v4636 = vshll.u32 %v4276, 16
      %v4638 = vrot.slane %v4636, 5
      %v4639 = vsel %vm921, %v4634, %v4638
      %v4641 = vshrl.u32 %v4277, 16
      %v4643 = vrot.slane %v4641, 4
      %v4644 = vshll.u32 %v4277, 16
      %v4646 = vrot.slane %v4644, 5
      %v4647 = vor.u32 %v4643, %v4646
      %v4648 = vrot.slane %v4647, 4
      %v4650 = vshll.u32 %v4278, 16
      %v4652 = vrot.slane %v4650, 5
      %v4653 = vsel %vm921, %v4648, %v4652
      %v4654 = vshrl.u32 %v4278, 16
      %v4656 = vrot.slane %v4654, 4
      %v4657 = vor.u32 %v4656, %v4652
      %v4658 = vrot.slane %v4657, 4
      %v4660 = vshll.u32 %v4279, 16
      %v4662 = vrot.slane %v4660, 5
      %v4663 = vsel %vm921, %v4658, %v4662
      %s4664 = scalar_lea.vmem %s1, 28
      %v4665 = vld [vmem:[%s4664] sm:$0xf]
      %v4666 = vunpack.c.l.b16 %v4293
      %v4667 = vunpack.c.l.b16 %v4303
      %v4668 = vunpack.c.l.b16 %v4317
      %v4669 = vunpack.c.l.b16 %v4327
      %v4670 = vunpack.c.l.b16 %v4341
      %v4671 = vunpack.c.l.b16 %v4351
      %v4672 = vunpack.c.l.b16 %v4365
      %v4673 = vunpack.c.l.b16 %v4375
      %v4674 = vunpack.c.l.b16 %v4389
      %v4675 = vunpack.c.l.b16 %v4399
      %v4676 = vunpack.c.l.b16 %v4413
      %v4677 = vunpack.c.l.b16 %v4423
      %v4678 = vunpack.c.l.b16 %v4437
      %v4679 = vunpack.c.l.b16 %v4447
      %v4680 = vunpack.c.l.b16 %v4461
      %v4681 = vunpack.c.l.b16 %v4471
      %v4682 = vunpack.c.l.b16 %v4485
      %v4683 = vunpack.c.l.b16 %v4495
      %v4684 = vunpack.c.l.b16 %v4509
      %v4685 = vunpack.c.l.b16 %v4519
      %v4686 = vunpack.c.l.b16 %v4533
      %v4687 = vunpack.c.l.b16 %v4543
      %v4688 = vunpack.c.l.b16 %v4557
      %v4689 = vunpack.c.l.b16 %v4567
      %v4690 = vunpack.c.l.b16 %v4581
      %v4691 = vunpack.c.l.b16 %v4591
      %v4692 = vunpack.c.l.b16 %v4605
      %v4693 = vunpack.c.l.b16 %v4615
      %v4694 = vunpack.c.l.b16 %v4629
      %v4695 = vunpack.c.l.b16 %v4639
      %v4696 = vunpack.c.l.b16 %v4653
      %v4697 = vunpack.c.l.b16 %v4663
      %v4698 = vpack.c.b16 %v4667, %v4666
      %v4699 = vpack.c.b16 %v4669, %v4668
      %v4700 = vpack.c.b16 %v4671, %v4670
      %v4701 = vpack.c.b16 %v4673, %v4672
      %v4702 = vpack.c.b16 %v4675, %v4674
      %v4703 = vpack.c.b16 %v4677, %v4676
      %v4704 = vpack.c.b16 %v4679, %v4678
      %v4705 = vpack.c.b16 %v4681, %v4680
      %v4706 = vpack.c.b16 %v4683, %v4682
      %v4707 = vpack.c.b16 %v4685, %v4684
      %v4708 = vpack.c.b16 %v4687, %v4686
      %v4709 = vpack.c.b16 %v4689, %v4688
      %v4710 = vpack.c.b16 %v4691, %v4690
      %v4711 = vpack.c.b16 %v4693, %v4692
      %v4712 = vpack.c.b16 %v4695, %v4694
      %v4713 = vpack.c.b16 %v4697, %v4696
      %v4715 = vsel %vm1356, %v4698, 0
      %v4718 = vsel %vm1356, %v4699, 0
      %v4721 = vsel %vm1356, %v4700, 0
      %v4724 = vsel %vm1356, %v4701, 0
      %v4727 = vsel %vm1356, %v4702, 0
      %v4730 = vsel %vm1356, %v4703, 0
      %v4733 = vsel %vm1356, %v4704, 0
      %v4736 = vsel %vm1356, %v4705, 0
      %v4739 = vsel %vm1356, %v4706, 0
      %v4742 = vsel %vm1356, %v4707, 0
      %v4745 = vsel %vm1356, %v4708, 0
      %v4748 = vsel %vm1356, %v4709, 0
      %v4751 = vsel %vm1356, %v4710, 0
      %v4754 = vsel %vm1356, %v4711, 0
      %v4757 = vsel %vm1356, %v4712, 0
      %v4760 = vsel %vm1356, %v4713, 0
      %v4763 = vsel %vm1405, %v4665, 0
      %4765 = vmatprep.subr.bf16.mxu0 0
      %4766 = vmatpush1.bf16.msra.mxu0 0
      %4767 = vmatprep.subr.bf16.mxu0 0
      %4768 = vmatpush1.bf16.msra.mxu0 0
      %4769 = vmatprep.subr.bf16.mxu0 0
      %4770 = vmatpush1.bf16.msra.mxu0 0
      %4771 = vmatprep.subr.bf16.mxu0 0
      %4772 = vmatpush1.bf16.msra.mxu0 0
      %4773 = vmatprep.subr.bf16.mxu0 0
      %4774 = vmatpush1.bf16.msra.mxu0 0
      %4775 = vmatprep.subr.bf16.mxu0 0
      %4776 = vmatpush1.bf16.msra.mxu0 0
      %4777 = vmatprep.subr.bf16.mxu0 0
      %4778 = vmatpush1.bf16.msra.mxu0 0
      %4779 = vmatprep.subr.bf16.mxu0 0
      %4780 = vmatpush1.bf16.msra.mxu0 %v4763
      %4781 = vmatprep.subr.bf16.mxu0 0
      %4782 = vmatpush2.bf16.msra.mxu0 0
      %4783 = vmatprep.subr.bf16.mxu0 0
      %4784 = vmatpush2.bf16.msra.mxu0 0
      %4785 = vmatprep.subr.bf16.mxu0 0
      %4786 = vmatpush2.bf16.msra.mxu0 0
      %4787 = vmatprep.subr.bf16.mxu0 0
      %4788 = vmatpush2.bf16.msra.mxu0 0
      %4789 = vmatprep.subr.bf16.mxu0 0
      %4790 = vmatpush2.bf16.msra.mxu0 0
      %4791 = vmatprep.subr.bf16.mxu0 0
      %4792 = vmatpush2.bf16.msra.mxu0 0
      %4793 = vmatprep.subr.bf16.mxu0 0
      %4794 = vmatpush2.bf16.msra.mxu0 0
      %4795 = vmatprep.subr.bf16.mxu0 0
      %4796 = vmatpush2.bf16.msra.mxu0 0
      %4797 = vmatprep.mubr.bf16.mxu0 0
      %4798 = vmatmul.mubr.bf16.gmra.mxu0 %v4715
      %v4799 = vpop.f32.mrf.mxu0
      %v4800 = vadd.f32 0.0, %v4799
      %v4801 = vpop.f32.mrf.mxu0
      %v4802 = vpop.f32.mrf.mxu0
      %v4803 = vadd.f32 0.0, %v4802
      %v4804 = vpop.f32.mrf.mxu0
      %4805 = vmatprep.mubr.bf16.mxu0 0
      %4806 = vmatmul.mubr.bf16.gmra.mxu0 %v4718
      %v4807 = vpop.f32.mrf.mxu0
      %v4808 = vadd.f32 0.0, %v4807
      %v4809 = vpop.f32.mrf.mxu0
      %v4810 = vpop.f32.mrf.mxu0
      %v4811 = vadd.f32 0.0, %v4810
      %v4812 = vpop.f32.mrf.mxu0
      %4813 = vmatprep.mubr.bf16.mxu0 0
      %4814 = vmatmul.mubr.bf16.gmra.mxu0 %v4721
      %v4815 = vpop.f32.mrf.mxu0
      %v4816 = vadd.f32 0.0, %v4815
      %v4817 = vpop.f32.mrf.mxu0
      %v4818 = vpop.f32.mrf.mxu0
      %v4819 = vadd.f32 0.0, %v4818
      %v4820 = vpop.f32.mrf.mxu0
      %4821 = vmatprep.mubr.bf16.mxu0 0
      %4822 = vmatmul.mubr.bf16.gmra.mxu0 %v4724
      %v4823 = vpop.f32.mrf.mxu0
      %v4824 = vadd.f32 0.0, %v4823
      %v4825 = vpop.f32.mrf.mxu0
      %v4826 = vpop.f32.mrf.mxu0
      %v4827 = vadd.f32 0.0, %v4826
      %v4828 = vpop.f32.mrf.mxu0
      %4829 = vmatprep.mubr.bf16.mxu0 0
      %4830 = vmatmul.mubr.bf16.gmra.mxu0 %v4727
      %v4831 = vpop.f32.mrf.mxu0
      %v4832 = vadd.f32 0.0, %v4831
      %v4833 = vpop.f32.mrf.mxu0
      %v4834 = vpop.f32.mrf.mxu0
      %v4835 = vadd.f32 0.0, %v4834
      %v4836 = vpop.f32.mrf.mxu0
      %4837 = vmatprep.mubr.bf16.mxu0 0
      %4838 = vmatmul.mubr.bf16.gmra.mxu0 %v4730
      %v4839 = vpop.f32.mrf.mxu0
      %v4840 = vadd.f32 0.0, %v4839
      %v4841 = vpop.f32.mrf.mxu0
      %v4842 = vpop.f32.mrf.mxu0
      %v4843 = vadd.f32 0.0, %v4842
      %v4844 = vpop.f32.mrf.mxu0
      %4845 = vmatprep.mubr.bf16.mxu0 0
      %4846 = vmatmul.mubr.bf16.gmra.mxu0 %v4733
      %v4847 = vpop.f32.mrf.mxu0
      %v4848 = vadd.f32 0.0, %v4847
      %v4849 = vpop.f32.mrf.mxu0
      %v4850 = vpop.f32.mrf.mxu0
      %v4851 = vadd.f32 0.0, %v4850
      %v4852 = vpop.f32.mrf.mxu0
      %4853 = vmatprep.mubr.bf16.mxu0 0
      %4854 = vmatmul.mubr.bf16.gmra.mxu0 %v4736
      %v4855 = vpop.f32.mrf.mxu0
      %v4856 = vadd.f32 0.0, %v4855
      %v4857 = vpop.f32.mrf.mxu0
      %v4858 = vpop.f32.mrf.mxu0
      %v4859 = vadd.f32 0.0, %v4858
      %v4860 = vpop.f32.mrf.mxu0
      %4861 = vmatprep.mubr.bf16.mxu0 0
      %4862 = vmatmul.mubr.bf16.gmra.mxu0 %v4739
      %v4863 = vpop.f32.mrf.mxu0
      %v4864 = vadd.f32 0.0, %v4863
      %v4865 = vpop.f32.mrf.mxu0
      %v4866 = vpop.f32.mrf.mxu0
      %v4867 = vadd.f32 0.0, %v4866
      %v4868 = vpop.f32.mrf.mxu0
      %4869 = vmatprep.mubr.bf16.mxu0 0
      %4870 = vmatmul.mubr.bf16.gmra.mxu0 %v4742
      %v4871 = vpop.f32.mrf.mxu0
      %v4872 = vadd.f32 0.0, %v4871
      %v4873 = vpop.f32.mrf.mxu0
      %v4874 = vpop.f32.mrf.mxu0
      %v4875 = vadd.f32 0.0, %v4874
      %v4876 = vpop.f32.mrf.mxu0
      %4877 = vmatprep.mubr.bf16.mxu0 0
      %4878 = vmatmul.mubr.bf16.gmra.mxu0 %v4745
      %v4879 = vpop.f32.mrf.mxu0
      %v4880 = vadd.f32 0.0, %v4879
      %v4881 = vpop.f32.mrf.mxu0
      %v4882 = vpop.f32.mrf.mxu0
      %v4883 = vadd.f32 0.0, %v4882
      %v4884 = vpop.f32.mrf.mxu0
      %4885 = vmatprep.mubr.bf16.mxu0 0
      %4886 = vmatmul.mubr.bf16.gmra.mxu0 %v4748
      %v4887 = vpop.f32.mrf.mxu0
      %v4888 = vadd.f32 0.0, %v4887
      %v4889 = vpop.f32.mrf.mxu0
      %v4890 = vpop.f32.mrf.mxu0
      %v4891 = vadd.f32 0.0, %v4890
      %v4892 = vpop.f32.mrf.mxu0
      %4893 = vmatprep.mubr.bf16.mxu0 0
      %4894 = vmatmul.mubr.bf16.gmra.mxu0 %v4751
      %v4895 = vpop.f32.mrf.mxu0
      %v4896 = vadd.f32 0.0, %v4895
      %v4897 = vpop.f32.mrf.mxu0
      %v4898 = vpop.f32.mrf.mxu0
      %v4899 = vadd.f32 0.0, %v4898
      %v4900 = vpop.f32.mrf.mxu0
      %4901 = vmatprep.mubr.bf16.mxu0 0
      %4902 = vmatmul.mubr.bf16.gmra.mxu0 %v4754
      %v4903 = vpop.f32.mrf.mxu0
      %v4904 = vadd.f32 0.0, %v4903
      %v4905 = vpop.f32.mrf.mxu0
      %v4906 = vpop.f32.mrf.mxu0
      %v4907 = vadd.f32 0.0, %v4906
      %v4908 = vpop.f32.mrf.mxu0
      %4909 = vmatprep.mubr.bf16.mxu0 0
      %4910 = vmatmul.mubr.bf16.gmra.mxu0 %v4757
      %v4911 = vpop.f32.mrf.mxu0
      %v4912 = vadd.f32 0.0, %v4911
      %v4913 = vpop.f32.mrf.mxu0
      %v4914 = vpop.f32.mrf.mxu0
      %v4915 = vadd.f32 0.0, %v4914
      %v4916 = vpop.f32.mrf.mxu0
      %4917 = vmatprep.mubr.bf16.mxu0 0
      %4918 = vmatmul.mubr.bf16.gmra.mxu0 %v4760
      %v4919 = vpop.f32.mrf.mxu0
      %v4920 = vadd.f32 0.0, %v4919
      %v4921 = vpop.f32.mrf.mxu0
      %v4922 = vpop.f32.mrf.mxu0
      %v4923 = vadd.f32 0.0, %v4922
      %v4924 = vpop.f32.mrf.mxu0
      %4925 = vdwg.mxu0
      %v4926 = vadd.f32 %v4200, %v4800
      %v4927 = vadd.f32 %v4201, %v4803
      %v4928 = vadd.f32 %v4202, %v4808
      %v4929 = vadd.f32 %v4203, %v4811
      %v4930 = vadd.f32 %v4204, %v4816
      %v4931 = vadd.f32 %v4205, %v4819
      %v4932 = vadd.f32 %v4206, %v4824
      %v4933 = vadd.f32 %v4207, %v4827
      %v4934 = vadd.f32 %v4208, %v4832
      %v4935 = vadd.f32 %v4209, %v4835
      %v4936 = vadd.f32 %v4210, %v4840
      %v4937 = vadd.f32 %v4211, %v4843
      %v4938 = vadd.f32 %v4212, %v4848
      %v4939 = vadd.f32 %v4213, %v4851
      %v4940 = vadd.f32 %v4214, %v4856
      %v4941 = vadd.f32 %v4215, %v4859
      %v4942 = vadd.f32 %v4216, %v4864
      %v4943 = vadd.f32 %v4217, %v4867
      %v4944 = vadd.f32 %v4218, %v4872
      %v4945 = vadd.f32 %v4219, %v4875
      %v4946 = vadd.f32 %v4220, %v4880
      %v4947 = vadd.f32 %v4221, %v4883
      %v4948 = vadd.f32 %v4222, %v4888
      %v4949 = vadd.f32 %v4223, %v4891
      %v4950 = vadd.f32 %v4224, %v4896
      %v4951 = vadd.f32 %v4225, %v4899
      %v4952 = vadd.f32 %v4226, %v4904
      %v4953 = vadd.f32 %v4227, %v4907
      %v4954 = vadd.f32 %v4228, %v4912
      %v4955 = vadd.f32 %v4229, %v4915
      %v4956 = vadd.f32 %v4230, %v4920
      %v4957 = vadd.f32 %v4231, %v4923
      %v4958 = vld [vmem:[%s3873] sm:$0xe]
      %v4959 = vld [vmem:[%s3873 + $0xc] sm:$0xe]
      %v4960 = vld [vmem:[%s3873 + $0x18] sm:$0xe]
      %v4961 = vld [vmem:[%s3873 + $0x24] sm:$0xe]
      %v4962 = vld [vmem:[%s3873 + $0x30] sm:$0xe]
      %v4963 = vld [vmem:[%s3873 + $0x3c] sm:$0xe]
      %v4964 = vld [vmem:[%s3873 + $0x48] sm:$0xe]
      %v4965 = vld [vmem:[%s3873 + $0x54] sm:$0xe]
      %v4966 = vld [vmem:[%s3873 + $0x60] sm:$0xe]
      %v4967 = vld [vmem:[%s3873 + $0x6c] sm:$0xe]
      %v4968 = vld [vmem:[%s3873 + $0x78] sm:$0xe]
      %v4969 = vld [vmem:[%s3873 + $0x84] sm:$0xe]
      %v4970 = vld [vmem:[%s3873 + $0x90] sm:$0xe]
      %v4971 = vld [vmem:[%s3873 + $0x9c] sm:$0xe]
      %v4972 = vld [vmem:[%s3873 + $0xa8] sm:$0xe]
      %v4973 = vld [vmem:[%s3873 + $0xb4] sm:$0xe]
      %v5022 = vrot.slane %v4958, 5
      %v5023 = vrot.slane %v5022, 4
      %v5024 = vrot.slane %v4233, 5
      %v5025 = vsel %vm1912, %v5023, %v5024
      %v5026 = vrot.slane %v5024, 4
      %v5027 = vrot.slane %v4234, 5
      %v5028 = vsel %vm1912, %v5026, %v5027
      %v5029 = vrot.slane %v4959, 5
      %v5030 = vrot.slane %v5029, 4
      %v5031 = vrot.slane %v4236, 5
      %v5032 = vsel %vm1912, %v5030, %v5031
      %v5033 = vrot.slane %v5031, 4
      %v5034 = vrot.slane %v4237, 5
      %v5035 = vsel %vm1912, %v5033, %v5034
      %v5036 = vrot.slane %v4960, 5
      %v5037 = vrot.slane %v5036, 4
      %v5038 = vrot.slane %v4239, 5
      %v5039 = vsel %vm1912, %v5037, %v5038
      %v5040 = vrot.slane %v5038, 4
      %v5041 = vrot.slane %v4240, 5
      %v5042 = vsel %vm1912, %v5040, %v5041
      %v5043 = vrot.slane %v4961, 5
      %v5044 = vrot.slane %v5043, 4
      %v5045 = vrot.slane %v4242, 5
      %v5046 = vsel %vm1912, %v5044, %v5045
      %v5047 = vrot.slane %v5045, 4
      %v5048 = vrot.slane %v4243, 5
      %v5049 = vsel %vm1912, %v5047, %v5048
      %v5050 = vrot.slane %v4962, 5
      %v5051 = vrot.slane %v5050, 4
      %v5052 = vrot.slane %v4245, 5
      %v5053 = vsel %vm1912, %v5051, %v5052
      %v5054 = vrot.slane %v5052, 4
      %v5055 = vrot.slane %v4246, 5
      %v5056 = vsel %vm1912, %v5054, %v5055
      %v5057 = vrot.slane %v4963, 5
      %v5058 = vrot.slane %v5057, 4
      %v5059 = vrot.slane %v4248, 5
      %v5060 = vsel %vm1912, %v5058, %v5059
      %v5061 = vrot.slane %v5059, 4
      %v5062 = vrot.slane %v4249, 5
      %v5063 = vsel %vm1912, %v5061, %v5062
      %v5064 = vrot.slane %v4964, 5
      %v5065 = vrot.slane %v5064, 4
      %v5066 = vrot.slane %v4251, 5
      %v5067 = vsel %vm1912, %v5065, %v5066
      %v5068 = vrot.slane %v5066, 4
      %v5069 = vrot.slane %v4252, 5
      %v5070 = vsel %vm1912, %v5068, %v5069
      %v5071 = vrot.slane %v4965, 5
      %v5072 = vrot.slane %v5071, 4
      %v5073 = vrot.slane %v4254, 5
      %v5074 = vsel %vm1912, %v5072, %v5073
      %v5075 = vrot.slane %v5073, 4
      %v5076 = vrot.slane %v4255, 5
      %v5077 = vsel %vm1912, %v5075, %v5076
      %v5078 = vrot.slane %v4966, 5
      %v5079 = vrot.slane %v5078, 4
      %v5080 = vrot.slane %v4257, 5
      %v5081 = vsel %vm1912, %v5079, %v5080
      %v5082 = vrot.slane %v5080, 4
      %v5083 = vrot.slane %v4258, 5
      %v5084 = vsel %vm1912, %v5082, %v5083
      %v5085 = vrot.slane %v4967, 5
      %v5086 = vrot.slane %v5085, 4
      %v5087 = vrot.slane %v4260, 5
      %v5088 = vsel %vm1912, %v5086, %v5087
      %v5089 = vrot.slane %v5087, 4
      %v5090 = vrot.slane %v4261, 5
      %v5091 = vsel %vm1912, %v5089, %v5090
      %v5092 = vrot.slane %v4968, 5
      %v5093 = vrot.slane %v5092, 4
      %v5094 = vrot.slane %v4263, 5
      %v5095 = vsel %vm1912, %v5093, %v5094
      %v5096 = vrot.slane %v5094, 4
      %v5097 = vrot.slane %v4264, 5
      %v5098 = vsel %vm1912, %v5096, %v5097
      %v5099 = vrot.slane %v4969, 5
      %v5100 = vrot.slane %v5099, 4
      %v5101 = vrot.slane %v4266, 5
      %v5102 = vsel %vm1912, %v5100, %v5101
      %v5103 = vrot.slane %v5101, 4
      %v5104 = vrot.slane %v4267, 5
      %v5105 = vsel %vm1912, %v5103, %v5104
      %v5106 = vrot.slane %v4970, 5
      %v5107 = vrot.slane %v5106, 4
      %v5108 = vrot.slane %v4269, 5
      %v5109 = vsel %vm1912, %v5107, %v5108
      %v5110 = vrot.slane %v5108, 4
      %v5111 = vrot.slane %v4270, 5
      %v5112 = vsel %vm1912, %v5110, %v5111
      %v5113 = vrot.slane %v4971, 5
      %v5114 = vrot.slane %v5113, 4
      %v5115 = vrot.slane %v4272, 5
      %v5116 = vsel %vm1912, %v5114, %v5115
      %v5117 = vrot.slane %v5115, 4
      %v5118 = vrot.slane %v4273, 5
      %v5119 = vsel %vm1912, %v5117, %v5118
      %v5120 = vrot.slane %v4972, 5
      %v5121 = vrot.slane %v5120, 4
      %v5122 = vrot.slane %v4275, 5
      %v5123 = vsel %vm1912, %v5121, %v5122
      %v5124 = vrot.slane %v5122, 4
      %v5125 = vrot.slane %v4276, 5
      %v5126 = vsel %vm1912, %v5124, %v5125
      %v5127 = vrot.slane %v4973, 5
      %v5128 = vrot.slane %v5127, 4
      %v5129 = vrot.slane %v4278, 5
      %v5130 = vsel %vm1912, %v5128, %v5129
      %v5131 = vrot.slane %v5129, 4
      %v5132 = vrot.slane %v4279, 5
      %v5133 = vsel %vm1912, %v5131, %v5132
      %s5134 = scalar_lea.vmem %s1, 32
      %v5135 = vld [vmem:[%s5134] sm:$0xf]
      %v5136 = vunpack.c.l.b16 %v5025
      %v5137 = vunpack.c.l.b16 %v5028
      %v5138 = vunpack.c.l.b16 %v5032
      %v5139 = vunpack.c.l.b16 %v5035
      %v5140 = vunpack.c.l.b16 %v5039
      %v5141 = vunpack.c.l.b16 %v5042
      %v5142 = vunpack.c.l.b16 %v5046
      %v5143 = vunpack.c.l.b16 %v5049
      %v5144 = vunpack.c.l.b16 %v5053
      %v5145 = vunpack.c.l.b16 %v5056
      %v5146 = vunpack.c.l.b16 %v5060
      %v5147 = vunpack.c.l.b16 %v5063
      %v5148 = vunpack.c.l.b16 %v5067
      %v5149 = vunpack.c.l.b16 %v5070
      %v5150 = vunpack.c.l.b16 %v5074
      %v5151 = vunpack.c.l.b16 %v5077
      %v5152 = vunpack.c.l.b16 %v5081
      %v5153 = vunpack.c.l.b16 %v5084
      %v5154 = vunpack.c.l.b16 %v5088
      %v5155 = vunpack.c.l.b16 %v5091
      %v5156 = vunpack.c.l.b16 %v5095
      %v5157 = vunpack.c.l.b16 %v5098
      %v5158 = vunpack.c.l.b16 %v5102
      %v5159 = vunpack.c.l.b16 %v5105
      %v5160 = vunpack.c.l.b16 %v5109
      %v5161 = vunpack.c.l.b16 %v5112
      %v5162 = vunpack.c.l.b16 %v5116
      %v5163 = vunpack.c.l.b16 %v5119
      %v5164 = vunpack.c.l.b16 %v5123
      %v5165 = vunpack.c.l.b16 %v5126
      %v5166 = vunpack.c.l.b16 %v5130
      %v5167 = vunpack.c.l.b16 %v5133
      %v5168 = vpack.c.b16 %v5137, %v5136
      %v5169 = vpack.c.b16 %v5139, %v5138
      %v5170 = vpack.c.b16 %v5141, %v5140
      %v5171 = vpack.c.b16 %v5143, %v5142
      %v5172 = vpack.c.b16 %v5145, %v5144
      %v5173 = vpack.c.b16 %v5147, %v5146
      %v5174 = vpack.c.b16 %v5149, %v5148
      %v5175 = vpack.c.b16 %v5151, %v5150
      %v5176 = vpack.c.b16 %v5153, %v5152
      %v5177 = vpack.c.b16 %v5155, %v5154
      %v5178 = vpack.c.b16 %v5157, %v5156
      %v5179 = vpack.c.b16 %v5159, %v5158
      %v5180 = vpack.c.b16 %v5161, %v5160
      %v5181 = vpack.c.b16 %v5163, %v5162
      %v5182 = vpack.c.b16 %v5165, %v5164
      %v5183 = vpack.c.b16 %v5167, %v5166
      %v5185 = vsel %vm1356, %v5168, 0
      %v5188 = vsel %vm1356, %v5169, 0
      %v5191 = vsel %vm1356, %v5170, 0
      %v5194 = vsel %vm1356, %v5171, 0
      %v5197 = vsel %vm1356, %v5172, 0
      %v5200 = vsel %vm1356, %v5173, 0
      %v5203 = vsel %vm1356, %v5174, 0
      %v5206 = vsel %vm1356, %v5175, 0
      %v5209 = vsel %vm1356, %v5176, 0
      %v5212 = vsel %vm1356, %v5177, 0
      %v5215 = vsel %vm1356, %v5178, 0
      %v5218 = vsel %vm1356, %v5179, 0
      %v5221 = vsel %vm1356, %v5180, 0
      %v5224 = vsel %vm1356, %v5181, 0
      %v5227 = vsel %vm1356, %v5182, 0
      %v5230 = vsel %vm1356, %v5183, 0
      %v5233 = vsel %vm1405, %v5135, 0
      %5235 = vmatprep.subr.bf16.mxu0 0
      %5236 = vmatpush1.bf16.msra.mxu0 0
      %5237 = vmatprep.subr.bf16.mxu0 0
      %5238 = vmatpush1.bf16.msra.mxu0 0
      %5239 = vmatprep.subr.bf16.mxu0 0
      %5240 = vmatpush1.bf16.msra.mxu0 0
      %5241 = vmatprep.subr.bf16.mxu0 0
      %5242 = vmatpush1.bf16.msra.mxu0 0
      %5243 = vmatprep.subr.bf16.mxu0 0
      %5244 = vmatpush1.bf16.msra.mxu0 0
      %5245 = vmatprep.subr.bf16.mxu0 0
      %5246 = vmatpush1.bf16.msra.mxu0 0
      %5247 = vmatprep.subr.bf16.mxu0 0
      %5248 = vmatpush1.bf16.msra.mxu0 0
      %5249 = vmatprep.subr.bf16.mxu0 0
      %5250 = vmatpush1.bf16.msra.mxu0 %v5233
      %5251 = vmatprep.subr.bf16.mxu0 0
      %5252 = vmatpush2.bf16.msra.mxu0 0
      %5253 = vmatprep.subr.bf16.mxu0 0
      %5254 = vmatpush2.bf16.msra.mxu0 0
      %5255 = vmatprep.subr.bf16.mxu0 0
      %5256 = vmatpush2.bf16.msra.mxu0 0
      %5257 = vmatprep.subr.bf16.mxu0 0
      %5258 = vmatpush2.bf16.msra.mxu0 0
      %5259 = vmatprep.subr.bf16.mxu0 0
      %5260 = vmatpush2.bf16.msra.mxu0 0
      %5261 = vmatprep.subr.bf16.mxu0 0
      %5262 = vmatpush2.bf16.msra.mxu0 0
      %5263 = vmatprep.subr.bf16.mxu0 0
      %5264 = vmatpush2.bf16.msra.mxu0 0
      %5265 = vmatprep.subr.bf16.mxu0 0
      %5266 = vmatpush2.bf16.msra.mxu0 0
      %5267 = vmatprep.mubr.bf16.mxu0 0
      %5268 = vmatmul.mubr.bf16.gmra.mxu0 %v5185
      %v5269 = vpop.f32.mrf.mxu0
      %v5270 = vadd.f32 0.0, %v5269
      %v5271 = vpop.f32.mrf.mxu0
      %v5272 = vpop.f32.mrf.mxu0
      %v5273 = vadd.f32 0.0, %v5272
      %v5274 = vpop.f32.mrf.mxu0
      %5275 = vmatprep.mubr.bf16.mxu0 0
      %5276 = vmatmul.mubr.bf16.gmra.mxu0 %v5188
      %v5277 = vpop.f32.mrf.mxu0
      %v5278 = vadd.f32 0.0, %v5277
      %v5279 = vpop.f32.mrf.mxu0
      %v5280 = vpop.f32.mrf.mxu0
      %v5281 = vadd.f32 0.0, %v5280
      %v5282 = vpop.f32.mrf.mxu0
      %5283 = vmatprep.mubr.bf16.mxu0 0
      %5284 = vmatmul.mubr.bf16.gmra.mxu0 %v5191
      %v5285 = vpop.f32.mrf.mxu0
      %v5286 = vadd.f32 0.0, %v5285
      %v5287 = vpop.f32.mrf.mxu0
      %v5288 = vpop.f32.mrf.mxu0
      %v5289 = vadd.f32 0.0, %v5288
      %v5290 = vpop.f32.mrf.mxu0
      %5291 = vmatprep.mubr.bf16.mxu0 0
      %5292 = vmatmul.mubr.bf16.gmra.mxu0 %v5194
      %v5293 = vpop.f32.mrf.mxu0
      %v5294 = vadd.f32 0.0, %v5293
      %v5295 = vpop.f32.mrf.mxu0
      %v5296 = vpop.f32.mrf.mxu0
      %v5297 = vadd.f32 0.0, %v5296
      %v5298 = vpop.f32.mrf.mxu0
      %5299 = vmatprep.mubr.bf16.mxu0 0
      %5300 = vmatmul.mubr.bf16.gmra.mxu0 %v5197
      %v5301 = vpop.f32.mrf.mxu0
      %v5302 = vadd.f32 0.0, %v5301
      %v5303 = vpop.f32.mrf.mxu0
      %v5304 = vpop.f32.mrf.mxu0
      %v5305 = vadd.f32 0.0, %v5304
      %v5306 = vpop.f32.mrf.mxu0
      %5307 = vmatprep.mubr.bf16.mxu0 0
      %5308 = vmatmul.mubr.bf16.gmra.mxu0 %v5200
      %v5309 = vpop.f32.mrf.mxu0
      %v5310 = vadd.f32 0.0, %v5309
      %v5311 = vpop.f32.mrf.mxu0
      %v5312 = vpop.f32.mrf.mxu0
      %v5313 = vadd.f32 0.0, %v5312
      %v5314 = vpop.f32.mrf.mxu0
      %5315 = vmatprep.mubr.bf16.mxu0 0
      %5316 = vmatmul.mubr.bf16.gmra.mxu0 %v5203
      %v5317 = vpop.f32.mrf.mxu0
      %v5318 = vadd.f32 0.0, %v5317
      %v5319 = vpop.f32.mrf.mxu0
      %v5320 = vpop.f32.mrf.mxu0
      %v5321 = vadd.f32 0.0, %v5320
      %v5322 = vpop.f32.mrf.mxu0
      %5323 = vmatprep.mubr.bf16.mxu0 0
      %5324 = vmatmul.mubr.bf16.gmra.mxu0 %v5206
      %v5325 = vpop.f32.mrf.mxu0
      %v5326 = vadd.f32 0.0, %v5325
      %v5327 = vpop.f32.mrf.mxu0
      %v5328 = vpop.f32.mrf.mxu0
      %v5329 = vadd.f32 0.0, %v5328
      %v5330 = vpop.f32.mrf.mxu0
      %5331 = vmatprep.mubr.bf16.mxu0 0
      %5332 = vmatmul.mubr.bf16.gmra.mxu0 %v5209
      %v5333 = vpop.f32.mrf.mxu0
      %v5334 = vadd.f32 0.0, %v5333
      %v5335 = vpop.f32.mrf.mxu0
      %v5336 = vpop.f32.mrf.mxu0
      %v5337 = vadd.f32 0.0, %v5336
      %v5338 = vpop.f32.mrf.mxu0
      %5339 = vmatprep.mubr.bf16.mxu0 0
      %5340 = vmatmul.mubr.bf16.gmra.mxu0 %v5212
      %v5341 = vpop.f32.mrf.mxu0
      %v5342 = vadd.f32 0.0, %v5341
      %v5343 = vpop.f32.mrf.mxu0
      %v5344 = vpop.f32.mrf.mxu0
      %v5345 = vadd.f32 0.0, %v5344
      %v5346 = vpop.f32.mrf.mxu0
      %5347 = vmatprep.mubr.bf16.mxu0 0
      %5348 = vmatmul.mubr.bf16.gmra.mxu0 %v5215
      %v5349 = vpop.f32.mrf.mxu0
      %v5350 = vadd.f32 0.0, %v5349
      %v5351 = vpop.f32.mrf.mxu0
      %v5352 = vpop.f32.mrf.mxu0
      %v5353 = vadd.f32 0.0, %v5352
      %v5354 = vpop.f32.mrf.mxu0
      %5355 = vmatprep.mubr.bf16.mxu0 0
      %5356 = vmatmul.mubr.bf16.gmra.mxu0 %v5218
      %v5357 = vpop.f32.mrf.mxu0
      %v5358 = vadd.f32 0.0, %v5357
      %v5359 = vpop.f32.mrf.mxu0
      %v5360 = vpop.f32.mrf.mxu0
      %v5361 = vadd.f32 0.0, %v5360
      %v5362 = vpop.f32.mrf.mxu0
      %5363 = vmatprep.mubr.bf16.mxu0 0
      %5364 = vmatmul.mubr.bf16.gmra.mxu0 %v5221
      %v5365 = vpop.f32.mrf.mxu0
      %v5366 = vadd.f32 0.0, %v5365
      %v5367 = vpop.f32.mrf.mxu0
      %v5368 = vpop.f32.mrf.mxu0
      %v5369 = vadd.f32 0.0, %v5368
      %v5370 = vpop.f32.mrf.mxu0
      %5371 = vmatprep.mubr.bf16.mxu0 0
      %5372 = vmatmul.mubr.bf16.gmra.mxu0 %v5224
      %v5373 = vpop.f32.mrf.mxu0
      %v5374 = vadd.f32 0.0, %v5373
      %v5375 = vpop.f32.mrf.mxu0
      %v5376 = vpop.f32.mrf.mxu0
      %v5377 = vadd.f32 0.0, %v5376
      %v5378 = vpop.f32.mrf.mxu0
      %5379 = vmatprep.mubr.bf16.mxu0 0
      %5380 = vmatmul.mubr.bf16.gmra.mxu0 %v5227
      %v5381 = vpop.f32.mrf.mxu0
      %v5382 = vadd.f32 0.0, %v5381
      %v5383 = vpop.f32.mrf.mxu0
      %v5384 = vpop.f32.mrf.mxu0
      %v5385 = vadd.f32 0.0, %v5384
      %v5386 = vpop.f32.mrf.mxu0
      %5387 = vmatprep.mubr.bf16.mxu0 0
      %5388 = vmatmul.mubr.bf16.gmra.mxu0 %v5230
      %v5389 = vpop.f32.mrf.mxu0
      %v5390 = vadd.f32 0.0, %v5389
      %v5391 = vpop.f32.mrf.mxu0
      %v5392 = vpop.f32.mrf.mxu0
      %v5393 = vadd.f32 0.0, %v5392
      %v5394 = vpop.f32.mrf.mxu0
      %5395 = vdwg.mxu0
      %v5396 = vadd.f32 %v4926, %v5270
      %v5397 = vadd.f32 %v4927, %v5273
      %v5398 = vadd.f32 %v4928, %v5278
      %v5399 = vadd.f32 %v4929, %v5281
      %v5400 = vadd.f32 %v4930, %v5286
      %v5401 = vadd.f32 %v4931, %v5289
      %v5402 = vadd.f32 %v4932, %v5294
      %v5403 = vadd.f32 %v4933, %v5297
      %v5404 = vadd.f32 %v4934, %v5302
      %v5405 = vadd.f32 %v4935, %v5305
      %v5406 = vadd.f32 %v4936, %v5310
      %v5407 = vadd.f32 %v4937, %v5313
      %v5408 = vadd.f32 %v4938, %v5318
      %v5409 = vadd.f32 %v4939, %v5321
      %v5410 = vadd.f32 %v4940, %v5326
      %v5411 = vadd.f32 %v4941, %v5329
      %v5412 = vadd.f32 %v4942, %v5334
      %v5413 = vadd.f32 %v4943, %v5337
      %v5414 = vadd.f32 %v4944, %v5342
      %v5415 = vadd.f32 %v4945, %v5345
      %v5416 = vadd.f32 %v4946, %v5350
      %v5417 = vadd.f32 %v4947, %v5353
      %v5418 = vadd.f32 %v4948, %v5358
      %v5419 = vadd.f32 %v4949, %v5361
      %v5420 = vadd.f32 %v4950, %v5366
      %v5421 = vadd.f32 %v4951, %v5369
      %v5422 = vadd.f32 %v4952, %v5374
      %v5423 = vadd.f32 %v4953, %v5377
      %v5424 = vadd.f32 %v4954, %v5382
      %v5425 = vadd.f32 %v4955, %v5385
      %v5426 = vadd.f32 %v4956, %v5390
      %v5427 = vadd.f32 %v4957, %v5393
      %v5428 = vpack.c.bf16 %v5397, %v5396
      %v5429 = vpack.c.bf16 %v5399, %v5398
      %v5430 = vpack.c.bf16 %v5401, %v5400
      %v5431 = vpack.c.bf16 %v5403, %v5402
      %v5432 = vpack.c.bf16 %v5405, %v5404
      %v5433 = vpack.c.bf16 %v5407, %v5406
      %v5434 = vpack.c.bf16 %v5409, %v5408
      %v5435 = vpack.c.bf16 %v5411, %v5410
      %v5436 = vpack.c.bf16 %v5413, %v5412
      %v5437 = vpack.c.bf16 %v5415, %v5414
      %v5438 = vpack.c.bf16 %v5417, %v5416
      %v5439 = vpack.c.bf16 %v5419, %v5418
      %v5440 = vpack.c.bf16 %v5421, %v5420
      %v5441 = vpack.c.bf16 %v5423, %v5422
      %v5442 = vpack.c.bf16 %v5425, %v5424
      %v5443 = vpack.c.bf16 %v5427, %v5426
      %v5460 = vunpack.c.l.b16 %v5428
      %v5461 = vunpack.c.h.b16 %v5428
      %v5462 = vunpack.c.l.b16 %v5429
      %v5463 = vunpack.c.h.b16 %v5429
      %v5464 = vunpack.c.l.b16 %v5430
      %v5465 = vunpack.c.h.b16 %v5430
      %v5466 = vunpack.c.l.b16 %v5431
      %v5467 = vunpack.c.h.b16 %v5431
      %v5468 = vunpack.c.l.b16 %v5432
      %v5469 = vunpack.c.h.b16 %v5432
      %v5470 = vunpack.c.l.b16 %v5433
      %v5471 = vunpack.c.h.b16 %v5433
      %v5472 = vunpack.c.l.b16 %v5434
      %v5473 = vunpack.c.h.b16 %v5434
      %v5474 = vunpack.c.l.b16 %v5435
      %v5475 = vunpack.c.h.b16 %v5435
      %v5476 = vunpack.c.l.b16 %v5436
      %v5477 = vunpack.c.h.b16 %v5436
      %v5478 = vunpack.c.l.b16 %v5437
      %v5479 = vunpack.c.h.b16 %v5437
      %v5480 = vunpack.c.l.b16 %v5438
      %v5481 = vunpack.c.h.b16 %v5438
      %v5482 = vunpack.c.l.b16 %v5439
      %v5483 = vunpack.c.h.b16 %v5439
      %v5484 = vunpack.c.l.b16 %v5440
      %v5485 = vunpack.c.h.b16 %v5440
      %v5486 = vunpack.c.l.b16 %v5441
      %v5487 = vunpack.c.h.b16 %v5441
      %v5488 = vunpack.c.l.b16 %v5442
      %v5489 = vunpack.c.h.b16 %v5442
      %v5490 = vunpack.c.l.b16 %v5443
      %v5491 = vunpack.c.h.b16 %v5443
      %v5492 = vpack.c.b16 %v5460, %v5460
      %v5493 = vpack.c.b16 %v5461, %v5461
      %v5494 = vpack.c.b16 %v5462, %v5462
      %v5495 = vpack.c.b16 %v5463, %v5463
      %v5496 = vpack.c.b16 %v5464, %v5464
      %v5497 = vpack.c.b16 %v5465, %v5465
      %v5498 = vpack.c.b16 %v5466, %v5466
      %v5499 = vpack.c.b16 %v5467, %v5467
      %v5500 = vpack.c.b16 %v5468, %v5468
      %v5501 = vpack.c.b16 %v5469, %v5469
      %v5502 = vpack.c.b16 %v5470, %v5470
      %v5503 = vpack.c.b16 %v5471, %v5471
      %v5504 = vpack.c.b16 %v5472, %v5472
      %v5505 = vpack.c.b16 %v5473, %v5473
      %v5506 = vpack.c.b16 %v5474, %v5474
      %v5507 = vpack.c.b16 %v5475, %v5475
      %v5508 = vpack.c.b16 %v5476, %v5476
      %v5509 = vpack.c.b16 %v5477, %v5477
      %v5510 = vpack.c.b16 %v5478, %v5478
      %v5511 = vpack.c.b16 %v5479, %v5479
      %v5512 = vpack.c.b16 %v5480, %v5480
      %v5513 = vpack.c.b16 %v5481, %v5481
      %v5514 = vpack.c.b16 %v5482, %v5482
      %v5515 = vpack.c.b16 %v5483, %v5483
      %v5516 = vpack.c.b16 %v5484, %v5484
      %v5517 = vpack.c.b16 %v5485, %v5485
      %v5518 = vpack.c.b16 %v5486, %v5486
      %v5519 = vpack.c.b16 %v5487, %v5487
      %v5520 = vpack.c.b16 %v5488, %v5488
      %v5521 = vpack.c.b16 %v5489, %v5489
      %v5522 = vpack.c.b16 %v5490, %v5490
      %v5523 = vpack.c.b16 %v5491, %v5491
      %5556 = vst.msk [vmem:[%s177] sm:$0xf] %vm183, %v5492
      %5557 = vst.msk [vmem:[%s177 + $0x4] sm:$0xf] %vm183, %v5493
      %5558 = vst.msk [vmem:[%s177 + $0x8] sm:$0xf] %vm183, %v5494
      %5559 = vst.msk [vmem:[%s177 + $0xc] sm:$0xf] %vm183, %v5495
      %5560 = vst.msk [vmem:[%s177 + $0x10] sm:$0xf] %vm183, %v5496
      %5561 = vst.msk [vmem:[%s177 + $0x14] sm:$0xf] %vm183, %v5497
      %5562 = vst.msk [vmem:[%s177 + $0x18] sm:$0xf] %vm183, %v5498
      %5563 = vst.msk [vmem:[%s177 + $0x1c] sm:$0xf] %vm183, %v5499
      %5564 = vst.msk [vmem:[%s177 + $0x20] sm:$0xf] %vm183, %v5500
      %5565 = vst.msk [vmem:[%s177 + $0x24] sm:$0xf] %vm183, %v5501
      %5566 = vst.msk [vmem:[%s177 + $0x28] sm:$0xf] %vm183, %v5502
      %5567 = vst.msk [vmem:[%s177 + $0x2c] sm:$0xf] %vm183, %v5503
      %5568 = vst.msk [vmem:[%s177 + $0x30] sm:$0xf] %vm183, %v5504
      %5569 = vst.msk [vmem:[%s177 + $0x34] sm:$0xf] %vm183, %v5505
      %5570 = vst.msk [vmem:[%s177 + $0x38] sm:$0xf] %vm183, %v5506
      %5571 = vst.msk [vmem:[%s177 + $0x3c] sm:$0xf] %vm183, %v5507
      %5572 = vst.msk [vmem:[%s177 + $0x40] sm:$0xf] %vm183, %v5508
      %5573 = vst.msk [vmem:[%s177 + $0x44] sm:$0xf] %vm183, %v5509
      %5574 = vst.msk [vmem:[%s177 + $0x48] sm:$0xf] %vm183, %v5510
      %5575 = vst.msk [vmem:[%s177 + $0x4c] sm:$0xf] %vm183, %v5511
      %5576 = vst.msk [vmem:[%s177 + $0x50] sm:$0xf] %vm183, %v5512
      %5577 = vst.msk [vmem:[%s177 + $0x54] sm:$0xf] %vm183, %v5513
      %5578 = vst.msk [vmem:[%s177 + $0x58] sm:$0xf] %vm183, %v5514
      %5579 = vst.msk [vmem:[%s177 + $0x5c] sm:$0xf] %vm183, %v5515
      %5580 = vst.msk [vmem:[%s177 + $0x60] sm:$0xf] %vm183, %v5516
      %5581 = vst.msk [vmem:[%s177 + $0x64] sm:$0xf] %vm183, %v5517
      %5582 = vst.msk [vmem:[%s177 + $0x68] sm:$0xf] %vm183, %v5518
      %5583 = vst.msk [vmem:[%s177 + $0x6c] sm:$0xf] %vm183, %v5519
      %5584 = vst.msk [vmem:[%s177 + $0x70] sm:$0xf] %vm183, %v5520
      %5585 = vst.msk [vmem:[%s177 + $0x74] sm:$0xf] %vm183, %v5521
      %5586 = vst.msk [vmem:[%s177 + $0x78] sm:$0xf] %vm183, %v5522
      %5587 = vst.msk [vmem:[%s177 + $0x7c] sm:$0xf] %vm183, %v5523
      %v5588 = vsel %vm1356, %v5396, 0.0
      %v5589 = vsel %vm1356, %v5397, 0.0
      %v5590 = vadd.f32 %v5588, %v5589
      %v5591 = vsel %vm1356, %v5398, 0.0
      %v5592 = vadd.f32 %v5590, %v5591
      %v5593 = vsel %vm1356, %v5399, 0.0
      %v5594 = vadd.f32 %v5592, %v5593
      %v5595 = vsel %vm1356, %v5400, 0.0
      %v5596 = vadd.f32 %v5594, %v5595
      %v5597 = vsel %vm1356, %v5401, 0.0
      %v5598 = vadd.f32 %v5596, %v5597
      %v5599 = vsel %vm1356, %v5402, 0.0
      %v5600 = vadd.f32 %v5598, %v5599
      %v5601 = vsel %vm1356, %v5403, 0.0
      %v5602 = vadd.f32 %v5600, %v5601
      %v5603 = vsel %vm1356, %v5404, 0.0
      %v5604 = vadd.f32 %v5602, %v5603
      %v5605 = vsel %vm1356, %v5405, 0.0
      %v5606 = vadd.f32 %v5604, %v5605
      %v5607 = vsel %vm1356, %v5406, 0.0
      %v5608 = vadd.f32 %v5606, %v5607
      %v5609 = vsel %vm1356, %v5407, 0.0
      %v5610 = vadd.f32 %v5608, %v5609
      %v5611 = vsel %vm1356, %v5408, 0.0
      %v5612 = vadd.f32 %v5610, %v5611
      %v5613 = vsel %vm1356, %v5409, 0.0
      %v5614 = vadd.f32 %v5612, %v5613
      %v5615 = vsel %vm1356, %v5410, 0.0
      %v5616 = vadd.f32 %v5614, %v5615
      %v5617 = vsel %vm1356, %v5411, 0.0
      %v5618 = vadd.f32 %v5616, %v5617
      %v5619 = vsel %vm1356, %v5412, 0.0
      %v5620 = vadd.f32 %v5618, %v5619
      %v5621 = vsel %vm1356, %v5413, 0.0
      %v5622 = vadd.f32 %v5620, %v5621
      %v5623 = vsel %vm1356, %v5414, 0.0
      %v5624 = vadd.f32 %v5622, %v5623
      %v5625 = vsel %vm1356, %v5415, 0.0
      %v5626 = vadd.f32 %v5624, %v5625
      %v5627 = vsel %vm1356, %v5416, 0.0
      %v5628 = vadd.f32 %v5626, %v5627
      %v5629 = vsel %vm1356, %v5417, 0.0
      %v5630 = vadd.f32 %v5628, %v5629
      %v5631 = vsel %vm1356, %v5418, 0.0
      %v5632 = vadd.f32 %v5630, %v5631
      %v5633 = vsel %vm1356, %v5419, 0.0
      %v5634 = vadd.f32 %v5632, %v5633
      %v5635 = vsel %vm1356, %v5420, 0.0
      %v5636 = vadd.f32 %v5634, %v5635
      %v5637 = vsel %vm1356, %v5421, 0.0
      %v5638 = vadd.f32 %v5636, %v5637
      %v5639 = vsel %vm1356, %v5422, 0.0
      %v5640 = vadd.f32 %v5638, %v5639
      %v5641 = vsel %vm1356, %v5423, 0.0
      %v5642 = vadd.f32 %v5640, %v5641
      %v5643 = vsel %vm1356, %v5424, 0.0
      %v5644 = vadd.f32 %v5642, %v5643
      %v5645 = vsel %vm1356, %v5425, 0.0
      %v5646 = vadd.f32 %v5644, %v5645
      %v5647 = vsel %vm1356, %v5426, 0.0
      %v5648 = vadd.f32 %v5646, %v5647
      %v5649 = vsel %vm1356, %v5427, 0.0
      %v5650 = vadd.f32 %v5648, %v5649
      %v5651 = vrot.slane %v5650, 4
      %v5652 = vadd.f32 %v5650, %v5651
      %v5653 = vrot.slane %v5652, 2
      %v5654 = vadd.f32 %v5652, %v5653
      %v5655 = vrot.slane %v5654, 1
      %v5656 = vadd.f32 %v5654, %v5655
      %v5657 = vmul.f32 %v5656, 0.00390625
      %v5658 = vsub.f32 %v5396, %v5657
      %v5659 = vsub.f32 %v5397, %v5657
      %v5660 = vsub.f32 %v5398, %v5657
      %v5661 = vsub.f32 %v5399, %v5657
      %v5662 = vsub.f32 %v5400, %v5657
      %v5663 = vsub.f32 %v5401, %v5657
      %v5664 = vsub.f32 %v5402, %v5657
      %v5665 = vsub.f32 %v5403, %v5657
      %v5666 = vsub.f32 %v5404, %v5657
      %v5667 = vsub.f32 %v5405, %v5657
      %v5668 = vsub.f32 %v5406, %v5657
      %v5669 = vsub.f32 %v5407, %v5657
      %v5670 = vsub.f32 %v5408, %v5657
      %v5671 = vsub.f32 %v5409, %v5657
      %v5672 = vsub.f32 %v5410, %v5657
      %v5673 = vsub.f32 %v5411, %v5657
      %v5674 = vsub.f32 %v5412, %v5657
      %v5675 = vsub.f32 %v5413, %v5657
      %v5676 = vsub.f32 %v5414, %v5657
      %v5677 = vsub.f32 %v5415, %v5657
      %v5678 = vsub.f32 %v5416, %v5657
      %v5679 = vsub.f32 %v5417, %v5657
      %v5680 = vsub.f32 %v5418, %v5657
      %v5681 = vsub.f32 %v5419, %v5657
      %v5682 = vsub.f32 %v5420, %v5657
      %v5683 = vsub.f32 %v5421, %v5657
      %v5684 = vsub.f32 %v5422, %v5657
      %v5685 = vsub.f32 %v5423, %v5657
      %v5686 = vsub.f32 %v5424, %v5657
      %v5687 = vsub.f32 %v5425, %v5657
      %v5688 = vsub.f32 %v5426, %v5657
      %v5689 = vsub.f32 %v5427, %v5657
      %5690 = vst.msk [vmem:[%s181] sm:$0x1] %vm186, %v5656
      %v5691 = vmul.f32 %v5658, %v5658
      %v5692 = vmul.f32 %v5659, %v5659
      %v5693 = vmul.f32 %v5660, %v5660
      %v5694 = vmul.f32 %v5661, %v5661
      %v5695 = vmul.f32 %v5662, %v5662
      %v5696 = vmul.f32 %v5663, %v5663
      %v5697 = vmul.f32 %v5664, %v5664
      %v5698 = vmul.f32 %v5665, %v5665
      %v5699 = vmul.f32 %v5666, %v5666
      %v5700 = vmul.f32 %v5667, %v5667
      %v5701 = vmul.f32 %v5668, %v5668
      %v5702 = vmul.f32 %v5669, %v5669
      %v5703 = vmul.f32 %v5670, %v5670
      %v5704 = vmul.f32 %v5671, %v5671
      %v5705 = vmul.f32 %v5672, %v5672
      %v5706 = vmul.f32 %v5673, %v5673
      %v5707 = vmul.f32 %v5674, %v5674
      %v5708 = vmul.f32 %v5675, %v5675
      %v5709 = vmul.f32 %v5676, %v5676
      %v5710 = vmul.f32 %v5677, %v5677
      %v5711 = vmul.f32 %v5678, %v5678
      %v5712 = vmul.f32 %v5679, %v5679
      %v5713 = vmul.f32 %v5680, %v5680
      %v5714 = vmul.f32 %v5681, %v5681
      %v5715 = vmul.f32 %v5682, %v5682
      %v5716 = vmul.f32 %v5683, %v5683
      %v5717 = vmul.f32 %v5684, %v5684
      %v5718 = vmul.f32 %v5685, %v5685
      %v5719 = vmul.f32 %v5686, %v5686
      %v5720 = vmul.f32 %v5687, %v5687
      %v5721 = vmul.f32 %v5688, %v5688
      %v5722 = vmul.f32 %v5689, %v5689
      %v5723 = vsel %vm1356, %v5691, 0.0
      %v5724 = vsel %vm1356, %v5692, 0.0
      %v5725 = vadd.f32 %v5723, %v5724
      %v5726 = vsel %vm1356, %v5693, 0.0
      %v5727 = vadd.f32 %v5725, %v5726
      %v5728 = vsel %vm1356, %v5694, 0.0
      %v5729 = vadd.f32 %v5727, %v5728
      %v5730 = vsel %vm1356, %v5695, 0.0
      %v5731 = vadd.f32 %v5729, %v5730
      %v5732 = vsel %vm1356, %v5696, 0.0
      %v5733 = vadd.f32 %v5731, %v5732
      %v5734 = vsel %vm1356, %v5697, 0.0
      %v5735 = vadd.f32 %v5733, %v5734
      %v5736 = vsel %vm1356, %v5698, 0.0
      %v5737 = vadd.f32 %v5735, %v5736
      %v5738 = vsel %vm1356, %v5699, 0.0
      %v5739 = vadd.f32 %v5737, %v5738
      %v5740 = vsel %vm1356, %v5700, 0.0
      %v5741 = vadd.f32 %v5739, %v5740
      %v5742 = vsel %vm1356, %v5701, 0.0
      %v5743 = vadd.f32 %v5741, %v5742
      %v5744 = vsel %vm1356, %v5702, 0.0
      %v5745 = vadd.f32 %v5743, %v5744
      %v5746 = vsel %vm1356, %v5703, 0.0
      %v5747 = vadd.f32 %v5745, %v5746
      %v5748 = vsel %vm1356, %v5704, 0.0
      %v5749 = vadd.f32 %v5747, %v5748
      %v5750 = vsel %vm1356, %v5705, 0.0
      %v5751 = vadd.f32 %v5749, %v5750
      %v5752 = vsel %vm1356, %v5706, 0.0
      %v5753 = vadd.f32 %v5751, %v5752
      %v5754 = vsel %vm1356, %v5707, 0.0
      %v5755 = vadd.f32 %v5753, %v5754
      %v5756 = vsel %vm1356, %v5708, 0.0
      %v5757 = vadd.f32 %v5755, %v5756
      %v5758 = vsel %vm1356, %v5709, 0.0
      %v5759 = vadd.f32 %v5757, %v5758
      %v5760 = vsel %vm1356, %v5710, 0.0
      %v5761 = vadd.f32 %v5759, %v5760
      %v5762 = vsel %vm1356, %v5711, 0.0
      %v5763 = vadd.f32 %v5761, %v5762
      %v5764 = vsel %vm1356, %v5712, 0.0
      %v5765 = vadd.f32 %v5763, %v5764
      %v5766 = vsel %vm1356, %v5713, 0.0
      %v5767 = vadd.f32 %v5765, %v5766
      %v5768 = vsel %vm1356, %v5714, 0.0
      %v5769 = vadd.f32 %v5767, %v5768
      %v5770 = vsel %vm1356, %v5715, 0.0
      %v5771 = vadd.f32 %v5769, %v5770
      %v5772 = vsel %vm1356, %v5716, 0.0
      %v5773 = vadd.f32 %v5771, %v5772
      %v5774 = vsel %vm1356, %v5717, 0.0
      %v5775 = vadd.f32 %v5773, %v5774
      %v5776 = vsel %vm1356, %v5718, 0.0
      %v5777 = vadd.f32 %v5775, %v5776
      %v5778 = vsel %vm1356, %v5719, 0.0
      %v5779 = vadd.f32 %v5777, %v5778
      %v5780 = vsel %vm1356, %v5720, 0.0
      %v5781 = vadd.f32 %v5779, %v5780
      %v5782 = vsel %vm1356, %v5721, 0.0
      %v5783 = vadd.f32 %v5781, %v5782
      %v5784 = vsel %vm1356, %v5722, 0.0
      %v5785 = vadd.f32 %v5783, %v5784
      %v5786 = vrot.slane %v5785, 4
      %v5787 = vadd.f32 %v5785, %v5786
      %v5788 = vrot.slane %v5787, 2
      %v5789 = vadd.f32 %v5787, %v5788
      %v5790 = vrot.slane %v5789, 1
      %v5791 = vadd.f32 %v5789, %v5790
      %5792 = vst.msk [vmem:[%s181 + $0x1] sm:$0x1] %vm186, %v5791
      %p5793 = scmp.lt.s32.totalorder %s15, 1
      %s5794 = scalar_select %p5793, %s15, 1
      %s5795 = smul.addr %s5794, 32
      %s5796 = smul.addr %s5795, 4
      %s5797 = scalar_lea.vmem %s2, %s5796
      %p5798 = scmp.lt.s32.totalorder %s15, 1
      %s5799 = scalar_select %p5798, %s15, 1
      %s5800 = smul.addr %s5799, 2
      %s5801 = scalar_lea.vmem %s3, %s5800
      // Predicated region
      $region29: #{basic_block_forward_nhwc.3} parent=27 // pred_check
        %p5802 = pneg %p80
      $region30: #{basic_block_forward_nhwc.3} parent=27 // pred_check_branch
        %5804 = sbr.rel (%p5802) target = $region32
      $region31: #{basic_block_forward_nhwc.3} parent=27 // pred_region
        _
      $region32: #{basic_block_forward_nhwc.3} parent=27 // pred_fallthru
        _
      // Predicated region
      $region33: #{basic_block_forward_nhwc.3} parent=27 // pred_check
        %p5805 = pneg %p106
      $region34: #{basic_block_forward_nhwc.3} parent=27 // pred_check_branch
        %5807 = sbr.rel (%p5805) target = $region36
      $region35: #{basic_block_forward_nhwc.3} parent=27 // pred_region
        _
      $region36: #{basic_block_forward_nhwc.3} parent=27 // pred_fallthru
        _
    $region28: #{basic_block_forward_nhwc.3} parent=5 // pred_fallthru
      _
    %p5808 = scmp.le.s32.totalorder 2, %s10
    // Predicated region
    $region37: #{basic_block_forward_nhwc.3} parent=5 // pred_check
      %p5809 = pneg %p5808
    $region38: #{basic_block_forward_nhwc.3} parent=5 // pred_check_branch
      %5811 = sbr.rel (%p5809) target = $region40
    $region39: #{basic_block_forward_nhwc.3} parent=5 // pred_region
      %s5812 = ssub.s32 %s10, 2
      // Predicated region
      $region41: #{basic_block_forward_nhwc.3} parent=39 // pred_check
        %p5813 = pneg %p86
      $region42: #{basic_block_forward_nhwc.3} parent=39 // pred_check_branch
        %5815 = sbr.rel (%p5813) target = $region44
      $region43: #{basic_block_forward_nhwc.3} parent=39 // pred_region
        %p5816 = scmp.lt.s32.totalorder %s16, 1
        %s5817 = scalar_select %p5816, %s16, 1
        %s5818 = smul.addr %s5817, 32
        %s5819 = smul.addr %s5818, 4
        %s5820 = scalar_lea.vmem %s2, %s5819
      $region44: #{basic_block_forward_nhwc.3} parent=39 // pred_fallthru
        _
      // Predicated region
      $region45: #{basic_block_forward_nhwc.3} parent=39 // pred_check
        %p5821 = pneg %p112
      $region46: #{basic_block_forward_nhwc.3} parent=39 // pred_check_branch
        %5823 = sbr.rel (%p5821) target = $region48
      $region47: #{basic_block_forward_nhwc.3} parent=39 // pred_region
        %p5824 = scmp.lt.s32.totalorder %s16, 1
        %s5825 = scalar_select %p5824, %s16, 1
        %s5826 = smul.addr %s5825, 2
        %s5827 = scalar_lea.vmem %s3, %s5826
      $region48: #{basic_block_forward_nhwc.3} parent=39 // pred_fallthru
        _
    $region40: #{basic_block_forward_nhwc.3} parent=5 // pred_fallthru
      _
  $region6: #{basic_block_forward_nhwc.3} parent=0 // loop_footer
    %s14 = sadd.s32 1, %s10
  $region7: #{basic_block_forward_nhwc.3} parent=0 // loop_footer_branch
    %9 = sbr.rel target = $region3
  $region8: #{basic_block_forward_nhwc.3} parent=0 // loop_exit
    _

// kernel: basic_block_forward_nhwc.4
$region0: #{basic_block_forward_nhwc.4}
  #allocation0 [shape = 'u32[]', space=smem, size = 0x4, offset = 0x4, fixed_abs, tag = 'smem constant byte address 0x4 - core index']
  #allocation1 [shape = 'u32[144,128]{1,0:T(1,128)}', space=vmem, size = 0x12000, scoped, tag = 'internal scratch']
  #allocation2 [shape = 'bf16[1,18,18,8]{3,2,1,0:T(8,128)(2,1)}', space=vmem, size = 0x1b000, scoped, tag = 'scratch operand']
  %s0 = inlined_call_operand.vmem [shape: bf16[2,16,16,8], index: 0, kind: input, shape index: {}]
  %s1 = inlined_call_operand.vmem [shape: f32[1,8], index: 1, kind: input, shape index: {}]
  %s2 = inlined_call_operand.vmem [shape: f32[1,8], index: 2, kind: input, shape index: {}]
  %s3 = inlined_call_operand.vmem [shape: bf16[9,8,8], index: 3, kind: input, shape index: {}]
  %s4 = inlined_call_operand.vmem [shape: bf16[2,16,16,8], index: 4, kind: output, shape index: {0}]
  %s5 = inlined_call_operand.vmem [shape: f32[2,2,8], index: 5, kind: output, shape index: {1}]
  %6 = xla_tuple %s4, %s5
  %s7 = sld [smem:[#allocation0]]
  $region57: #{basic_block_forward_nhwc.4} parent=0
    _
  %s9 = ssub.s32 1, %s7
  %s10 = scalar_select 0, %s9, %s7
  loop: start=0, step=1, limit=4
  $region2: #{basic_block_forward_nhwc.4} parent=0 // loop_pre_header
    _
  $region3: #{basic_block_forward_nhwc.4} parent=0 // loop_header
    %s12 = sphi 0, %s16
    %p13 = scmp.ge.s32.totalorder %s12, 4
    %s22 = sphi 0, %s24
    %s25 = sphi 0, %s22
    %s26 = sphi 0, %s25
    %s42 = sphi 0, %s26
    %s46 = sphi 0, %s46
    %s48 = sphi 0, %s46
    %s49 = sphi 0, %s48
    %s63 = sphi 0, %s49
    %s67 = sphi 0, %s67
    %s69 = sphi 0, %s67
    %s70 = sphi 0, %s69
    %s84 = sphi 0, %s70
    %s88 = sphi 0, %s88
    %s90 = sphi 0, %s88
    %s91 = sphi 0, %s90
    %s105 = sphi 0, %s91
    %s111 = sphi 0, %s113
    %s114 = sphi 0, %s111
    %s115 = sphi 0, %s114
    %s131 = sphi 0, %s115
    %s137 = sphi 0, %s139
    %s140 = sphi 0, %s137
    %s141 = sphi 0, %s140
    %s157 = sphi 0, %s141
  $region4: #{basic_block_forward_nhwc.4} parent=0 // loop_header_branch
    %15 = sbr.rel (%p13) target = $region8
  $region5: #{basic_block_forward_nhwc.4} parent=0 // loop_body
    %s17 = ssub.s32 %s12, 1
    %s18 = ssub.s32 %s12, 2
    %s19 = sadd.s32 %s12, 1
    %s20 = ssub.s32 %s12, %s19
    %p21 = scmp.eq.s32.totalorder %s20, 0
    %s23 = sadd.s32 %s22, 1
    %s24 = scalar_select %p21, %s22, %s23
    %p27 = pneg %p21
    %p28 = scmp.eq.s32.totalorder %s12, 1
    %p29 = por %p27, %p28
    %p30 = scmp.ne.s32.totalorder %s22, %s25
    %p31 = scmp.eq.s32.totalorder %s12, 0
    %p32 = por %p30, %p31
    %p33 = scmp.ne.s32.totalorder %s22, %s25
    %p34 = scmp.eq.s32.totalorder %s17, 1
    %p35 = por %p33, %p34
    %p36 = scmp.ne.s32.totalorder %s25, %s26
    %p37 = scmp.eq.s32.totalorder %s17, 0
    %p38 = por %p36, %p37
    %p39 = scmp.ne.s32.totalorder %s25, %s26
    %p40 = scmp.eq.s32.totalorder %s18, 1
    %p41 = por %p39, %p40
    %p43 = scmp.ne.s32.totalorder %s26, %s42
    %p44 = scmp.eq.s32.totalorder %s18, 0
    %p45 = por %p43, %p44
    %s47 = sadd.s32 %s46, 1
    %p50 = scmp.eq.s32.totalorder %s12, 1
    %p51 = scmp.ne.s32.totalorder %s46, %s48
    %p52 = scmp.eq.s32.totalorder %s12, 0
    %p53 = por %p51, %p52
    %p54 = scmp.ne.s32.totalorder %s46, %s48
    %p55 = scmp.eq.s32.totalorder %s17, 1
    %p56 = por %p54, %p55
    %p57 = scmp.ne.s32.totalorder %s48, %s49
    %p58 = scmp.eq.s32.totalorder %s17, 0
    %p59 = por %p57, %p58
    %p60 = scmp.ne.s32.totalorder %s48, %s49
    %p61 = scmp.eq.s32.totalorder %s18, 1
    %p62 = por %p60, %p61
    %p64 = scmp.ne.s32.totalorder %s49, %s63
    %p65 = scmp.eq.s32.totalorder %s18, 0
    %p66 = por %p64, %p65
    %s68 = sadd.s32 %s67, 1
    %p71 = scmp.eq.s32.totalorder %s12, 1
    %p72 = scmp.ne.s32.totalorder %s67, %s69
    %p73 = scmp.eq.s32.totalorder %s12, 0
    %p74 = por %p72, %p73
    %p75 = scmp.ne.s32.totalorder %s67, %s69
    %p76 = scmp.eq.s32.totalorder %s17, 1
    %p77 = por %p75, %p76
    %p78 = scmp.ne.s32.totalorder %s69, %s70
    %p79 = scmp.eq.s32.totalorder %s17, 0
    %p80 = por %p78, %p79
    %p81 = scmp.ne.s32.totalorder %s69, %s70
    %p82 = scmp.eq.s32.totalorder %s18, 1
    %p83 = por %p81, %p82
    %p85 = scmp.ne.s32.totalorder %s70, %s84
    %p86 = scmp.eq.s32.totalorder %s18, 0
    %p87 = por %p85, %p86
    %s89 = sadd.s32 %s88, 1
    %p92 = scmp.eq.s32.totalorder %s12, 1
    %p93 = scmp.ne.s32.totalorder %s88, %s90
    %p94 = scmp.eq.s32.totalorder %s12, 0
    %p95 = por %p93, %p94
    %p96 = scmp.ne.s32.totalorder %s88, %s90
    %p97 = scmp.eq.s32.totalorder %s17, 1
    %p98 = por %p96, %p97
    %p99 = scmp.ne.s32.totalorder %s90, %s91
    %p100 = scmp.eq.s32.totalorder %s17, 0
    %p101 = por %p99, %p100
    %p102 = scmp.ne.s32.totalorder %s90, %s91
    %p103 = scmp.eq.s32.totalorder %s18, 1
    %p104 = por %p102, %p103
    %p106 = scmp.ne.s32.totalorder %s91, %s105
    %p107 = scmp.eq.s32.totalorder %s18, 0
    %p108 = por %p106, %p107
    %s109 = ssub.s32 %s12, %s19
    %p110 = scmp.eq.s32.totalorder %s109, 0
    %s112 = sadd.s32 %s111, 1
    %s113 = scalar_select %p110, %s111, %s112
    %p116 = pneg %p110
    %p117 = scmp.eq.s32.totalorder %s12, 1
    %p118 = por %p116, %p117
    %p119 = scmp.ne.s32.totalorder %s111, %s114
    %p120 = scmp.eq.s32.totalorder %s12, 0
    %p121 = por %p119, %p120
    %p122 = scmp.ne.s32.totalorder %s111, %s114
    %p123 = scmp.eq.s32.totalorder %s17, 1
    %p124 = por %p122, %p123
    %p125 = scmp.ne.s32.totalorder %s114, %s115
    %p126 = scmp.eq.s32.totalorder %s17, 0
    %p127 = por %p125, %p126
    %p128 = scmp.ne.s32.totalorder %s114, %s115
    %p129 = scmp.eq.s32.totalorder %s18, 1
    %p130 = por %p128, %p129
    %p132 = scmp.ne.s32.totalorder %s115, %s131
    %p133 = scmp.eq.s32.totalorder %s18, 0
    %p134 = por %p132, %p133
    %s135 = ssub.s32 %s12, %s19
    %p136 = scmp.eq.s32.totalorder %s135, 0
    %s138 = sadd.s32 %s137, 1
    %s139 = scalar_select %p136, %s137, %s138
    %p142 = pneg %p136
    %p143 = scmp.eq.s32.totalorder %s12, 1
    %p144 = por %p142, %p143
    %p145 = scmp.ne.s32.totalorder %s137, %s140
    %p146 = scmp.eq.s32.totalorder %s12, 0
    %p147 = por %p145, %p146
    %p148 = scmp.ne.s32.totalorder %s137, %s140
    %p149 = scmp.eq.s32.totalorder %s17, 1
    %p150 = por %p148, %p149
    %p151 = scmp.ne.s32.totalorder %s140, %s141
    %p152 = scmp.eq.s32.totalorder %s17, 0
    %p153 = por %p151, %p152
    %p154 = scmp.ne.s32.totalorder %s140, %s141
    %p155 = scmp.eq.s32.totalorder %s18, 1
    %p156 = por %p154, %p155
    %p158 = scmp.ne.s32.totalorder %s141, %s157
    %p159 = scmp.eq.s32.totalorder %s18, 0
    %p160 = por %p158, %p159
    %p161 = scmp.le.s32.totalorder 1, %s12
    %p162 = scmp.lt.s32.totalorder %s12, 3
    %p163 = pnand %p161, %p162
    %p164 = pneg %p163
    // Predicated region
    $region9: #{basic_block_forward_nhwc.4} parent=5 // pred_check
      _
    $region10: #{basic_block_forward_nhwc.4} parent=5 // pred_check_branch
      %166 = sbr.rel (%p163) target = $region12
    $region11: #{basic_block_forward_nhwc.4} parent=5 // pred_region
      %s167 = ssub.s32 %s12, 1
      // Predicated region
      $region13: #{basic_block_forward_nhwc.4} parent=11 // pred_check
        %p168 = pneg %p59
      $region14: #{basic_block_forward_nhwc.4} parent=11 // pred_check_branch
        %170 = sbr.rel (%p168) target = $region16
      $region15: #{basic_block_forward_nhwc.4} parent=11 // pred_region
        _
      $region16: #{basic_block_forward_nhwc.4} parent=11 // pred_fallthru
        _
      // Predicated region
      $region17: #{basic_block_forward_nhwc.4} parent=11 // pred_check
        %p171 = pneg %p80
      $region18: #{basic_block_forward_nhwc.4} parent=11 // pred_check_branch
        %173 = sbr.rel (%p171) target = $region20
      $region19: #{basic_block_forward_nhwc.4} parent=11 // pred_region
        _
      $region20: #{basic_block_forward_nhwc.4} parent=11 // pred_fallthru
        _
      // Predicated region
      $region21: #{basic_block_forward_nhwc.4} parent=11 // pred_check
        %p174 = pneg %p101
      $region22: #{basic_block_forward_nhwc.4} parent=11 // pred_check_branch
        %176 = sbr.rel (%p174) target = $region24
      $region23: #{basic_block_forward_nhwc.4} parent=11 // pred_region
        _
      $region24: #{basic_block_forward_nhwc.4} parent=11 // pred_fallthru
        _
    $region12: #{basic_block_forward_nhwc.4} parent=5 // pred_fallthru
      _
    %p177 = scmp.lt.s32.totalorder %s12, 2
    // Predicated region
    $region25: #{basic_block_forward_nhwc.4} parent=5 // pred_check
      %p178 = pneg %p177
    $region26: #{basic_block_forward_nhwc.4} parent=5 // pred_check_branch
      %180 = sbr.rel (%p178) target = $region28
    $region27: #{basic_block_forward_nhwc.4} parent=5 // pred_region
      // Predicated region
      $region29: #{basic_block_forward_nhwc.4} parent=27 // pred_check
        %p181 = pneg %p32
      $region30: #{basic_block_forward_nhwc.4} parent=27 // pred_check_branch
        %183 = sbr.rel (%p181) target = $region32
      $region31: #{basic_block_forward_nhwc.4} parent=27 // pred_region
        %p184 = scmp.lt.s32.totalorder %s12, 1
        %s185 = scalar_select %p184, %s12, 1
        %s186 = smul.addr %s185, 32
        %s187 = smul.addr %s186, 4
        %s188 = scalar_lea.vmem %s0, %s187
      $region32: #{basic_block_forward_nhwc.4} parent=27 // pred_fallthru
        _
    $region28: #{basic_block_forward_nhwc.4} parent=5 // pred_fallthru
      _
    %p189 = scmp.le.s32.totalorder 1, %s12
    %p190 = scmp.lt.s32.totalorder %s12, 3
    %p191 = pnand %p189, %p190
    %p192 = pneg %p191
    // Predicated region
    $region33: #{basic_block_forward_nhwc.4} parent=5 // pred_check
      _
    $region34: #{basic_block_forward_nhwc.4} parent=5 // pred_check_branch
      %194 = sbr.rel (%p191) target = $region36
    $region35: #{basic_block_forward_nhwc.4} parent=5 // pred_region
      %s195 = ssub.s32 %s12, 1
      %p196 = scmp.lt.s32.totalorder %s17, 1
      %s197 = scalar_select %p196, %s17, 1
      %s198 = smul.addr %s197, 32
      %s199 = smul.addr %s198, 4
      %s200 = scalar_lea.vmem %s0, %s199
      %p201 = pneg %p38
      %p202 = pneg %p35
      %p203 = pneg %p59
      %p204 = pneg %p56
      %p205 = pneg %p80
      %p206 = pneg %p77
      %p207 = pneg %p101
      %p208 = pneg %p98
      %p209 = pneg %p127
      %p210 = pneg %p124
      %p211 = scmp.lt.s32.totalorder %s17, 1
      %s212 = scalar_select %p211, %s17, 1
      %s213 = smul.addr %s212, 32
      %s214 = smul.addr %s213, 4
      %s215 = scalar_lea.vmem %s4, %s214
      %p216 = pneg %p153
      %p217 = pneg %p150
      %p218 = scmp.lt.s32.totalorder %s17, 1
      %s219 = scalar_select %p218, %s17, 1
      %s220 = smul.addr %s219, 2
      %s221 = scalar_lea.vmem %s5, %s220
      %p222 = scmp.lt.s32.totalorder %s17, 1
      %s223 = scalar_select %p222, %s17, 1
      %s224 = smul.addr %s223, 32
      %s225 = smul.addr %s224, 4
      %s226 = scalar_lea.vmem %s0, %s225
      %p227 = scmp.lt.s32.totalorder %s17, 1
      %s228 = scalar_select %p227, %s17, 1
      %s229 = smul.addr %s228, 32
      %s230 = smul.addr %s229, 4
      %s231 = scalar_lea.vmem %s4, %s230
      %p232 = scmp.lt.s32.totalorder %s17, 1
      %s233 = scalar_select %p232, %s17, 1
      %s234 = smul.addr %s233, 2
      %s235 = scalar_lea.vmem %s5, %s234
      %vm237 = vcmask 60416
      %238 = vst.msk [vmem:[#allocation2] sm:$0xf] %vm237, 0
      %239 = vst.msk [vmem:[#allocation2 + $0x4] sm:$0xf] %vm237, 0
      %vm240 = vcmask 57344
      %241 = vst.msk [vmem:[#allocation2 + $0x8] sm:$0x1] %vm240, 0
      %s242 = scalar_lea.vmem [#allocation2], 204
      %243 = vst.msk [vmem:[%s242] sm:$0xf] %vm237, 0
      %244 = vst.msk [vmem:[%s242 + $0x4] sm:$0xf] %vm237, 0
      %245 = vst.msk [vmem:[%s242 + $0x8] sm:$0x1] %vm240, 0
      %vm246 = vcmask 57344
      %vm247 = vsmask.f32 256
      %vm248 = vmand %vm246, %vm247
      %v249 = vld [vmem:[#allocation2] sm:$0x1]
      %v250 = vsel %vm248, 0, %v249
      %251 = vst [vmem:[#allocation2] sm:$0x1] %v250
      %v252 = vld [vmem:[#allocation2 + $0xc] sm:$0x1]
      %v253 = vsel %vm248, 0, %v252
      %254 = vst [vmem:[#allocation2 + $0xc] sm:$0x1] %v253
      %v255 = vld [vmem:[#allocation2 + $0x18] sm:$0x1]
      %v256 = vsel %vm248, 0, %v255
      %257 = vst [vmem:[#allocation2 + $0x18] sm:$0x1] %v256
      %v258 = vld [vmem:[#allocation2 + $0x24] sm:$0x1]
      %v259 = vsel %vm248, 0, %v258
      %260 = vst [vmem:[#allocation2 + $0x24] sm:$0x1] %v259
      %v261 = vld [vmem:[#allocation2 + $0x30] sm:$0x1]
      %v262 = vsel %vm248, 0, %v261
      %263 = vst [vmem:[#allocation2 + $0x30] sm:$0x1] %v262
      %v264 = vld [vmem:[#allocation2 + $0x3c] sm:$0x1]
      %v265 = vsel %vm248, 0, %v264
      %266 = vst [vmem:[#allocation2 + $0x3c] sm:$0x1] %v265
      %v267 = vld [vmem:[#allocation2 + $0x48] sm:$0x1]
      %v268 = vsel %vm248, 0, %v267
      %269 = vst [vmem:[#allocation2 + $0x48] sm:$0x1] %v268
      %v270 = vld [vmem:[#allocation2 + $0x54] sm:$0x1]
      %v271 = vsel %vm248, 0, %v270
      %272 = vst [vmem:[#allocation2 + $0x54] sm:$0x1] %v271
      %v273 = vld [vmem:[#allocation2 + $0x60] sm:$0x1]
      %v274 = vsel %vm248, 0, %v273
      %275 = vst [vmem:[#allocation2 + $0x60] sm:$0x1] %v274
      %v276 = vld [vmem:[#allocation2 + $0x6c] sm:$0x1]
      %v277 = vsel %vm248, 0, %v276
      %278 = vst [vmem:[#allocation2 + $0x6c] sm:$0x1] %v277
      %v279 = vld [vmem:[#allocation2 + $0x78] sm:$0x1]
      %v280 = vsel %vm248, 0, %v279
      %281 = vst [vmem:[#allocation2 + $0x78] sm:$0x1] %v280
      %v282 = vld [vmem:[#allocation2 + $0x84] sm:$0x1]
      %v283 = vsel %vm248, 0, %v282
      %284 = vst [vmem:[#allocation2 + $0x84] sm:$0x1] %v283
      %v285 = vld [vmem:[#allocation2 + $0x90] sm:$0x1]
      %v286 = vsel %vm248, 0, %v285
      %287 = vst [vmem:[#allocation2 + $0x90] sm:$0x1] %v286
      %v288 = vld [vmem:[#allocation2 + $0x9c] sm:$0x1]
      %v289 = vsel %vm248, 0, %v288
      %290 = vst [vmem:[#allocation2 + $0x9c] sm:$0x1] %v289
      %v291 = vld [vmem:[#allocation2 + $0xa8] sm:$0x1]
      %v292 = vsel %vm248, 0, %v291
      %293 = vst [vmem:[#allocation2 + $0xa8] sm:$0x1] %v292
      %v294 = vld [vmem:[#allocation2 + $0xb4] sm:$0x1]
      %v295 = vsel %vm248, 0, %v294
      %296 = vst [vmem:[#allocation2 + $0xb4] sm:$0x1] %v295
      %v297 = vld [vmem:[#allocation2 + $0xc0] sm:$0x1]
      %v298 = vsel %vm248, 0, %v297
      %299 = vst [vmem:[#allocation2 + $0xc0] sm:$0x1] %v298
      %v300 = vld [vmem:[#allocation2 + $0xcc] sm:$0x1]
      %v301 = vsel %vm248, 0, %v300
      %302 = vst [vmem:[#allocation2 + $0xcc] sm:$0x1] %v301
      %vm303 = vsmask.f32 7938
      %vm304 = vmand %vm246, %vm303
      %v305 = vld [vmem:[#allocation2 + $0x8] sm:$0x1]
      %v306 = vsel %vm304, 0, %v305
      %307 = vst [vmem:[#allocation2 + $0x8] sm:$0x1] %v306
      %v308 = vld [vmem:[#allocation2 + $0x14] sm:$0x1]
      %v309 = vsel %vm304, 0, %v308
      %310 = vst [vmem:[#allocation2 + $0x14] sm:$0x1] %v309
      %v311 = vld [vmem:[#allocation2 + $0x20] sm:$0x1]
      %v312 = vsel %vm304, 0, %v311
      %313 = vst [vmem:[#allocation2 + $0x20] sm:$0x1] %v312
      %v314 = vld [vmem:[#allocation2 + $0x2c] sm:$0x1]
      %v315 = vsel %vm304, 0, %v314
      %316 = vst [vmem:[#allocation2 + $0x2c] sm:$0x1] %v315
      %v317 = vld [vmem:[#allocation2 + $0x38] sm:$0x1]
      %v318 = vsel %vm304, 0, %v317
      %319 = vst [vmem:[#allocation2 + $0x38] sm:$0x1] %v318
      %v320 = vld [vmem:[#allocation2 + $0x44] sm:$0x1]
      %v321 = vsel %vm304, 0, %v320
      %322 = vst [vmem:[#allocation2 + $0x44] sm:$0x1] %v321
      %v323 = vld [vmem:[#allocation2 + $0x50] sm:$0x1]
      %v324 = vsel %vm304, 0, %v323
      %325 = vst [vmem:[#allocation2 + $0x50] sm:$0x1] %v324
      %v326 = vld [vmem:[#allocation2 + $0x5c] sm:$0x1]
      %v327 = vsel %vm304, 0, %v326
      %328 = vst [vmem:[#allocation2 + $0x5c] sm:$0x1] %v327
      %v329 = vld [vmem:[#allocation2 + $0x68] sm:$0x1]
      %v330 = vsel %vm304, 0, %v329
      %331 = vst [vmem:[#allocation2 + $0x68] sm:$0x1] %v330
      %v332 = vld [vmem:[#allocation2 + $0x74] sm:$0x1]
      %v333 = vsel %vm304, 0, %v332
      %334 = vst [vmem:[#allocation2 + $0x74] sm:$0x1] %v333
      %v335 = vld [vmem:[#allocation2 + $0x80] sm:$0x1]
      %v336 = vsel %vm304, 0, %v335
      %337 = vst [vmem:[#allocation2 + $0x80] sm:$0x1] %v336
      %v338 = vld [vmem:[#allocation2 + $0x8c] sm:$0x1]
      %v339 = vsel %vm304, 0, %v338
      %340 = vst [vmem:[#allocation2 + $0x8c] sm:$0x1] %v339
      %v341 = vld [vmem:[#allocation2 + $0x98] sm:$0x1]
      %v342 = vsel %vm304, 0, %v341
      %343 = vst [vmem:[#allocation2 + $0x98] sm:$0x1] %v342
      %v344 = vld [vmem:[#allocation2 + $0xa4] sm:$0x1]
      %v345 = vsel %vm304, 0, %v344
      %346 = vst [vmem:[#allocation2 + $0xa4] sm:$0x1] %v345
      %v347 = vld [vmem:[#allocation2 + $0xb0] sm:$0x1]
      %v348 = vsel %vm304, 0, %v347
      %349 = vst [vmem:[#allocation2 + $0xb0] sm:$0x1] %v348
      %v350 = vld [vmem:[#allocation2 + $0xbc] sm:$0x1]
      %v351 = vsel %vm304, 0, %v350
      %352 = vst [vmem:[#allocation2 + $0xbc] sm:$0x1] %v351
      %v353 = vld [vmem:[#allocation2 + $0xc8] sm:$0x1]
      %v354 = vsel %vm304, 0, %v353
      %355 = vst [vmem:[#allocation2 + $0xc8] sm:$0x1] %v354
      %v356 = vld [vmem:[#allocation2 + $0xd4] sm:$0x1]
      %v357 = vsel %vm304, 0, %v356
      %358 = vst [vmem:[#allocation2 + $0xd4] sm:$0x1] %v357
      %v359 = vld [vmem:[%s226] sm:$0xf]
      %v360 = vld [vmem:[%s226 + $0x4] sm:$0xf]
      %v361 = vld [vmem:[%s226 + $0x8] sm:$0xf]
      %v362 = vld [vmem:[%s226 + $0xc] sm:$0xf]
      %v363 = vld [vmem:[%s226 + $0x10] sm:$0xf]
      %v364 = vld [vmem:[%s226 + $0x14] sm:$0xf]
      %v365 = vld [vmem:[%s226 + $0x18] sm:$0xf]
      %v366 = vld [vmem:[%s226 + $0x1c] sm:$0xf]
      %v367 = vld [vmem:[%s226 + $0x20] sm:$0xf]
      %v368 = vld [vmem:[%s226 + $0x24] sm:$0xf]
      %v369 = vld [vmem:[%s226 + $0x28] sm:$0xf]
      %v370 = vld [vmem:[%s226 + $0x2c] sm:$0xf]
      %v371 = vld [vmem:[%s226 + $0x30] sm:$0xf]
      %v372 = vld [vmem:[%s226 + $0x34] sm:$0xf]
      %v373 = vld [vmem:[%s226 + $0x38] sm:$0xf]
      %v374 = vld [vmem:[%s226 + $0x3c] sm:$0xf]
      %v375 = vld [vmem:[%s226 + $0x40] sm:$0xf]
      %v376 = vld [vmem:[%s226 + $0x44] sm:$0xf]
      %v377 = vld [vmem:[%s226 + $0x48] sm:$0xf]
      %v378 = vld [vmem:[%s226 + $0x4c] sm:$0xf]
      %v379 = vld [vmem:[%s226 + $0x50] sm:$0xf]
      %v380 = vld [vmem:[%s226 + $0x54] sm:$0xf]
      %v381 = vld [vmem:[%s226 + $0x58] sm:$0xf]
      %v382 = vld [vmem:[%s226 + $0x5c] sm:$0xf]
      %v383 = vld [vmem:[%s226 + $0x60] sm:$0xf]
      %v384 = vld [vmem:[%s226 + $0x64] sm:$0xf]
      %v385 = vld [vmem:[%s226 + $0x68] sm:$0xf]
      %v386 = vld [vmem:[%s226 + $0x6c] sm:$0xf]
      %v387 = vld [vmem:[%s226 + $0x70] sm:$0xf]
      %v388 = vld [vmem:[%s226 + $0x74] sm:$0xf]
      %v389 = vld [vmem:[%s226 + $0x78] sm:$0xf]
      %v390 = vld [vmem:[%s226 + $0x7c] sm:$0xf]
      %v391 = vunpack.c.l.bf16 %v359
      %v392 = vunpack.c.l.bf16 %v360
      %v393 = vunpack.c.l.bf16 %v361
      %v394 = vunpack.c.l.bf16 %v362
      %v395 = vunpack.c.l.bf16 %v363
      %v396 = vunpack.c.l.bf16 %v364
      %v397 = vunpack.c.l.bf16 %v365
      %v398 = vunpack.c.l.bf16 %v366
      %v399 = vunpack.c.l.bf16 %v367
      %v400 = vunpack.c.l.bf16 %v368
      %v401 = vunpack.c.l.bf16 %v369
      %v402 = vunpack.c.l.bf16 %v370
      %v403 = vunpack.c.l.bf16 %v371
      %v404 = vunpack.c.l.bf16 %v372
      %v405 = vunpack.c.l.bf16 %v373
      %v406 = vunpack.c.l.bf16 %v374
      %v407 = vunpack.c.l.bf16 %v375
      %v408 = vunpack.c.l.bf16 %v376
      %v409 = vunpack.c.l.bf16 %v377
      %v410 = vunpack.c.l.bf16 %v378
      %v411 = vunpack.c.l.bf16 %v379
      %v412 = vunpack.c.l.bf16 %v380
      %v413 = vunpack.c.l.bf16 %v381
      %v414 = vunpack.c.l.bf16 %v382
      %v415 = vunpack.c.l.bf16 %v383
      %v416 = vunpack.c.l.bf16 %v384
      %v417 = vunpack.c.l.bf16 %v385
      %v418 = vunpack.c.l.bf16 %v386
      %v419 = vunpack.c.l.bf16 %v387
      %v420 = vunpack.c.l.bf16 %v388
      %v421 = vunpack.c.l.bf16 %v389
      %v422 = vunpack.c.l.bf16 %v390
      %v423 = vld [vmem:[%s1] sm:$0x1]
      %v425 = vlaneseq
      %v426 = vshrl.u32 %v425, 7
      %v427 = vsub.s32 0, %v426
      %v428 = vrot.slane %v423, %v427
      %v430 = vmul.f32 %v391, %v428
      %v431 = vmul.f32 %v392, %v428
      %v432 = vmul.f32 %v393, %v428
      %v433 = vmul.f32 %v394, %v428
      %v434 = vmul.f32 %v395, %v428
      %v435 = vmul.f32 %v396, %v428
      %v436 = vmul.f32 %v397, %v428
      %v437 = vmul.f32 %v398, %v428
      %v438 = vmul.f32 %v399, %v428
      %v439 = vmul.f32 %v400, %v428
      %v440 = vmul.f32 %v401, %v428
      %v441 = vmul.f32 %v402, %v428
      %v442 = vmul.f32 %v403, %v428
      %v443 = vmul.f32 %v404, %v428
      %v444 = vmul.f32 %v405, %v428
      %v445 = vmul.f32 %v406, %v428
      %v446 = vmul.f32 %v407, %v428
      %v447 = vmul.f32 %v408, %v428
      %v448 = vmul.f32 %v409, %v428
      %v449 = vmul.f32 %v410, %v428
      %v450 = vmul.f32 %v411, %v428
      %v451 = vmul.f32 %v412, %v428
      %v452 = vmul.f32 %v413, %v428
      %v453 = vmul.f32 %v414, %v428
      %v454 = vmul.f32 %v415, %v428
      %v455 = vmul.f32 %v416, %v428
      %v456 = vmul.f32 %v417, %v428
      %v457 = vmul.f32 %v418, %v428
      %v458 = vmul.f32 %v419, %v428
      %v459 = vmul.f32 %v420, %v428
      %v460 = vmul.f32 %v421, %v428
      %v461 = vmul.f32 %v422, %v428
      %v462 = vld [vmem:[%s2] sm:$0x1]
      %v464 = vlaneseq
      %v465 = vshrl.u32 %v464, 7
      %v466 = vsub.s32 0, %v465
      %v467 = vrot.slane %v462, %v466
      %v469 = vadd.f32 %v430, %v467
      %v470 = vadd.f32 %v431, %v467
      %v471 = vadd.f32 %v432, %v467
      %v472 = vadd.f32 %v433, %v467
      %v473 = vadd.f32 %v434, %v467
      %v474 = vadd.f32 %v435, %v467
      %v475 = vadd.f32 %v436, %v467
      %v476 = vadd.f32 %v437, %v467
      %v477 = vadd.f32 %v438, %v467
      %v478 = vadd.f32 %v439, %v467
      %v479 = vadd.f32 %v440, %v467
      %v480 = vadd.f32 %v441, %v467
      %v481 = vadd.f32 %v442, %v467
      %v482 = vadd.f32 %v443, %v467
      %v483 = vadd.f32 %v444, %v467
      %v484 = vadd.f32 %v445, %v467
      %v485 = vadd.f32 %v446, %v467
      %v486 = vadd.f32 %v447, %v467
      %v487 = vadd.f32 %v448, %v467
      %v488 = vadd.f32 %v449, %v467
      %v489 = vadd.f32 %v450, %v467
      %v490 = vadd.f32 %v451, %v467
      %v491 = vadd.f32 %v452, %v467
      %v492 = vadd.f32 %v453, %v467
      %v493 = vadd.f32 %v454, %v467
      %v494 = vadd.f32 %v455, %v467
      %v495 = vadd.f32 %v456, %v467
      %v496 = vadd.f32 %v457, %v467
      %v497 = vadd.f32 %v458, %v467
      %v498 = vadd.f32 %v459, %v467
      %v499 = vadd.f32 %v460, %v467
      %v500 = vadd.f32 %v461, %v467
      %v501 = vmax.f32 %v469, 0.0
      %v502 = vmax.f32 %v470, 0.0
      %v503 = vmax.f32 %v471, 0.0
      %v504 = vmax.f32 %v472, 0.0
      %v505 = vmax.f32 %v473, 0.0
      %v506 = vmax.f32 %v474, 0.0
      %v507 = vmax.f32 %v475, 0.0
      %v508 = vmax.f32 %v476, 0.0
      %v509 = vmax.f32 %v477, 0.0
      %v510 = vmax.f32 %v478, 0.0
      %v511 = vmax.f32 %v479, 0.0
      %v512 = vmax.f32 %v480, 0.0
      %v513 = vmax.f32 %v481, 0.0
      %v514 = vmax.f32 %v482, 0.0
      %v515 = vmax.f32 %v483, 0.0
      %v516 = vmax.f32 %v484, 0.0
      %v517 = vmax.f32 %v485, 0.0
      %v518 = vmax.f32 %v486, 0.0
      %v519 = vmax.f32 %v487, 0.0
      %v520 = vmax.f32 %v488, 0.0
      %v521 = vmax.f32 %v489, 0.0
      %v522 = vmax.f32 %v490, 0.0
      %v523 = vmax.f32 %v491, 0.0
      %v524 = vmax.f32 %v492, 0.0
      %v525 = vmax.f32 %v493, 0.0
      %v526 = vmax.f32 %v494, 0.0
      %v527 = vmax.f32 %v495, 0.0
      %v528 = vmax.f32 %v496, 0.0
      %v529 = vmax.f32 %v497, 0.0
      %v530 = vmax.f32 %v498, 0.0
      %v531 = vmax.f32 %v499, 0.0
      %v532 = vmax.f32 %v500, 0.0
      %v533 = vpack.c.bf16 %v502, %v501
      %v534 = vpack.c.bf16 %v504, %v503
      %v535 = vpack.c.bf16 %v506, %v505
      %v536 = vpack.c.bf16 %v508, %v507
      %v537 = vpack.c.bf16 %v510, %v509
      %v538 = vpack.c.bf16 %v512, %v511
      %v539 = vpack.c.bf16 %v514, %v513
      %v540 = vpack.c.bf16 %v516, %v515
      %v541 = vpack.c.bf16 %v518, %v517
      %v542 = vpack.c.bf16 %v520, %v519
      %v543 = vpack.c.bf16 %v522, %v521
      %v544 = vpack.c.bf16 %v524, %v523
      %v545 = vpack.c.bf16 %v526, %v525
      %v546 = vpack.c.bf16 %v528, %v527
      %v547 = vpack.c.bf16 %v530, %v529
      %v548 = vpack.c.bf16 %v532, %v531
      %v565 = vunpack.c.l.b16 %v533
      %v566 = vunpack.c.h.b16 %v533
      %v567 = vunpack.c.l.b16 %v534
      %v568 = vunpack.c.h.b16 %v534
      %v569 = vunpack.c.l.b16 %v535
      %v570 = vunpack.c.h.b16 %v535
      %v571 = vunpack.c.l.b16 %v536
      %v572 = vunpack.c.h.b16 %v536
      %v573 = vunpack.c.l.b16 %v537
      %v574 = vunpack.c.h.b16 %v537
      %v575 = vunpack.c.l.b16 %v538
      %v576 = vunpack.c.h.b16 %v538
      %v577 = vunpack.c.l.b16 %v539
      %v578 = vunpack.c.h.b16 %v539
      %v579 = vunpack.c.l.b16 %v540
      %v580 = vunpack.c.h.b16 %v540
      %v581 = vunpack.c.l.b16 %v541
      %v582 = vunpack.c.h.b16 %v541
      %v583 = vunpack.c.l.b16 %v542
      %v584 = vunpack.c.h.b16 %v542
      %v585 = vunpack.c.l.b16 %v543
      %v586 = vunpack.c.h.b16 %v543
      %v587 = vunpack.c.l.b16 %v544
      %v588 = vunpack.c.h.b16 %v544
      %v589 = vunpack.c.l.b16 %v545
      %v590 = vunpack.c.h.b16 %v545
      %v591 = vunpack.c.l.b16 %v546
      %v592 = vunpack.c.h.b16 %v546
      %v593 = vunpack.c.l.b16 %v547
      %v594 = vunpack.c.h.b16 %v547
      %v595 = vunpack.c.l.b16 %v548
      %v596 = vunpack.c.h.b16 %v548
      %v597 = vpack.c.b16 %v565, %v565
      %v598 = vpack.c.b16 %v566, %v566
      %v599 = vpack.c.b16 %v567, %v567
      %v600 = vpack.c.b16 %v568, %v568
      %v601 = vpack.c.b16 %v569, %v569
      %v602 = vpack.c.b16 %v570, %v570
      %v603 = vpack.c.b16 %v571, %v571
      %v604 = vpack.c.b16 %v572, %v572
      %v605 = vpack.c.b16 %v573, %v573
      %v606 = vpack.c.b16 %v574, %v574
      %v607 = vpack.c.b16 %v575, %v575
      %v608 = vpack.c.b16 %v576, %v576
      %v609 = vpack.c.b16 %v577, %v577
      %v610 = vpack.c.b16 %v578, %v578
      %v611 = vpack.c.b16 %v579, %v579
      %v612 = vpack.c.b16 %v580, %v580
      %v613 = vpack.c.b16 %v581, %v581
      %v614 = vpack.c.b16 %v582, %v582
      %v615 = vpack.c.b16 %v583, %v583
      %v616 = vpack.c.b16 %v584, %v584
      %v617 = vpack.c.b16 %v585, %v585
      %v618 = vpack.c.b16 %v586, %v586
      %v619 = vpack.c.b16 %v587, %v587
      %v620 = vpack.c.b16 %v588, %v588
      %v621 = vpack.c.b16 %v589, %v589
      %v622 = vpack.c.b16 %v590, %v590
      %v623 = vpack.c.b16 %v591, %v591
      %v624 = vpack.c.b16 %v592, %v592
      %v625 = vpack.c.b16 %v593, %v593
      %v626 = vpack.c.b16 %v594, %v594
      %v627 = vpack.c.b16 %v595, %v595
      %v628 = vpack.c.b16 %v596, %v596
      %vm629 = vsmask.f32 4368
      %vm630 = vmor %vm247, %vm629
      %v632 = vshrl.u32 %v597, 16
      %v634 = vrot.slane %v632, 7
      %v635 = vshll.u32 %v597, 16
      %v637 = vor.u32 %v634, %v635
      %v638 = vrot.slane %v634, 4
      %v640 = vshrl.u32 %v598, 16
      %v642 = vrot.slane %v640, 7
      %v643 = vshll.u32 %v598, 16
      %v645 = vor.u32 %v642, %v643
      %v646 = vsel %vm630, %v638, %v645
      %v647 = vrot.slane %v642, 4
      %v649 = vshrl.u32 %v599, 16
      %v651 = vrot.slane %v649, 7
      %v652 = vshll.u32 %v599, 16
      %v654 = vor.u32 %v651, %v652
      %v655 = vrot.slane %v651, 4
      %v657 = vshrl.u32 %v600, 16
      %v659 = vrot.slane %v657, 7
      %v660 = vshll.u32 %v600, 16
      %v662 = vor.u32 %v659, %v660
      %v663 = vsel %vm630, %v655, %v662
      %v664 = vrot.slane %v659, 4
      %v666 = vshrl.u32 %v601, 16
      %v668 = vrot.slane %v666, 7
      %v669 = vshll.u32 %v601, 16
      %v671 = vor.u32 %v668, %v669
      %v672 = vrot.slane %v668, 4
      %v674 = vshrl.u32 %v602, 16
      %v676 = vrot.slane %v674, 7
      %v677 = vshll.u32 %v602, 16
      %v679 = vor.u32 %v676, %v677
      %v680 = vsel %vm630, %v672, %v679
      %v681 = vrot.slane %v676, 4
      %v683 = vshrl.u32 %v603, 16
      %v685 = vrot.slane %v683, 7
      %v686 = vshll.u32 %v603, 16
      %v688 = vor.u32 %v685, %v686
      %v689 = vrot.slane %v685, 4
      %v691 = vshrl.u32 %v604, 16
      %v693 = vrot.slane %v691, 7
      %v694 = vshll.u32 %v604, 16
      %v696 = vor.u32 %v693, %v694
      %v697 = vsel %vm630, %v689, %v696
      %v698 = vrot.slane %v693, 4
      %v700 = vshrl.u32 %v605, 16
      %v702 = vrot.slane %v700, 7
      %v703 = vshll.u32 %v605, 16
      %v705 = vor.u32 %v702, %v703
      %v706 = vrot.slane %v702, 4
      %v708 = vshrl.u32 %v606, 16
      %v710 = vrot.slane %v708, 7
      %v711 = vshll.u32 %v606, 16
      %v713 = vor.u32 %v710, %v711
      %v714 = vsel %vm630, %v706, %v713
      %v715 = vrot.slane %v710, 4
      %v717 = vshrl.u32 %v607, 16
      %v719 = vrot.slane %v717, 7
      %v720 = vshll.u32 %v607, 16
      %v722 = vor.u32 %v719, %v720
      %v723 = vrot.slane %v719, 4
      %v725 = vshrl.u32 %v608, 16
      %v727 = vrot.slane %v725, 7
      %v728 = vshll.u32 %v608, 16
      %v730 = vor.u32 %v727, %v728
      %v731 = vsel %vm630, %v723, %v730
      %v732 = vrot.slane %v727, 4
      %v734 = vshrl.u32 %v609, 16
      %v736 = vrot.slane %v734, 7
      %v737 = vshll.u32 %v609, 16
      %v739 = vor.u32 %v736, %v737
      %v740 = vrot.slane %v736, 4
      %v742 = vshrl.u32 %v610, 16
      %v744 = vrot.slane %v742, 7
      %v745 = vshll.u32 %v610, 16
      %v747 = vor.u32 %v744, %v745
      %v748 = vsel %vm630, %v740, %v747
      %v749 = vrot.slane %v744, 4
      %v751 = vshrl.u32 %v611, 16
      %v753 = vrot.slane %v751, 7
      %v754 = vshll.u32 %v611, 16
      %v756 = vor.u32 %v753, %v754
      %v757 = vrot.slane %v753, 4
      %v759 = vshrl.u32 %v612, 16
      %v761 = vrot.slane %v759, 7
      %v762 = vshll.u32 %v612, 16
      %v764 = vor.u32 %v761, %v762
      %v765 = vsel %vm630, %v757, %v764
      %v766 = vrot.slane %v761, 4
      %v768 = vshrl.u32 %v613, 16
      %v770 = vrot.slane %v768, 7
      %v771 = vshll.u32 %v613, 16
      %v773 = vor.u32 %v770, %v771
      %v774 = vrot.slane %v770, 4
      %v776 = vshrl.u32 %v614, 16
      %v778 = vrot.slane %v776, 7
      %v779 = vshll.u32 %v614, 16
      %v781 = vor.u32 %v778, %v779
      %v782 = vsel %vm630, %v774, %v781
      %v783 = vrot.slane %v778, 4
      %v785 = vshrl.u32 %v615, 16
      %v787 = vrot.slane %v785, 7
      %v788 = vshll.u32 %v615, 16
      %v790 = vor.u32 %v787, %v788
      %v791 = vrot.slane %v787, 4
      %v793 = vshrl.u32 %v616, 16
      %v795 = vrot.slane %v793, 7
      %v796 = vshll.u32 %v616, 16
      %v798 = vor.u32 %v795, %v796
      %v799 = vsel %vm630, %v791, %v798
      %v800 = vrot.slane %v795, 4
      %v802 = vshrl.u32 %v617, 16
      %v804 = vrot.slane %v802, 7
      %v805 = vshll.u32 %v617, 16
      %v807 = vor.u32 %v804, %v805
      %v808 = vrot.slane %v804, 4
      %v810 = vshrl.u32 %v618, 16
      %v812 = vrot.slane %v810, 7
      %v813 = vshll.u32 %v618, 16
      %v815 = vor.u32 %v812, %v813
      %v816 = vsel %vm630, %v808, %v815
      %v817 = vrot.slane %v812, 4
      %v819 = vshrl.u32 %v619, 16
      %v821 = vrot.slane %v819, 7
      %v822 = vshll.u32 %v619, 16
      %v824 = vor.u32 %v821, %v822
      %v825 = vrot.slane %v821, 4
      %v827 = vshrl.u32 %v620, 16
      %v829 = vrot.slane %v827, 7
      %v830 = vshll.u32 %v620, 16
      %v832 = vor.u32 %v829, %v830
      %v833 = vsel %vm630, %v825, %v832
      %v834 = vrot.slane %v829, 4
      %v836 = vshrl.u32 %v621, 16
      %v838 = vrot.slane %v836, 7
      %v839 = vshll.u32 %v621, 16
      %v841 = vor.u32 %v838, %v839
      %v842 = vrot.slane %v838, 4
      %v844 = vshrl.u32 %v622, 16
      %v846 = vrot.slane %v844, 7
      %v847 = vshll.u32 %v622, 16
      %v849 = vor.u32 %v846, %v847
      %v850 = vsel %vm630, %v842, %v849
      %v851 = vrot.slane %v846, 4
      %v853 = vshrl.u32 %v623, 16
      %v855 = vrot.slane %v853, 7
      %v856 = vshll.u32 %v623, 16
      %v858 = vor.u32 %v855, %v856
      %v859 = vrot.slane %v855, 4
      %v861 = vshrl.u32 %v624, 16
      %v863 = vrot.slane %v861, 7
      %v864 = vshll.u32 %v624, 16
      %v866 = vor.u32 %v863, %v864
      %v867 = vsel %vm630, %v859, %v866
      %v868 = vrot.slane %v863, 4
      %v870 = vshrl.u32 %v625, 16
      %v872 = vrot.slane %v870, 7
      %v873 = vshll.u32 %v625, 16
      %v875 = vor.u32 %v872, %v873
      %v876 = vrot.slane %v872, 4
      %v878 = vshrl.u32 %v626, 16
      %v880 = vrot.slane %v878, 7
      %v881 = vshll.u32 %v626, 16
      %v883 = vor.u32 %v880, %v881
      %v884 = vsel %vm630, %v876, %v883
      %v885 = vrot.slane %v880, 4
      %v887 = vshrl.u32 %v627, 16
      %v889 = vrot.slane %v887, 7
      %v890 = vshll.u32 %v627, 16
      %v892 = vor.u32 %v889, %v890
      %v893 = vrot.slane %v889, 4
      %v895 = vshrl.u32 %v628, 16
      %v897 = vrot.slane %v895, 7
      %v898 = vshll.u32 %v628, 16
      %v900 = vor.u32 %v897, %v898
      %v901 = vsel %vm630, %v893, %v900
      %v902 = vrot.slane %v897, 4
      %s951 = scalar_lea.vmem [#allocation2], 12
      %vm952 = vcmask 60416
      %vm953 = vmand %vm952, %vm303
      %v954 = vld [vmem:[%s951] sm:$0xf]
      %v955 = vsel %vm953, %v637, %v954
      %956 = vst [vmem:[%s951] sm:$0xf] %v955
      %957 = vst.msk [vmem:[%s951 + $0x4] sm:$0xf] %vm237, %v646
      %v958 = vld [vmem:[%s951 + $0x8] sm:$0x1]
      %v959 = vsel %vm248, %v647, %v958
      %960 = vst [vmem:[%s951 + $0x8] sm:$0x1] %v959
      %v961 = vld [vmem:[%s951 + $0xc] sm:$0xf]
      %v962 = vsel %vm953, %v654, %v961
      %963 = vst [vmem:[%s951 + $0xc] sm:$0xf] %v962
      %964 = vst.msk [vmem:[%s951 + $0x10] sm:$0xf] %vm237, %v663
      %v965 = vld [vmem:[%s951 + $0x14] sm:$0x1]
      %v966 = vsel %vm248, %v664, %v965
      %967 = vst [vmem:[%s951 + $0x14] sm:$0x1] %v966
      %v968 = vld [vmem:[%s951 + $0x18] sm:$0xf]
      %v969 = vsel %vm953, %v671, %v968
      %970 = vst [vmem:[%s951 + $0x18] sm:$0xf] %v969
      %971 = vst.msk [vmem:[%s951 + $0x1c] sm:$0xf] %vm237, %v680
      %v972 = vld [vmem:[%s951 + $0x20] sm:$0x1]
      %v973 = vsel %vm248, %v681, %v972
      %974 = vst [vmem:[%s951 + $0x20] sm:$0x1] %v973
      %v975 = vld [vmem:[%s951 + $0x24] sm:$0xf]
      %v976 = vsel %vm953, %v688, %v975
      %977 = vst [vmem:[%s951 + $0x24] sm:$0xf] %v976
      %978 = vst.msk [vmem:[%s951 + $0x28] sm:$0xf] %vm237, %v697
      %v979 = vld [vmem:[%s951 + $0x2c] sm:$0x1]
      %v980 = vsel %vm248, %v698, %v979
      %981 = vst [vmem:[%s951 + $0x2c] sm:$0x1] %v980
      %v982 = vld [vmem:[%s951 + $0x30] sm:$0xf]
      %v983 = vsel %vm953, %v705, %v982
      %984 = vst [vmem:[%s951 + $0x30] sm:$0xf] %v983
      %985 = vst.msk [vmem:[%s951 + $0x34] sm:$0xf] %vm237, %v714
      %v986 = vld [vmem:[%s951 + $0x38] sm:$0x1]
      %v987 = vsel %vm248, %v715, %v986
      %988 = vst [vmem:[%s951 + $0x38] sm:$0x1] %v987
      %v989 = vld [vmem:[%s951 + $0x3c] sm:$0xf]
      %v990 = vsel %vm953, %v722, %v989
      %991 = vst [vmem:[%s951 + $0x3c] sm:$0xf] %v990
      %992 = vst.msk [vmem:[%s951 + $0x40] sm:$0xf] %vm237, %v731
      %v993 = vld [vmem:[%s951 + $0x44] sm:$0x1]
      %v994 = vsel %vm248, %v732, %v993
      %995 = vst [vmem:[%s951 + $0x44] sm:$0x1] %v994
      %v996 = vld [vmem:[%s951 + $0x48] sm:$0xf]
      %v997 = vsel %vm953, %v739, %v996
      %998 = vst [vmem:[%s951 + $0x48] sm:$0xf] %v997
      %999 = vst.msk [vmem:[%s951 + $0x4c] sm:$0xf] %vm237, %v748
      %v1000 = vld [vmem:[%s951 + $0x50] sm:$0x1]
      %v1001 = vsel %vm248, %v749, %v1000
      %1002 = vst [vmem:[%s951 + $0x50] sm:$0x1] %v1001
      %v1003 = vld [vmem:[%s951 + $0x54] sm:$0xf]
      %v1004 = vsel %vm953, %v756, %v1003
      %1005 = vst [vmem:[%s951 + $0x54] sm:$0xf] %v1004
      %1006 = vst.msk [vmem:[%s951 + $0x58] sm:$0xf] %vm237, %v765
      %v1007 = vld [vmem:[%s951 + $0x5c] sm:$0x1]
      %v1008 = vsel %vm248, %v766, %v1007
      %1009 = vst [vmem:[%s951 + $0x5c] sm:$0x1] %v1008
      %v1010 = vld [vmem:[%s951 + $0x60] sm:$0xf]
      %v1011 = vsel %vm953, %v773, %v1010
      %1012 = vst [vmem:[%s951 + $0x60] sm:$0xf] %v1011
      %1013 = vst.msk [vmem:[%s951 + $0x64] sm:$0xf] %vm237, %v782
      %v1014 = vld [vmem:[%s951 + $0x68] sm:$0x1]
      %v1015 = vsel %vm248, %v783, %v1014
      %1016 = vst [vmem:[%s951 + $0x68] sm:$0x1] %v1015
      %v1017 = vld [vmem:[%s951 + $0x6c] sm:$0xf]
      %v1018 = vsel %vm953, %v790, %v1017
      %1019 = vst [vmem:[%s951 + $0x6c] sm:$0xf] %v1018
      %1020 = vst.msk [vmem:[%s951 + $0x70] sm:$0xf] %vm237, %v799
      %v1021 = vld [vmem:[%s951 + $0x74] sm:$0x1]
      %v1022 = vsel %vm248, %v800, %v1021
      %1023 = vst [vmem:[%s951 + $0x74] sm:$0x1] %v1022
      %v1024 = vld [vmem:[%s951 + $0x78] sm:$0xf]
      %v1025 = vsel %vm953, %v807, %v1024
      %1026 = vst [vmem:[%s951 + $0x78] sm:$0xf] %v1025
      %1027 = vst.msk [vmem:[%s951 + $0x7c] sm:$0xf] %vm237, %v816
      %v1028 = vld [vmem:[%s951 + $0x80] sm:$0x1]
      %v1029 = vsel %vm248, %v817, %v1028
      %1030 = vst [vmem:[%s951 + $0x80] sm:$0x1] %v1029
      %v1031 = vld [vmem:[%s951 + $0x84] sm:$0xf]
      %v1032 = vsel %vm953, %v824, %v1031
      %1033 = vst [vmem:[%s951 + $0x84] sm:$0xf] %v1032
      %1034 = vst.msk [vmem:[%s951 + $0x88] sm:$0xf] %vm237, %v833
      %v1035 = vld [vmem:[%s951 + $0x8c] sm:$0x1]
      %v1036 = vsel %vm248, %v834, %v1035
      %1037 = vst [vmem:[%s951 + $0x8c] sm:$0x1] %v1036
      %v1038 = vld [vmem:[%s951 + $0x90] sm:$0xf]
      %v1039 = vsel %vm953, %v841, %v1038
      %1040 = vst [vmem:[%s951 + $0x90] sm:$0xf] %v1039
      %1041 = vst.msk [vmem:[%s951 + $0x94] sm:$0xf] %vm237, %v850
      %v1042 = vld [vmem:[%s951 + $0x98] sm:$0x1]
      %v1043 = vsel %vm248, %v851, %v1042
      %1044 = vst [vmem:[%s951 + $0x98] sm:$0x1] %v1043
      %v1045 = vld [vmem:[%s951 + $0x9c] sm:$0xf]
      %v1046 = vsel %vm953, %v858, %v1045
      %1047 = vst [vmem:[%s951 + $0x9c] sm:$0xf] %v1046
      %1048 = vst.msk [vmem:[%s951 + $0xa0] sm:$0xf] %vm237, %v867
      %v1049 = vld [vmem:[%s951 + $0xa4] sm:$0x1]
      %v1050 = vsel %vm248, %v868, %v1049
      %1051 = vst [vmem:[%s951 + $0xa4] sm:$0x1] %v1050
      %v1052 = vld [vmem:[%s951 + $0xa8] sm:$0xf]
      %v1053 = vsel %vm953, %v875, %v1052
      %1054 = vst [vmem:[%s951 + $0xa8] sm:$0xf] %v1053
      %1055 = vst.msk [vmem:[%s951 + $0xac] sm:$0xf] %vm237, %v884
      %v1056 = vld [vmem:[%s951 + $0xb0] sm:$0x1]
      %v1057 = vsel %vm248, %v885, %v1056
      %1058 = vst [vmem:[%s951 + $0xb0] sm:$0x1] %v1057
      %v1059 = vld [vmem:[%s951 + $0xb4] sm:$0xf]
      %v1060 = vsel %vm953, %v892, %v1059
      %1061 = vst [vmem:[%s951 + $0xb4] sm:$0xf] %v1060
      %1062 = vst.msk [vmem:[%s951 + $0xb8] sm:$0xf] %vm237, %v901
      %v1063 = vld [vmem:[%s951 + $0xbc] sm:$0x1]
      %v1064 = vsel %vm248, %v902, %v1063
      %1065 = vst [vmem:[%s951 + $0xbc] sm:$0x1] %v1064
      %v1066 = vld [vmem:[#allocation2] sm:$0xf]
      %v1067 = vld [vmem:[#allocation2 + $0x4] sm:$0xf]
      %v1068 = vld [vmem:[#allocation2 + $0xc] sm:$0xf]
      %v1069 = vld [vmem:[#allocation2 + $0x10] sm:$0xf]
      %v1070 = vld [vmem:[#allocation2 + $0x18] sm:$0xf]
      %v1071 = vld [vmem:[#allocation2 + $0x1c] sm:$0xf]
      %v1072 = vld [vmem:[#allocation2 + $0x24] sm:$0xf]
      %v1073 = vld [vmem:[#allocation2 + $0x28] sm:$0xf]
      %v1074 = vld [vmem:[#allocation2 + $0x30] sm:$0xf]
      %v1075 = vld [vmem:[#allocation2 + $0x34] sm:$0xf]
      %v1076 = vld [vmem:[#allocation2 + $0x3c] sm:$0xf]
      %v1077 = vld [vmem:[#allocation2 + $0x40] sm:$0xf]
      %v1078 = vld [vmem:[#allocation2 + $0x48] sm:$0xf]
      %v1079 = vld [vmem:[#allocation2 + $0x4c] sm:$0xf]
      %v1080 = vld [vmem:[#allocation2 + $0x54] sm:$0xf]
      %v1081 = vld [vmem:[#allocation2 + $0x58] sm:$0xf]
      %v1082 = vld [vmem:[#allocation2 + $0x60] sm:$0xf]
      %v1083 = vld [vmem:[#allocation2 + $0x64] sm:$0xf]
      %v1084 = vld [vmem:[#allocation2 + $0x6c] sm:$0xf]
      %v1085 = vld [vmem:[#allocation2 + $0x70] sm:$0xf]
      %v1086 = vld [vmem:[#allocation2 + $0x78] sm:$0xf]
      %v1087 = vld [vmem:[#allocation2 + $0x7c] sm:$0xf]
      %v1088 = vld [vmem:[#allocation2 + $0x84] sm:$0xf]
      %v1089 = vld [vmem:[#allocation2 + $0x88] sm:$0xf]
      %v1090 = vld [vmem:[#allocation2 + $0x90] sm:$0xf]
      %v1091 = vld [vmem:[#allocation2 + $0x94] sm:$0xf]
      %v1092 = vld [vmem:[#allocation2 + $0x9c] sm:$0xf]
      %v1093 = vld [vmem:[#allocation2 + $0xa0] sm:$0xf]
      %v1094 = vld [vmem:[#allocation2 + $0xa8] sm:$0xf]
      %v1095 = vld [vmem:[#allocation2 + $0xac] sm:$0xf]
      %v1096 = vld [vmem:[#allocation2 + $0xb4] sm:$0xf]
      %v1097 = vld [vmem:[#allocation2 + $0xb8] sm:$0xf]
      %v1098 = vld [vmem:[%s3] sm:$0xf]
      %v1099 = vld [vmem:[#allocation2 + $0x8] sm:$0x1]
      %v1100 = vld [vmem:[#allocation2 + $0x14] sm:$0x1]
      %v1101 = vld [vmem:[#allocation2 + $0x20] sm:$0x1]
      %v1102 = vld [vmem:[#allocation2 + $0x2c] sm:$0x1]
      %v1103 = vld [vmem:[#allocation2 + $0x38] sm:$0x1]
      %v1104 = vld [vmem:[#allocation2 + $0x44] sm:$0x1]
      %v1105 = vld [vmem:[#allocation2 + $0x50] sm:$0x1]
      %v1106 = vld [vmem:[#allocation2 + $0x5c] sm:$0x1]
      %v1107 = vld [vmem:[#allocation2 + $0x68] sm:$0x1]
      %v1108 = vld [vmem:[#allocation2 + $0x74] sm:$0x1]
      %v1109 = vld [vmem:[#allocation2 + $0x80] sm:$0x1]
      %v1110 = vld [vmem:[#allocation2 + $0x8c] sm:$0x1]
      %v1111 = vld [vmem:[#allocation2 + $0x98] sm:$0x1]
      %v1112 = vld [vmem:[#allocation2 + $0xa4] sm:$0x1]
      %v1113 = vld [vmem:[#allocation2 + $0xb0] sm:$0x1]
      %v1114 = vld [vmem:[#allocation2 + $0xbc] sm:$0x1]
      %vm1115 = vsmask.f32 3328
      %vm1116 = vsmask.f32 7440
      %vm1117 = vmor %vm1115, %vm1116
      %v1119 = vshrl.u32 %v1066, 16
      %v1121 = vrot.slane %v1119, 4
      %v1122 = vshll.u32 %v1066, 16
      %v1124 = vrot.slane %v1122, 5
      %v1125 = vor.u32 %v1121, %v1124
      %v1126 = vrot.slane %v1125, 4
      %v1128 = vshll.u32 %v1067, 16
      %v1130 = vrot.slane %v1128, 5
      %v1131 = vsel %vm1117, %v1126, %v1130
      %v1132 = vshrl.u32 %v1067, 16
      %v1134 = vrot.slane %v1132, 4
      %v1135 = vor.u32 %v1134, %v1130
      %v1136 = vrot.slane %v1135, 4
      %v1138 = vshll.u32 %v1099, 16
      %v1140 = vrot.slane %v1138, 5
      %v1141 = vsel %vm1117, %v1136, %v1140
      %v1143 = vshrl.u32 %v1068, 16
      %v1145 = vrot.slane %v1143, 4
      %v1146 = vshll.u32 %v1068, 16
      %v1148 = vrot.slane %v1146, 5
      %v1149 = vor.u32 %v1145, %v1148
      %v1150 = vrot.slane %v1149, 4
      %v1152 = vshll.u32 %v1069, 16
      %v1154 = vrot.slane %v1152, 5
      %v1155 = vsel %vm1117, %v1150, %v1154
      %v1156 = vshrl.u32 %v1069, 16
      %v1158 = vrot.slane %v1156, 4
      %v1159 = vor.u32 %v1158, %v1154
      %v1160 = vrot.slane %v1159, 4
      %v1162 = vshll.u32 %v1100, 16
      %v1164 = vrot.slane %v1162, 5
      %v1165 = vsel %vm1117, %v1160, %v1164
      %v1167 = vshrl.u32 %v1070, 16
      %v1169 = vrot.slane %v1167, 4
      %v1170 = vshll.u32 %v1070, 16
      %v1172 = vrot.slane %v1170, 5
      %v1173 = vor.u32 %v1169, %v1172
      %v1174 = vrot.slane %v1173, 4
      %v1176 = vshll.u32 %v1071, 16
      %v1178 = vrot.slane %v1176, 5
      %v1179 = vsel %vm1117, %v1174, %v1178
      %v1180 = vshrl.u32 %v1071, 16
      %v1182 = vrot.slane %v1180, 4
      %v1183 = vor.u32 %v1182, %v1178
      %v1184 = vrot.slane %v1183, 4
      %v1186 = vshll.u32 %v1101, 16
      %v1188 = vrot.slane %v1186, 5
      %v1189 = vsel %vm1117, %v1184, %v1188
      %v1191 = vshrl.u32 %v1072, 16
      %v1193 = vrot.slane %v1191, 4
      %v1194 = vshll.u32 %v1072, 16
      %v1196 = vrot.slane %v1194, 5
      %v1197 = vor.u32 %v1193, %v1196
      %v1198 = vrot.slane %v1197, 4
      %v1200 = vshll.u32 %v1073, 16
      %v1202 = vrot.slane %v1200, 5
      %v1203 = vsel %vm1117, %v1198, %v1202
      %v1204 = vshrl.u32 %v1073, 16
      %v1206 = vrot.slane %v1204, 4
      %v1207 = vor.u32 %v1206, %v1202
      %v1208 = vrot.slane %v1207, 4
      %v1210 = vshll.u32 %v1102, 16
      %v1212 = vrot.slane %v1210, 5
      %v1213 = vsel %vm1117, %v1208, %v1212
      %v1215 = vshrl.u32 %v1074, 16
      %v1217 = vrot.slane %v1215, 4
      %v1218 = vshll.u32 %v1074, 16
      %v1220 = vrot.slane %v1218, 5
      %v1221 = vor.u32 %v1217, %v1220
      %v1222 = vrot.slane %v1221, 4
      %v1224 = vshll.u32 %v1075, 16
      %v1226 = vrot.slane %v1224, 5
      %v1227 = vsel %vm1117, %v1222, %v1226
      %v1228 = vshrl.u32 %v1075, 16
      %v1230 = vrot.slane %v1228, 4
      %v1231 = vor.u32 %v1230, %v1226
      %v1232 = vrot.slane %v1231, 4
      %v1234 = vshll.u32 %v1103, 16
      %v1236 = vrot.slane %v1234, 5
      %v1237 = vsel %vm1117, %v1232, %v1236
      %v1239 = vshrl.u32 %v1076, 16
      %v1241 = vrot.slane %v1239, 4
      %v1242 = vshll.u32 %v1076, 16
      %v1244 = vrot.slane %v1242, 5
      %v1245 = vor.u32 %v1241, %v1244
      %v1246 = vrot.slane %v1245, 4
      %v1248 = vshll.u32 %v1077, 16
      %v1250 = vrot.slane %v1248, 5
      %v1251 = vsel %vm1117, %v1246, %v1250
      %v1252 = vshrl.u32 %v1077, 16
      %v1254 = vrot.slane %v1252, 4
      %v1255 = vor.u32 %v1254, %v1250
      %v1256 = vrot.slane %v1255, 4
      %v1258 = vshll.u32 %v1104, 16
      %v1260 = vrot.slane %v1258, 5
      %v1261 = vsel %vm1117, %v1256, %v1260
      %v1263 = vshrl.u32 %v1078, 16
      %v1265 = vrot.slane %v1263, 4
      %v1266 = vshll.u32 %v1078, 16
      %v1268 = vrot.slane %v1266, 5
      %v1269 = vor.u32 %v1265, %v1268
      %v1270 = vrot.slane %v1269, 4
      %v1272 = vshll.u32 %v1079, 16
      %v1274 = vrot.slane %v1272, 5
      %v1275 = vsel %vm1117, %v1270, %v1274
      %v1276 = vshrl.u32 %v1079, 16
      %v1278 = vrot.slane %v1276, 4
      %v1279 = vor.u32 %v1278, %v1274
      %v1280 = vrot.slane %v1279, 4
      %v1282 = vshll.u32 %v1105, 16
      %v1284 = vrot.slane %v1282, 5
      %v1285 = vsel %vm1117, %v1280, %v1284
      %v1287 = vshrl.u32 %v1080, 16
      %v1289 = vrot.slane %v1287, 4
      %v1290 = vshll.u32 %v1080, 16
      %v1292 = vrot.slane %v1290, 5
      %v1293 = vor.u32 %v1289, %v1292
      %v1294 = vrot.slane %v1293, 4
      %v1296 = vshll.u32 %v1081, 16
      %v1298 = vrot.slane %v1296, 5
      %v1299 = vsel %vm1117, %v1294, %v1298
      %v1300 = vshrl.u32 %v1081, 16
      %v1302 = vrot.slane %v1300, 4
      %v1303 = vor.u32 %v1302, %v1298
      %v1304 = vrot.slane %v1303, 4
      %v1306 = vshll.u32 %v1106, 16
      %v1308 = vrot.slane %v1306, 5
      %v1309 = vsel %vm1117, %v1304, %v1308
      %v1311 = vshrl.u32 %v1082, 16
      %v1313 = vrot.slane %v1311, 4
      %v1314 = vshll.u32 %v1082, 16
      %v1316 = vrot.slane %v1314, 5
      %v1317 = vor.u32 %v1313, %v1316
      %v1318 = vrot.slane %v1317, 4
      %v1320 = vshll.u32 %v1083, 16
      %v1322 = vrot.slane %v1320, 5
      %v1323 = vsel %vm1117, %v1318, %v1322
      %v1324 = vshrl.u32 %v1083, 16
      %v1326 = vrot.slane %v1324, 4
      %v1327 = vor.u32 %v1326, %v1322
      %v1328 = vrot.slane %v1327, 4
      %v1330 = vshll.u32 %v1107, 16
      %v1332 = vrot.slane %v1330, 5
      %v1333 = vsel %vm1117, %v1328, %v1332
      %v1335 = vshrl.u32 %v1084, 16
      %v1337 = vrot.slane %v1335, 4
      %v1338 = vshll.u32 %v1084, 16
      %v1340 = vrot.slane %v1338, 5
      %v1341 = vor.u32 %v1337, %v1340
      %v1342 = vrot.slane %v1341, 4
      %v1344 = vshll.u32 %v1085, 16
      %v1346 = vrot.slane %v1344, 5
      %v1347 = vsel %vm1117, %v1342, %v1346
      %v1348 = vshrl.u32 %v1085, 16
      %v1350 = vrot.slane %v1348, 4
      %v1351 = vor.u32 %v1350, %v1346
      %v1352 = vrot.slane %v1351, 4
      %v1354 = vshll.u32 %v1108, 16
      %v1356 = vrot.slane %v1354, 5
      %v1357 = vsel %vm1117, %v1352, %v1356
      %v1359 = vshrl.u32 %v1086, 16
      %v1361 = vrot.slane %v1359, 4
      %v1362 = vshll.u32 %v1086, 16
      %v1364 = vrot.slane %v1362, 5
      %v1365 = vor.u32 %v1361, %v1364
      %v1366 = vrot.slane %v1365, 4
      %v1368 = vshll.u32 %v1087, 16
      %v1370 = vrot.slane %v1368, 5
      %v1371 = vsel %vm1117, %v1366, %v1370
      %v1372 = vshrl.u32 %v1087, 16
      %v1374 = vrot.slane %v1372, 4
      %v1375 = vor.u32 %v1374, %v1370
      %v1376 = vrot.slane %v1375, 4
      %v1378 = vshll.u32 %v1109, 16
      %v1380 = vrot.slane %v1378, 5
      %v1381 = vsel %vm1117, %v1376, %v1380
      %v1383 = vshrl.u32 %v1088, 16
      %v1385 = vrot.slane %v1383, 4
      %v1386 = vshll.u32 %v1088, 16
      %v1388 = vrot.slane %v1386, 5
      %v1389 = vor.u32 %v1385, %v1388
      %v1390 = vrot.slane %v1389, 4
      %v1392 = vshll.u32 %v1089, 16
      %v1394 = vrot.slane %v1392, 5
      %v1395 = vsel %vm1117, %v1390, %v1394
      %v1396 = vshrl.u32 %v1089, 16
      %v1398 = vrot.slane %v1396, 4
      %v1399 = vor.u32 %v1398, %v1394
      %v1400 = vrot.slane %v1399, 4
      %v1402 = vshll.u32 %v1110, 16
      %v1404 = vrot.slane %v1402, 5
      %v1405 = vsel %vm1117, %v1400, %v1404
      %v1407 = vshrl.u32 %v1090, 16
      %v1409 = vrot.slane %v1407, 4
      %v1410 = vshll.u32 %v1090, 16
      %v1412 = vrot.slane %v1410, 5
      %v1413 = vor.u32 %v1409, %v1412
      %v1414 = vrot.slane %v1413, 4
      %v1416 = vshll.u32 %v1091, 16
      %v1418 = vrot.slane %v1416, 5
      %v1419 = vsel %vm1117, %v1414, %v1418
      %v1420 = vshrl.u32 %v1091, 16
      %v1422 = vrot.slane %v1420, 4
      %v1423 = vor.u32 %v1422, %v1418
      %v1424 = vrot.slane %v1423, 4
      %v1426 = vshll.u32 %v1111, 16
      %v1428 = vrot.slane %v1426, 5
      %v1429 = vsel %vm1117, %v1424, %v1428
      %v1431 = vshrl.u32 %v1092, 16
      %v1433 = vrot.slane %v1431, 4
      %v1434 = vshll.u32 %v1092, 16
      %v1436 = vrot.slane %v1434, 5
      %v1437 = vor.u32 %v1433, %v1436
      %v1438 = vrot.slane %v1437, 4
      %v1440 = vshll.u32 %v1093, 16
      %v1442 = vrot.slane %v1440, 5
      %v1443 = vsel %vm1117, %v1438, %v1442
      %v1444 = vshrl.u32 %v1093, 16
      %v1446 = vrot.slane %v1444, 4
      %v1447 = vor.u32 %v1446, %v1442
      %v1448 = vrot.slane %v1447, 4
      %v1450 = vshll.u32 %v1112, 16
      %v1452 = vrot.slane %v1450, 5
      %v1453 = vsel %vm1117, %v1448, %v1452
      %v1455 = vshrl.u32 %v1094, 16
      %v1457 = vrot.slane %v1455, 4
      %v1458 = vshll.u32 %v1094, 16
      %v1460 = vrot.slane %v1458, 5
      %v1461 = vor.u32 %v1457, %v1460
      %v1462 = vrot.slane %v1461, 4
      %v1464 = vshll.u32 %v1095, 16
      %v1466 = vrot.slane %v1464, 5
      %v1467 = vsel %vm1117, %v1462, %v1466
      %v1468 = vshrl.u32 %v1095, 16
      %v1470 = vrot.slane %v1468, 4
      %v1471 = vor.u32 %v1470, %v1466
      %v1472 = vrot.slane %v1471, 4
      %v1474 = vshll.u32 %v1113, 16
      %v1476 = vrot.slane %v1474, 5
      %v1477 = vsel %vm1117, %v1472, %v1476
      %v1479 = vshrl.u32 %v1096, 16
      %v1481 = vrot.slane %v1479, 4
      %v1482 = vshll.u32 %v1096, 16
      %v1484 = vrot.slane %v1482, 5
      %v1485 = vor.u32 %v1481, %v1484
      %v1486 = vrot.slane %v1485, 4
      %v1488 = vshll.u32 %v1097, 16
      %v1490 = vrot.slane %v1488, 5
      %v1491 = vsel %vm1117, %v1486, %v1490
      %v1492 = vshrl.u32 %v1097, 16
      %v1494 = vrot.slane %v1492, 4
      %v1495 = vor.u32 %v1494, %v1490
      %v1496 = vrot.slane %v1495, 4
      %v1498 = vshll.u32 %v1114, 16
      %v1500 = vrot.slane %v1498, 5
      %v1501 = vsel %vm1117, %v1496, %v1500
      %s1502 = scalar_lea.vmem %s3, 4
      %v1503 = vld [vmem:[%s1502] sm:$0xf]
      %v1504 = vunpack.c.l.b16 %v1131
      %v1505 = vunpack.c.l.b16 %v1141
      %v1506 = vunpack.c.l.b16 %v1155
      %v1507 = vunpack.c.l.b16 %v1165
      %v1508 = vunpack.c.l.b16 %v1179
      %v1509 = vunpack.c.l.b16 %v1189
      %v1510 = vunpack.c.l.b16 %v1203
      %v1511 = vunpack.c.l.b16 %v1213
      %v1512 = vunpack.c.l.b16 %v1227
      %v1513 = vunpack.c.l.b16 %v1237
      %v1514 = vunpack.c.l.b16 %v1251
      %v1515 = vunpack.c.l.b16 %v1261
      %v1516 = vunpack.c.l.b16 %v1275
      %v1517 = vunpack.c.l.b16 %v1285
      %v1518 = vunpack.c.l.b16 %v1299
      %v1519 = vunpack.c.l.b16 %v1309
      %v1520 = vunpack.c.l.b16 %v1323
      %v1521 = vunpack.c.l.b16 %v1333
      %v1522 = vunpack.c.l.b16 %v1347
      %v1523 = vunpack.c.l.b16 %v1357
      %v1524 = vunpack.c.l.b16 %v1371
      %v1525 = vunpack.c.l.b16 %v1381
      %v1526 = vunpack.c.l.b16 %v1395
      %v1527 = vunpack.c.l.b16 %v1405
      %v1528 = vunpack.c.l.b16 %v1419
      %v1529 = vunpack.c.l.b16 %v1429
      %v1530 = vunpack.c.l.b16 %v1443
      %v1531 = vunpack.c.l.b16 %v1453
      %v1532 = vunpack.c.l.b16 %v1467
      %v1533 = vunpack.c.l.b16 %v1477
      %v1534 = vunpack.c.l.b16 %v1491
      %v1535 = vunpack.c.l.b16 %v1501
      %v1536 = vpack.c.b16 %v1505, %v1504
      %v1537 = vpack.c.b16 %v1507, %v1506
      %v1538 = vpack.c.b16 %v1509, %v1508
      %v1539 = vpack.c.b16 %v1511, %v1510
      %v1540 = vpack.c.b16 %v1513, %v1512
      %v1541 = vpack.c.b16 %v1515, %v1514
      %v1542 = vpack.c.b16 %v1517, %v1516
      %v1543 = vpack.c.b16 %v1519, %v1518
      %v1544 = vpack.c.b16 %v1521, %v1520
      %v1545 = vpack.c.b16 %v1523, %v1522
      %v1546 = vpack.c.b16 %v1525, %v1524
      %v1547 = vpack.c.b16 %v1527, %v1526
      %v1548 = vpack.c.b16 %v1529, %v1528
      %v1549 = vpack.c.b16 %v1531, %v1530
      %v1550 = vpack.c.b16 %v1533, %v1532
      %v1551 = vpack.c.b16 %v1535, %v1534
      %vm1552 = vcmask 64512
      %v1554 = vsel %vm1552, %v1536, 0
      %v1557 = vsel %vm1552, %v1537, 0
      %v1560 = vsel %vm1552, %v1538, 0
      %v1563 = vsel %vm1552, %v1539, 0
      %v1566 = vsel %vm1552, %v1540, 0
      %v1569 = vsel %vm1552, %v1541, 0
      %v1572 = vsel %vm1552, %v1542, 0
      %v1575 = vsel %vm1552, %v1543, 0
      %v1578 = vsel %vm1552, %v1544, 0
      %v1581 = vsel %vm1552, %v1545, 0
      %v1584 = vsel %vm1552, %v1546, 0
      %v1587 = vsel %vm1552, %v1547, 0
      %v1590 = vsel %vm1552, %v1548, 0
      %v1593 = vsel %vm1552, %v1549, 0
      %v1596 = vsel %vm1552, %v1550, 0
      %v1599 = vsel %vm1552, %v1551, 0
      %vm1601 = vcmask 1043456
      %v1603 = vsel %vm1601, %v1503, 0
      %1605 = vmatprep.subr.bf16.mxu0 0
      %1606 = vmatpush1.bf16.msra.mxu0 0
      %1607 = vmatprep.subr.bf16.mxu0 0
      %1608 = vmatpush1.bf16.msra.mxu0 0
      %1609 = vmatprep.subr.bf16.mxu0 0
      %1610 = vmatpush1.bf16.msra.mxu0 0
      %1611 = vmatprep.subr.bf16.mxu0 0
      %1612 = vmatpush1.bf16.msra.mxu0 0
      %1613 = vmatprep.subr.bf16.mxu0 0
      %1614 = vmatpush1.bf16.msra.mxu0 0
      %1615 = vmatprep.subr.bf16.mxu0 0
      %1616 = vmatpush1.bf16.msra.mxu0 0
      %1617 = vmatprep.subr.bf16.mxu0 0
      %1618 = vmatpush1.bf16.msra.mxu0 0
      %1619 = vmatprep.subr.bf16.mxu0 0
      %1620 = vmatpush1.bf16.msra.mxu0 %v1603
      %1621 = vmatprep.subr.bf16.mxu0 0
      %1622 = vmatpush2.bf16.msra.mxu0 0
      %1623 = vmatprep.subr.bf16.mxu0 0
      %1624 = vmatpush2.bf16.msra.mxu0 0
      %1625 = vmatprep.subr.bf16.mxu0 0
      %1626 = vmatpush2.bf16.msra.mxu0 0
      %1627 = vmatprep.subr.bf16.mxu0 0
      %1628 = vmatpush2.bf16.msra.mxu0 0
      %1629 = vmatprep.subr.bf16.mxu0 0
      %1630 = vmatpush2.bf16.msra.mxu0 0
      %1631 = vmatprep.subr.bf16.mxu0 0
      %1632 = vmatpush2.bf16.msra.mxu0 0
      %1633 = vmatprep.subr.bf16.mxu0 0
      %1634 = vmatpush2.bf16.msra.mxu0 0
      %1635 = vmatprep.subr.bf16.mxu0 0
      %1636 = vmatpush2.bf16.msra.mxu0 0
      %1637 = vmatprep.mubr.bf16.mxu0 0
      %1638 = vmatmul.mubr.bf16.gmra.mxu0 %v1554
      %v1639 = vpop.f32.mrf.mxu0
      %v1640 = vadd.f32 0.0, %v1639
      %v1641 = vpop.f32.mrf.mxu0
      %v1642 = vpop.f32.mrf.mxu0
      %v1643 = vadd.f32 0.0, %v1642
      %v1644 = vpop.f32.mrf.mxu0
      %1645 = vmatprep.mubr.bf16.mxu0 0
      %1646 = vmatmul.mubr.bf16.gmra.mxu0 %v1557
      %v1647 = vpop.f32.mrf.mxu0
      %v1648 = vadd.f32 0.0, %v1647
      %v1649 = vpop.f32.mrf.mxu0
      %v1650 = vpop.f32.mrf.mxu0
      %v1651 = vadd.f32 0.0, %v1650
      %v1652 = vpop.f32.mrf.mxu0
      %1653 = vmatprep.mubr.bf16.mxu0 0
      %1654 = vmatmul.mubr.bf16.gmra.mxu0 %v1560
      %v1655 = vpop.f32.mrf.mxu0
      %v1656 = vadd.f32 0.0, %v1655
      %v1657 = vpop.f32.mrf.mxu0
      %v1658 = vpop.f32.mrf.mxu0
      %v1659 = vadd.f32 0.0, %v1658
      %v1660 = vpop.f32.mrf.mxu0
      %1661 = vmatprep.mubr.bf16.mxu0 0
      %1662 = vmatmul.mubr.bf16.gmra.mxu0 %v1563
      %v1663 = vpop.f32.mrf.mxu0
      %v1664 = vadd.f32 0.0, %v1663
      %v1665 = vpop.f32.mrf.mxu0
      %v1666 = vpop.f32.mrf.mxu0
      %v1667 = vadd.f32 0.0, %v1666
      %v1668 = vpop.f32.mrf.mxu0
      %1669 = vmatprep.mubr.bf16.mxu0 0
      %1670 = vmatmul.mubr.bf16.gmra.mxu0 %v1566
      %v1671 = vpop.f32.mrf.mxu0
      %v1672 = vadd.f32 0.0, %v1671
      %v1673 = vpop.f32.mrf.mxu0
      %v1674 = vpop.f32.mrf.mxu0
      %v1675 = vadd.f32 0.0, %v1674
      %v1676 = vpop.f32.mrf.mxu0
      %1677 = vmatprep.mubr.bf16.mxu0 0
      %1678 = vmatmul.mubr.bf16.gmra.mxu0 %v1569
      %v1679 = vpop.f32.mrf.mxu0
      %v1680 = vadd.f32 0.0, %v1679
      %v1681 = vpop.f32.mrf.mxu0
      %v1682 = vpop.f32.mrf.mxu0
      %v1683 = vadd.f32 0.0, %v1682
      %v1684 = vpop.f32.mrf.mxu0
      %1685 = vmatprep.mubr.bf16.mxu0 0
      %1686 = vmatmul.mubr.bf16.gmra.mxu0 %v1572
      %v1687 = vpop.f32.mrf.mxu0
      %v1688 = vadd.f32 0.0, %v1687
      %v1689 = vpop.f32.mrf.mxu0
      %v1690 = vpop.f32.mrf.mxu0
      %v1691 = vadd.f32 0.0, %v1690
      %v1692 = vpop.f32.mrf.mxu0
      %1693 = vmatprep.mubr.bf16.mxu0 0
      %1694 = vmatmul.mubr.bf16.gmra.mxu0 %v1575
      %v1695 = vpop.f32.mrf.mxu0
      %v1696 = vadd.f32 0.0, %v1695
      %v1697 = vpop.f32.mrf.mxu0
      %v1698 = vpop.f32.mrf.mxu0
      %v1699 = vadd.f32 0.0, %v1698
      %v1700 = vpop.f32.mrf.mxu0
      %1701 = vmatprep.mubr.bf16.mxu0 0
      %1702 = vmatmul.mubr.bf16.gmra.mxu0 %v1578
      %v1703 = vpop.f32.mrf.mxu0
      %v1704 = vadd.f32 0.0, %v1703
      %v1705 = vpop.f32.mrf.mxu0
      %v1706 = vpop.f32.mrf.mxu0
      %v1707 = vadd.f32 0.0, %v1706
      %v1708 = vpop.f32.mrf.mxu0
      %1709 = vmatprep.mubr.bf16.mxu0 0
      %1710 = vmatmul.mubr.bf16.gmra.mxu0 %v1581
      %v1711 = vpop.f32.mrf.mxu0
      %v1712 = vadd.f32 0.0, %v1711
      %v1713 = vpop.f32.mrf.mxu0
      %v1714 = vpop.f32.mrf.mxu0
      %v1715 = vadd.f32 0.0, %v1714
      %v1716 = vpop.f32.mrf.mxu0
      %1717 = vmatprep.mubr.bf16.mxu0 0
      %1718 = vmatmul.mubr.bf16.gmra.mxu0 %v1584
      %v1719 = vpop.f32.mrf.mxu0
      %v1720 = vadd.f32 0.0, %v1719
      %v1721 = vpop.f32.mrf.mxu0
      %v1722 = vpop.f32.mrf.mxu0
      %v1723 = vadd.f32 0.0, %v1722
      %v1724 = vpop.f32.mrf.mxu0
      %1725 = vmatprep.mubr.bf16.mxu0 0
      %1726 = vmatmul.mubr.bf16.gmra.mxu0 %v1587
      %v1727 = vpop.f32.mrf.mxu0
      %v1728 = vadd.f32 0.0, %v1727
      %v1729 = vpop.f32.mrf.mxu0
      %v1730 = vpop.f32.mrf.mxu0
      %v1731 = vadd.f32 0.0, %v1730
      %v1732 = vpop.f32.mrf.mxu0
      %1733 = vmatprep.mubr.bf16.mxu0 0
      %1734 = vmatmul.mubr.bf16.gmra.mxu0 %v1590
      %v1735 = vpop.f32.mrf.mxu0
      %v1736 = vadd.f32 0.0, %v1735
      %v1737 = vpop.f32.mrf.mxu0
      %v1738 = vpop.f32.mrf.mxu0
      %v1739 = vadd.f32 0.0, %v1738
      %v1740 = vpop.f32.mrf.mxu0
      %1741 = vmatprep.mubr.bf16.mxu0 0
      %1742 = vmatmul.mubr.bf16.gmra.mxu0 %v1593
      %v1743 = vpop.f32.mrf.mxu0
      %v1744 = vadd.f32 0.0, %v1743
      %v1745 = vpop.f32.mrf.mxu0
      %v1746 = vpop.f32.mrf.mxu0
      %v1747 = vadd.f32 0.0, %v1746
      %v1748 = vpop.f32.mrf.mxu0
      %1749 = vmatprep.mubr.bf16.mxu0 0
      %1750 = vmatmul.mubr.bf16.gmra.mxu0 %v1596
      %v1751 = vpop.f32.mrf.mxu0
      %v1752 = vadd.f32 0.0, %v1751
      %v1753 = vpop.f32.mrf.mxu0
      %v1754 = vpop.f32.mrf.mxu0
      %v1755 = vadd.f32 0.0, %v1754
      %v1756 = vpop.f32.mrf.mxu0
      %1757 = vmatprep.mubr.bf16.mxu0 0
      %1758 = vmatmul.mubr.bf16.gmra.mxu0 %v1599
      %v1759 = vpop.f32.mrf.mxu0
      %v1760 = vadd.f32 0.0, %v1759
      %v1761 = vpop.f32.mrf.mxu0
      %v1762 = vpop.f32.mrf.mxu0
      %v1763 = vadd.f32 0.0, %v1762
      %v1764 = vpop.f32.mrf.mxu0
      %1765 = vdwg.mxu0
      %v1798 = vunpack.c.l.b16 %v1066
      %v1799 = vunpack.c.l.b16 %v1067
      %v1800 = vunpack.c.l.b16 %v1068
      %v1801 = vunpack.c.l.b16 %v1069
      %v1802 = vunpack.c.l.b16 %v1070
      %v1803 = vunpack.c.l.b16 %v1071
      %v1804 = vunpack.c.l.b16 %v1072
      %v1805 = vunpack.c.l.b16 %v1073
      %v1806 = vunpack.c.l.b16 %v1074
      %v1807 = vunpack.c.l.b16 %v1075
      %v1808 = vunpack.c.l.b16 %v1076
      %v1809 = vunpack.c.l.b16 %v1077
      %v1810 = vunpack.c.l.b16 %v1078
      %v1811 = vunpack.c.l.b16 %v1079
      %v1812 = vunpack.c.l.b16 %v1080
      %v1813 = vunpack.c.l.b16 %v1081
      %v1814 = vunpack.c.l.b16 %v1082
      %v1815 = vunpack.c.l.b16 %v1083
      %v1816 = vunpack.c.l.b16 %v1084
      %v1817 = vunpack.c.l.b16 %v1085
      %v1818 = vunpack.c.l.b16 %v1086
      %v1819 = vunpack.c.l.b16 %v1087
      %v1820 = vunpack.c.l.b16 %v1088
      %v1821 = vunpack.c.l.b16 %v1089
      %v1822 = vunpack.c.l.b16 %v1090
      %v1823 = vunpack.c.l.b16 %v1091
      %v1824 = vunpack.c.l.b16 %v1092
      %v1825 = vunpack.c.l.b16 %v1093
      %v1826 = vunpack.c.l.b16 %v1094
      %v1827 = vunpack.c.l.b16 %v1095
      %v1828 = vunpack.c.l.b16 %v1096
      %v1829 = vunpack.c.l.b16 %v1097
      %v1830 = vpack.c.b16 %v1799, %v1798
      %v1831 = vpack.c.b16 %v1801, %v1800
      %v1832 = vpack.c.b16 %v1803, %v1802
      %v1833 = vpack.c.b16 %v1805, %v1804
      %v1834 = vpack.c.b16 %v1807, %v1806
      %v1835 = vpack.c.b16 %v1809, %v1808
      %v1836 = vpack.c.b16 %v1811, %v1810
      %v1837 = vpack.c.b16 %v1813, %v1812
      %v1838 = vpack.c.b16 %v1815, %v1814
      %v1839 = vpack.c.b16 %v1817, %v1816
      %v1840 = vpack.c.b16 %v1819, %v1818
      %v1841 = vpack.c.b16 %v1821, %v1820
      %v1842 = vpack.c.b16 %v1823, %v1822
      %v1843 = vpack.c.b16 %v1825, %v1824
      %v1844 = vpack.c.b16 %v1827, %v1826
      %v1845 = vpack.c.b16 %v1829, %v1828
      %v1847 = vsel %vm1552, %v1830, 0
      %v1850 = vsel %vm1552, %v1831, 0
      %v1853 = vsel %vm1552, %v1832, 0
      %v1856 = vsel %vm1552, %v1833, 0
      %v1859 = vsel %vm1552, %v1834, 0
      %v1862 = vsel %vm1552, %v1835, 0
      %v1865 = vsel %vm1552, %v1836, 0
      %v1868 = vsel %vm1552, %v1837, 0
      %v1871 = vsel %vm1552, %v1838, 0
      %v1874 = vsel %vm1552, %v1839, 0
      %v1877 = vsel %vm1552, %v1840, 0
      %v1880 = vsel %vm1552, %v1841, 0
      %v1883 = vsel %vm1552, %v1842, 0
      %v1886 = vsel %vm1552, %v1843, 0
      %v1889 = vsel %vm1552, %v1844, 0
      %v1892 = vsel %vm1552, %v1845, 0
      %v1895 = vsel %vm1601, %v1098, 0
      %1897 = vmatprep.subr.bf16.mxu0 0
      %1898 = vmatpush1.bf16.msra.mxu0 0
      %1899 = vmatprep.subr.bf16.mxu0 0
      %1900 = vmatpush1.bf16.msra.mxu0 0
      %1901 = vmatprep.subr.bf16.mxu0 0
      %1902 = vmatpush1.bf16.msra.mxu0 0
      %1903 = vmatprep.subr.bf16.mxu0 0
      %1904 = vmatpush1.bf16.msra.mxu0 0
      %1905 = vmatprep.subr.bf16.mxu0 0
      %1906 = vmatpush1.bf16.msra.mxu0 0
      %1907 = vmatprep.subr.bf16.mxu0 0
      %1908 = vmatpush1.bf16.msra.mxu0 0
      %1909 = vmatprep.subr.bf16.mxu0 0
      %1910 = vmatpush1.bf16.msra.mxu0 0
      %1911 = vmatprep.subr.bf16.mxu0 0
      %1912 = vmatpush1.bf16.msra.mxu0 %v1895
      %1913 = vmatprep.subr.bf16.mxu0 0
      %1914 = vmatpush2.bf16.msra.mxu0 0
      %1915 = vmatprep.subr.bf16.mxu0 0
      %1916 = vmatpush2.bf16.msra.mxu0 0
      %1917 = vmatprep.subr.bf16.mxu0 0
      %1918 = vmatpush2.bf16.msra.mxu0 0
      %1919 = vmatprep.subr.bf16.mxu0 0
      %1920 = vmatpush2.bf16.msra.mxu0 0
      %1921 = vmatprep.subr.bf16.mxu0 0
      %1922 = vmatpush2.bf16.msra.mxu0 0
      %1923 = vmatprep.subr.bf16.mxu0 0
      %1924 = vmatpush2.bf16.msra.mxu0 0
      %1925 = vmatprep.subr.bf16.mxu0 0
      %1926 = vmatpush2.bf16.msra.mxu0 0
      %1927 = vmatprep.subr.bf16.mxu0 0
      %1928 = vmatpush2.bf16.msra.mxu0 0
      %1929 = vmatprep.mubr.bf16.mxu0 0
      %1930 = vmatmul.mubr.bf16.gmra.mxu0 %v1847
      %v1931 = vpop.f32.mrf.mxu0
      %v1932 = vadd.f32 %v1640, %v1931
      %v1933 = vpop.f32.mrf.mxu0
      %v1934 = vpop.f32.mrf.mxu0
      %v1935 = vadd.f32 %v1643, %v1934
      %v1936 = vpop.f32.mrf.mxu0
      %1937 = vmatprep.mubr.bf16.mxu0 0
      %1938 = vmatmul.mubr.bf16.gmra.mxu0 %v1850
      %v1939 = vpop.f32.mrf.mxu0
      %v1940 = vadd.f32 %v1648, %v1939
      %v1941 = vpop.f32.mrf.mxu0
      %v1942 = vpop.f32.mrf.mxu0
      %v1943 = vadd.f32 %v1651, %v1942
      %v1944 = vpop.f32.mrf.mxu0
      %1945 = vmatprep.mubr.bf16.mxu0 0
      %1946 = vmatmul.mubr.bf16.gmra.mxu0 %v1853
      %v1947 = vpop.f32.mrf.mxu0
      %v1948 = vadd.f32 %v1656, %v1947
      %v1949 = vpop.f32.mrf.mxu0
      %v1950 = vpop.f32.mrf.mxu0
      %v1951 = vadd.f32 %v1659, %v1950
      %v1952 = vpop.f32.mrf.mxu0
      %1953 = vmatprep.mubr.bf16.mxu0 0
      %1954 = vmatmul.mubr.bf16.gmra.mxu0 %v1856
      %v1955 = vpop.f32.mrf.mxu0
      %v1956 = vadd.f32 %v1664, %v1955
      %v1957 = vpop.f32.mrf.mxu0
      %v1958 = vpop.f32.mrf.mxu0
      %v1959 = vadd.f32 %v1667, %v1958
      %v1960 = vpop.f32.mrf.mxu0
      %1961 = vmatprep.mubr.bf16.mxu0 0
      %1962 = vmatmul.mubr.bf16.gmra.mxu0 %v1859
      %v1963 = vpop.f32.mrf.mxu0
      %v1964 = vadd.f32 %v1672, %v1963
      %v1965 = vpop.f32.mrf.mxu0
      %v1966 = vpop.f32.mrf.mxu0
      %v1967 = vadd.f32 %v1675, %v1966
      %v1968 = vpop.f32.mrf.mxu0
      %1969 = vmatprep.mubr.bf16.mxu0 0
      %1970 = vmatmul.mubr.bf16.gmra.mxu0 %v1862
      %v1971 = vpop.f32.mrf.mxu0
      %v1972 = vadd.f32 %v1680, %v1971
      %v1973 = vpop.f32.mrf.mxu0
      %v1974 = vpop.f32.mrf.mxu0
      %v1975 = vadd.f32 %v1683, %v1974
      %v1976 = vpop.f32.mrf.mxu0
      %1977 = vmatprep.mubr.bf16.mxu0 0
      %1978 = vmatmul.mubr.bf16.gmra.mxu0 %v1865
      %v1979 = vpop.f32.mrf.mxu0
      %v1980 = vadd.f32 %v1688, %v1979
      %v1981 = vpop.f32.mrf.mxu0
      %v1982 = vpop.f32.mrf.mxu0
      %v1983 = vadd.f32 %v1691, %v1982
      %v1984 = vpop.f32.mrf.mxu0
      %1985 = vmatprep.mubr.bf16.mxu0 0
      %1986 = vmatmul.mubr.bf16.gmra.mxu0 %v1868
      %v1987 = vpop.f32.mrf.mxu0
      %v1988 = vadd.f32 %v1696, %v1987
      %v1989 = vpop.f32.mrf.mxu0
      %v1990 = vpop.f32.mrf.mxu0
      %v1991 = vadd.f32 %v1699, %v1990
      %v1992 = vpop.f32.mrf.mxu0
      %1993 = vmatprep.mubr.bf16.mxu0 0
      %1994 = vmatmul.mubr.bf16.gmra.mxu0 %v1871
      %v1995 = vpop.f32.mrf.mxu0
      %v1996 = vadd.f32 %v1704, %v1995
      %v1997 = vpop.f32.mrf.mxu0
      %v1998 = vpop.f32.mrf.mxu0
      %v1999 = vadd.f32 %v1707, %v1998
      %v2000 = vpop.f32.mrf.mxu0
      %2001 = vmatprep.mubr.bf16.mxu0 0
      %2002 = vmatmul.mubr.bf16.gmra.mxu0 %v1874
      %v2003 = vpop.f32.mrf.mxu0
      %v2004 = vadd.f32 %v1712, %v2003
      %v2005 = vpop.f32.mrf.mxu0
      %v2006 = vpop.f32.mrf.mxu0
      %v2007 = vadd.f32 %v1715, %v2006
      %v2008 = vpop.f32.mrf.mxu0
      %2009 = vmatprep.mubr.bf16.mxu0 0
      %2010 = vmatmul.mubr.bf16.gmra.mxu0 %v1877
      %v2011 = vpop.f32.mrf.mxu0
      %v2012 = vadd.f32 %v1720, %v2011
      %v2013 = vpop.f32.mrf.mxu0
      %v2014 = vpop.f32.mrf.mxu0
      %v2015 = vadd.f32 %v1723, %v2014
      %v2016 = vpop.f32.mrf.mxu0
      %2017 = vmatprep.mubr.bf16.mxu0 0
      %2018 = vmatmul.mubr.bf16.gmra.mxu0 %v1880
      %v2019 = vpop.f32.mrf.mxu0
      %v2020 = vadd.f32 %v1728, %v2019
      %v2021 = vpop.f32.mrf.mxu0
      %v2022 = vpop.f32.mrf.mxu0
      %v2023 = vadd.f32 %v1731, %v2022
      %v2024 = vpop.f32.mrf.mxu0
      %2025 = vmatprep.mubr.bf16.mxu0 0
      %2026 = vmatmul.mubr.bf16.gmra.mxu0 %v1883
      %v2027 = vpop.f32.mrf.mxu0
      %v2028 = vadd.f32 %v1736, %v2027
      %v2029 = vpop.f32.mrf.mxu0
      %v2030 = vpop.f32.mrf.mxu0
      %v2031 = vadd.f32 %v1739, %v2030
      %v2032 = vpop.f32.mrf.mxu0
      %2033 = vmatprep.mubr.bf16.mxu0 0
      %2034 = vmatmul.mubr.bf16.gmra.mxu0 %v1886
      %v2035 = vpop.f32.mrf.mxu0
      %v2036 = vadd.f32 %v1744, %v2035
      %v2037 = vpop.f32.mrf.mxu0
      %v2038 = vpop.f32.mrf.mxu0
      %v2039 = vadd.f32 %v1747, %v2038
      %v2040 = vpop.f32.mrf.mxu0
      %2041 = vmatprep.mubr.bf16.mxu0 0
      %2042 = vmatmul.mubr.bf16.gmra.mxu0 %v1889
      %v2043 = vpop.f32.mrf.mxu0
      %v2044 = vadd.f32 %v1752, %v2043
      %v2045 = vpop.f32.mrf.mxu0
      %v2046 = vpop.f32.mrf.mxu0
      %v2047 = vadd.f32 %v1755, %v2046
      %v2048 = vpop.f32.mrf.mxu0
      %2049 = vmatprep.mubr.bf16.mxu0 0
      %2050 = vmatmul.mubr.bf16.gmra.mxu0 %v1892
      %v2051 = vpop.f32.mrf.mxu0
      %v2052 = vadd.f32 %v1760, %v2051
      %v2053 = vpop.f32.mrf.mxu0
      %v2054 = vpop.f32.mrf.mxu0
      %v2055 = vadd.f32 %v1763, %v2054
      %v2056 = vpop.f32.mrf.mxu0
      %2057 = vdwg.mxu0
      %v2058 = vld [vmem:[#allocation2] sm:$0xe]
      %v2059 = vld [vmem:[#allocation2 + $0xc] sm:$0xe]
      %v2060 = vld [vmem:[#allocation2 + $0x18] sm:$0xe]
      %v2061 = vld [vmem:[#allocation2 + $0x24] sm:$0xe]
      %v2062 = vld [vmem:[#allocation2 + $0x30] sm:$0xe]
      %v2063 = vld [vmem:[#allocation2 + $0x3c] sm:$0xe]
      %v2064 = vld [vmem:[#allocation2 + $0x48] sm:$0xe]
      %v2065 = vld [vmem:[#allocation2 + $0x54] sm:$0xe]
      %v2066 = vld [vmem:[#allocation2 + $0x60] sm:$0xe]
      %v2067 = vld [vmem:[#allocation2 + $0x6c] sm:$0xe]
      %v2068 = vld [vmem:[#allocation2 + $0x78] sm:$0xe]
      %v2069 = vld [vmem:[#allocation2 + $0x84] sm:$0xe]
      %v2070 = vld [vmem:[#allocation2 + $0x90] sm:$0xe]
      %v2071 = vld [vmem:[#allocation2 + $0x9c] sm:$0xe]
      %v2072 = vld [vmem:[#allocation2 + $0xa8] sm:$0xe]
      %v2073 = vld [vmem:[#allocation2 + $0xb4] sm:$0xe]
      %vm2106 = vcmask 1042432
      %vm2107 = vcmask 1046532
      %vm2108 = vmor %vm2106, %vm2107
      %v2109 = vrot.slane %v2058, 5
      %v2110 = vrot.slane %v2109, 4
      %v2111 = vrot.slane %v1067, 5
      %v2112 = vsel %vm2108, %v2110, %v2111
      %v2113 = vrot.slane %v2111, 4
      %v2114 = vrot.slane %v1099, 5
      %v2115 = vsel %vm2108, %v2113, %v2114
      %v2116 = vrot.slane %v2059, 5
      %v2117 = vrot.slane %v2116, 4
      %v2118 = vrot.slane %v1069, 5
      %v2119 = vsel %vm2108, %v2117, %v2118
      %v2120 = vrot.slane %v2118, 4
      %v2121 = vrot.slane %v1100, 5
      %v2122 = vsel %vm2108, %v2120, %v2121
      %v2123 = vrot.slane %v2060, 5
      %v2124 = vrot.slane %v2123, 4
      %v2125 = vrot.slane %v1071, 5
      %v2126 = vsel %vm2108, %v2124, %v2125
      %v2127 = vrot.slane %v2125, 4
      %v2128 = vrot.slane %v1101, 5
      %v2129 = vsel %vm2108, %v2127, %v2128
      %v2130 = vrot.slane %v2061, 5
      %v2131 = vrot.slane %v2130, 4
      %v2132 = vrot.slane %v1073, 5
      %v2133 = vsel %vm2108, %v2131, %v2132
      %v2134 = vrot.slane %v2132, 4
      %v2135 = vrot.slane %v1102, 5
      %v2136 = vsel %vm2108, %v2134, %v2135
      %v2137 = vrot.slane %v2062, 5
      %v2138 = vrot.slane %v2137, 4
      %v2139 = vrot.slane %v1075, 5
      %v2140 = vsel %vm2108, %v2138, %v2139
      %v2141 = vrot.slane %v2139, 4
      %v2142 = vrot.slane %v1103, 5
      %v2143 = vsel %vm2108, %v2141, %v2142
      %v2144 = vrot.slane %v2063, 5
      %v2145 = vrot.slane %v2144, 4
      %v2146 = vrot.slane %v1077, 5
      %v2147 = vsel %vm2108, %v2145, %v2146
      %v2148 = vrot.slane %v2146, 4
      %v2149 = vrot.slane %v1104, 5
      %v2150 = vsel %vm2108, %v2148, %v2149
      %v2151 = vrot.slane %v2064, 5
      %v2152 = vrot.slane %v2151, 4
      %v2153 = vrot.slane %v1079, 5
      %v2154 = vsel %vm2108, %v2152, %v2153
      %v2155 = vrot.slane %v2153, 4
      %v2156 = vrot.slane %v1105, 5
      %v2157 = vsel %vm2108, %v2155, %v2156
      %v2158 = vrot.slane %v2065, 5
      %v2159 = vrot.slane %v2158, 4
      %v2160 = vrot.slane %v1081, 5
      %v2161 = vsel %vm2108, %v2159, %v2160
      %v2162 = vrot.slane %v2160, 4
      %v2163 = vrot.slane %v1106, 5
      %v2164 = vsel %vm2108, %v2162, %v2163
      %v2165 = vrot.slane %v2066, 5
      %v2166 = vrot.slane %v2165, 4
      %v2167 = vrot.slane %v1083, 5
      %v2168 = vsel %vm2108, %v2166, %v2167
      %v2169 = vrot.slane %v2167, 4
      %v2170 = vrot.slane %v1107, 5
      %v2171 = vsel %vm2108, %v2169, %v2170
      %v2172 = vrot.slane %v2067, 5
      %v2173 = vrot.slane %v2172, 4
      %v2174 = vrot.slane %v1085, 5
      %v2175 = vsel %vm2108, %v2173, %v2174
      %v2176 = vrot.slane %v2174, 4
      %v2177 = vrot.slane %v1108, 5
      %v2178 = vsel %vm2108, %v2176, %v2177
      %v2179 = vrot.slane %v2068, 5
      %v2180 = vrot.slane %v2179, 4
      %v2181 = vrot.slane %v1087, 5
      %v2182 = vsel %vm2108, %v2180, %v2181
      %v2183 = vrot.slane %v2181, 4
      %v2184 = vrot.slane %v1109, 5
      %v2185 = vsel %vm2108, %v2183, %v2184
      %v2186 = vrot.slane %v2069, 5
      %v2187 = vrot.slane %v2186, 4
      %v2188 = vrot.slane %v1089, 5
      %v2189 = vsel %vm2108, %v2187, %v2188
      %v2190 = vrot.slane %v2188, 4
      %v2191 = vrot.slane %v1110, 5
      %v2192 = vsel %vm2108, %v2190, %v2191
      %v2193 = vrot.slane %v2070, 5
      %v2194 = vrot.slane %v2193, 4
      %v2195 = vrot.slane %v1091, 5
      %v2196 = vsel %vm2108, %v2194, %v2195
      %v2197 = vrot.slane %v2195, 4
      %v2198 = vrot.slane %v1111, 5
      %v2199 = vsel %vm2108, %v2197, %v2198
      %v2200 = vrot.slane %v2071, 5
      %v2201 = vrot.slane %v2200, 4
      %v2202 = vrot.slane %v1093, 5
      %v2203 = vsel %vm2108, %v2201, %v2202
      %v2204 = vrot.slane %v2202, 4
      %v2205 = vrot.slane %v1112, 5
      %v2206 = vsel %vm2108, %v2204, %v2205
      %v2207 = vrot.slane %v2072, 5
      %v2208 = vrot.slane %v2207, 4
      %v2209 = vrot.slane %v1095, 5
      %v2210 = vsel %vm2108, %v2208, %v2209
      %v2211 = vrot.slane %v2209, 4
      %v2212 = vrot.slane %v1113, 5
      %v2213 = vsel %vm2108, %v2211, %v2212
      %v2214 = vrot.slane %v2073, 5
      %v2215 = vrot.slane %v2214, 4
      %v2216 = vrot.slane %v1097, 5
      %v2217 = vsel %vm2108, %v2215, %v2216
      %v2218 = vrot.slane %v2216, 4
      %v2219 = vrot.slane %v1114, 5
      %v2220 = vsel %vm2108, %v2218, %v2219
      %s2221 = scalar_lea.vmem %s3, 8
      %v2222 = vld [vmem:[%s2221] sm:$0xf]
      %v2223 = vunpack.c.l.b16 %v2112
      %v2224 = vunpack.c.l.b16 %v2115
      %v2225 = vunpack.c.l.b16 %v2119
      %v2226 = vunpack.c.l.b16 %v2122
      %v2227 = vunpack.c.l.b16 %v2126
      %v2228 = vunpack.c.l.b16 %v2129
      %v2229 = vunpack.c.l.b16 %v2133
      %v2230 = vunpack.c.l.b16 %v2136
      %v2231 = vunpack.c.l.b16 %v2140
      %v2232 = vunpack.c.l.b16 %v2143
      %v2233 = vunpack.c.l.b16 %v2147
      %v2234 = vunpack.c.l.b16 %v2150
      %v2235 = vunpack.c.l.b16 %v2154
      %v2236 = vunpack.c.l.b16 %v2157
      %v2237 = vunpack.c.l.b16 %v2161
      %v2238 = vunpack.c.l.b16 %v2164
      %v2239 = vunpack.c.l.b16 %v2168
      %v2240 = vunpack.c.l.b16 %v2171
      %v2241 = vunpack.c.l.b16 %v2175
      %v2242 = vunpack.c.l.b16 %v2178
      %v2243 = vunpack.c.l.b16 %v2182
      %v2244 = vunpack.c.l.b16 %v2185
      %v2245 = vunpack.c.l.b16 %v2189
      %v2246 = vunpack.c.l.b16 %v2192
      %v2247 = vunpack.c.l.b16 %v2196
      %v2248 = vunpack.c.l.b16 %v2199
      %v2249 = vunpack.c.l.b16 %v2203
      %v2250 = vunpack.c.l.b16 %v2206
      %v2251 = vunpack.c.l.b16 %v2210
      %v2252 = vunpack.c.l.b16 %v2213
      %v2253 = vunpack.c.l.b16 %v2217
      %v2254 = vunpack.c.l.b16 %v2220
      %v2255 = vpack.c.b16 %v2224, %v2223
      %v2256 = vpack.c.b16 %v2226, %v2225
      %v2257 = vpack.c.b16 %v2228, %v2227
      %v2258 = vpack.c.b16 %v2230, %v2229
      %v2259 = vpack.c.b16 %v2232, %v2231
      %v2260 = vpack.c.b16 %v2234, %v2233
      %v2261 = vpack.c.b16 %v2236, %v2235
      %v2262 = vpack.c.b16 %v2238, %v2237
      %v2263 = vpack.c.b16 %v2240, %v2239
      %v2264 = vpack.c.b16 %v2242, %v2241
      %v2265 = vpack.c.b16 %v2244, %v2243
      %v2266 = vpack.c.b16 %v2246, %v2245
      %v2267 = vpack.c.b16 %v2248, %v2247
      %v2268 = vpack.c.b16 %v2250, %v2249
      %v2269 = vpack.c.b16 %v2252, %v2251
      %v2270 = vpack.c.b16 %v2254, %v2253
      %v2272 = vsel %vm1552, %v2255, 0
      %v2275 = vsel %vm1552, %v2256, 0
      %v2278 = vsel %vm1552, %v2257, 0
      %v2281 = vsel %vm1552, %v2258, 0
      %v2284 = vsel %vm1552, %v2259, 0
      %v2287 = vsel %vm1552, %v2260, 0
      %v2290 = vsel %vm1552, %v2261, 0
      %v2293 = vsel %vm1552, %v2262, 0
      %v2296 = vsel %vm1552, %v2263, 0
      %v2299 = vsel %vm1552, %v2264, 0
      %v2302 = vsel %vm1552, %v2265, 0
      %v2305 = vsel %vm1552, %v2266, 0
      %v2308 = vsel %vm1552, %v2267, 0
      %v2311 = vsel %vm1552, %v2268, 0
      %v2314 = vsel %vm1552, %v2269, 0
      %v2317 = vsel %vm1552, %v2270, 0
      %v2320 = vsel %vm1601, %v2222, 0
      %2322 = vmatprep.subr.bf16.mxu0 0
      %2323 = vmatpush1.bf16.msra.mxu0 0
      %2324 = vmatprep.subr.bf16.mxu0 0
      %2325 = vmatpush1.bf16.msra.mxu0 0
      %2326 = vmatprep.subr.bf16.mxu0 0
      %2327 = vmatpush1.bf16.msra.mxu0 0
      %2328 = vmatprep.subr.bf16.mxu0 0
      %2329 = vmatpush1.bf16.msra.mxu0 0
      %2330 = vmatprep.subr.bf16.mxu0 0
      %2331 = vmatpush1.bf16.msra.mxu0 0
      %2332 = vmatprep.subr.bf16.mxu0 0
      %2333 = vmatpush1.bf16.msra.mxu0 0
      %2334 = vmatprep.subr.bf16.mxu0 0
      %2335 = vmatpush1.bf16.msra.mxu0 0
      %2336 = vmatprep.subr.bf16.mxu0 0
      %2337 = vmatpush1.bf16.msra.mxu0 %v2320
      %2338 = vmatprep.subr.bf16.mxu0 0
      %2339 = vmatpush2.bf16.msra.mxu0 0
      %2340 = vmatprep.subr.bf16.mxu0 0
      %2341 = vmatpush2.bf16.msra.mxu0 0
      %2342 = vmatprep.subr.bf16.mxu0 0
      %2343 = vmatpush2.bf16.msra.mxu0 0
      %2344 = vmatprep.subr.bf16.mxu0 0
      %2345 = vmatpush2.bf16.msra.mxu0 0
      %2346 = vmatprep.subr.bf16.mxu0 0
      %2347 = vmatpush2.bf16.msra.mxu0 0
      %2348 = vmatprep.subr.bf16.mxu0 0
      %2349 = vmatpush2.bf16.msra.mxu0 0
      %2350 = vmatprep.subr.bf16.mxu0 0
      %2351 = vmatpush2.bf16.msra.mxu0 0
      %2352 = vmatprep.subr.bf16.mxu0 0
      %2353 = vmatpush2.bf16.msra.mxu0 0
      %2354 = vmatprep.mubr.bf16.mxu0 0
      %2355 = vmatmul.mubr.bf16.gmra.mxu0 %v2272
      %v2356 = vpop.f32.mrf.mxu0
      %v2357 = vadd.f32 0.0, %v2356
      %v2358 = vpop.f32.mrf.mxu0
      %v2359 = vpop.f32.mrf.mxu0
      %v2360 = vadd.f32 0.0, %v2359
      %v2361 = vpop.f32.mrf.mxu0
      %2362 = vmatprep.mubr.bf16.mxu0 0
      %2363 = vmatmul.mubr.bf16.gmra.mxu0 %v2275
      %v2364 = vpop.f32.mrf.mxu0
      %v2365 = vadd.f32 0.0, %v2364
      %v2366 = vpop.f32.mrf.mxu0
      %v2367 = vpop.f32.mrf.mxu0
      %v2368 = vadd.f32 0.0, %v2367
      %v2369 = vpop.f32.mrf.mxu0
      %2370 = vmatprep.mubr.bf16.mxu0 0
      %2371 = vmatmul.mubr.bf16.gmra.mxu0 %v2278
      %v2372 = vpop.f32.mrf.mxu0
      %v2373 = vadd.f32 0.0, %v2372
      %v2374 = vpop.f32.mrf.mxu0
      %v2375 = vpop.f32.mrf.mxu0
      %v2376 = vadd.f32 0.0, %v2375
      %v2377 = vpop.f32.mrf.mxu0
      %2378 = vmatprep.mubr.bf16.mxu0 0
      %2379 = vmatmul.mubr.bf16.gmra.mxu0 %v2281
      %v2380 = vpop.f32.mrf.mxu0
      %v2381 = vadd.f32 0.0, %v2380
      %v2382 = vpop.f32.mrf.mxu0
      %v2383 = vpop.f32.mrf.mxu0
      %v2384 = vadd.f32 0.0, %v2383
      %v2385 = vpop.f32.mrf.mxu0
      %2386 = vmatprep.mubr.bf16.mxu0 0
      %2387 = vmatmul.mubr.bf16.gmra.mxu0 %v2284
      %v2388 = vpop.f32.mrf.mxu0
      %v2389 = vadd.f32 0.0, %v2388
      %v2390 = vpop.f32.mrf.mxu0
      %v2391 = vpop.f32.mrf.mxu0
      %v2392 = vadd.f32 0.0, %v2391
      %v2393 = vpop.f32.mrf.mxu0
      %2394 = vmatprep.mubr.bf16.mxu0 0
      %2395 = vmatmul.mubr.bf16.gmra.mxu0 %v2287
      %v2396 = vpop.f32.mrf.mxu0
      %v2397 = vadd.f32 0.0, %v2396
      %v2398 = vpop.f32.mrf.mxu0
      %v2399 = vpop.f32.mrf.mxu0
      %v2400 = vadd.f32 0.0, %v2399
      %v2401 = vpop.f32.mrf.mxu0
      %2402 = vmatprep.mubr.bf16.mxu0 0
      %2403 = vmatmul.mubr.bf16.gmra.mxu0 %v2290
      %v2404 = vpop.f32.mrf.mxu0
      %v2405 = vadd.f32 0.0, %v2404
      %v2406 = vpop.f32.mrf.mxu0
      %v2407 = vpop.f32.mrf.mxu0
      %v2408 = vadd.f32 0.0, %v2407
      %v2409 = vpop.f32.mrf.mxu0
      %2410 = vmatprep.mubr.bf16.mxu0 0
      %2411 = vmatmul.mubr.bf16.gmra.mxu0 %v2293
      %v2412 = vpop.f32.mrf.mxu0
      %v2413 = vadd.f32 0.0, %v2412
      %v2414 = vpop.f32.mrf.mxu0
      %v2415 = vpop.f32.mrf.mxu0
      %v2416 = vadd.f32 0.0, %v2415
      %v2417 = vpop.f32.mrf.mxu0
      %2418 = vmatprep.mubr.bf16.mxu0 0
      %2419 = vmatmul.mubr.bf16.gmra.mxu0 %v2296
      %v2420 = vpop.f32.mrf.mxu0
      %v2421 = vadd.f32 0.0, %v2420
      %v2422 = vpop.f32.mrf.mxu0
      %v2423 = vpop.f32.mrf.mxu0
      %v2424 = vadd.f32 0.0, %v2423
      %v2425 = vpop.f32.mrf.mxu0
      %2426 = vmatprep.mubr.bf16.mxu0 0
      %2427 = vmatmul.mubr.bf16.gmra.mxu0 %v2299
      %v2428 = vpop.f32.mrf.mxu0
      %v2429 = vadd.f32 0.0, %v2428
      %v2430 = vpop.f32.mrf.mxu0
      %v2431 = vpop.f32.mrf.mxu0
      %v2432 = vadd.f32 0.0, %v2431
      %v2433 = vpop.f32.mrf.mxu0
      %2434 = vmatprep.mubr.bf16.mxu0 0
      %2435 = vmatmul.mubr.bf16.gmra.mxu0 %v2302
      %v2436 = vpop.f32.mrf.mxu0
      %v2437 = vadd.f32 0.0, %v2436
      %v2438 = vpop.f32.mrf.mxu0
      %v2439 = vpop.f32.mrf.mxu0
      %v2440 = vadd.f32 0.0, %v2439
      %v2441 = vpop.f32.mrf.mxu0
      %2442 = vmatprep.mubr.bf16.mxu0 0
      %2443 = vmatmul.mubr.bf16.gmra.mxu0 %v2305
      %v2444 = vpop.f32.mrf.mxu0
      %v2445 = vadd.f32 0.0, %v2444
      %v2446 = vpop.f32.mrf.mxu0
      %v2447 = vpop.f32.mrf.mxu0
      %v2448 = vadd.f32 0.0, %v2447
      %v2449 = vpop.f32.mrf.mxu0
      %2450 = vmatprep.mubr.bf16.mxu0 0
      %2451 = vmatmul.mubr.bf16.gmra.mxu0 %v2308
      %v2452 = vpop.f32.mrf.mxu0
      %v2453 = vadd.f32 0.0, %v2452
      %v2454 = vpop.f32.mrf.mxu0
      %v2455 = vpop.f32.mrf.mxu0
      %v2456 = vadd.f32 0.0, %v2455
      %v2457 = vpop.f32.mrf.mxu0
      %2458 = vmatprep.mubr.bf16.mxu0 0
      %2459 = vmatmul.mubr.bf16.gmra.mxu0 %v2311
      %v2460 = vpop.f32.mrf.mxu0
      %v2461 = vadd.f32 0.0, %v2460
      %v2462 = vpop.f32.mrf.mxu0
      %v2463 = vpop.f32.mrf.mxu0
      %v2464 = vadd.f32 0.0, %v2463
      %v2465 = vpop.f32.mrf.mxu0
      %2466 = vmatprep.mubr.bf16.mxu0 0
      %2467 = vmatmul.mubr.bf16.gmra.mxu0 %v2314
      %v2468 = vpop.f32.mrf.mxu0
      %v2469 = vadd.f32 0.0, %v2468
      %v2470 = vpop.f32.mrf.mxu0
      %v2471 = vpop.f32.mrf.mxu0
      %v2472 = vadd.f32 0.0, %v2471
      %v2473 = vpop.f32.mrf.mxu0
      %2474 = vmatprep.mubr.bf16.mxu0 0
      %2475 = vmatmul.mubr.bf16.gmra.mxu0 %v2317
      %v2476 = vpop.f32.mrf.mxu0
      %v2477 = vadd.f32 0.0, %v2476
      %v2478 = vpop.f32.mrf.mxu0
      %v2479 = vpop.f32.mrf.mxu0
      %v2480 = vadd.f32 0.0, %v2479
      %v2481 = vpop.f32.mrf.mxu0
      %2482 = vdwg.mxu0
      %v2483 = vadd.f32 %v1932, %v2357
      %v2484 = vadd.f32 %v1935, %v2360
      %v2485 = vadd.f32 %v1940, %v2365
      %v2486 = vadd.f32 %v1943, %v2368
      %v2487 = vadd.f32 %v1948, %v2373
      %v2488 = vadd.f32 %v1951, %v2376
      %v2489 = vadd.f32 %v1956, %v2381
      %v2490 = vadd.f32 %v1959, %v2384
      %v2491 = vadd.f32 %v1964, %v2389
      %v2492 = vadd.f32 %v1967, %v2392
      %v2493 = vadd.f32 %v1972, %v2397
      %v2494 = vadd.f32 %v1975, %v2400
      %v2495 = vadd.f32 %v1980, %v2405
      %v2496 = vadd.f32 %v1983, %v2408
      %v2497 = vadd.f32 %v1988, %v2413
      %v2498 = vadd.f32 %v1991, %v2416
      %v2499 = vadd.f32 %v1996, %v2421
      %v2500 = vadd.f32 %v1999, %v2424
      %v2501 = vadd.f32 %v2004, %v2429
      %v2502 = vadd.f32 %v2007, %v2432
      %v2503 = vadd.f32 %v2012, %v2437
      %v2504 = vadd.f32 %v2015, %v2440
      %v2505 = vadd.f32 %v2020, %v2445
      %v2506 = vadd.f32 %v2023, %v2448
      %v2507 = vadd.f32 %v2028, %v2453
      %v2508 = vadd.f32 %v2031, %v2456
      %v2509 = vadd.f32 %v2036, %v2461
      %v2510 = vadd.f32 %v2039, %v2464
      %v2511 = vadd.f32 %v2044, %v2469
      %v2512 = vadd.f32 %v2047, %v2472
      %v2513 = vadd.f32 %v2052, %v2477
      %v2514 = vadd.f32 %v2055, %v2480
      %v2515 = vld [vmem:[%s951] sm:$0xf]
      %v2516 = vld [vmem:[%s951 + $0x4] sm:$0xf]
      %v2517 = vld [vmem:[%s951 + $0xc] sm:$0xf]
      %v2518 = vld [vmem:[%s951 + $0x10] sm:$0xf]
      %v2519 = vld [vmem:[%s951 + $0x18] sm:$0xf]
      %v2520 = vld [vmem:[%s951 + $0x1c] sm:$0xf]
      %v2521 = vld [vmem:[%s951 + $0x24] sm:$0xf]
      %v2522 = vld [vmem:[%s951 + $0x28] sm:$0xf]
      %v2523 = vld [vmem:[%s951 + $0x30] sm:$0xf]
      %v2524 = vld [vmem:[%s951 + $0x34] sm:$0xf]
      %v2525 = vld [vmem:[%s951 + $0x3c] sm:$0xf]
      %v2526 = vld [vmem:[%s951 + $0x40] sm:$0xf]
      %v2527 = vld [vmem:[%s951 + $0x48] sm:$0xf]
      %v2528 = vld [vmem:[%s951 + $0x4c] sm:$0xf]
      %v2529 = vld [vmem:[%s951 + $0x54] sm:$0xf]
      %v2530 = vld [vmem:[%s951 + $0x58] sm:$0xf]
      %v2531 = vld [vmem:[%s951 + $0x60] sm:$0xf]
      %v2532 = vld [vmem:[%s951 + $0x64] sm:$0xf]
      %v2533 = vld [vmem:[%s951 + $0x6c] sm:$0xf]
      %v2534 = vld [vmem:[%s951 + $0x70] sm:$0xf]
      %v2535 = vld [vmem:[%s951 + $0x78] sm:$0xf]
      %v2536 = vld [vmem:[%s951 + $0x7c] sm:$0xf]
      %v2537 = vld [vmem:[%s951 + $0x84] sm:$0xf]
      %v2538 = vld [vmem:[%s951 + $0x88] sm:$0xf]
      %v2539 = vld [vmem:[%s951 + $0x90] sm:$0xf]
      %v2540 = vld [vmem:[%s951 + $0x94] sm:$0xf]
      %v2541 = vld [vmem:[%s951 + $0x9c] sm:$0xf]
      %v2542 = vld [vmem:[%s951 + $0xa0] sm:$0xf]
      %v2543 = vld [vmem:[%s951 + $0xa8] sm:$0xf]
      %v2544 = vld [vmem:[%s951 + $0xac] sm:$0xf]
      %v2545 = vld [vmem:[%s951 + $0xb4] sm:$0xf]
      %v2546 = vld [vmem:[%s951 + $0xb8] sm:$0xf]
      %s2547 = scalar_lea.vmem %s3, 12
      %v2548 = vld [vmem:[%s2547] sm:$0xf]
      %v2581 = vunpack.c.l.b16 %v2515
      %v2582 = vunpack.c.l.b16 %v2516
      %v2583 = vunpack.c.l.b16 %v2517
      %v2584 = vunpack.c.l.b16 %v2518
      %v2585 = vunpack.c.l.b16 %v2519
      %v2586 = vunpack.c.l.b16 %v2520
      %v2587 = vunpack.c.l.b16 %v2521
      %v2588 = vunpack.c.l.b16 %v2522
      %v2589 = vunpack.c.l.b16 %v2523
      %v2590 = vunpack.c.l.b16 %v2524
      %v2591 = vunpack.c.l.b16 %v2525
      %v2592 = vunpack.c.l.b16 %v2526
      %v2593 = vunpack.c.l.b16 %v2527
      %v2594 = vunpack.c.l.b16 %v2528
      %v2595 = vunpack.c.l.b16 %v2529
      %v2596 = vunpack.c.l.b16 %v2530
      %v2597 = vunpack.c.l.b16 %v2531
      %v2598 = vunpack.c.l.b16 %v2532
      %v2599 = vunpack.c.l.b16 %v2533
      %v2600 = vunpack.c.l.b16 %v2534
      %v2601 = vunpack.c.l.b16 %v2535
      %v2602 = vunpack.c.l.b16 %v2536
      %v2603 = vunpack.c.l.b16 %v2537
      %v2604 = vunpack.c.l.b16 %v2538
      %v2605 = vunpack.c.l.b16 %v2539
      %v2606 = vunpack.c.l.b16 %v2540
      %v2607 = vunpack.c.l.b16 %v2541
      %v2608 = vunpack.c.l.b16 %v2542
      %v2609 = vunpack.c.l.b16 %v2543
      %v2610 = vunpack.c.l.b16 %v2544
      %v2611 = vunpack.c.l.b16 %v2545
      %v2612 = vunpack.c.l.b16 %v2546
      %v2613 = vpack.c.b16 %v2582, %v2581
      %v2614 = vpack.c.b16 %v2584, %v2583
      %v2615 = vpack.c.b16 %v2586, %v2585
      %v2616 = vpack.c.b16 %v2588, %v2587
      %v2617 = vpack.c.b16 %v2590, %v2589
      %v2618 = vpack.c.b16 %v2592, %v2591
      %v2619 = vpack.c.b16 %v2594, %v2593
      %v2620 = vpack.c.b16 %v2596, %v2595
      %v2621 = vpack.c.b16 %v2598, %v2597
      %v2622 = vpack.c.b16 %v2600, %v2599
      %v2623 = vpack.c.b16 %v2602, %v2601
      %v2624 = vpack.c.b16 %v2604, %v2603
      %v2625 = vpack.c.b16 %v2606, %v2605
      %v2626 = vpack.c.b16 %v2608, %v2607
      %v2627 = vpack.c.b16 %v2610, %v2609
      %v2628 = vpack.c.b16 %v2612, %v2611
      %v2630 = vsel %vm1552, %v2613, 0
      %v2633 = vsel %vm1552, %v2614, 0
      %v2636 = vsel %vm1552, %v2615, 0
      %v2639 = vsel %vm1552, %v2616, 0
      %v2642 = vsel %vm1552, %v2617, 0
      %v2645 = vsel %vm1552, %v2618, 0
      %v2648 = vsel %vm1552, %v2619, 0
      %v2651 = vsel %vm1552, %v2620, 0
      %v2654 = vsel %vm1552, %v2621, 0
      %v2657 = vsel %vm1552, %v2622, 0
      %v2660 = vsel %vm1552, %v2623, 0
      %v2663 = vsel %vm1552, %v2624, 0
      %v2666 = vsel %vm1552, %v2625, 0
      %v2669 = vsel %vm1552, %v2626, 0
      %v2672 = vsel %vm1552, %v2627, 0
      %v2675 = vsel %vm1552, %v2628, 0
      %v2678 = vsel %vm1601, %v2548, 0
      %2680 = vmatprep.subr.bf16.mxu0 0
      %2681 = vmatpush1.bf16.msra.mxu0 0
      %2682 = vmatprep.subr.bf16.mxu0 0
      %2683 = vmatpush1.bf16.msra.mxu0 0
      %2684 = vmatprep.subr.bf16.mxu0 0
      %2685 = vmatpush1.bf16.msra.mxu0 0
      %2686 = vmatprep.subr.bf16.mxu0 0
      %2687 = vmatpush1.bf16.msra.mxu0 0
      %2688 = vmatprep.subr.bf16.mxu0 0
      %2689 = vmatpush1.bf16.msra.mxu0 0
      %2690 = vmatprep.subr.bf16.mxu0 0
      %2691 = vmatpush1.bf16.msra.mxu0 0
      %2692 = vmatprep.subr.bf16.mxu0 0
      %2693 = vmatpush1.bf16.msra.mxu0 0
      %2694 = vmatprep.subr.bf16.mxu0 0
      %2695 = vmatpush1.bf16.msra.mxu0 %v2678
      %2696 = vmatprep.subr.bf16.mxu0 0
      %2697 = vmatpush2.bf16.msra.mxu0 0
      %2698 = vmatprep.subr.bf16.mxu0 0
      %2699 = vmatpush2.bf16.msra.mxu0 0
      %2700 = vmatprep.subr.bf16.mxu0 0
      %2701 = vmatpush2.bf16.msra.mxu0 0
      %2702 = vmatprep.subr.bf16.mxu0 0
      %2703 = vmatpush2.bf16.msra.mxu0 0
      %2704 = vmatprep.subr.bf16.mxu0 0
      %2705 = vmatpush2.bf16.msra.mxu0 0
      %2706 = vmatprep.subr.bf16.mxu0 0
      %2707 = vmatpush2.bf16.msra.mxu0 0
      %2708 = vmatprep.subr.bf16.mxu0 0
      %2709 = vmatpush2.bf16.msra.mxu0 0
      %2710 = vmatprep.subr.bf16.mxu0 0
      %2711 = vmatpush2.bf16.msra.mxu0 0
      %2712 = vmatprep.mubr.bf16.mxu0 0
      %2713 = vmatmul.mubr.bf16.gmra.mxu0 %v2630
      %v2714 = vpop.f32.mrf.mxu0
      %v2715 = vadd.f32 0.0, %v2714
      %v2716 = vpop.f32.mrf.mxu0
      %v2717 = vpop.f32.mrf.mxu0
      %v2718 = vadd.f32 0.0, %v2717
      %v2719 = vpop.f32.mrf.mxu0
      %2720 = vmatprep.mubr.bf16.mxu0 0
      %2721 = vmatmul.mubr.bf16.gmra.mxu0 %v2633
      %v2722 = vpop.f32.mrf.mxu0
      %v2723 = vadd.f32 0.0, %v2722
      %v2724 = vpop.f32.mrf.mxu0
      %v2725 = vpop.f32.mrf.mxu0
      %v2726 = vadd.f32 0.0, %v2725
      %v2727 = vpop.f32.mrf.mxu0
      %2728 = vmatprep.mubr.bf16.mxu0 0
      %2729 = vmatmul.mubr.bf16.gmra.mxu0 %v2636
      %v2730 = vpop.f32.mrf.mxu0
      %v2731 = vadd.f32 0.0, %v2730
      %v2732 = vpop.f32.mrf.mxu0
      %v2733 = vpop.f32.mrf.mxu0
      %v2734 = vadd.f32 0.0, %v2733
      %v2735 = vpop.f32.mrf.mxu0
      %2736 = vmatprep.mubr.bf16.mxu0 0
      %2737 = vmatmul.mubr.bf16.gmra.mxu0 %v2639
      %v2738 = vpop.f32.mrf.mxu0
      %v2739 = vadd.f32 0.0, %v2738
      %v2740 = vpop.f32.mrf.mxu0
      %v2741 = vpop.f32.mrf.mxu0
      %v2742 = vadd.f32 0.0, %v2741
      %v2743 = vpop.f32.mrf.mxu0
      %2744 = vmatprep.mubr.bf16.mxu0 0
      %2745 = vmatmul.mubr.bf16.gmra.mxu0 %v2642
      %v2746 = vpop.f32.mrf.mxu0
      %v2747 = vadd.f32 0.0, %v2746
      %v2748 = vpop.f32.mrf.mxu0
      %v2749 = vpop.f32.mrf.mxu0
      %v2750 = vadd.f32 0.0, %v2749
      %v2751 = vpop.f32.mrf.mxu0
      %2752 = vmatprep.mubr.bf16.mxu0 0
      %2753 = vmatmul.mubr.bf16.gmra.mxu0 %v2645
      %v2754 = vpop.f32.mrf.mxu0
      %v2755 = vadd.f32 0.0, %v2754
      %v2756 = vpop.f32.mrf.mxu0
      %v2757 = vpop.f32.mrf.mxu0
      %v2758 = vadd.f32 0.0, %v2757
      %v2759 = vpop.f32.mrf.mxu0
      %2760 = vmatprep.mubr.bf16.mxu0 0
      %2761 = vmatmul.mubr.bf16.gmra.mxu0 %v2648
      %v2762 = vpop.f32.mrf.mxu0
      %v2763 = vadd.f32 0.0, %v2762
      %v2764 = vpop.f32.mrf.mxu0
      %v2765 = vpop.f32.mrf.mxu0
      %v2766 = vadd.f32 0.0, %v2765
      %v2767 = vpop.f32.mrf.mxu0
      %2768 = vmatprep.mubr.bf16.mxu0 0
      %2769 = vmatmul.mubr.bf16.gmra.mxu0 %v2651
      %v2770 = vpop.f32.mrf.mxu0
      %v2771 = vadd.f32 0.0, %v2770
      %v2772 = vpop.f32.mrf.mxu0
      %v2773 = vpop.f32.mrf.mxu0
      %v2774 = vadd.f32 0.0, %v2773
      %v2775 = vpop.f32.mrf.mxu0
      %2776 = vmatprep.mubr.bf16.mxu0 0
      %2777 = vmatmul.mubr.bf16.gmra.mxu0 %v2654
      %v2778 = vpop.f32.mrf.mxu0
      %v2779 = vadd.f32 0.0, %v2778
      %v2780 = vpop.f32.mrf.mxu0
      %v2781 = vpop.f32.mrf.mxu0
      %v2782 = vadd.f32 0.0, %v2781
      %v2783 = vpop.f32.mrf.mxu0
      %2784 = vmatprep.mubr.bf16.mxu0 0
      %2785 = vmatmul.mubr.bf16.gmra.mxu0 %v2657
      %v2786 = vpop.f32.mrf.mxu0
      %v2787 = vadd.f32 0.0, %v2786
      %v2788 = vpop.f32.mrf.mxu0
      %v2789 = vpop.f32.mrf.mxu0
      %v2790 = vadd.f32 0.0, %v2789
      %v2791 = vpop.f32.mrf.mxu0
      %2792 = vmatprep.mubr.bf16.mxu0 0
      %2793 = vmatmul.mubr.bf16.gmra.mxu0 %v2660
      %v2794 = vpop.f32.mrf.mxu0
      %v2795 = vadd.f32 0.0, %v2794
      %v2796 = vpop.f32.mrf.mxu0
      %v2797 = vpop.f32.mrf.mxu0
      %v2798 = vadd.f32 0.0, %v2797
      %v2799 = vpop.f32.mrf.mxu0
      %2800 = vmatprep.mubr.bf16.mxu0 0
      %2801 = vmatmul.mubr.bf16.gmra.mxu0 %v2663
      %v2802 = vpop.f32.mrf.mxu0
      %v2803 = vadd.f32 0.0, %v2802
      %v2804 = vpop.f32.mrf.mxu0
      %v2805 = vpop.f32.mrf.mxu0
      %v2806 = vadd.f32 0.0, %v2805
      %v2807 = vpop.f32.mrf.mxu0
      %2808 = vmatprep.mubr.bf16.mxu0 0
      %2809 = vmatmul.mubr.bf16.gmra.mxu0 %v2666
      %v2810 = vpop.f32.mrf.mxu0
      %v2811 = vadd.f32 0.0, %v2810
      %v2812 = vpop.f32.mrf.mxu0
      %v2813 = vpop.f32.mrf.mxu0
      %v2814 = vadd.f32 0.0, %v2813
      %v2815 = vpop.f32.mrf.mxu0
      %2816 = vmatprep.mubr.bf16.mxu0 0
      %2817 = vmatmul.mubr.bf16.gmra.mxu0 %v2669
      %v2818 = vpop.f32.mrf.mxu0
      %v2819 = vadd.f32 0.0, %v2818
      %v2820 = vpop.f32.mrf.mxu0
      %v2821 = vpop.f32.mrf.mxu0
      %v2822 = vadd.f32 0.0, %v2821
      %v2823 = vpop.f32.mrf.mxu0
      %2824 = vmatprep.mubr.bf16.mxu0 0
      %2825 = vmatmul.mubr.bf16.gmra.mxu0 %v2672
      %v2826 = vpop.f32.mrf.mxu0
      %v2827 = vadd.f32 0.0, %v2826
      %v2828 = vpop.f32.mrf.mxu0
      %v2829 = vpop.f32.mrf.mxu0
      %v2830 = vadd.f32 0.0, %v2829
      %v2831 = vpop.f32.mrf.mxu0
      %2832 = vmatprep.mubr.bf16.mxu0 0
      %2833 = vmatmul.mubr.bf16.gmra.mxu0 %v2675
      %v2834 = vpop.f32.mrf.mxu0
      %v2835 = vadd.f32 0.0, %v2834
      %v2836 = vpop.f32.mrf.mxu0
      %v2837 = vpop.f32.mrf.mxu0
      %v2838 = vadd.f32 0.0, %v2837
      %v2839 = vpop.f32.mrf.mxu0
      %2840 = vdwg.mxu0
      %v2841 = vadd.f32 %v2483, %v2715
      %v2842 = vadd.f32 %v2484, %v2718
      %v2843 = vadd.f32 %v2485, %v2723
      %v2844 = vadd.f32 %v2486, %v2726
      %v2845 = vadd.f32 %v2487, %v2731
      %v2846 = vadd.f32 %v2488, %v2734
      %v2847 = vadd.f32 %v2489, %v2739
      %v2848 = vadd.f32 %v2490, %v2742
      %v2849 = vadd.f32 %v2491, %v2747
      %v2850 = vadd.f32 %v2492, %v2750
      %v2851 = vadd.f32 %v2493, %v2755
      %v2852 = vadd.f32 %v2494, %v2758
      %v2853 = vadd.f32 %v2495, %v2763
      %v2854 = vadd.f32 %v2496, %v2766
      %v2855 = vadd.f32 %v2497, %v2771
      %v2856 = vadd.f32 %v2498, %v2774
      %v2857 = vadd.f32 %v2499, %v2779
      %v2858 = vadd.f32 %v2500, %v2782
      %v2859 = vadd.f32 %v2501, %v2787
      %v2860 = vadd.f32 %v2502, %v2790
      %v2861 = vadd.f32 %v2503, %v2795
      %v2862 = vadd.f32 %v2504, %v2798
      %v2863 = vadd.f32 %v2505, %v2803
      %v2864 = vadd.f32 %v2506, %v2806
      %v2865 = vadd.f32 %v2507, %v2811
      %v2866 = vadd.f32 %v2508, %v2814
      %v2867 = vadd.f32 %v2509, %v2819
      %v2868 = vadd.f32 %v2510, %v2822
      %v2869 = vadd.f32 %v2511, %v2827
      %v2870 = vadd.f32 %v2512, %v2830
      %v2871 = vadd.f32 %v2513, %v2835
      %v2872 = vadd.f32 %v2514, %v2838
      %v2873 = vld [vmem:[%s951] sm:$0xf]
      %v2874 = vld [vmem:[%s951 + $0x4] sm:$0xf]
      %v2875 = vld [vmem:[%s951 + $0x8] sm:$0x1]
      %v2876 = vld [vmem:[%s951 + $0xc] sm:$0xf]
      %v2877 = vld [vmem:[%s951 + $0x10] sm:$0xf]
      %v2878 = vld [vmem:[%s951 + $0x14] sm:$0x1]
      %v2879 = vld [vmem:[%s951 + $0x18] sm:$0xf]
      %v2880 = vld [vmem:[%s951 + $0x1c] sm:$0xf]
      %v2881 = vld [vmem:[%s951 + $0x20] sm:$0x1]
      %v2882 = vld [vmem:[%s951 + $0x24] sm:$0xf]
      %v2883 = vld [vmem:[%s951 + $0x28] sm:$0xf]
      %v2884 = vld [vmem:[%s951 + $0x2c] sm:$0x1]
      %v2885 = vld [vmem:[%s951 + $0x30] sm:$0xf]
      %v2886 = vld [vmem:[%s951 + $0x34] sm:$0xf]
      %v2887 = vld [vmem:[%s951 + $0x38] sm:$0x1]
      %v2888 = vld [vmem:[%s951 + $0x3c] sm:$0xf]
      %v2889 = vld [vmem:[%s951 + $0x40] sm:$0xf]
      %v2890 = vld [vmem:[%s951 + $0x44] sm:$0x1]
      %v2891 = vld [vmem:[%s951 + $0x48] sm:$0xf]
      %v2892 = vld [vmem:[%s951 + $0x4c] sm:$0xf]
      %v2893 = vld [vmem:[%s951 + $0x50] sm:$0x1]
      %v2894 = vld [vmem:[%s951 + $0x54] sm:$0xf]
      %v2895 = vld [vmem:[%s951 + $0x58] sm:$0xf]
      %v2896 = vld [vmem:[%s951 + $0x5c] sm:$0x1]
      %v2897 = vld [vmem:[%s951 + $0x60] sm:$0xf]
      %v2898 = vld [vmem:[%s951 + $0x64] sm:$0xf]
      %v2899 = vld [vmem:[%s951 + $0x68] sm:$0x1]
      %v2900 = vld [vmem:[%s951 + $0x6c] sm:$0xf]
      %v2901 = vld [vmem:[%s951 + $0x70] sm:$0xf]
      %v2902 = vld [vmem:[%s951 + $0x74] sm:$0x1]
      %v2903 = vld [vmem:[%s951 + $0x78] sm:$0xf]
      %v2904 = vld [vmem:[%s951 + $0x7c] sm:$0xf]
      %v2905 = vld [vmem:[%s951 + $0x80] sm:$0x1]
      %v2906 = vld [vmem:[%s951 + $0x84] sm:$0xf]
      %v2907 = vld [vmem:[%s951 + $0x88] sm:$0xf]
      %v2908 = vld [vmem:[%s951 + $0x8c] sm:$0x1]
      %v2909 = vld [vmem:[%s951 + $0x90] sm:$0xf]
      %v2910 = vld [vmem:[%s951 + $0x94] sm:$0xf]
      %v2911 = vld [vmem:[%s951 + $0x98] sm:$0x1]
      %v2912 = vld [vmem:[%s951 + $0x9c] sm:$0xf]
      %v2913 = vld [vmem:[%s951 + $0xa0] sm:$0xf]
      %v2914 = vld [vmem:[%s951 + $0xa4] sm:$0x1]
      %v2915 = vld [vmem:[%s951 + $0xa8] sm:$0xf]
      %v2916 = vld [vmem:[%s951 + $0xac] sm:$0xf]
      %v2917 = vld [vmem:[%s951 + $0xb0] sm:$0x1]
      %v2918 = vld [vmem:[%s951 + $0xb4] sm:$0xf]
      %v2919 = vld [vmem:[%s951 + $0xb8] sm:$0xf]
      %v2920 = vld [vmem:[%s951 + $0xbc] sm:$0x1]
      %v2922 = vshrl.u32 %v2873, 16
      %v2924 = vrot.slane %v2922, 4
      %v2925 = vshll.u32 %v2873, 16
      %v2927 = vrot.slane %v2925, 5
      %v2928 = vor.u32 %v2924, %v2927
      %v2929 = vrot.slane %v2928, 4
      %v2931 = vshll.u32 %v2874, 16
      %v2933 = vrot.slane %v2931, 5
      %v2934 = vsel %vm1117, %v2929, %v2933
      %v2935 = vshrl.u32 %v2874, 16
      %v2937 = vrot.slane %v2935, 4
      %v2938 = vor.u32 %v2937, %v2933
      %v2939 = vrot.slane %v2938, 4
      %v2941 = vshll.u32 %v2875, 16
      %v2943 = vrot.slane %v2941, 5
      %v2944 = vsel %vm1117, %v2939, %v2943
      %v2946 = vshrl.u32 %v2876, 16
      %v2948 = vrot.slane %v2946, 4
      %v2949 = vshll.u32 %v2876, 16
      %v2951 = vrot.slane %v2949, 5
      %v2952 = vor.u32 %v2948, %v2951
      %v2953 = vrot.slane %v2952, 4
      %v2955 = vshll.u32 %v2877, 16
      %v2957 = vrot.slane %v2955, 5
      %v2958 = vsel %vm1117, %v2953, %v2957
      %v2959 = vshrl.u32 %v2877, 16
      %v2961 = vrot.slane %v2959, 4
      %v2962 = vor.u32 %v2961, %v2957
      %v2963 = vrot.slane %v2962, 4
      %v2965 = vshll.u32 %v2878, 16
      %v2967 = vrot.slane %v2965, 5
      %v2968 = vsel %vm1117, %v2963, %v2967
      %v2970 = vshrl.u32 %v2879, 16
      %v2972 = vrot.slane %v2970, 4
      %v2973 = vshll.u32 %v2879, 16
      %v2975 = vrot.slane %v2973, 5
      %v2976 = vor.u32 %v2972, %v2975
      %v2977 = vrot.slane %v2976, 4
      %v2979 = vshll.u32 %v2880, 16
      %v2981 = vrot.slane %v2979, 5
      %v2982 = vsel %vm1117, %v2977, %v2981
      %v2983 = vshrl.u32 %v2880, 16
      %v2985 = vrot.slane %v2983, 4
      %v2986 = vor.u32 %v2985, %v2981
      %v2987 = vrot.slane %v2986, 4
      %v2989 = vshll.u32 %v2881, 16
      %v2991 = vrot.slane %v2989, 5
      %v2992 = vsel %vm1117, %v2987, %v2991
      %v2994 = vshrl.u32 %v2882, 16
      %v2996 = vrot.slane %v2994, 4
      %v2997 = vshll.u32 %v2882, 16
      %v2999 = vrot.slane %v2997, 5
      %v3000 = vor.u32 %v2996, %v2999
      %v3001 = vrot.slane %v3000, 4
      %v3003 = vshll.u32 %v2883, 16
      %v3005 = vrot.slane %v3003, 5
      %v3006 = vsel %vm1117, %v3001, %v3005
      %v3007 = vshrl.u32 %v2883, 16
      %v3009 = vrot.slane %v3007, 4
      %v3010 = vor.u32 %v3009, %v3005
      %v3011 = vrot.slane %v3010, 4
      %v3013 = vshll.u32 %v2884, 16
      %v3015 = vrot.slane %v3013, 5
      %v3016 = vsel %vm1117, %v3011, %v3015
      %v3018 = vshrl.u32 %v2885, 16
      %v3020 = vrot.slane %v3018, 4
      %v3021 = vshll.u32 %v2885, 16
      %v3023 = vrot.slane %v3021, 5
      %v3024 = vor.u32 %v3020, %v3023
      %v3025 = vrot.slane %v3024, 4
      %v3027 = vshll.u32 %v2886, 16
      %v3029 = vrot.slane %v3027, 5
      %v3030 = vsel %vm1117, %v3025, %v3029
      %v3031 = vshrl.u32 %v2886, 16
      %v3033 = vrot.slane %v3031, 4
      %v3034 = vor.u32 %v3033, %v3029
      %v3035 = vrot.slane %v3034, 4
      %v3037 = vshll.u32 %v2887, 16
      %v3039 = vrot.slane %v3037, 5
      %v3040 = vsel %vm1117, %v3035, %v3039
      %v3042 = vshrl.u32 %v2888, 16
      %v3044 = vrot.slane %v3042, 4
      %v3045 = vshll.u32 %v2888, 16
      %v3047 = vrot.slane %v3045, 5
      %v3048 = vor.u32 %v3044, %v3047
      %v3049 = vrot.slane %v3048, 4
      %v3051 = vshll.u32 %v2889, 16
      %v3053 = vrot.slane %v3051, 5
      %v3054 = vsel %vm1117, %v3049, %v3053
      %v3055 = vshrl.u32 %v2889, 16
      %v3057 = vrot.slane %v3055, 4
      %v3058 = vor.u32 %v3057, %v3053
      %v3059 = vrot.slane %v3058, 4
      %v3061 = vshll.u32 %v2890, 16
      %v3063 = vrot.slane %v3061, 5
      %v3064 = vsel %vm1117, %v3059, %v3063
      %v3066 = vshrl.u32 %v2891, 16
      %v3068 = vrot.slane %v3066, 4
      %v3069 = vshll.u32 %v2891, 16
      %v3071 = vrot.slane %v3069, 5
      %v3072 = vor.u32 %v3068, %v3071
      %v3073 = vrot.slane %v3072, 4
      %v3075 = vshll.u32 %v2892, 16
      %v3077 = vrot.slane %v3075, 5
      %v3078 = vsel %vm1117, %v3073, %v3077
      %v3079 = vshrl.u32 %v2892, 16
      %v3081 = vrot.slane %v3079, 4
      %v3082 = vor.u32 %v3081, %v3077
      %v3083 = vrot.slane %v3082, 4
      %v3085 = vshll.u32 %v2893, 16
      %v3087 = vrot.slane %v3085, 5
      %v3088 = vsel %vm1117, %v3083, %v3087
      %v3090 = vshrl.u32 %v2894, 16
      %v3092 = vrot.slane %v3090, 4
      %v3093 = vshll.u32 %v2894, 16
      %v3095 = vrot.slane %v3093, 5
      %v3096 = vor.u32 %v3092, %v3095
      %v3097 = vrot.slane %v3096, 4
      %v3099 = vshll.u32 %v2895, 16
      %v3101 = vrot.slane %v3099, 5
      %v3102 = vsel %vm1117, %v3097, %v3101
      %v3103 = vshrl.u32 %v2895, 16
      %v3105 = vrot.slane %v3103, 4
      %v3106 = vor.u32 %v3105, %v3101
      %v3107 = vrot.slane %v3106, 4
      %v3109 = vshll.u32 %v2896, 16
      %v3111 = vrot.slane %v3109, 5
      %v3112 = vsel %vm1117, %v3107, %v3111
      %v3114 = vshrl.u32 %v2897, 16
      %v3116 = vrot.slane %v3114, 4
      %v3117 = vshll.u32 %v2897, 16
      %v3119 = vrot.slane %v3117, 5
      %v3120 = vor.u32 %v3116, %v3119
      %v3121 = vrot.slane %v3120, 4
      %v3123 = vshll.u32 %v2898, 16
      %v3125 = vrot.slane %v3123, 5
      %v3126 = vsel %vm1117, %v3121, %v3125
      %v3127 = vshrl.u32 %v2898, 16
      %v3129 = vrot.slane %v3127, 4
      %v3130 = vor.u32 %v3129, %v3125
      %v3131 = vrot.slane %v3130, 4
      %v3133 = vshll.u32 %v2899, 16
      %v3135 = vrot.slane %v3133, 5
      %v3136 = vsel %vm1117, %v3131, %v3135
      %v3138 = vshrl.u32 %v2900, 16
      %v3140 = vrot.slane %v3138, 4
      %v3141 = vshll.u32 %v2900, 16
      %v3143 = vrot.slane %v3141, 5
      %v3144 = vor.u32 %v3140, %v3143
      %v3145 = vrot.slane %v3144, 4
      %v3147 = vshll.u32 %v2901, 16
      %v3149 = vrot.slane %v3147, 5
      %v3150 = vsel %vm1117, %v3145, %v3149
      %v3151 = vshrl.u32 %v2901, 16
      %v3153 = vrot.slane %v3151, 4
      %v3154 = vor.u32 %v3153, %v3149
      %v3155 = vrot.slane %v3154, 4
      %v3157 = vshll.u32 %v2902, 16
      %v3159 = vrot.slane %v3157, 5
      %v3160 = vsel %vm1117, %v3155, %v3159
      %v3162 = vshrl.u32 %v2903, 16
      %v3164 = vrot.slane %v3162, 4
      %v3165 = vshll.u32 %v2903, 16
      %v3167 = vrot.slane %v3165, 5
      %v3168 = vor.u32 %v3164, %v3167
      %v3169 = vrot.slane %v3168, 4
      %v3171 = vshll.u32 %v2904, 16
      %v3173 = vrot.slane %v3171, 5
      %v3174 = vsel %vm1117, %v3169, %v3173
      %v3175 = vshrl.u32 %v2904, 16
      %v3177 = vrot.slane %v3175, 4
      %v3178 = vor.u32 %v3177, %v3173
      %v3179 = vrot.slane %v3178, 4
      %v3181 = vshll.u32 %v2905, 16
      %v3183 = vrot.slane %v3181, 5
      %v3184 = vsel %vm1117, %v3179, %v3183
      %v3186 = vshrl.u32 %v2906, 16
      %v3188 = vrot.slane %v3186, 4
      %v3189 = vshll.u32 %v2906, 16
      %v3191 = vrot.slane %v3189, 5
      %v3192 = vor.u32 %v3188, %v3191
      %v3193 = vrot.slane %v3192, 4
      %v3195 = vshll.u32 %v2907, 16
      %v3197 = vrot.slane %v3195, 5
      %v3198 = vsel %vm1117, %v3193, %v3197
      %v3199 = vshrl.u32 %v2907, 16
      %v3201 = vrot.slane %v3199, 4
      %v3202 = vor.u32 %v3201, %v3197
      %v3203 = vrot.slane %v3202, 4
      %v3205 = vshll.u32 %v2908, 16
      %v3207 = vrot.slane %v3205, 5
      %v3208 = vsel %vm1117, %v3203, %v3207
      %v3210 = vshrl.u32 %v2909, 16
      %v3212 = vrot.slane %v3210, 4
      %v3213 = vshll.u32 %v2909, 16
      %v3215 = vrot.slane %v3213, 5
      %v3216 = vor.u32 %v3212, %v3215
      %v3217 = vrot.slane %v3216, 4
      %v3219 = vshll.u32 %v2910, 16
      %v3221 = vrot.slane %v3219, 5
      %v3222 = vsel %vm1117, %v3217, %v3221
      %v3223 = vshrl.u32 %v2910, 16
      %v3225 = vrot.slane %v3223, 4
      %v3226 = vor.u32 %v3225, %v3221
      %v3227 = vrot.slane %v3226, 4
      %v3229 = vshll.u32 %v2911, 16
      %v3231 = vrot.slane %v3229, 5
      %v3232 = vsel %vm1117, %v3227, %v3231
      %v3234 = vshrl.u32 %v2912, 16
      %v3236 = vrot.slane %v3234, 4
      %v3237 = vshll.u32 %v2912, 16
      %v3239 = vrot.slane %v3237, 5
      %v3240 = vor.u32 %v3236, %v3239
      %v3241 = vrot.slane %v3240, 4
      %v3243 = vshll.u32 %v2913, 16
      %v3245 = vrot.slane %v3243, 5
      %v3246 = vsel %vm1117, %v3241, %v3245
      %v3247 = vshrl.u32 %v2913, 16
      %v3249 = vrot.slane %v3247, 4
      %v3250 = vor.u32 %v3249, %v3245
      %v3251 = vrot.slane %v3250, 4
      %v3253 = vshll.u32 %v2914, 16
      %v3255 = vrot.slane %v3253, 5
      %v3256 = vsel %vm1117, %v3251, %v3255
      %v3258 = vshrl.u32 %v2915, 16
      %v3260 = vrot.slane %v3258, 4
      %v3261 = vshll.u32 %v2915, 16
      %v3263 = vrot.slane %v3261, 5
      %v3264 = vor.u32 %v3260, %v3263
      %v3265 = vrot.slane %v3264, 4
      %v3267 = vshll.u32 %v2916, 16
      %v3269 = vrot.slane %v3267, 5
      %v3270 = vsel %vm1117, %v3265, %v3269
      %v3271 = vshrl.u32 %v2916, 16
      %v3273 = vrot.slane %v3271, 4
      %v3274 = vor.u32 %v3273, %v3269
      %v3275 = vrot.slane %v3274, 4
      %v3277 = vshll.u32 %v2917, 16
      %v3279 = vrot.slane %v3277, 5
      %v3280 = vsel %vm1117, %v3275, %v3279
      %v3282 = vshrl.u32 %v2918, 16
      %v3284 = vrot.slane %v3282, 4
      %v3285 = vshll.u32 %v2918, 16
      %v3287 = vrot.slane %v3285, 5
      %v3288 = vor.u32 %v3284, %v3287
      %v3289 = vrot.slane %v3288, 4
      %v3291 = vshll.u32 %v2919, 16
      %v3293 = vrot.slane %v3291, 5
      %v3294 = vsel %vm1117, %v3289, %v3293
      %v3295 = vshrl.u32 %v2919, 16
      %v3297 = vrot.slane %v3295, 4
      %v3298 = vor.u32 %v3297, %v3293
      %v3299 = vrot.slane %v3298, 4
      %v3301 = vshll.u32 %v2920, 16
      %v3303 = vrot.slane %v3301, 5
      %v3304 = vsel %vm1117, %v3299, %v3303
      %s3305 = scalar_lea.vmem %s3, 16
      %v3306 = vld [vmem:[%s3305] sm:$0xf]
      %v3307 = vunpack.c.l.b16 %v2934
      %v3308 = vunpack.c.l.b16 %v2944
      %v3309 = vunpack.c.l.b16 %v2958
      %v3310 = vunpack.c.l.b16 %v2968
      %v3311 = vunpack.c.l.b16 %v2982
      %v3312 = vunpack.c.l.b16 %v2992
      %v3313 = vunpack.c.l.b16 %v3006
      %v3314 = vunpack.c.l.b16 %v3016
      %v3315 = vunpack.c.l.b16 %v3030
      %v3316 = vunpack.c.l.b16 %v3040
      %v3317 = vunpack.c.l.b16 %v3054
      %v3318 = vunpack.c.l.b16 %v3064
      %v3319 = vunpack.c.l.b16 %v3078
      %v3320 = vunpack.c.l.b16 %v3088
      %v3321 = vunpack.c.l.b16 %v3102
      %v3322 = vunpack.c.l.b16 %v3112
      %v3323 = vunpack.c.l.b16 %v3126
      %v3324 = vunpack.c.l.b16 %v3136
      %v3325 = vunpack.c.l.b16 %v3150
      %v3326 = vunpack.c.l.b16 %v3160
      %v3327 = vunpack.c.l.b16 %v3174
      %v3328 = vunpack.c.l.b16 %v3184
      %v3329 = vunpack.c.l.b16 %v3198
      %v3330 = vunpack.c.l.b16 %v3208
      %v3331 = vunpack.c.l.b16 %v3222
      %v3332 = vunpack.c.l.b16 %v3232
      %v3333 = vunpack.c.l.b16 %v3246
      %v3334 = vunpack.c.l.b16 %v3256
      %v3335 = vunpack.c.l.b16 %v3270
      %v3336 = vunpack.c.l.b16 %v3280
      %v3337 = vunpack.c.l.b16 %v3294
      %v3338 = vunpack.c.l.b16 %v3304
      %v3339 = vpack.c.b16 %v3308, %v3307
      %v3340 = vpack.c.b16 %v3310, %v3309
      %v3341 = vpack.c.b16 %v3312, %v3311
      %v3342 = vpack.c.b16 %v3314, %v3313
      %v3343 = vpack.c.b16 %v3316, %v3315
      %v3344 = vpack.c.b16 %v3318, %v3317
      %v3345 = vpack.c.b16 %v3320, %v3319
      %v3346 = vpack.c.b16 %v3322, %v3321
      %v3347 = vpack.c.b16 %v3324, %v3323
      %v3348 = vpack.c.b16 %v3326, %v3325
      %v3349 = vpack.c.b16 %v3328, %v3327
      %v3350 = vpack.c.b16 %v3330, %v3329
      %v3351 = vpack.c.b16 %v3332, %v3331
      %v3352 = vpack.c.b16 %v3334, %v3333
      %v3353 = vpack.c.b16 %v3336, %v3335
      %v3354 = vpack.c.b16 %v3338, %v3337
      %v3356 = vsel %vm1552, %v3339, 0
      %v3359 = vsel %vm1552, %v3340, 0
      %v3362 = vsel %vm1552, %v3341, 0
      %v3365 = vsel %vm1552, %v3342, 0
      %v3368 = vsel %vm1552, %v3343, 0
      %v3371 = vsel %vm1552, %v3344, 0
      %v3374 = vsel %vm1552, %v3345, 0
      %v3377 = vsel %vm1552, %v3346, 0
      %v3380 = vsel %vm1552, %v3347, 0
      %v3383 = vsel %vm1552, %v3348, 0
      %v3386 = vsel %vm1552, %v3349, 0
      %v3389 = vsel %vm1552, %v3350, 0
      %v3392 = vsel %vm1552, %v3351, 0
      %v3395 = vsel %vm1552, %v3352, 0
      %v3398 = vsel %vm1552, %v3353, 0
      %v3401 = vsel %vm1552, %v3354, 0
      %v3404 = vsel %vm1601, %v3306, 0
      %3406 = vmatprep.subr.bf16.mxu0 0
      %3407 = vmatpush1.bf16.msra.mxu0 0
      %3408 = vmatprep.subr.bf16.mxu0 0
      %3409 = vmatpush1.bf16.msra.mxu0 0
      %3410 = vmatprep.subr.bf16.mxu0 0
      %3411 = vmatpush1.bf16.msra.mxu0 0
      %3412 = vmatprep.subr.bf16.mxu0 0
      %3413 = vmatpush1.bf16.msra.mxu0 0
      %3414 = vmatprep.subr.bf16.mxu0 0
      %3415 = vmatpush1.bf16.msra.mxu0 0
      %3416 = vmatprep.subr.bf16.mxu0 0
      %3417 = vmatpush1.bf16.msra.mxu0 0
      %3418 = vmatprep.subr.bf16.mxu0 0
      %3419 = vmatpush1.bf16.msra.mxu0 0
      %3420 = vmatprep.subr.bf16.mxu0 0
      %3421 = vmatpush1.bf16.msra.mxu0 %v3404
      %3422 = vmatprep.subr.bf16.mxu0 0
      %3423 = vmatpush2.bf16.msra.mxu0 0
      %3424 = vmatprep.subr.bf16.mxu0 0
      %3425 = vmatpush2.bf16.msra.mxu0 0
      %3426 = vmatprep.subr.bf16.mxu0 0
      %3427 = vmatpush2.bf16.msra.mxu0 0
      %3428 = vmatprep.subr.bf16.mxu0 0
      %3429 = vmatpush2.bf16.msra.mxu0 0
      %3430 = vmatprep.subr.bf16.mxu0 0
      %3431 = vmatpush2.bf16.msra.mxu0 0
      %3432 = vmatprep.subr.bf16.mxu0 0
      %3433 = vmatpush2.bf16.msra.mxu0 0
      %3434 = vmatprep.subr.bf16.mxu0 0
      %3435 = vmatpush2.bf16.msra.mxu0 0
      %3436 = vmatprep.subr.bf16.mxu0 0
      %3437 = vmatpush2.bf16.msra.mxu0 0
      %3438 = vmatprep.mubr.bf16.mxu0 0
      %3439 = vmatmul.mubr.bf16.gmra.mxu0 %v3356
      %v3440 = vpop.f32.mrf.mxu0
      %v3441 = vadd.f32 0.0, %v3440
      %v3442 = vpop.f32.mrf.mxu0
      %v3443 = vpop.f32.mrf.mxu0
      %v3444 = vadd.f32 0.0, %v3443
      %v3445 = vpop.f32.mrf.mxu0
      %3446 = vmatprep.mubr.bf16.mxu0 0
      %3447 = vmatmul.mubr.bf16.gmra.mxu0 %v3359
      %v3448 = vpop.f32.mrf.mxu0
      %v3449 = vadd.f32 0.0, %v3448
      %v3450 = vpop.f32.mrf.mxu0
      %v3451 = vpop.f32.mrf.mxu0
      %v3452 = vadd.f32 0.0, %v3451
      %v3453 = vpop.f32.mrf.mxu0
      %3454 = vmatprep.mubr.bf16.mxu0 0
      %3455 = vmatmul.mubr.bf16.gmra.mxu0 %v3362
      %v3456 = vpop.f32.mrf.mxu0
      %v3457 = vadd.f32 0.0, %v3456
      %v3458 = vpop.f32.mrf.mxu0
      %v3459 = vpop.f32.mrf.mxu0
      %v3460 = vadd.f32 0.0, %v3459
      %v3461 = vpop.f32.mrf.mxu0
      %3462 = vmatprep.mubr.bf16.mxu0 0
      %3463 = vmatmul.mubr.bf16.gmra.mxu0 %v3365
      %v3464 = vpop.f32.mrf.mxu0
      %v3465 = vadd.f32 0.0, %v3464
      %v3466 = vpop.f32.mrf.mxu0
      %v3467 = vpop.f32.mrf.mxu0
      %v3468 = vadd.f32 0.0, %v3467
      %v3469 = vpop.f32.mrf.mxu0
      %3470 = vmatprep.mubr.bf16.mxu0 0
      %3471 = vmatmul.mubr.bf16.gmra.mxu0 %v3368
      %v3472 = vpop.f32.mrf.mxu0
      %v3473 = vadd.f32 0.0, %v3472
      %v3474 = vpop.f32.mrf.mxu0
      %v3475 = vpop.f32.mrf.mxu0
      %v3476 = vadd.f32 0.0, %v3475
      %v3477 = vpop.f32.mrf.mxu0
      %3478 = vmatprep.mubr.bf16.mxu0 0
      %3479 = vmatmul.mubr.bf16.gmra.mxu0 %v3371
      %v3480 = vpop.f32.mrf.mxu0
      %v3481 = vadd.f32 0.0, %v3480
      %v3482 = vpop.f32.mrf.mxu0
      %v3483 = vpop.f32.mrf.mxu0
      %v3484 = vadd.f32 0.0, %v3483
      %v3485 = vpop.f32.mrf.mxu0
      %3486 = vmatprep.mubr.bf16.mxu0 0
      %3487 = vmatmul.mubr.bf16.gmra.mxu0 %v3374
      %v3488 = vpop.f32.mrf.mxu0
      %v3489 = vadd.f32 0.0, %v3488
      %v3490 = vpop.f32.mrf.mxu0
      %v3491 = vpop.f32.mrf.mxu0
      %v3492 = vadd.f32 0.0, %v3491
      %v3493 = vpop.f32.mrf.mxu0
      %3494 = vmatprep.mubr.bf16.mxu0 0
      %3495 = vmatmul.mubr.bf16.gmra.mxu0 %v3377
      %v3496 = vpop.f32.mrf.mxu0
      %v3497 = vadd.f32 0.0, %v3496
      %v3498 = vpop.f32.mrf.mxu0
      %v3499 = vpop.f32.mrf.mxu0
      %v3500 = vadd.f32 0.0, %v3499
      %v3501 = vpop.f32.mrf.mxu0
      %3502 = vmatprep.mubr.bf16.mxu0 0
      %3503 = vmatmul.mubr.bf16.gmra.mxu0 %v3380
      %v3504 = vpop.f32.mrf.mxu0
      %v3505 = vadd.f32 0.0, %v3504
      %v3506 = vpop.f32.mrf.mxu0
      %v3507 = vpop.f32.mrf.mxu0
      %v3508 = vadd.f32 0.0, %v3507
      %v3509 = vpop.f32.mrf.mxu0
      %3510 = vmatprep.mubr.bf16.mxu0 0
      %3511 = vmatmul.mubr.bf16.gmra.mxu0 %v3383
      %v3512 = vpop.f32.mrf.mxu0
      %v3513 = vadd.f32 0.0, %v3512
      %v3514 = vpop.f32.mrf.mxu0
      %v3515 = vpop.f32.mrf.mxu0
      %v3516 = vadd.f32 0.0, %v3515
      %v3517 = vpop.f32.mrf.mxu0
      %3518 = vmatprep.mubr.bf16.mxu0 0
      %3519 = vmatmul.mubr.bf16.gmra.mxu0 %v3386
      %v3520 = vpop.f32.mrf.mxu0
      %v3521 = vadd.f32 0.0, %v3520
      %v3522 = vpop.f32.mrf.mxu0
      %v3523 = vpop.f32.mrf.mxu0
      %v3524 = vadd.f32 0.0, %v3523
      %v3525 = vpop.f32.mrf.mxu0
      %3526 = vmatprep.mubr.bf16.mxu0 0
      %3527 = vmatmul.mubr.bf16.gmra.mxu0 %v3389
      %v3528 = vpop.f32.mrf.mxu0
      %v3529 = vadd.f32 0.0, %v3528
      %v3530 = vpop.f32.mrf.mxu0
      %v3531 = vpop.f32.mrf.mxu0
      %v3532 = vadd.f32 0.0, %v3531
      %v3533 = vpop.f32.mrf.mxu0
      %3534 = vmatprep.mubr.bf16.mxu0 0
      %3535 = vmatmul.mubr.bf16.gmra.mxu0 %v3392
      %v3536 = vpop.f32.mrf.mxu0
      %v3537 = vadd.f32 0.0, %v3536
      %v3538 = vpop.f32.mrf.mxu0
      %v3539 = vpop.f32.mrf.mxu0
      %v3540 = vadd.f32 0.0, %v3539
      %v3541 = vpop.f32.mrf.mxu0
      %3542 = vmatprep.mubr.bf16.mxu0 0
      %3543 = vmatmul.mubr.bf16.gmra.mxu0 %v3395
      %v3544 = vpop.f32.mrf.mxu0
      %v3545 = vadd.f32 0.0, %v3544
      %v3546 = vpop.f32.mrf.mxu0
      %v3547 = vpop.f32.mrf.mxu0
      %v3548 = vadd.f32 0.0, %v3547
      %v3549 = vpop.f32.mrf.mxu0
      %3550 = vmatprep.mubr.bf16.mxu0 0
      %3551 = vmatmul.mubr.bf16.gmra.mxu0 %v3398
      %v3552 = vpop.f32.mrf.mxu0
      %v3553 = vadd.f32 0.0, %v3552
      %v3554 = vpop.f32.mrf.mxu0
      %v3555 = vpop.f32.mrf.mxu0
      %v3556 = vadd.f32 0.0, %v3555
      %v3557 = vpop.f32.mrf.mxu0
      %3558 = vmatprep.mubr.bf16.mxu0 0
      %3559 = vmatmul.mubr.bf16.gmra.mxu0 %v3401
      %v3560 = vpop.f32.mrf.mxu0
      %v3561 = vadd.f32 0.0, %v3560
      %v3562 = vpop.f32.mrf.mxu0
      %v3563 = vpop.f32.mrf.mxu0
      %v3564 = vadd.f32 0.0, %v3563
      %v3565 = vpop.f32.mrf.mxu0
      %3566 = vdwg.mxu0
      %v3567 = vadd.f32 %v2841, %v3441
      %v3568 = vadd.f32 %v2842, %v3444
      %v3569 = vadd.f32 %v2843, %v3449
      %v3570 = vadd.f32 %v2844, %v3452
      %v3571 = vadd.f32 %v2845, %v3457
      %v3572 = vadd.f32 %v2846, %v3460
      %v3573 = vadd.f32 %v2847, %v3465
      %v3574 = vadd.f32 %v2848, %v3468
      %v3575 = vadd.f32 %v2849, %v3473
      %v3576 = vadd.f32 %v2850, %v3476
      %v3577 = vadd.f32 %v2851, %v3481
      %v3578 = vadd.f32 %v2852, %v3484
      %v3579 = vadd.f32 %v2853, %v3489
      %v3580 = vadd.f32 %v2854, %v3492
      %v3581 = vadd.f32 %v2855, %v3497
      %v3582 = vadd.f32 %v2856, %v3500
      %v3583 = vadd.f32 %v2857, %v3505
      %v3584 = vadd.f32 %v2858, %v3508
      %v3585 = vadd.f32 %v2859, %v3513
      %v3586 = vadd.f32 %v2860, %v3516
      %v3587 = vadd.f32 %v2861, %v3521
      %v3588 = vadd.f32 %v2862, %v3524
      %v3589 = vadd.f32 %v2863, %v3529
      %v3590 = vadd.f32 %v2864, %v3532
      %v3591 = vadd.f32 %v2865, %v3537
      %v3592 = vadd.f32 %v2866, %v3540
      %v3593 = vadd.f32 %v2867, %v3545
      %v3594 = vadd.f32 %v2868, %v3548
      %v3595 = vadd.f32 %v2869, %v3553
      %v3596 = vadd.f32 %v2870, %v3556
      %v3597 = vadd.f32 %v2871, %v3561
      %v3598 = vadd.f32 %v2872, %v3564
      %v3599 = vld [vmem:[%s951] sm:$0xe]
      %v3600 = vld [vmem:[%s951 + $0xc] sm:$0xe]
      %v3601 = vld [vmem:[%s951 + $0x18] sm:$0xe]
      %v3602 = vld [vmem:[%s951 + $0x24] sm:$0xe]
      %v3603 = vld [vmem:[%s951 + $0x30] sm:$0xe]
      %v3604 = vld [vmem:[%s951 + $0x3c] sm:$0xe]
      %v3605 = vld [vmem:[%s951 + $0x48] sm:$0xe]
      %v3606 = vld [vmem:[%s951 + $0x54] sm:$0xe]
      %v3607 = vld [vmem:[%s951 + $0x60] sm:$0xe]
      %v3608 = vld [vmem:[%s951 + $0x6c] sm:$0xe]
      %v3609 = vld [vmem:[%s951 + $0x78] sm:$0xe]
      %v3610 = vld [vmem:[%s951 + $0x84] sm:$0xe]
      %v3611 = vld [vmem:[%s951 + $0x90] sm:$0xe]
      %v3612 = vld [vmem:[%s951 + $0x9c] sm:$0xe]
      %v3613 = vld [vmem:[%s951 + $0xa8] sm:$0xe]
      %v3614 = vld [vmem:[%s951 + $0xb4] sm:$0xe]
      %v3663 = vrot.slane %v3599, 5
      %v3664 = vrot.slane %v3663, 4
      %v3665 = vrot.slane %v2874, 5
      %v3666 = vsel %vm2108, %v3664, %v3665
      %v3667 = vrot.slane %v3665, 4
      %v3668 = vrot.slane %v2875, 5
      %v3669 = vsel %vm2108, %v3667, %v3668
      %v3670 = vrot.slane %v3600, 5
      %v3671 = vrot.slane %v3670, 4
      %v3672 = vrot.slane %v2877, 5
      %v3673 = vsel %vm2108, %v3671, %v3672
      %v3674 = vrot.slane %v3672, 4
      %v3675 = vrot.slane %v2878, 5
      %v3676 = vsel %vm2108, %v3674, %v3675
      %v3677 = vrot.slane %v3601, 5
      %v3678 = vrot.slane %v3677, 4
      %v3679 = vrot.slane %v2880, 5
      %v3680 = vsel %vm2108, %v3678, %v3679
      %v3681 = vrot.slane %v3679, 4
      %v3682 = vrot.slane %v2881, 5
      %v3683 = vsel %vm2108, %v3681, %v3682
      %v3684 = vrot.slane %v3602, 5
      %v3685 = vrot.slane %v3684, 4
      %v3686 = vrot.slane %v2883, 5
      %v3687 = vsel %vm2108, %v3685, %v3686
      %v3688 = vrot.slane %v3686, 4
      %v3689 = vrot.slane %v2884, 5
      %v3690 = vsel %vm2108, %v3688, %v3689
      %v3691 = vrot.slane %v3603, 5
      %v3692 = vrot.slane %v3691, 4
      %v3693 = vrot.slane %v2886, 5
      %v3694 = vsel %vm2108, %v3692, %v3693
      %v3695 = vrot.slane %v3693, 4
      %v3696 = vrot.slane %v2887, 5
      %v3697 = vsel %vm2108, %v3695, %v3696
      %v3698 = vrot.slane %v3604, 5
      %v3699 = vrot.slane %v3698, 4
      %v3700 = vrot.slane %v2889, 5
      %v3701 = vsel %vm2108, %v3699, %v3700
      %v3702 = vrot.slane %v3700, 4
      %v3703 = vrot.slane %v2890, 5
      %v3704 = vsel %vm2108, %v3702, %v3703
      %v3705 = vrot.slane %v3605, 5
      %v3706 = vrot.slane %v3705, 4
      %v3707 = vrot.slane %v2892, 5
      %v3708 = vsel %vm2108, %v3706, %v3707
      %v3709 = vrot.slane %v3707, 4
      %v3710 = vrot.slane %v2893, 5
      %v3711 = vsel %vm2108, %v3709, %v3710
      %v3712 = vrot.slane %v3606, 5
      %v3713 = vrot.slane %v3712, 4
      %v3714 = vrot.slane %v2895, 5
      %v3715 = vsel %vm2108, %v3713, %v3714
      %v3716 = vrot.slane %v3714, 4
      %v3717 = vrot.slane %v2896, 5
      %v3718 = vsel %vm2108, %v3716, %v3717
      %v3719 = vrot.slane %v3607, 5
      %v3720 = vrot.slane %v3719, 4
      %v3721 = vrot.slane %v2898, 5
      %v3722 = vsel %vm2108, %v3720, %v3721
      %v3723 = vrot.slane %v3721, 4
      %v3724 = vrot.slane %v2899, 5
      %v3725 = vsel %vm2108, %v3723, %v3724
      %v3726 = vrot.slane %v3608, 5
      %v3727 = vrot.slane %v3726, 4
      %v3728 = vrot.slane %v2901, 5
      %v3729 = vsel %vm2108, %v3727, %v3728
      %v3730 = vrot.slane %v3728, 4
      %v3731 = vrot.slane %v2902, 5
      %v3732 = vsel %vm2108, %v3730, %v3731
      %v3733 = vrot.slane %v3609, 5
      %v3734 = vrot.slane %v3733, 4
      %v3735 = vrot.slane %v2904, 5
      %v3736 = vsel %vm2108, %v3734, %v3735
      %v3737 = vrot.slane %v3735, 4
      %v3738 = vrot.slane %v2905, 5
      %v3739 = vsel %vm2108, %v3737, %v3738
      %v3740 = vrot.slane %v3610, 5
      %v3741 = vrot.slane %v3740, 4
      %v3742 = vrot.slane %v2907, 5
      %v3743 = vsel %vm2108, %v3741, %v3742
      %v3744 = vrot.slane %v3742, 4
      %v3745 = vrot.slane %v2908, 5
      %v3746 = vsel %vm2108, %v3744, %v3745
      %v3747 = vrot.slane %v3611, 5
      %v3748 = vrot.slane %v3747, 4
      %v3749 = vrot.slane %v2910, 5
      %v3750 = vsel %vm2108, %v3748, %v3749
      %v3751 = vrot.slane %v3749, 4
      %v3752 = vrot.slane %v2911, 5
      %v3753 = vsel %vm2108, %v3751, %v3752
      %v3754 = vrot.slane %v3612, 5
      %v3755 = vrot.slane %v3754, 4
      %v3756 = vrot.slane %v2913, 5
      %v3757 = vsel %vm2108, %v3755, %v3756
      %v3758 = vrot.slane %v3756, 4
      %v3759 = vrot.slane %v2914, 5
      %v3760 = vsel %vm2108, %v3758, %v3759
      %v3761 = vrot.slane %v3613, 5
      %v3762 = vrot.slane %v3761, 4
      %v3763 = vrot.slane %v2916, 5
      %v3764 = vsel %vm2108, %v3762, %v3763
      %v3765 = vrot.slane %v3763, 4
      %v3766 = vrot.slane %v2917, 5
      %v3767 = vsel %vm2108, %v3765, %v3766
      %v3768 = vrot.slane %v3614, 5
      %v3769 = vrot.slane %v3768, 4
      %v3770 = vrot.slane %v2919, 5
      %v3771 = vsel %vm2108, %v3769, %v3770
      %v3772 = vrot.slane %v3770, 4
      %v3773 = vrot.slane %v2920, 5
      %v3774 = vsel %vm2108, %v3772, %v3773
      %s3775 = scalar_lea.vmem %s3, 20
      %v3776 = vld [vmem:[%s3775] sm:$0xf]
      %v3777 = vunpack.c.l.b16 %v3666
      %v3778 = vunpack.c.l.b16 %v3669
      %v3779 = vunpack.c.l.b16 %v3673
      %v3780 = vunpack.c.l.b16 %v3676
      %v3781 = vunpack.c.l.b16 %v3680
      %v3782 = vunpack.c.l.b16 %v3683
      %v3783 = vunpack.c.l.b16 %v3687
      %v3784 = vunpack.c.l.b16 %v3690
      %v3785 = vunpack.c.l.b16 %v3694
      %v3786 = vunpack.c.l.b16 %v3697
      %v3787 = vunpack.c.l.b16 %v3701
      %v3788 = vunpack.c.l.b16 %v3704
      %v3789 = vunpack.c.l.b16 %v3708
      %v3790 = vunpack.c.l.b16 %v3711
      %v3791 = vunpack.c.l.b16 %v3715
      %v3792 = vunpack.c.l.b16 %v3718
      %v3793 = vunpack.c.l.b16 %v3722
      %v3794 = vunpack.c.l.b16 %v3725
      %v3795 = vunpack.c.l.b16 %v3729
      %v3796 = vunpack.c.l.b16 %v3732
      %v3797 = vunpack.c.l.b16 %v3736
      %v3798 = vunpack.c.l.b16 %v3739
      %v3799 = vunpack.c.l.b16 %v3743
      %v3800 = vunpack.c.l.b16 %v3746
      %v3801 = vunpack.c.l.b16 %v3750
      %v3802 = vunpack.c.l.b16 %v3753
      %v3803 = vunpack.c.l.b16 %v3757
      %v3804 = vunpack.c.l.b16 %v3760
      %v3805 = vunpack.c.l.b16 %v3764
      %v3806 = vunpack.c.l.b16 %v3767
      %v3807 = vunpack.c.l.b16 %v3771
      %v3808 = vunpack.c.l.b16 %v3774
      %v3809 = vpack.c.b16 %v3778, %v3777
      %v3810 = vpack.c.b16 %v3780, %v3779
      %v3811 = vpack.c.b16 %v3782, %v3781
      %v3812 = vpack.c.b16 %v3784, %v3783
      %v3813 = vpack.c.b16 %v3786, %v3785
      %v3814 = vpack.c.b16 %v3788, %v3787
      %v3815 = vpack.c.b16 %v3790, %v3789
      %v3816 = vpack.c.b16 %v3792, %v3791
      %v3817 = vpack.c.b16 %v3794, %v3793
      %v3818 = vpack.c.b16 %v3796, %v3795
      %v3819 = vpack.c.b16 %v3798, %v3797
      %v3820 = vpack.c.b16 %v3800, %v3799
      %v3821 = vpack.c.b16 %v3802, %v3801
      %v3822 = vpack.c.b16 %v3804, %v3803
      %v3823 = vpack.c.b16 %v3806, %v3805
      %v3824 = vpack.c.b16 %v3808, %v3807
      %v3826 = vsel %vm1552, %v3809, 0
      %v3829 = vsel %vm1552, %v3810, 0
      %v3832 = vsel %vm1552, %v3811, 0
      %v3835 = vsel %vm1552, %v3812, 0
      %v3838 = vsel %vm1552, %v3813, 0
      %v3841 = vsel %vm1552, %v3814, 0
      %v3844 = vsel %vm1552, %v3815, 0
      %v3847 = vsel %vm1552, %v3816, 0
      %v3850 = vsel %vm1552, %v3817, 0
      %v3853 = vsel %vm1552, %v3818, 0
      %v3856 = vsel %vm1552, %v3819, 0
      %v3859 = vsel %vm1552, %v3820, 0
      %v3862 = vsel %vm1552, %v3821, 0
      %v3865 = vsel %vm1552, %v3822, 0
      %v3868 = vsel %vm1552, %v3823, 0
      %v3871 = vsel %vm1552, %v3824, 0
      %v3874 = vsel %vm1601, %v3776, 0
      %3876 = vmatprep.subr.bf16.mxu0 0
      %3877 = vmatpush1.bf16.msra.mxu0 0
      %3878 = vmatprep.subr.bf16.mxu0 0
      %3879 = vmatpush1.bf16.msra.mxu0 0
      %3880 = vmatprep.subr.bf16.mxu0 0
      %3881 = vmatpush1.bf16.msra.mxu0 0
      %3882 = vmatprep.subr.bf16.mxu0 0
      %3883 = vmatpush1.bf16.msra.mxu0 0
      %3884 = vmatprep.subr.bf16.mxu0 0
      %3885 = vmatpush1.bf16.msra.mxu0 0
      %3886 = vmatprep.subr.bf16.mxu0 0
      %3887 = vmatpush1.bf16.msra.mxu0 0
      %3888 = vmatprep.subr.bf16.mxu0 0
      %3889 = vmatpush1.bf16.msra.mxu0 0
      %3890 = vmatprep.subr.bf16.mxu0 0
      %3891 = vmatpush1.bf16.msra.mxu0 %v3874
      %3892 = vmatprep.subr.bf16.mxu0 0
      %3893 = vmatpush2.bf16.msra.mxu0 0
      %3894 = vmatprep.subr.bf16.mxu0 0
      %3895 = vmatpush2.bf16.msra.mxu0 0
      %3896 = vmatprep.subr.bf16.mxu0 0
      %3897 = vmatpush2.bf16.msra.mxu0 0
      %3898 = vmatprep.subr.bf16.mxu0 0
      %3899 = vmatpush2.bf16.msra.mxu0 0
      %3900 = vmatprep.subr.bf16.mxu0 0
      %3901 = vmatpush2.bf16.msra.mxu0 0
      %3902 = vmatprep.subr.bf16.mxu0 0
      %3903 = vmatpush2.bf16.msra.mxu0 0
      %3904 = vmatprep.subr.bf16.mxu0 0
      %3905 = vmatpush2.bf16.msra.mxu0 0
      %3906 = vmatprep.subr.bf16.mxu0 0
      %3907 = vmatpush2.bf16.msra.mxu0 0
      %3908 = vmatprep.mubr.bf16.mxu0 0
      %3909 = vmatmul.mubr.bf16.gmra.mxu0 %v3826
      %v3910 = vpop.f32.mrf.mxu0
      %v3911 = vadd.f32 0.0, %v3910
      %v3912 = vpop.f32.mrf.mxu0
      %v3913 = vpop.f32.mrf.mxu0
      %v3914 = vadd.f32 0.0, %v3913
      %v3915 = vpop.f32.mrf.mxu0
      %3916 = vmatprep.mubr.bf16.mxu0 0
      %3917 = vmatmul.mubr.bf16.gmra.mxu0 %v3829
      %v3918 = vpop.f32.mrf.mxu0
      %v3919 = vadd.f32 0.0, %v3918
      %v3920 = vpop.f32.mrf.mxu0
      %v3921 = vpop.f32.mrf.mxu0
      %v3922 = vadd.f32 0.0, %v3921
      %v3923 = vpop.f32.mrf.mxu0
      %3924 = vmatprep.mubr.bf16.mxu0 0
      %3925 = vmatmul.mubr.bf16.gmra.mxu0 %v3832
      %v3926 = vpop.f32.mrf.mxu0
      %v3927 = vadd.f32 0.0, %v3926
      %v3928 = vpop.f32.mrf.mxu0
      %v3929 = vpop.f32.mrf.mxu0
      %v3930 = vadd.f32 0.0, %v3929
      %v3931 = vpop.f32.mrf.mxu0
      %3932 = vmatprep.mubr.bf16.mxu0 0
      %3933 = vmatmul.mubr.bf16.gmra.mxu0 %v3835
      %v3934 = vpop.f32.mrf.mxu0
      %v3935 = vadd.f32 0.0, %v3934
      %v3936 = vpop.f32.mrf.mxu0
      %v3937 = vpop.f32.mrf.mxu0
      %v3938 = vadd.f32 0.0, %v3937
      %v3939 = vpop.f32.mrf.mxu0
      %3940 = vmatprep.mubr.bf16.mxu0 0
      %3941 = vmatmul.mubr.bf16.gmra.mxu0 %v3838
      %v3942 = vpop.f32.mrf.mxu0
      %v3943 = vadd.f32 0.0, %v3942
      %v3944 = vpop.f32.mrf.mxu0
      %v3945 = vpop.f32.mrf.mxu0
      %v3946 = vadd.f32 0.0, %v3945
      %v3947 = vpop.f32.mrf.mxu0
      %3948 = vmatprep.mubr.bf16.mxu0 0
      %3949 = vmatmul.mubr.bf16.gmra.mxu0 %v3841
      %v3950 = vpop.f32.mrf.mxu0
      %v3951 = vadd.f32 0.0, %v3950
      %v3952 = vpop.f32.mrf.mxu0
      %v3953 = vpop.f32.mrf.mxu0
      %v3954 = vadd.f32 0.0, %v3953
      %v3955 = vpop.f32.mrf.mxu0
      %3956 = vmatprep.mubr.bf16.mxu0 0
      %3957 = vmatmul.mubr.bf16.gmra.mxu0 %v3844
      %v3958 = vpop.f32.mrf.mxu0
      %v3959 = vadd.f32 0.0, %v3958
      %v3960 = vpop.f32.mrf.mxu0
      %v3961 = vpop.f32.mrf.mxu0
      %v3962 = vadd.f32 0.0, %v3961
      %v3963 = vpop.f32.mrf.mxu0
      %3964 = vmatprep.mubr.bf16.mxu0 0
      %3965 = vmatmul.mubr.bf16.gmra.mxu0 %v3847
      %v3966 = vpop.f32.mrf.mxu0
      %v3967 = vadd.f32 0.0, %v3966
      %v3968 = vpop.f32.mrf.mxu0
      %v3969 = vpop.f32.mrf.mxu0
      %v3970 = vadd.f32 0.0, %v3969
      %v3971 = vpop.f32.mrf.mxu0
      %3972 = vmatprep.mubr.bf16.mxu0 0
      %3973 = vmatmul.mubr.bf16.gmra.mxu0 %v3850
      %v3974 = vpop.f32.mrf.mxu0
      %v3975 = vadd.f32 0.0, %v3974
      %v3976 = vpop.f32.mrf.mxu0
      %v3977 = vpop.f32.mrf.mxu0
      %v3978 = vadd.f32 0.0, %v3977
      %v3979 = vpop.f32.mrf.mxu0
      %3980 = vmatprep.mubr.bf16.mxu0 0
      %3981 = vmatmul.mubr.bf16.gmra.mxu0 %v3853
      %v3982 = vpop.f32.mrf.mxu0
      %v3983 = vadd.f32 0.0, %v3982
      %v3984 = vpop.f32.mrf.mxu0
      %v3985 = vpop.f32.mrf.mxu0
      %v3986 = vadd.f32 0.0, %v3985
      %v3987 = vpop.f32.mrf.mxu0
      %3988 = vmatprep.mubr.bf16.mxu0 0
      %3989 = vmatmul.mubr.bf16.gmra.mxu0 %v3856
      %v3990 = vpop.f32.mrf.mxu0
      %v3991 = vadd.f32 0.0, %v3990
      %v3992 = vpop.f32.mrf.mxu0
      %v3993 = vpop.f32.mrf.mxu0
      %v3994 = vadd.f32 0.0, %v3993
      %v3995 = vpop.f32.mrf.mxu0
      %3996 = vmatprep.mubr.bf16.mxu0 0
      %3997 = vmatmul.mubr.bf16.gmra.mxu0 %v3859
      %v3998 = vpop.f32.mrf.mxu0
      %v3999 = vadd.f32 0.0, %v3998
      %v4000 = vpop.f32.mrf.mxu0
      %v4001 = vpop.f32.mrf.mxu0
      %v4002 = vadd.f32 0.0, %v4001
      %v4003 = vpop.f32.mrf.mxu0
      %4004 = vmatprep.mubr.bf16.mxu0 0
      %4005 = vmatmul.mubr.bf16.gmra.mxu0 %v3862
      %v4006 = vpop.f32.mrf.mxu0
      %v4007 = vadd.f32 0.0, %v4006
      %v4008 = vpop.f32.mrf.mxu0
      %v4009 = vpop.f32.mrf.mxu0
      %v4010 = vadd.f32 0.0, %v4009
      %v4011 = vpop.f32.mrf.mxu0
      %4012 = vmatprep.mubr.bf16.mxu0 0
      %4013 = vmatmul.mubr.bf16.gmra.mxu0 %v3865
      %v4014 = vpop.f32.mrf.mxu0
      %v4015 = vadd.f32 0.0, %v4014
      %v4016 = vpop.f32.mrf.mxu0
      %v4017 = vpop.f32.mrf.mxu0
      %v4018 = vadd.f32 0.0, %v4017
      %v4019 = vpop.f32.mrf.mxu0
      %4020 = vmatprep.mubr.bf16.mxu0 0
      %4021 = vmatmul.mubr.bf16.gmra.mxu0 %v3868
      %v4022 = vpop.f32.mrf.mxu0
      %v4023 = vadd.f32 0.0, %v4022
      %v4024 = vpop.f32.mrf.mxu0
      %v4025 = vpop.f32.mrf.mxu0
      %v4026 = vadd.f32 0.0, %v4025
      %v4027 = vpop.f32.mrf.mxu0
      %4028 = vmatprep.mubr.bf16.mxu0 0
      %4029 = vmatmul.mubr.bf16.gmra.mxu0 %v3871
      %v4030 = vpop.f32.mrf.mxu0
      %v4031 = vadd.f32 0.0, %v4030
      %v4032 = vpop.f32.mrf.mxu0
      %v4033 = vpop.f32.mrf.mxu0
      %v4034 = vadd.f32 0.0, %v4033
      %v4035 = vpop.f32.mrf.mxu0
      %4036 = vdwg.mxu0
      %v4037 = vadd.f32 %v3567, %v3911
      %v4038 = vadd.f32 %v3568, %v3914
      %v4039 = vadd.f32 %v3569, %v3919
      %v4040 = vadd.f32 %v3570, %v3922
      %v4041 = vadd.f32 %v3571, %v3927
      %v4042 = vadd.f32 %v3572, %v3930
      %v4043 = vadd.f32 %v3573, %v3935
      %v4044 = vadd.f32 %v3574, %v3938
      %v4045 = vadd.f32 %v3575, %v3943
      %v4046 = vadd.f32 %v3576, %v3946
      %v4047 = vadd.f32 %v3577, %v3951
      %v4048 = vadd.f32 %v3578, %v3954
      %v4049 = vadd.f32 %v3579, %v3959
      %v4050 = vadd.f32 %v3580, %v3962
      %v4051 = vadd.f32 %v3581, %v3967
      %v4052 = vadd.f32 %v3582, %v3970
      %v4053 = vadd.f32 %v3583, %v3975
      %v4054 = vadd.f32 %v3584, %v3978
      %v4055 = vadd.f32 %v3585, %v3983
      %v4056 = vadd.f32 %v3586, %v3986
      %v4057 = vadd.f32 %v3587, %v3991
      %v4058 = vadd.f32 %v3588, %v3994
      %v4059 = vadd.f32 %v3589, %v3999
      %v4060 = vadd.f32 %v3590, %v4002
      %v4061 = vadd.f32 %v3591, %v4007
      %v4062 = vadd.f32 %v3592, %v4010
      %v4063 = vadd.f32 %v3593, %v4015
      %v4064 = vadd.f32 %v3594, %v4018
      %v4065 = vadd.f32 %v3595, %v4023
      %v4066 = vadd.f32 %v3596, %v4026
      %v4067 = vadd.f32 %v3597, %v4031
      %v4068 = vadd.f32 %v3598, %v4034
      %s4069 = scalar_lea.vmem [#allocation2], 24
      %v4070 = vld [vmem:[%s4069] sm:$0xf]
      %v4071 = vld [vmem:[%s4069 + $0x4] sm:$0xf]
      %v4072 = vld [vmem:[%s4069 + $0xc] sm:$0xf]
      %v4073 = vld [vmem:[%s4069 + $0x10] sm:$0xf]
      %v4074 = vld [vmem:[%s4069 + $0x18] sm:$0xf]
      %v4075 = vld [vmem:[%s4069 + $0x1c] sm:$0xf]
      %v4076 = vld [vmem:[%s4069 + $0x24] sm:$0xf]
      %v4077 = vld [vmem:[%s4069 + $0x28] sm:$0xf]
      %v4078 = vld [vmem:[%s4069 + $0x30] sm:$0xf]
      %v4079 = vld [vmem:[%s4069 + $0x34] sm:$0xf]
      %v4080 = vld [vmem:[%s4069 + $0x3c] sm:$0xf]
      %v4081 = vld [vmem:[%s4069 + $0x40] sm:$0xf]
      %v4082 = vld [vmem:[%s4069 + $0x48] sm:$0xf]
      %v4083 = vld [vmem:[%s4069 + $0x4c] sm:$0xf]
      %v4084 = vld [vmem:[%s4069 + $0x54] sm:$0xf]
      %v4085 = vld [vmem:[%s4069 + $0x58] sm:$0xf]
      %v4086 = vld [vmem:[%s4069 + $0x60] sm:$0xf]
      %v4087 = vld [vmem:[%s4069 + $0x64] sm:$0xf]
      %v4088 = vld [vmem:[%s4069 + $0x6c] sm:$0xf]
      %v4089 = vld [vmem:[%s4069 + $0x70] sm:$0xf]
      %v4090 = vld [vmem:[%s4069 + $0x78] sm:$0xf]
      %v4091 = vld [vmem:[%s4069 + $0x7c] sm:$0xf]
      %v4092 = vld [vmem:[%s4069 + $0x84] sm:$0xf]
      %v4093 = vld [vmem:[%s4069 + $0x88] sm:$0xf]
      %v4094 = vld [vmem:[%s4069 + $0x90] sm:$0xf]
      %v4095 = vld [vmem:[%s4069 + $0x94] sm:$0xf]
      %v4096 = vld [vmem:[%s4069 + $0x9c] sm:$0xf]
      %v4097 = vld [vmem:[%s4069 + $0xa0] sm:$0xf]
      %v4098 = vld [vmem:[%s4069 + $0xa8] sm:$0xf]
      %v4099 = vld [vmem:[%s4069 + $0xac] sm:$0xf]
      %v4100 = vld [vmem:[%s4069 + $0xb4] sm:$0xf]
      %v4101 = vld [vmem:[%s4069 + $0xb8] sm:$0xf]
      %s4102 = scalar_lea.vmem %s3, 24
      %v4103 = vld [vmem:[%s4102] sm:$0xf]
      %v4136 = vunpack.c.l.b16 %v4070
      %v4137 = vunpack.c.l.b16 %v4071
      %v4138 = vunpack.c.l.b16 %v4072
      %v4139 = vunpack.c.l.b16 %v4073
      %v4140 = vunpack.c.l.b16 %v4074
      %v4141 = vunpack.c.l.b16 %v4075
      %v4142 = vunpack.c.l.b16 %v4076
      %v4143 = vunpack.c.l.b16 %v4077
      %v4144 = vunpack.c.l.b16 %v4078
      %v4145 = vunpack.c.l.b16 %v4079
      %v4146 = vunpack.c.l.b16 %v4080
      %v4147 = vunpack.c.l.b16 %v4081
      %v4148 = vunpack.c.l.b16 %v4082
      %v4149 = vunpack.c.l.b16 %v4083
      %v4150 = vunpack.c.l.b16 %v4084
      %v4151 = vunpack.c.l.b16 %v4085
      %v4152 = vunpack.c.l.b16 %v4086
      %v4153 = vunpack.c.l.b16 %v4087
      %v4154 = vunpack.c.l.b16 %v4088
      %v4155 = vunpack.c.l.b16 %v4089
      %v4156 = vunpack.c.l.b16 %v4090
      %v4157 = vunpack.c.l.b16 %v4091
      %v4158 = vunpack.c.l.b16 %v4092
      %v4159 = vunpack.c.l.b16 %v4093
      %v4160 = vunpack.c.l.b16 %v4094
      %v4161 = vunpack.c.l.b16 %v4095
      %v4162 = vunpack.c.l.b16 %v4096
      %v4163 = vunpack.c.l.b16 %v4097
      %v4164 = vunpack.c.l.b16 %v4098
      %v4165 = vunpack.c.l.b16 %v4099
      %v4166 = vunpack.c.l.b16 %v4100
      %v4167 = vunpack.c.l.b16 %v4101
      %v4168 = vpack.c.b16 %v4137, %v4136
      %v4169 = vpack.c.b16 %v4139, %v4138
      %v4170 = vpack.c.b16 %v4141, %v4140
      %v4171 = vpack.c.b16 %v4143, %v4142
      %v4172 = vpack.c.b16 %v4145, %v4144
      %v4173 = vpack.c.b16 %v4147, %v4146
      %v4174 = vpack.c.b16 %v4149, %v4148
      %v4175 = vpack.c.b16 %v4151, %v4150
      %v4176 = vpack.c.b16 %v4153, %v4152
      %v4177 = vpack.c.b16 %v4155, %v4154
      %v4178 = vpack.c.b16 %v4157, %v4156
      %v4179 = vpack.c.b16 %v4159, %v4158
      %v4180 = vpack.c.b16 %v4161, %v4160
      %v4181 = vpack.c.b16 %v4163, %v4162
      %v4182 = vpack.c.b16 %v4165, %v4164
      %v4183 = vpack.c.b16 %v4167, %v4166
      %v4185 = vsel %vm1552, %v4168, 0
      %v4188 = vsel %vm1552, %v4169, 0
      %v4191 = vsel %vm1552, %v4170, 0
      %v4194 = vsel %vm1552, %v4171, 0
      %v4197 = vsel %vm1552, %v4172, 0
      %v4200 = vsel %vm1552, %v4173, 0
      %v4203 = vsel %vm1552, %v4174, 0
      %v4206 = vsel %vm1552, %v4175, 0
      %v4209 = vsel %vm1552, %v4176, 0
      %v4212 = vsel %vm1552, %v4177, 0
      %v4215 = vsel %vm1552, %v4178, 0
      %v4218 = vsel %vm1552, %v4179, 0
      %v4221 = vsel %vm1552, %v4180, 0
      %v4224 = vsel %vm1552, %v4181, 0
      %v4227 = vsel %vm1552, %v4182, 0
      %v4230 = vsel %vm1552, %v4183, 0
      %v4233 = vsel %vm1601, %v4103, 0
      %4235 = vmatprep.subr.bf16.mxu0 0
      %4236 = vmatpush1.bf16.msra.mxu0 0
      %4237 = vmatprep.subr.bf16.mxu0 0
      %4238 = vmatpush1.bf16.msra.mxu0 0
      %4239 = vmatprep.subr.bf16.mxu0 0
      %4240 = vmatpush1.bf16.msra.mxu0 0
      %4241 = vmatprep.subr.bf16.mxu0 0
      %4242 = vmatpush1.bf16.msra.mxu0 0
      %4243 = vmatprep.subr.bf16.mxu0 0
      %4244 = vmatpush1.bf16.msra.mxu0 0
      %4245 = vmatprep.subr.bf16.mxu0 0
      %4246 = vmatpush1.bf16.msra.mxu0 0
      %4247 = vmatprep.subr.bf16.mxu0 0
      %4248 = vmatpush1.bf16.msra.mxu0 0
      %4249 = vmatprep.subr.bf16.mxu0 0
      %4250 = vmatpush1.bf16.msra.mxu0 %v4233
      %4251 = vmatprep.subr.bf16.mxu0 0
      %4252 = vmatpush2.bf16.msra.mxu0 0
      %4253 = vmatprep.subr.bf16.mxu0 0
      %4254 = vmatpush2.bf16.msra.mxu0 0
      %4255 = vmatprep.subr.bf16.mxu0 0
      %4256 = vmatpush2.bf16.msra.mxu0 0
      %4257 = vmatprep.subr.bf16.mxu0 0
      %4258 = vmatpush2.bf16.msra.mxu0 0
      %4259 = vmatprep.subr.bf16.mxu0 0
      %4260 = vmatpush2.bf16.msra.mxu0 0
      %4261 = vmatprep.subr.bf16.mxu0 0
      %4262 = vmatpush2.bf16.msra.mxu0 0
      %4263 = vmatprep.subr.bf16.mxu0 0
      %4264 = vmatpush2.bf16.msra.mxu0 0
      %4265 = vmatprep.subr.bf16.mxu0 0
      %4266 = vmatpush2.bf16.msra.mxu0 0
      %4267 = vmatprep.mubr.bf16.mxu0 0
      %4268 = vmatmul.mubr.bf16.gmra.mxu0 %v4185
      %v4269 = vpop.f32.mrf.mxu0
      %v4270 = vadd.f32 0.0, %v4269
      %v4271 = vpop.f32.mrf.mxu0
      %v4272 = vpop.f32.mrf.mxu0
      %v4273 = vadd.f32 0.0, %v4272
      %v4274 = vpop.f32.mrf.mxu0
      %4275 = vmatprep.mubr.bf16.mxu0 0
      %4276 = vmatmul.mubr.bf16.gmra.mxu0 %v4188
      %v4277 = vpop.f32.mrf.mxu0
      %v4278 = vadd.f32 0.0, %v4277
      %v4279 = vpop.f32.mrf.mxu0
      %v4280 = vpop.f32.mrf.mxu0
      %v4281 = vadd.f32 0.0, %v4280
      %v4282 = vpop.f32.mrf.mxu0
      %4283 = vmatprep.mubr.bf16.mxu0 0
      %4284 = vmatmul.mubr.bf16.gmra.mxu0 %v4191
      %v4285 = vpop.f32.mrf.mxu0
      %v4286 = vadd.f32 0.0, %v4285
      %v4287 = vpop.f32.mrf.mxu0
      %v4288 = vpop.f32.mrf.mxu0
      %v4289 = vadd.f32 0.0, %v4288
      %v4290 = vpop.f32.mrf.mxu0
      %4291 = vmatprep.mubr.bf16.mxu0 0
      %4292 = vmatmul.mubr.bf16.gmra.mxu0 %v4194
      %v4293 = vpop.f32.mrf.mxu0
      %v4294 = vadd.f32 0.0, %v4293
      %v4295 = vpop.f32.mrf.mxu0
      %v4296 = vpop.f32.mrf.mxu0
      %v4297 = vadd.f32 0.0, %v4296
      %v4298 = vpop.f32.mrf.mxu0
      %4299 = vmatprep.mubr.bf16.mxu0 0
      %4300 = vmatmul.mubr.bf16.gmra.mxu0 %v4197
      %v4301 = vpop.f32.mrf.mxu0
      %v4302 = vadd.f32 0.0, %v4301
      %v4303 = vpop.f32.mrf.mxu0
      %v4304 = vpop.f32.mrf.mxu0
      %v4305 = vadd.f32 0.0, %v4304
      %v4306 = vpop.f32.mrf.mxu0
      %4307 = vmatprep.mubr.bf16.mxu0 0
      %4308 = vmatmul.mubr.bf16.gmra.mxu0 %v4200
      %v4309 = vpop.f32.mrf.mxu0
      %v4310 = vadd.f32 0.0, %v4309
      %v4311 = vpop.f32.mrf.mxu0
      %v4312 = vpop.f32.mrf.mxu0
      %v4313 = vadd.f32 0.0, %v4312
      %v4314 = vpop.f32.mrf.mxu0
      %4315 = vmatprep.mubr.bf16.mxu0 0
      %4316 = vmatmul.mubr.bf16.gmra.mxu0 %v4203
      %v4317 = vpop.f32.mrf.mxu0
      %v4318 = vadd.f32 0.0, %v4317
      %v4319 = vpop.f32.mrf.mxu0
      %v4320 = vpop.f32.mrf.mxu0
      %v4321 = vadd.f32 0.0, %v4320
      %v4322 = vpop.f32.mrf.mxu0
      %4323 = vmatprep.mubr.bf16.mxu0 0
      %4324 = vmatmul.mubr.bf16.gmra.mxu0 %v4206
      %v4325 = vpop.f32.mrf.mxu0
      %v4326 = vadd.f32 0.0, %v4325
      %v4327 = vpop.f32.mrf.mxu0
      %v4328 = vpop.f32.mrf.mxu0
      %v4329 = vadd.f32 0.0, %v4328
      %v4330 = vpop.f32.mrf.mxu0
      %4331 = vmatprep.mubr.bf16.mxu0 0
      %4332 = vmatmul.mubr.bf16.gmra.mxu0 %v4209
      %v4333 = vpop.f32.mrf.mxu0
      %v4334 = vadd.f32 0.0, %v4333
      %v4335 = vpop.f32.mrf.mxu0
      %v4336 = vpop.f32.mrf.mxu0
      %v4337 = vadd.f32 0.0, %v4336
      %v4338 = vpop.f32.mrf.mxu0
      %4339 = vmatprep.mubr.bf16.mxu0 0
      %4340 = vmatmul.mubr.bf16.gmra.mxu0 %v4212
      %v4341 = vpop.f32.mrf.mxu0
      %v4342 = vadd.f32 0.0, %v4341
      %v4343 = vpop.f32.mrf.mxu0
      %v4344 = vpop.f32.mrf.mxu0
      %v4345 = vadd.f32 0.0, %v4344
      %v4346 = vpop.f32.mrf.mxu0
      %4347 = vmatprep.mubr.bf16.mxu0 0
      %4348 = vmatmul.mubr.bf16.gmra.mxu0 %v4215
      %v4349 = vpop.f32.mrf.mxu0
      %v4350 = vadd.f32 0.0, %v4349
      %v4351 = vpop.f32.mrf.mxu0
      %v4352 = vpop.f32.mrf.mxu0
      %v4353 = vadd.f32 0.0, %v4352
      %v4354 = vpop.f32.mrf.mxu0
      %4355 = vmatprep.mubr.bf16.mxu0 0
      %4356 = vmatmul.mubr.bf16.gmra.mxu0 %v4218
      %v4357 = vpop.f32.mrf.mxu0
      %v4358 = vadd.f32 0.0, %v4357
      %v4359 = vpop.f32.mrf.mxu0
      %v4360 = vpop.f32.mrf.mxu0
      %v4361 = vadd.f32 0.0, %v4360
      %v4362 = vpop.f32.mrf.mxu0
      %4363 = vmatprep.mubr.bf16.mxu0 0
      %4364 = vmatmul.mubr.bf16.gmra.mxu0 %v4221
      %v4365 = vpop.f32.mrf.mxu0
      %v4366 = vadd.f32 0.0, %v4365
      %v4367 = vpop.f32.mrf.mxu0
      %v4368 = vpop.f32.mrf.mxu0
      %v4369 = vadd.f32 0.0, %v4368
      %v4370 = vpop.f32.mrf.mxu0
      %4371 = vmatprep.mubr.bf16.mxu0 0
      %4372 = vmatmul.mubr.bf16.gmra.mxu0 %v4224
      %v4373 = vpop.f32.mrf.mxu0
      %v4374 = vadd.f32 0.0, %v4373
      %v4375 = vpop.f32.mrf.mxu0
      %v4376 = vpop.f32.mrf.mxu0
      %v4377 = vadd.f32 0.0, %v4376
      %v4378 = vpop.f32.mrf.mxu0
      %4379 = vmatprep.mubr.bf16.mxu0 0
      %4380 = vmatmul.mubr.bf16.gmra.mxu0 %v4227
      %v4381 = vpop.f32.mrf.mxu0
      %v4382 = vadd.f32 0.0, %v4381
      %v4383 = vpop.f32.mrf.mxu0
      %v4384 = vpop.f32.mrf.mxu0
      %v4385 = vadd.f32 0.0, %v4384
      %v4386 = vpop.f32.mrf.mxu0
      %4387 = vmatprep.mubr.bf16.mxu0 0
      %4388 = vmatmul.mubr.bf16.gmra.mxu0 %v4230
      %v4389 = vpop.f32.mrf.mxu0
      %v4390 = vadd.f32 0.0, %v4389
      %v4391 = vpop.f32.mrf.mxu0
      %v4392 = vpop.f32.mrf.mxu0
      %v4393 = vadd.f32 0.0, %v4392
      %v4394 = vpop.f32.mrf.mxu0
      %4395 = vdwg.mxu0
      %v4396 = vadd.f32 %v4037, %v4270
      %v4397 = vadd.f32 %v4038, %v4273
      %v4398 = vadd.f32 %v4039, %v4278
      %v4399 = vadd.f32 %v4040, %v4281
      %v4400 = vadd.f32 %v4041, %v4286
      %v4401 = vadd.f32 %v4042, %v4289
      %v4402 = vadd.f32 %v4043, %v4294
      %v4403 = vadd.f32 %v4044, %v4297
      %v4404 = vadd.f32 %v4045, %v4302
      %v4405 = vadd.f32 %v4046, %v4305
      %v4406 = vadd.f32 %v4047, %v4310
      %v4407 = vadd.f32 %v4048, %v4313
      %v4408 = vadd.f32 %v4049, %v4318
      %v4409 = vadd.f32 %v4050, %v4321
      %v4410 = vadd.f32 %v4051, %v4326
      %v4411 = vadd.f32 %v4052, %v4329
      %v4412 = vadd.f32 %v4053, %v4334
      %v4413 = vadd.f32 %v4054, %v4337
      %v4414 = vadd.f32 %v4055, %v4342
      %v4415 = vadd.f32 %v4056, %v4345
      %v4416 = vadd.f32 %v4057, %v4350
      %v4417 = vadd.f32 %v4058, %v4353
      %v4418 = vadd.f32 %v4059, %v4358
      %v4419 = vadd.f32 %v4060, %v4361
      %v4420 = vadd.f32 %v4061, %v4366
      %v4421 = vadd.f32 %v4062, %v4369
      %v4422 = vadd.f32 %v4063, %v4374
      %v4423 = vadd.f32 %v4064, %v4377
      %v4424 = vadd.f32 %v4065, %v4382
      %v4425 = vadd.f32 %v4066, %v4385
      %v4426 = vadd.f32 %v4067, %v4390
      %v4427 = vadd.f32 %v4068, %v4393
      %v4428 = vld [vmem:[%s4069] sm:$0xf]
      %v4429 = vld [vmem:[%s4069 + $0x4] sm:$0xf]
      %v4430 = vld [vmem:[%s4069 + $0x8] sm:$0x1]
      %v4431 = vld [vmem:[%s4069 + $0xc] sm:$0xf]
      %v4432 = vld [vmem:[%s4069 + $0x10] sm:$0xf]
      %v4433 = vld [vmem:[%s4069 + $0x14] sm:$0x1]
      %v4434 = vld [vmem:[%s4069 + $0x18] sm:$0xf]
      %v4435 = vld [vmem:[%s4069 + $0x1c] sm:$0xf]
      %v4436 = vld [vmem:[%s4069 + $0x20] sm:$0x1]
      %v4437 = vld [vmem:[%s4069 + $0x24] sm:$0xf]
      %v4438 = vld [vmem:[%s4069 + $0x28] sm:$0xf]
      %v4439 = vld [vmem:[%s4069 + $0x2c] sm:$0x1]
      %v4440 = vld [vmem:[%s4069 + $0x30] sm:$0xf]
      %v4441 = vld [vmem:[%s4069 + $0x34] sm:$0xf]
      %v4442 = vld [vmem:[%s4069 + $0x38] sm:$0x1]
      %v4443 = vld [vmem:[%s4069 + $0x3c] sm:$0xf]
      %v4444 = vld [vmem:[%s4069 + $0x40] sm:$0xf]
      %v4445 = vld [vmem:[%s4069 + $0x44] sm:$0x1]
      %v4446 = vld [vmem:[%s4069 + $0x48] sm:$0xf]
      %v4447 = vld [vmem:[%s4069 + $0x4c] sm:$0xf]
      %v4448 = vld [vmem:[%s4069 + $0x50] sm:$0x1]
      %v4449 = vld [vmem:[%s4069 + $0x54] sm:$0xf]
      %v4450 = vld [vmem:[%s4069 + $0x58] sm:$0xf]
      %v4451 = vld [vmem:[%s4069 + $0x5c] sm:$0x1]
      %v4452 = vld [vmem:[%s4069 + $0x60] sm:$0xf]
      %v4453 = vld [vmem:[%s4069 + $0x64] sm:$0xf]
      %v4454 = vld [vmem:[%s4069 + $0x68] sm:$0x1]
      %v4455 = vld [vmem:[%s4069 + $0x6c] sm:$0xf]
      %v4456 = vld [vmem:[%s4069 + $0x70] sm:$0xf]
      %v4457 = vld [vmem:[%s4069 + $0x74] sm:$0x1]
      %v4458 = vld [vmem:[%s4069 + $0x78] sm:$0xf]
      %v4459 = vld [vmem:[%s4069 + $0x7c] sm:$0xf]
      %v4460 = vld [vmem:[%s4069 + $0x80] sm:$0x1]
      %v4461 = vld [vmem:[%s4069 + $0x84] sm:$0xf]
      %v4462 = vld [vmem:[%s4069 + $0x88] sm:$0xf]
      %v4463 = vld [vmem:[%s4069 + $0x8c] sm:$0x1]
      %v4464 = vld [vmem:[%s4069 + $0x90] sm:$0xf]
      %v4465 = vld [vmem:[%s4069 + $0x94] sm:$0xf]
      %v4466 = vld [vmem:[%s4069 + $0x98] sm:$0x1]
      %v4467 = vld [vmem:[%s4069 + $0x9c] sm:$0xf]
      %v4468 = vld [vmem:[%s4069 + $0xa0] sm:$0xf]
      %v4469 = vld [vmem:[%s4069 + $0xa4] sm:$0x1]
      %v4470 = vld [vmem:[%s4069 + $0xa8] sm:$0xf]
      %v4471 = vld [vmem:[%s4069 + $0xac] sm:$0xf]
      %v4472 = vld [vmem:[%s4069 + $0xb0] sm:$0x1]
      %v4473 = vld [vmem:[%s4069 + $0xb4] sm:$0xf]
      %v4474 = vld [vmem:[%s4069 + $0xb8] sm:$0xf]
      %v4475 = vld [vmem:[%s4069 + $0xbc] sm:$0x1]
      %v4477 = vshrl.u32 %v4428, 16
      %v4479 = vrot.slane %v4477, 4
      %v4480 = vshll.u32 %v4428, 16
      %v4482 = vrot.slane %v4480, 5
      %v4483 = vor.u32 %v4479, %v4482
      %v4484 = vrot.slane %v4483, 4
      %v4486 = vshll.u32 %v4429, 16
      %v4488 = vrot.slane %v4486, 5
      %v4489 = vsel %vm1117, %v4484, %v4488
      %v4490 = vshrl.u32 %v4429, 16
      %v4492 = vrot.slane %v4490, 4
      %v4493 = vor.u32 %v4492, %v4488
      %v4494 = vrot.slane %v4493, 4
      %v4496 = vshll.u32 %v4430, 16
      %v4498 = vrot.slane %v4496, 5
      %v4499 = vsel %vm1117, %v4494, %v4498
      %v4501 = vshrl.u32 %v4431, 16
      %v4503 = vrot.slane %v4501, 4
      %v4504 = vshll.u32 %v4431, 16
      %v4506 = vrot.slane %v4504, 5
      %v4507 = vor.u32 %v4503, %v4506
      %v4508 = vrot.slane %v4507, 4
      %v4510 = vshll.u32 %v4432, 16
      %v4512 = vrot.slane %v4510, 5
      %v4513 = vsel %vm1117, %v4508, %v4512
      %v4514 = vshrl.u32 %v4432, 16
      %v4516 = vrot.slane %v4514, 4
      %v4517 = vor.u32 %v4516, %v4512
      %v4518 = vrot.slane %v4517, 4
      %v4520 = vshll.u32 %v4433, 16
      %v4522 = vrot.slane %v4520, 5
      %v4523 = vsel %vm1117, %v4518, %v4522
      %v4525 = vshrl.u32 %v4434, 16
      %v4527 = vrot.slane %v4525, 4
      %v4528 = vshll.u32 %v4434, 16
      %v4530 = vrot.slane %v4528, 5
      %v4531 = vor.u32 %v4527, %v4530
      %v4532 = vrot.slane %v4531, 4
      %v4534 = vshll.u32 %v4435, 16
      %v4536 = vrot.slane %v4534, 5
      %v4537 = vsel %vm1117, %v4532, %v4536
      %v4538 = vshrl.u32 %v4435, 16
      %v4540 = vrot.slane %v4538, 4
      %v4541 = vor.u32 %v4540, %v4536
      %v4542 = vrot.slane %v4541, 4
      %v4544 = vshll.u32 %v4436, 16
      %v4546 = vrot.slane %v4544, 5
      %v4547 = vsel %vm1117, %v4542, %v4546
      %v4549 = vshrl.u32 %v4437, 16
      %v4551 = vrot.slane %v4549, 4
      %v4552 = vshll.u32 %v4437, 16
      %v4554 = vrot.slane %v4552, 5
      %v4555 = vor.u32 %v4551, %v4554
      %v4556 = vrot.slane %v4555, 4
      %v4558 = vshll.u32 %v4438, 16
      %v4560 = vrot.slane %v4558, 5
      %v4561 = vsel %vm1117, %v4556, %v4560
      %v4562 = vshrl.u32 %v4438, 16
      %v4564 = vrot.slane %v4562, 4
      %v4565 = vor.u32 %v4564, %v4560
      %v4566 = vrot.slane %v4565, 4
      %v4568 = vshll.u32 %v4439, 16
      %v4570 = vrot.slane %v4568, 5
      %v4571 = vsel %vm1117, %v4566, %v4570
      %v4573 = vshrl.u32 %v4440, 16
      %v4575 = vrot.slane %v4573, 4
      %v4576 = vshll.u32 %v4440, 16
      %v4578 = vrot.slane %v4576, 5
      %v4579 = vor.u32 %v4575, %v4578
      %v4580 = vrot.slane %v4579, 4
      %v4582 = vshll.u32 %v4441, 16
      %v4584 = vrot.slane %v4582, 5
      %v4585 = vsel %vm1117, %v4580, %v4584
      %v4586 = vshrl.u32 %v4441, 16
      %v4588 = vrot.slane %v4586, 4
      %v4589 = vor.u32 %v4588, %v4584
      %v4590 = vrot.slane %v4589, 4
      %v4592 = vshll.u32 %v4442, 16
      %v4594 = vrot.slane %v4592, 5
      %v4595 = vsel %vm1117, %v4590, %v4594
      %v4597 = vshrl.u32 %v4443, 16
      %v4599 = vrot.slane %v4597, 4
      %v4600 = vshll.u32 %v4443, 16
      %v4602 = vrot.slane %v4600, 5
      %v4603 = vor.u32 %v4599, %v4602
      %v4604 = vrot.slane %v4603, 4
      %v4606 = vshll.u32 %v4444, 16
      %v4608 = vrot.slane %v4606, 5
      %v4609 = vsel %vm1117, %v4604, %v4608
      %v4610 = vshrl.u32 %v4444, 16
      %v4612 = vrot.slane %v4610, 4
      %v4613 = vor.u32 %v4612, %v4608
      %v4614 = vrot.slane %v4613, 4
      %v4616 = vshll.u32 %v4445, 16
      %v4618 = vrot.slane %v4616, 5
      %v4619 = vsel %vm1117, %v4614, %v4618
      %v4621 = vshrl.u32 %v4446, 16
      %v4623 = vrot.slane %v4621, 4
      %v4624 = vshll.u32 %v4446, 16
      %v4626 = vrot.slane %v4624, 5
      %v4627 = vor.u32 %v4623, %v4626
      %v4628 = vrot.slane %v4627, 4
      %v4630 = vshll.u32 %v4447, 16
      %v4632 = vrot.slane %v4630, 5
      %v4633 = vsel %vm1117, %v4628, %v4632
      %v4634 = vshrl.u32 %v4447, 16
      %v4636 = vrot.slane %v4634, 4
      %v4637 = vor.u32 %v4636, %v4632
      %v4638 = vrot.slane %v4637, 4
      %v4640 = vshll.u32 %v4448, 16
      %v4642 = vrot.slane %v4640, 5
      %v4643 = vsel %vm1117, %v4638, %v4642
      %v4645 = vshrl.u32 %v4449, 16
      %v4647 = vrot.slane %v4645, 4
      %v4648 = vshll.u32 %v4449, 16
      %v4650 = vrot.slane %v4648, 5
      %v4651 = vor.u32 %v4647, %v4650
      %v4652 = vrot.slane %v4651, 4
      %v4654 = vshll.u32 %v4450, 16
      %v4656 = vrot.slane %v4654, 5
      %v4657 = vsel %vm1117, %v4652, %v4656
      %v4658 = vshrl.u32 %v4450, 16
      %v4660 = vrot.slane %v4658, 4
      %v4661 = vor.u32 %v4660, %v4656
      %v4662 = vrot.slane %v4661, 4
      %v4664 = vshll.u32 %v4451, 16
      %v4666 = vrot.slane %v4664, 5
      %v4667 = vsel %vm1117, %v4662, %v4666
      %v4669 = vshrl.u32 %v4452, 16
      %v4671 = vrot.slane %v4669, 4
      %v4672 = vshll.u32 %v4452, 16
      %v4674 = vrot.slane %v4672, 5
      %v4675 = vor.u32 %v4671, %v4674
      %v4676 = vrot.slane %v4675, 4
      %v4678 = vshll.u32 %v4453, 16
      %v4680 = vrot.slane %v4678, 5
      %v4681 = vsel %vm1117, %v4676, %v4680
      %v4682 = vshrl.u32 %v4453, 16
      %v4684 = vrot.slane %v4682, 4
      %v4685 = vor.u32 %v4684, %v4680
      %v4686 = vrot.slane %v4685, 4
      %v4688 = vshll.u32 %v4454, 16
      %v4690 = vrot.slane %v4688, 5
      %v4691 = vsel %vm1117, %v4686, %v4690
      %v4693 = vshrl.u32 %v4455, 16
      %v4695 = vrot.slane %v4693, 4
      %v4696 = vshll.u32 %v4455, 16
      %v4698 = vrot.slane %v4696, 5
      %v4699 = vor.u32 %v4695, %v4698
      %v4700 = vrot.slane %v4699, 4
      %v4702 = vshll.u32 %v4456, 16
      %v4704 = vrot.slane %v4702, 5
      %v4705 = vsel %vm1117, %v4700, %v4704
      %v4706 = vshrl.u32 %v4456, 16
      %v4708 = vrot.slane %v4706, 4
      %v4709 = vor.u32 %v4708, %v4704
      %v4710 = vrot.slane %v4709, 4
      %v4712 = vshll.u32 %v4457, 16
      %v4714 = vrot.slane %v4712, 5
      %v4715 = vsel %vm1117, %v4710, %v4714
      %v4717 = vshrl.u32 %v4458, 16
      %v4719 = vrot.slane %v4717, 4
      %v4720 = vshll.u32 %v4458, 16
      %v4722 = vrot.slane %v4720, 5
      %v4723 = vor.u32 %v4719, %v4722
      %v4724 = vrot.slane %v4723, 4
      %v4726 = vshll.u32 %v4459, 16
      %v4728 = vrot.slane %v4726, 5
      %v4729 = vsel %vm1117, %v4724, %v4728
      %v4730 = vshrl.u32 %v4459, 16
      %v4732 = vrot.slane %v4730, 4
      %v4733 = vor.u32 %v4732, %v4728
      %v4734 = vrot.slane %v4733, 4
      %v4736 = vshll.u32 %v4460, 16
      %v4738 = vrot.slane %v4736, 5
      %v4739 = vsel %vm1117, %v4734, %v4738
      %v4741 = vshrl.u32 %v4461, 16
      %v4743 = vrot.slane %v4741, 4
      %v4744 = vshll.u32 %v4461, 16
      %v4746 = vrot.slane %v4744, 5
      %v4747 = vor.u32 %v4743, %v4746
      %v4748 = vrot.slane %v4747, 4
      %v4750 = vshll.u32 %v4462, 16
      %v4752 = vrot.slane %v4750, 5
      %v4753 = vsel %vm1117, %v4748, %v4752
      %v4754 = vshrl.u32 %v4462, 16
      %v4756 = vrot.slane %v4754, 4
      %v4757 = vor.u32 %v4756, %v4752
      %v4758 = vrot.slane %v4757, 4
      %v4760 = vshll.u32 %v4463, 16
      %v4762 = vrot.slane %v4760, 5
      %v4763 = vsel %vm1117, %v4758, %v4762
      %v4765 = vshrl.u32 %v4464, 16
      %v4767 = vrot.slane %v4765, 4
      %v4768 = vshll.u32 %v4464, 16
      %v4770 = vrot.slane %v4768, 5
      %v4771 = vor.u32 %v4767, %v4770
      %v4772 = vrot.slane %v4771, 4
      %v4774 = vshll.u32 %v4465, 16
      %v4776 = vrot.slane %v4774, 5
      %v4777 = vsel %vm1117, %v4772, %v4776
      %v4778 = vshrl.u32 %v4465, 16
      %v4780 = vrot.slane %v4778, 4
      %v4781 = vor.u32 %v4780, %v4776
      %v4782 = vrot.slane %v4781, 4
      %v4784 = vshll.u32 %v4466, 16
      %v4786 = vrot.slane %v4784, 5
      %v4787 = vsel %vm1117, %v4782, %v4786
      %v4789 = vshrl.u32 %v4467, 16
      %v4791 = vrot.slane %v4789, 4
      %v4792 = vshll.u32 %v4467, 16
      %v4794 = vrot.slane %v4792, 5
      %v4795 = vor.u32 %v4791, %v4794
      %v4796 = vrot.slane %v4795, 4
      %v4798 = vshll.u32 %v4468, 16
      %v4800 = vrot.slane %v4798, 5
      %v4801 = vsel %vm1117, %v4796, %v4800
      %v4802 = vshrl.u32 %v4468, 16
      %v4804 = vrot.slane %v4802, 4
      %v4805 = vor.u32 %v4804, %v4800
      %v4806 = vrot.slane %v4805, 4
      %v4808 = vshll.u32 %v4469, 16
      %v4810 = vrot.slane %v4808, 5
      %v4811 = vsel %vm1117, %v4806, %v4810
      %v4813 = vshrl.u32 %v4470, 16
      %v4815 = vrot.slane %v4813, 4
      %v4816 = vshll.u32 %v4470, 16
      %v4818 = vrot.slane %v4816, 5
      %v4819 = vor.u32 %v4815, %v4818
      %v4820 = vrot.slane %v4819, 4
      %v4822 = vshll.u32 %v4471, 16
      %v4824 = vrot.slane %v4822, 5
      %v4825 = vsel %vm1117, %v4820, %v4824
      %v4826 = vshrl.u32 %v4471, 16
      %v4828 = vrot.slane %v4826, 4
      %v4829 = vor.u32 %v4828, %v4824
      %v4830 = vrot.slane %v4829, 4
      %v4832 = vshll.u32 %v4472, 16
      %v4834 = vrot.slane %v4832, 5
      %v4835 = vsel %vm1117, %v4830, %v4834
      %v4837 = vshrl.u32 %v4473, 16
      %v4839 = vrot.slane %v4837, 4
      %v4840 = vshll.u32 %v4473, 16
      %v4842 = vrot.slane %v4840, 5
      %v4843 = vor.u32 %v4839, %v4842
      %v4844 = vrot.slane %v4843, 4
      %v4846 = vshll.u32 %v4474, 16
      %v4848 = vrot.slane %v4846, 5
      %v4849 = vsel %vm1117, %v4844, %v4848
      %v4850 = vshrl.u32 %v4474, 16
      %v4852 = vrot.slane %v4850, 4
      %v4853 = vor.u32 %v4852, %v4848
      %v4854 = vrot.slane %v4853, 4
      %v4856 = vshll.u32 %v4475, 16
      %v4858 = vrot.slane %v4856, 5
      %v4859 = vsel %vm1117, %v4854, %v4858
      %s4860 = scalar_lea.vmem %s3, 28
      %v4861 = vld [vmem:[%s4860] sm:$0xf]
      %v4862 = vunpack.c.l.b16 %v4489
      %v4863 = vunpack.c.l.b16 %v4499
      %v4864 = vunpack.c.l.b16 %v4513
      %v4865 = vunpack.c.l.b16 %v4523
      %v4866 = vunpack.c.l.b16 %v4537
      %v4867 = vunpack.c.l.b16 %v4547
      %v4868 = vunpack.c.l.b16 %v4561
      %v4869 = vunpack.c.l.b16 %v4571
      %v4870 = vunpack.c.l.b16 %v4585
      %v4871 = vunpack.c.l.b16 %v4595
      %v4872 = vunpack.c.l.b16 %v4609
      %v4873 = vunpack.c.l.b16 %v4619
      %v4874 = vunpack.c.l.b16 %v4633
      %v4875 = vunpack.c.l.b16 %v4643
      %v4876 = vunpack.c.l.b16 %v4657
      %v4877 = vunpack.c.l.b16 %v4667
      %v4878 = vunpack.c.l.b16 %v4681
      %v4879 = vunpack.c.l.b16 %v4691
      %v4880 = vunpack.c.l.b16 %v4705
      %v4881 = vunpack.c.l.b16 %v4715
      %v4882 = vunpack.c.l.b16 %v4729
      %v4883 = vunpack.c.l.b16 %v4739
      %v4884 = vunpack.c.l.b16 %v4753
      %v4885 = vunpack.c.l.b16 %v4763
      %v4886 = vunpack.c.l.b16 %v4777
      %v4887 = vunpack.c.l.b16 %v4787
      %v4888 = vunpack.c.l.b16 %v4801
      %v4889 = vunpack.c.l.b16 %v4811
      %v4890 = vunpack.c.l.b16 %v4825
      %v4891 = vunpack.c.l.b16 %v4835
      %v4892 = vunpack.c.l.b16 %v4849
      %v4893 = vunpack.c.l.b16 %v4859
      %v4894 = vpack.c.b16 %v4863, %v4862
      %v4895 = vpack.c.b16 %v4865, %v4864
      %v4896 = vpack.c.b16 %v4867, %v4866
      %v4897 = vpack.c.b16 %v4869, %v4868
      %v4898 = vpack.c.b16 %v4871, %v4870
      %v4899 = vpack.c.b16 %v4873, %v4872
      %v4900 = vpack.c.b16 %v4875, %v4874
      %v4901 = vpack.c.b16 %v4877, %v4876
      %v4902 = vpack.c.b16 %v4879, %v4878
      %v4903 = vpack.c.b16 %v4881, %v4880
      %v4904 = vpack.c.b16 %v4883, %v4882
      %v4905 = vpack.c.b16 %v4885, %v4884
      %v4906 = vpack.c.b16 %v4887, %v4886
      %v4907 = vpack.c.b16 %v4889, %v4888
      %v4908 = vpack.c.b16 %v4891, %v4890
      %v4909 = vpack.c.b16 %v4893, %v4892
      %v4911 = vsel %vm1552, %v4894, 0
      %v4914 = vsel %vm1552, %v4895, 0
      %v4917 = vsel %vm1552, %v4896, 0
      %v4920 = vsel %vm1552, %v4897, 0
      %v4923 = vsel %vm1552, %v4898, 0
      %v4926 = vsel %vm1552, %v4899, 0
      %v4929 = vsel %vm1552, %v4900, 0
      %v4932 = vsel %vm1552, %v4901, 0
      %v4935 = vsel %vm1552, %v4902, 0
      %v4938 = vsel %vm1552, %v4903, 0
      %v4941 = vsel %vm1552, %v4904, 0
      %v4944 = vsel %vm1552, %v4905, 0
      %v4947 = vsel %vm1552, %v4906, 0
      %v4950 = vsel %vm1552, %v4907, 0
      %v4953 = vsel %vm1552, %v4908, 0
      %v4956 = vsel %vm1552, %v4909, 0
      %v4959 = vsel %vm1601, %v4861, 0
      %4961 = vmatprep.subr.bf16.mxu0 0
      %4962 = vmatpush1.bf16.msra.mxu0 0
      %4963 = vmatprep.subr.bf16.mxu0 0
      %4964 = vmatpush1.bf16.msra.mxu0 0
      %4965 = vmatprep.subr.bf16.mxu0 0
      %4966 = vmatpush1.bf16.msra.mxu0 0
      %4967 = vmatprep.subr.bf16.mxu0 0
      %4968 = vmatpush1.bf16.msra.mxu0 0
      %4969 = vmatprep.subr.bf16.mxu0 0
      %4970 = vmatpush1.bf16.msra.mxu0 0
      %4971 = vmatprep.subr.bf16.mxu0 0
      %4972 = vmatpush1.bf16.msra.mxu0 0
      %4973 = vmatprep.subr.bf16.mxu0 0
      %4974 = vmatpush1.bf16.msra.mxu0 0
      %4975 = vmatprep.subr.bf16.mxu0 0
      %4976 = vmatpush1.bf16.msra.mxu0 %v4959
      %4977 = vmatprep.subr.bf16.mxu0 0
      %4978 = vmatpush2.bf16.msra.mxu0 0
      %4979 = vmatprep.subr.bf16.mxu0 0
      %4980 = vmatpush2.bf16.msra.mxu0 0
      %4981 = vmatprep.subr.bf16.mxu0 0
      %4982 = vmatpush2.bf16.msra.mxu0 0
      %4983 = vmatprep.subr.bf16.mxu0 0
      %4984 = vmatpush2.bf16.msra.mxu0 0
      %4985 = vmatprep.subr.bf16.mxu0 0
      %4986 = vmatpush2.bf16.msra.mxu0 0
      %4987 = vmatprep.subr.bf16.mxu0 0
      %4988 = vmatpush2.bf16.msra.mxu0 0
      %4989 = vmatprep.subr.bf16.mxu0 0
      %4990 = vmatpush2.bf16.msra.mxu0 0
      %4991 = vmatprep.subr.bf16.mxu0 0
      %4992 = vmatpush2.bf16.msra.mxu0 0
      %4993 = vmatprep.mubr.bf16.mxu0 0
      %4994 = vmatmul.mubr.bf16.gmra.mxu0 %v4911
      %v4995 = vpop.f32.mrf.mxu0
      %v4996 = vadd.f32 0.0, %v4995
      %v4997 = vpop.f32.mrf.mxu0
      %v4998 = vpop.f32.mrf.mxu0
      %v4999 = vadd.f32 0.0, %v4998
      %v5000 = vpop.f32.mrf.mxu0
      %5001 = vmatprep.mubr.bf16.mxu0 0
      %5002 = vmatmul.mubr.bf16.gmra.mxu0 %v4914
      %v5003 = vpop.f32.mrf.mxu0
      %v5004 = vadd.f32 0.0, %v5003
      %v5005 = vpop.f32.mrf.mxu0
      %v5006 = vpop.f32.mrf.mxu0
      %v5007 = vadd.f32 0.0, %v5006
      %v5008 = vpop.f32.mrf.mxu0
      %5009 = vmatprep.mubr.bf16.mxu0 0
      %5010 = vmatmul.mubr.bf16.gmra.mxu0 %v4917
      %v5011 = vpop.f32.mrf.mxu0
      %v5012 = vadd.f32 0.0, %v5011
      %v5013 = vpop.f32.mrf.mxu0
      %v5014 = vpop.f32.mrf.mxu0
      %v5015 = vadd.f32 0.0, %v5014
      %v5016 = vpop.f32.mrf.mxu0
      %5017 = vmatprep.mubr.bf16.mxu0 0
      %5018 = vmatmul.mubr.bf16.gmra.mxu0 %v4920
      %v5019 = vpop.f32.mrf.mxu0
      %v5020 = vadd.f32 0.0, %v5019
      %v5021 = vpop.f32.mrf.mxu0
      %v5022 = vpop.f32.mrf.mxu0
      %v5023 = vadd.f32 0.0, %v5022
      %v5024 = vpop.f32.mrf.mxu0
      %5025 = vmatprep.mubr.bf16.mxu0 0
      %5026 = vmatmul.mubr.bf16.gmra.mxu0 %v4923
      %v5027 = vpop.f32.mrf.mxu0
      %v5028 = vadd.f32 0.0, %v5027
      %v5029 = vpop.f32.mrf.mxu0
      %v5030 = vpop.f32.mrf.mxu0
      %v5031 = vadd.f32 0.0, %v5030
      %v5032 = vpop.f32.mrf.mxu0
      %5033 = vmatprep.mubr.bf16.mxu0 0
      %5034 = vmatmul.mubr.bf16.gmra.mxu0 %v4926
      %v5035 = vpop.f32.mrf.mxu0
      %v5036 = vadd.f32 0.0, %v5035
      %v5037 = vpop.f32.mrf.mxu0
      %v5038 = vpop.f32.mrf.mxu0
      %v5039 = vadd.f32 0.0, %v5038
      %v5040 = vpop.f32.mrf.mxu0
      %5041 = vmatprep.mubr.bf16.mxu0 0
      %5042 = vmatmul.mubr.bf16.gmra.mxu0 %v4929
      %v5043 = vpop.f32.mrf.mxu0
      %v5044 = vadd.f32 0.0, %v5043
      %v5045 = vpop.f32.mrf.mxu0
      %v5046 = vpop.f32.mrf.mxu0
      %v5047 = vadd.f32 0.0, %v5046
      %v5048 = vpop.f32.mrf.mxu0
      %5049 = vmatprep.mubr.bf16.mxu0 0
      %5050 = vmatmul.mubr.bf16.gmra.mxu0 %v4932
      %v5051 = vpop.f32.mrf.mxu0
      %v5052 = vadd.f32 0.0, %v5051
      %v5053 = vpop.f32.mrf.mxu0
      %v5054 = vpop.f32.mrf.mxu0
      %v5055 = vadd.f32 0.0, %v5054
      %v5056 = vpop.f32.mrf.mxu0
      %5057 = vmatprep.mubr.bf16.mxu0 0
      %5058 = vmatmul.mubr.bf16.gmra.mxu0 %v4935
      %v5059 = vpop.f32.mrf.mxu0
      %v5060 = vadd.f32 0.0, %v5059
      %v5061 = vpop.f32.mrf.mxu0
      %v5062 = vpop.f32.mrf.mxu0
      %v5063 = vadd.f32 0.0, %v5062
      %v5064 = vpop.f32.mrf.mxu0
      %5065 = vmatprep.mubr.bf16.mxu0 0
      %5066 = vmatmul.mubr.bf16.gmra.mxu0 %v4938
      %v5067 = vpop.f32.mrf.mxu0
      %v5068 = vadd.f32 0.0, %v5067
      %v5069 = vpop.f32.mrf.mxu0
      %v5070 = vpop.f32.mrf.mxu0
      %v5071 = vadd.f32 0.0, %v5070
      %v5072 = vpop.f32.mrf.mxu0
      %5073 = vmatprep.mubr.bf16.mxu0 0
      %5074 = vmatmul.mubr.bf16.gmra.mxu0 %v4941
      %v5075 = vpop.f32.mrf.mxu0
      %v5076 = vadd.f32 0.0, %v5075
      %v5077 = vpop.f32.mrf.mxu0
      %v5078 = vpop.f32.mrf.mxu0
      %v5079 = vadd.f32 0.0, %v5078
      %v5080 = vpop.f32.mrf.mxu0
      %5081 = vmatprep.mubr.bf16.mxu0 0
      %5082 = vmatmul.mubr.bf16.gmra.mxu0 %v4944
      %v5083 = vpop.f32.mrf.mxu0
      %v5084 = vadd.f32 0.0, %v5083
      %v5085 = vpop.f32.mrf.mxu0
      %v5086 = vpop.f32.mrf.mxu0
      %v5087 = vadd.f32 0.0, %v5086
      %v5088 = vpop.f32.mrf.mxu0
      %5089 = vmatprep.mubr.bf16.mxu0 0
      %5090 = vmatmul.mubr.bf16.gmra.mxu0 %v4947
      %v5091 = vpop.f32.mrf.mxu0
      %v5092 = vadd.f32 0.0, %v5091
      %v5093 = vpop.f32.mrf.mxu0
      %v5094 = vpop.f32.mrf.mxu0
      %v5095 = vadd.f32 0.0, %v5094
      %v5096 = vpop.f32.mrf.mxu0
      %5097 = vmatprep.mubr.bf16.mxu0 0
      %5098 = vmatmul.mubr.bf16.gmra.mxu0 %v4950
      %v5099 = vpop.f32.mrf.mxu0
      %v5100 = vadd.f32 0.0, %v5099
      %v5101 = vpop.f32.mrf.mxu0
      %v5102 = vpop.f32.mrf.mxu0
      %v5103 = vadd.f32 0.0, %v5102
      %v5104 = vpop.f32.mrf.mxu0
      %5105 = vmatprep.mubr.bf16.mxu0 0
      %5106 = vmatmul.mubr.bf16.gmra.mxu0 %v4953
      %v5107 = vpop.f32.mrf.mxu0
      %v5108 = vadd.f32 0.0, %v5107
      %v5109 = vpop.f32.mrf.mxu0
      %v5110 = vpop.f32.mrf.mxu0
      %v5111 = vadd.f32 0.0, %v5110
      %v5112 = vpop.f32.mrf.mxu0
      %5113 = vmatprep.mubr.bf16.mxu0 0
      %5114 = vmatmul.mubr.bf16.gmra.mxu0 %v4956
      %v5115 = vpop.f32.mrf.mxu0
      %v5116 = vadd.f32 0.0, %v5115
      %v5117 = vpop.f32.mrf.mxu0
      %v5118 = vpop.f32.mrf.mxu0
      %v5119 = vadd.f32 0.0, %v5118
      %v5120 = vpop.f32.mrf.mxu0
      %5121 = vdwg.mxu0
      %v5122 = vadd.f32 %v4396, %v4996
      %v5123 = vadd.f32 %v4397, %v4999
      %v5124 = vadd.f32 %v4398, %v5004
      %v5125 = vadd.f32 %v4399, %v5007
      %v5126 = vadd.f32 %v4400, %v5012
      %v5127 = vadd.f32 %v4401, %v5015
      %v5128 = vadd.f32 %v4402, %v5020
      %v5129 = vadd.f32 %v4403, %v5023
      %v5130 = vadd.f32 %v4404, %v5028
      %v5131 = vadd.f32 %v4405, %v5031
      %v5132 = vadd.f32 %v4406, %v5036
      %v5133 = vadd.f32 %v4407, %v5039
      %v5134 = vadd.f32 %v4408, %v5044
      %v5135 = vadd.f32 %v4409, %v5047
      %v5136 = vadd.f32 %v4410, %v5052
      %v5137 = vadd.f32 %v4411, %v5055
      %v5138 = vadd.f32 %v4412, %v5060
      %v5139 = vadd.f32 %v4413, %v5063
      %v5140 = vadd.f32 %v4414, %v5068
      %v5141 = vadd.f32 %v4415, %v5071
      %v5142 = vadd.f32 %v4416, %v5076
      %v5143 = vadd.f32 %v4417, %v5079
      %v5144 = vadd.f32 %v4418, %v5084
      %v5145 = vadd.f32 %v4419, %v5087
      %v5146 = vadd.f32 %v4420, %v5092
      %v5147 = vadd.f32 %v4421, %v5095
      %v5148 = vadd.f32 %v4422, %v5100
      %v5149 = vadd.f32 %v4423, %v5103
      %v5150 = vadd.f32 %v4424, %v5108
      %v5151 = vadd.f32 %v4425, %v5111
      %v5152 = vadd.f32 %v4426, %v5116
      %v5153 = vadd.f32 %v4427, %v5119
      %v5154 = vld [vmem:[%s4069] sm:$0xe]
      %v5155 = vld [vmem:[%s4069 + $0xc] sm:$0xe]
      %v5156 = vld [vmem:[%s4069 + $0x18] sm:$0xe]
      %v5157 = vld [vmem:[%s4069 + $0x24] sm:$0xe]
      %v5158 = vld [vmem:[%s4069 + $0x30] sm:$0xe]
      %v5159 = vld [vmem:[%s4069 + $0x3c] sm:$0xe]
      %v5160 = vld [vmem:[%s4069 + $0x48] sm:$0xe]
      %v5161 = vld [vmem:[%s4069 + $0x54] sm:$0xe]
      %v5162 = vld [vmem:[%s4069 + $0x60] sm:$0xe]
      %v5163 = vld [vmem:[%s4069 + $0x6c] sm:$0xe]
      %v5164 = vld [vmem:[%s4069 + $0x78] sm:$0xe]
      %v5165 = vld [vmem:[%s4069 + $0x84] sm:$0xe]
      %v5166 = vld [vmem:[%s4069 + $0x90] sm:$0xe]
      %v5167 = vld [vmem:[%s4069 + $0x9c] sm:$0xe]
      %v5168 = vld [vmem:[%s4069 + $0xa8] sm:$0xe]
      %v5169 = vld [vmem:[%s4069 + $0xb4] sm:$0xe]
      %v5218 = vrot.slane %v5154, 5
      %v5219 = vrot.slane %v5218, 4
      %v5220 = vrot.slane %v4429, 5
      %v5221 = vsel %vm2108, %v5219, %v5220
      %v5222 = vrot.slane %v5220, 4
      %v5223 = vrot.slane %v4430, 5
      %v5224 = vsel %vm2108, %v5222, %v5223
      %v5225 = vrot.slane %v5155, 5
      %v5226 = vrot.slane %v5225, 4
      %v5227 = vrot.slane %v4432, 5
      %v5228 = vsel %vm2108, %v5226, %v5227
      %v5229 = vrot.slane %v5227, 4
      %v5230 = vrot.slane %v4433, 5
      %v5231 = vsel %vm2108, %v5229, %v5230
      %v5232 = vrot.slane %v5156, 5
      %v5233 = vrot.slane %v5232, 4
      %v5234 = vrot.slane %v4435, 5
      %v5235 = vsel %vm2108, %v5233, %v5234
      %v5236 = vrot.slane %v5234, 4
      %v5237 = vrot.slane %v4436, 5
      %v5238 = vsel %vm2108, %v5236, %v5237
      %v5239 = vrot.slane %v5157, 5
      %v5240 = vrot.slane %v5239, 4
      %v5241 = vrot.slane %v4438, 5
      %v5242 = vsel %vm2108, %v5240, %v5241
      %v5243 = vrot.slane %v5241, 4
      %v5244 = vrot.slane %v4439, 5
      %v5245 = vsel %vm2108, %v5243, %v5244
      %v5246 = vrot.slane %v5158, 5
      %v5247 = vrot.slane %v5246, 4
      %v5248 = vrot.slane %v4441, 5
      %v5249 = vsel %vm2108, %v5247, %v5248
      %v5250 = vrot.slane %v5248, 4
      %v5251 = vrot.slane %v4442, 5
      %v5252 = vsel %vm2108, %v5250, %v5251
      %v5253 = vrot.slane %v5159, 5
      %v5254 = vrot.slane %v5253, 4
      %v5255 = vrot.slane %v4444, 5
      %v5256 = vsel %vm2108, %v5254, %v5255
      %v5257 = vrot.slane %v5255, 4
      %v5258 = vrot.slane %v4445, 5
      %v5259 = vsel %vm2108, %v5257, %v5258
      %v5260 = vrot.slane %v5160, 5
      %v5261 = vrot.slane %v5260, 4
      %v5262 = vrot.slane %v4447, 5
      %v5263 = vsel %vm2108, %v5261, %v5262
      %v5264 = vrot.slane %v5262, 4
      %v5265 = vrot.slane %v4448, 5
      %v5266 = vsel %vm2108, %v5264, %v5265
      %v5267 = vrot.slane %v5161, 5
      %v5268 = vrot.slane %v5267, 4
      %v5269 = vrot.slane %v4450, 5
      %v5270 = vsel %vm2108, %v5268, %v5269
      %v5271 = vrot.slane %v5269, 4
      %v5272 = vrot.slane %v4451, 5
      %v5273 = vsel %vm2108, %v5271, %v5272
      %v5274 = vrot.slane %v5162, 5
      %v5275 = vrot.slane %v5274, 4
      %v5276 = vrot.slane %v4453, 5
      %v5277 = vsel %vm2108, %v5275, %v5276
      %v5278 = vrot.slane %v5276, 4
      %v5279 = vrot.slane %v4454, 5
      %v5280 = vsel %vm2108, %v5278, %v5279
      %v5281 = vrot.slane %v5163, 5
      %v5282 = vrot.slane %v5281, 4
      %v5283 = vrot.slane %v4456, 5
      %v5284 = vsel %vm2108, %v5282, %v5283
      %v5285 = vrot.slane %v5283, 4
      %v5286 = vrot.slane %v4457, 5
      %v5287 = vsel %vm2108, %v5285, %v5286
      %v5288 = vrot.slane %v5164, 5
      %v5289 = vrot.slane %v5288, 4
      %v5290 = vrot.slane %v4459, 5
      %v5291 = vsel %vm2108, %v5289, %v5290
      %v5292 = vrot.slane %v5290, 4
      %v5293 = vrot.slane %v4460, 5
      %v5294 = vsel %vm2108, %v5292, %v5293
      %v5295 = vrot.slane %v5165, 5
      %v5296 = vrot.slane %v5295, 4
      %v5297 = vrot.slane %v4462, 5
      %v5298 = vsel %vm2108, %v5296, %v5297
      %v5299 = vrot.slane %v5297, 4
      %v5300 = vrot.slane %v4463, 5
      %v5301 = vsel %vm2108, %v5299, %v5300
      %v5302 = vrot.slane %v5166, 5
      %v5303 = vrot.slane %v5302, 4
      %v5304 = vrot.slane %v4465, 5
      %v5305 = vsel %vm2108, %v5303, %v5304
      %v5306 = vrot.slane %v5304, 4
      %v5307 = vrot.slane %v4466, 5
      %v5308 = vsel %vm2108, %v5306, %v5307
      %v5309 = vrot.slane %v5167, 5
      %v5310 = vrot.slane %v5309, 4
      %v5311 = vrot.slane %v4468, 5
      %v5312 = vsel %vm2108, %v5310, %v5311
      %v5313 = vrot.slane %v5311, 4
      %v5314 = vrot.slane %v4469, 5
      %v5315 = vsel %vm2108, %v5313, %v5314
      %v5316 = vrot.slane %v5168, 5
      %v5317 = vrot.slane %v5316, 4
      %v5318 = vrot.slane %v4471, 5
      %v5319 = vsel %vm2108, %v5317, %v5318
      %v5320 = vrot.slane %v5318, 4
      %v5321 = vrot.slane %v4472, 5
      %v5322 = vsel %vm2108, %v5320, %v5321
      %v5323 = vrot.slane %v5169, 5
      %v5324 = vrot.slane %v5323, 4
      %v5325 = vrot.slane %v4474, 5
      %v5326 = vsel %vm2108, %v5324, %v5325
      %v5327 = vrot.slane %v5325, 4
      %v5328 = vrot.slane %v4475, 5
      %v5329 = vsel %vm2108, %v5327, %v5328
      %s5330 = scalar_lea.vmem %s3, 32
      %v5331 = vld [vmem:[%s5330] sm:$0xf]
      %v5332 = vunpack.c.l.b16 %v5221
      %v5333 = vunpack.c.l.b16 %v5224
      %v5334 = vunpack.c.l.b16 %v5228
      %v5335 = vunpack.c.l.b16 %v5231
      %v5336 = vunpack.c.l.b16 %v5235
      %v5337 = vunpack.c.l.b16 %v5238
      %v5338 = vunpack.c.l.b16 %v5242
      %v5339 = vunpack.c.l.b16 %v5245
      %v5340 = vunpack.c.l.b16 %v5249
      %v5341 = vunpack.c.l.b16 %v5252
      %v5342 = vunpack.c.l.b16 %v5256
      %v5343 = vunpack.c.l.b16 %v5259
      %v5344 = vunpack.c.l.b16 %v5263
      %v5345 = vunpack.c.l.b16 %v5266
      %v5346 = vunpack.c.l.b16 %v5270
      %v5347 = vunpack.c.l.b16 %v5273
      %v5348 = vunpack.c.l.b16 %v5277
      %v5349 = vunpack.c.l.b16 %v5280
      %v5350 = vunpack.c.l.b16 %v5284
      %v5351 = vunpack.c.l.b16 %v5287
      %v5352 = vunpack.c.l.b16 %v5291
      %v5353 = vunpack.c.l.b16 %v5294
      %v5354 = vunpack.c.l.b16 %v5298
      %v5355 = vunpack.c.l.b16 %v5301
      %v5356 = vunpack.c.l.b16 %v5305
      %v5357 = vunpack.c.l.b16 %v5308
      %v5358 = vunpack.c.l.b16 %v5312
      %v5359 = vunpack.c.l.b16 %v5315
      %v5360 = vunpack.c.l.b16 %v5319
      %v5361 = vunpack.c.l.b16 %v5322
      %v5362 = vunpack.c.l.b16 %v5326
      %v5363 = vunpack.c.l.b16 %v5329
      %v5364 = vpack.c.b16 %v5333, %v5332
      %v5365 = vpack.c.b16 %v5335, %v5334
      %v5366 = vpack.c.b16 %v5337, %v5336
      %v5367 = vpack.c.b16 %v5339, %v5338
      %v5368 = vpack.c.b16 %v5341, %v5340
      %v5369 = vpack.c.b16 %v5343, %v5342
      %v5370 = vpack.c.b16 %v5345, %v5344
      %v5371 = vpack.c.b16 %v5347, %v5346
      %v5372 = vpack.c.b16 %v5349, %v5348
      %v5373 = vpack.c.b16 %v5351, %v5350
      %v5374 = vpack.c.b16 %v5353, %v5352
      %v5375 = vpack.c.b16 %v5355, %v5354
      %v5376 = vpack.c.b16 %v5357, %v5356
      %v5377 = vpack.c.b16 %v5359, %v5358
      %v5378 = vpack.c.b16 %v5361, %v5360
      %v5379 = vpack.c.b16 %v5363, %v5362
      %v5381 = vsel %vm1552, %v5364, 0
      %v5384 = vsel %vm1552, %v5365, 0
      %v5387 = vsel %vm1552, %v5366, 0
      %v5390 = vsel %vm1552, %v5367, 0
      %v5393 = vsel %vm1552, %v5368, 0
      %v5396 = vsel %vm1552, %v5369, 0
      %v5399 = vsel %vm1552, %v5370, 0
      %v5402 = vsel %vm1552, %v5371, 0
      %v5405 = vsel %vm1552, %v5372, 0
      %v5408 = vsel %vm1552, %v5373, 0
      %v5411 = vsel %vm1552, %v5374, 0
      %v5414 = vsel %vm1552, %v5375, 0
      %v5417 = vsel %vm1552, %v5376, 0
      %v5420 = vsel %vm1552, %v5377, 0
      %v5423 = vsel %vm1552, %v5378, 0
      %v5426 = vsel %vm1552, %v5379, 0
      %v5429 = vsel %vm1601, %v5331, 0
      %5431 = vmatprep.subr.bf16.mxu0 0
      %5432 = vmatpush1.bf16.msra.mxu0 0
      %5433 = vmatprep.subr.bf16.mxu0 0
      %5434 = vmatpush1.bf16.msra.mxu0 0
      %5435 = vmatprep.subr.bf16.mxu0 0
      %5436 = vmatpush1.bf16.msra.mxu0 0
      %5437 = vmatprep.subr.bf16.mxu0 0
      %5438 = vmatpush1.bf16.msra.mxu0 0
      %5439 = vmatprep.subr.bf16.mxu0 0
      %5440 = vmatpush1.bf16.msra.mxu0 0
      %5441 = vmatprep.subr.bf16.mxu0 0
      %5442 = vmatpush1.bf16.msra.mxu0 0
      %5443 = vmatprep.subr.bf16.mxu0 0
      %5444 = vmatpush1.bf16.msra.mxu0 0
      %5445 = vmatprep.subr.bf16.mxu0 0
      %5446 = vmatpush1.bf16.msra.mxu0 %v5429
      %5447 = vmatprep.subr.bf16.mxu0 0
      %5448 = vmatpush2.bf16.msra.mxu0 0
      %5449 = vmatprep.subr.bf16.mxu0 0
      %5450 = vmatpush2.bf16.msra.mxu0 0
      %5451 = vmatprep.subr.bf16.mxu0 0
      %5452 = vmatpush2.bf16.msra.mxu0 0
      %5453 = vmatprep.subr.bf16.mxu0 0
      %5454 = vmatpush2.bf16.msra.mxu0 0
      %5455 = vmatprep.subr.bf16.mxu0 0
      %5456 = vmatpush2.bf16.msra.mxu0 0
      %5457 = vmatprep.subr.bf16.mxu0 0
      %5458 = vmatpush2.bf16.msra.mxu0 0
      %5459 = vmatprep.subr.bf16.mxu0 0
      %5460 = vmatpush2.bf16.msra.mxu0 0
      %5461 = vmatprep.subr.bf16.mxu0 0
      %5462 = vmatpush2.bf16.msra.mxu0 0
      %5463 = vmatprep.mubr.bf16.mxu0 0
      %5464 = vmatmul.mubr.bf16.gmra.mxu0 %v5381
      %v5465 = vpop.f32.mrf.mxu0
      %v5466 = vadd.f32 0.0, %v5465
      %v5467 = vpop.f32.mrf.mxu0
      %v5468 = vpop.f32.mrf.mxu0
      %v5469 = vadd.f32 0.0, %v5468
      %v5470 = vpop.f32.mrf.mxu0
      %5471 = vmatprep.mubr.bf16.mxu0 0
      %5472 = vmatmul.mubr.bf16.gmra.mxu0 %v5384
      %v5473 = vpop.f32.mrf.mxu0
      %v5474 = vadd.f32 0.0, %v5473
      %v5475 = vpop.f32.mrf.mxu0
      %v5476 = vpop.f32.mrf.mxu0
      %v5477 = vadd.f32 0.0, %v5476
      %v5478 = vpop.f32.mrf.mxu0
      %5479 = vmatprep.mubr.bf16.mxu0 0
      %5480 = vmatmul.mubr.bf16.gmra.mxu0 %v5387
      %v5481 = vpop.f32.mrf.mxu0
      %v5482 = vadd.f32 0.0, %v5481
      %v5483 = vpop.f32.mrf.mxu0
      %v5484 = vpop.f32.mrf.mxu0
      %v5485 = vadd.f32 0.0, %v5484
      %v5486 = vpop.f32.mrf.mxu0
      %5487 = vmatprep.mubr.bf16.mxu0 0
      %5488 = vmatmul.mubr.bf16.gmra.mxu0 %v5390
      %v5489 = vpop.f32.mrf.mxu0
      %v5490 = vadd.f32 0.0, %v5489
      %v5491 = vpop.f32.mrf.mxu0
      %v5492 = vpop.f32.mrf.mxu0
      %v5493 = vadd.f32 0.0, %v5492
      %v5494 = vpop.f32.mrf.mxu0
      %5495 = vmatprep.mubr.bf16.mxu0 0
      %5496 = vmatmul.mubr.bf16.gmra.mxu0 %v5393
      %v5497 = vpop.f32.mrf.mxu0
      %v5498 = vadd.f32 0.0, %v5497
      %v5499 = vpop.f32.mrf.mxu0
      %v5500 = vpop.f32.mrf.mxu0
      %v5501 = vadd.f32 0.0, %v5500
      %v5502 = vpop.f32.mrf.mxu0
      %5503 = vmatprep.mubr.bf16.mxu0 0
      %5504 = vmatmul.mubr.bf16.gmra.mxu0 %v5396
      %v5505 = vpop.f32.mrf.mxu0
      %v5506 = vadd.f32 0.0, %v5505
      %v5507 = vpop.f32.mrf.mxu0
      %v5508 = vpop.f32.mrf.mxu0
      %v5509 = vadd.f32 0.0, %v5508
      %v5510 = vpop.f32.mrf.mxu0
      %5511 = vmatprep.mubr.bf16.mxu0 0
      %5512 = vmatmul.mubr.bf16.gmra.mxu0 %v5399
      %v5513 = vpop.f32.mrf.mxu0
      %v5514 = vadd.f32 0.0, %v5513
      %v5515 = vpop.f32.mrf.mxu0
      %v5516 = vpop.f32.mrf.mxu0
      %v5517 = vadd.f32 0.0, %v5516
      %v5518 = vpop.f32.mrf.mxu0
      %5519 = vmatprep.mubr.bf16.mxu0 0
      %5520 = vmatmul.mubr.bf16.gmra.mxu0 %v5402
      %v5521 = vpop.f32.mrf.mxu0
      %v5522 = vadd.f32 0.0, %v5521
      %v5523 = vpop.f32.mrf.mxu0
      %v5524 = vpop.f32.mrf.mxu0
      %v5525 = vadd.f32 0.0, %v5524
      %v5526 = vpop.f32.mrf.mxu0
      %5527 = vmatprep.mubr.bf16.mxu0 0
      %5528 = vmatmul.mubr.bf16.gmra.mxu0 %v5405
      %v5529 = vpop.f32.mrf.mxu0
      %v5530 = vadd.f32 0.0, %v5529
      %v5531 = vpop.f32.mrf.mxu0
      %v5532 = vpop.f32.mrf.mxu0
      %v5533 = vadd.f32 0.0, %v5532
      %v5534 = vpop.f32.mrf.mxu0
      %5535 = vmatprep.mubr.bf16.mxu0 0
      %5536 = vmatmul.mubr.bf16.gmra.mxu0 %v5408
      %v5537 = vpop.f32.mrf.mxu0
      %v5538 = vadd.f32 0.0, %v5537
      %v5539 = vpop.f32.mrf.mxu0
      %v5540 = vpop.f32.mrf.mxu0
      %v5541 = vadd.f32 0.0, %v5540
      %v5542 = vpop.f32.mrf.mxu0
      %5543 = vmatprep.mubr.bf16.mxu0 0
      %5544 = vmatmul.mubr.bf16.gmra.mxu0 %v5411
      %v5545 = vpop.f32.mrf.mxu0
      %v5546 = vadd.f32 0.0, %v5545
      %v5547 = vpop.f32.mrf.mxu0
      %v5548 = vpop.f32.mrf.mxu0
      %v5549 = vadd.f32 0.0, %v5548
      %v5550 = vpop.f32.mrf.mxu0
      %5551 = vmatprep.mubr.bf16.mxu0 0
      %5552 = vmatmul.mubr.bf16.gmra.mxu0 %v5414
      %v5553 = vpop.f32.mrf.mxu0
      %v5554 = vadd.f32 0.0, %v5553
      %v5555 = vpop.f32.mrf.mxu0
      %v5556 = vpop.f32.mrf.mxu0
      %v5557 = vadd.f32 0.0, %v5556
      %v5558 = vpop.f32.mrf.mxu0
      %5559 = vmatprep.mubr.bf16.mxu0 0
      %5560 = vmatmul.mubr.bf16.gmra.mxu0 %v5417
      %v5561 = vpop.f32.mrf.mxu0
      %v5562 = vadd.f32 0.0, %v5561
      %v5563 = vpop.f32.mrf.mxu0
      %v5564 = vpop.f32.mrf.mxu0
      %v5565 = vadd.f32 0.0, %v5564
      %v5566 = vpop.f32.mrf.mxu0
      %5567 = vmatprep.mubr.bf16.mxu0 0
      %5568 = vmatmul.mubr.bf16.gmra.mxu0 %v5420
      %v5569 = vpop.f32.mrf.mxu0
      %v5570 = vadd.f32 0.0, %v5569
      %v5571 = vpop.f32.mrf.mxu0
      %v5572 = vpop.f32.mrf.mxu0
      %v5573 = vadd.f32 0.0, %v5572
      %v5574 = vpop.f32.mrf.mxu0
      %5575 = vmatprep.mubr.bf16.mxu0 0
      %5576 = vmatmul.mubr.bf16.gmra.mxu0 %v5423
      %v5577 = vpop.f32.mrf.mxu0
      %v5578 = vadd.f32 0.0, %v5577
      %v5579 = vpop.f32.mrf.mxu0
      %v5580 = vpop.f32.mrf.mxu0
      %v5581 = vadd.f32 0.0, %v5580
      %v5582 = vpop.f32.mrf.mxu0
      %5583 = vmatprep.mubr.bf16.mxu0 0
      %5584 = vmatmul.mubr.bf16.gmra.mxu0 %v5426
      %v5585 = vpop.f32.mrf.mxu0
      %v5586 = vadd.f32 0.0, %v5585
      %v5587 = vpop.f32.mrf.mxu0
      %v5588 = vpop.f32.mrf.mxu0
      %v5589 = vadd.f32 0.0, %v5588
      %v5590 = vpop.f32.mrf.mxu0
      %5591 = vdwg.mxu0
      %v5592 = vadd.f32 %v5122, %v5466
      %v5593 = vadd.f32 %v5123, %v5469
      %v5594 = vadd.f32 %v5124, %v5474
      %v5595 = vadd.f32 %v5125, %v5477
      %v5596 = vadd.f32 %v5126, %v5482
      %v5597 = vadd.f32 %v5127, %v5485
      %v5598 = vadd.f32 %v5128, %v5490
      %v5599 = vadd.f32 %v5129, %v5493
      %v5600 = vadd.f32 %v5130, %v5498
      %v5601 = vadd.f32 %v5131, %v5501
      %v5602 = vadd.f32 %v5132, %v5506
      %v5603 = vadd.f32 %v5133, %v5509
      %v5604 = vadd.f32 %v5134, %v5514
      %v5605 = vadd.f32 %v5135, %v5517
      %v5606 = vadd.f32 %v5136, %v5522
      %v5607 = vadd.f32 %v5137, %v5525
      %v5608 = vadd.f32 %v5138, %v5530
      %v5609 = vadd.f32 %v5139, %v5533
      %v5610 = vadd.f32 %v5140, %v5538
      %v5611 = vadd.f32 %v5141, %v5541
      %v5612 = vadd.f32 %v5142, %v5546
      %v5613 = vadd.f32 %v5143, %v5549
      %v5614 = vadd.f32 %v5144, %v5554
      %v5615 = vadd.f32 %v5145, %v5557
      %v5616 = vadd.f32 %v5146, %v5562
      %v5617 = vadd.f32 %v5147, %v5565
      %v5618 = vadd.f32 %v5148, %v5570
      %v5619 = vadd.f32 %v5149, %v5573
      %v5620 = vadd.f32 %v5150, %v5578
      %v5621 = vadd.f32 %v5151, %v5581
      %v5622 = vadd.f32 %v5152, %v5586
      %v5623 = vadd.f32 %v5153, %v5589
      %v5624 = vpack.c.bf16 %v5593, %v5592
      %v5625 = vpack.c.bf16 %v5595, %v5594
      %v5626 = vpack.c.bf16 %v5597, %v5596
      %v5627 = vpack.c.bf16 %v5599, %v5598
      %v5628 = vpack.c.bf16 %v5601, %v5600
      %v5629 = vpack.c.bf16 %v5603, %v5602
      %v5630 = vpack.c.bf16 %v5605, %v5604
      %v5631 = vpack.c.bf16 %v5607, %v5606
      %v5632 = vpack.c.bf16 %v5609, %v5608
      %v5633 = vpack.c.bf16 %v5611, %v5610
      %v5634 = vpack.c.bf16 %v5613, %v5612
      %v5635 = vpack.c.bf16 %v5615, %v5614
      %v5636 = vpack.c.bf16 %v5617, %v5616
      %v5637 = vpack.c.bf16 %v5619, %v5618
      %v5638 = vpack.c.bf16 %v5621, %v5620
      %v5639 = vpack.c.bf16 %v5623, %v5622
      %v5656 = vunpack.c.l.b16 %v5624
      %v5657 = vunpack.c.h.b16 %v5624
      %v5658 = vunpack.c.l.b16 %v5625
      %v5659 = vunpack.c.h.b16 %v5625
      %v5660 = vunpack.c.l.b16 %v5626
      %v5661 = vunpack.c.h.b16 %v5626
      %v5662 = vunpack.c.l.b16 %v5627
      %v5663 = vunpack.c.h.b16 %v5627
      %v5664 = vunpack.c.l.b16 %v5628
      %v5665 = vunpack.c.h.b16 %v5628
      %v5666 = vunpack.c.l.b16 %v5629
      %v5667 = vunpack.c.h.b16 %v5629
      %v5668 = vunpack.c.l.b16 %v5630
      %v5669 = vunpack.c.h.b16 %v5630
      %v5670 = vunpack.c.l.b16 %v5631
      %v5671 = vunpack.c.h.b16 %v5631
      %v5672 = vunpack.c.l.b16 %v5632
      %v5673 = vunpack.c.h.b16 %v5632
      %v5674 = vunpack.c.l.b16 %v5633
      %v5675 = vunpack.c.h.b16 %v5633
      %v5676 = vunpack.c.l.b16 %v5634
      %v5677 = vunpack.c.h.b16 %v5634
      %v5678 = vunpack.c.l.b16 %v5635
      %v5679 = vunpack.c.h.b16 %v5635
      %v5680 = vunpack.c.l.b16 %v5636
      %v5681 = vunpack.c.h.b16 %v5636
      %v5682 = vunpack.c.l.b16 %v5637
      %v5683 = vunpack.c.h.b16 %v5637
      %v5684 = vunpack.c.l.b16 %v5638
      %v5685 = vunpack.c.h.b16 %v5638
      %v5686 = vunpack.c.l.b16 %v5639
      %v5687 = vunpack.c.h.b16 %v5639
      %v5688 = vpack.c.b16 %v5656, %v5656
      %v5689 = vpack.c.b16 %v5657, %v5657
      %v5690 = vpack.c.b16 %v5658, %v5658
      %v5691 = vpack.c.b16 %v5659, %v5659
      %v5692 = vpack.c.b16 %v5660, %v5660
      %v5693 = vpack.c.b16 %v5661, %v5661
      %v5694 = vpack.c.b16 %v5662, %v5662
      %v5695 = vpack.c.b16 %v5663, %v5663
      %v5696 = vpack.c.b16 %v5664, %v5664
      %v5697 = vpack.c.b16 %v5665, %v5665
      %v5698 = vpack.c.b16 %v5666, %v5666
      %v5699 = vpack.c.b16 %v5667, %v5667
      %v5700 = vpack.c.b16 %v5668, %v5668
      %v5701 = vpack.c.b16 %v5669, %v5669
      %v5702 = vpack.c.b16 %v5670, %v5670
      %v5703 = vpack.c.b16 %v5671, %v5671
      %v5704 = vpack.c.b16 %v5672, %v5672
      %v5705 = vpack.c.b16 %v5673, %v5673
      %v5706 = vpack.c.b16 %v5674, %v5674
      %v5707 = vpack.c.b16 %v5675, %v5675
      %v5708 = vpack.c.b16 %v5676, %v5676
      %v5709 = vpack.c.b16 %v5677, %v5677
      %v5710 = vpack.c.b16 %v5678, %v5678
      %v5711 = vpack.c.b16 %v5679, %v5679
      %v5712 = vpack.c.b16 %v5680, %v5680
      %v5713 = vpack.c.b16 %v5681, %v5681
      %v5714 = vpack.c.b16 %v5682, %v5682
      %v5715 = vpack.c.b16 %v5683, %v5683
      %v5716 = vpack.c.b16 %v5684, %v5684
      %v5717 = vpack.c.b16 %v5685, %v5685
      %v5718 = vpack.c.b16 %v5686, %v5686
      %v5719 = vpack.c.b16 %v5687, %v5687
      %5752 = vst.msk [vmem:[%s231] sm:$0xf] %vm237, %v5688
      %5753 = vst.msk [vmem:[%s231 + $0x4] sm:$0xf] %vm237, %v5689
      %5754 = vst.msk [vmem:[%s231 + $0x8] sm:$0xf] %vm237, %v5690
      %5755 = vst.msk [vmem:[%s231 + $0xc] sm:$0xf] %vm237, %v5691
      %5756 = vst.msk [vmem:[%s231 + $0x10] sm:$0xf] %vm237, %v5692
      %5757 = vst.msk [vmem:[%s231 + $0x14] sm:$0xf] %vm237, %v5693
      %5758 = vst.msk [vmem:[%s231 + $0x18] sm:$0xf] %vm237, %v5694
      %5759 = vst.msk [vmem:[%s231 + $0x1c] sm:$0xf] %vm237, %v5695
      %5760 = vst.msk [vmem:[%s231 + $0x20] sm:$0xf] %vm237, %v5696
      %5761 = vst.msk [vmem:[%s231 + $0x24] sm:$0xf] %vm237, %v5697
      %5762 = vst.msk [vmem:[%s231 + $0x28] sm:$0xf] %vm237, %v5698
      %5763 = vst.msk [vmem:[%s231 + $0x2c] sm:$0xf] %vm237, %v5699
      %5764 = vst.msk [vmem:[%s231 + $0x30] sm:$0xf] %vm237, %v5700
      %5765 = vst.msk [vmem:[%s231 + $0x34] sm:$0xf] %vm237, %v5701
      %5766 = vst.msk [vmem:[%s231 + $0x38] sm:$0xf] %vm237, %v5702
      %5767 = vst.msk [vmem:[%s231 + $0x3c] sm:$0xf] %vm237, %v5703
      %5768 = vst.msk [vmem:[%s231 + $0x40] sm:$0xf] %vm237, %v5704
      %5769 = vst.msk [vmem:[%s231 + $0x44] sm:$0xf] %vm237, %v5705
      %5770 = vst.msk [vmem:[%s231 + $0x48] sm:$0xf] %vm237, %v5706
      %5771 = vst.msk [vmem:[%s231 + $0x4c] sm:$0xf] %vm237, %v5707
      %5772 = vst.msk [vmem:[%s231 + $0x50] sm:$0xf] %vm237, %v5708
      %5773 = vst.msk [vmem:[%s231 + $0x54] sm:$0xf] %vm237, %v5709
      %5774 = vst.msk [vmem:[%s231 + $0x58] sm:$0xf] %vm237, %v5710
      %5775 = vst.msk [vmem:[%s231 + $0x5c] sm:$0xf] %vm237, %v5711
      %5776 = vst.msk [vmem:[%s231 + $0x60] sm:$0xf] %vm237, %v5712
      %5777 = vst.msk [vmem:[%s231 + $0x64] sm:$0xf] %vm237, %v5713
      %5778 = vst.msk [vmem:[%s231 + $0x68] sm:$0xf] %vm237, %v5714
      %5779 = vst.msk [vmem:[%s231 + $0x6c] sm:$0xf] %vm237, %v5715
      %5780 = vst.msk [vmem:[%s231 + $0x70] sm:$0xf] %vm237, %v5716
      %5781 = vst.msk [vmem:[%s231 + $0x74] sm:$0xf] %vm237, %v5717
      %5782 = vst.msk [vmem:[%s231 + $0x78] sm:$0xf] %vm237, %v5718
      %5783 = vst.msk [vmem:[%s231 + $0x7c] sm:$0xf] %vm237, %v5719
      %v5784 = vsel %vm1552, %v5592, 0.0
      %v5785 = vsel %vm1552, %v5593, 0.0
      %v5786 = vadd.f32 %v5784, %v5785
      %v5787 = vsel %vm1552, %v5594, 0.0
      %v5788 = vadd.f32 %v5786, %v5787
      %v5789 = vsel %vm1552, %v5595, 0.0
      %v5790 = vadd.f32 %v5788, %v5789
      %v5791 = vsel %vm1552, %v5596, 0.0
      %v5792 = vadd.f32 %v5790, %v5791
      %v5793 = vsel %vm1552, %v5597, 0.0
      %v5794 = vadd.f32 %v5792, %v5793
      %v5795 = vsel %vm1552, %v5598, 0.0
      %v5796 = vadd.f32 %v5794, %v5795
      %v5797 = vsel %vm1552, %v5599, 0.0
      %v5798 = vadd.f32 %v5796, %v5797
      %v5799 = vsel %vm1552, %v5600, 0.0
      %v5800 = vadd.f32 %v5798, %v5799
      %v5801 = vsel %vm1552, %v5601, 0.0
      %v5802 = vadd.f32 %v5800, %v5801
      %v5803 = vsel %vm1552, %v5602, 0.0
      %v5804 = vadd.f32 %v5802, %v5803
      %v5805 = vsel %vm1552, %v5603, 0.0
      %v5806 = vadd.f32 %v5804, %v5805
      %v5807 = vsel %vm1552, %v5604, 0.0
      %v5808 = vadd.f32 %v5806, %v5807
      %v5809 = vsel %vm1552, %v5605, 0.0
      %v5810 = vadd.f32 %v5808, %v5809
      %v5811 = vsel %vm1552, %v5606, 0.0
      %v5812 = vadd.f32 %v5810, %v5811
      %v5813 = vsel %vm1552, %v5607, 0.0
      %v5814 = vadd.f32 %v5812, %v5813
      %v5815 = vsel %vm1552, %v5608, 0.0
      %v5816 = vadd.f32 %v5814, %v5815
      %v5817 = vsel %vm1552, %v5609, 0.0
      %v5818 = vadd.f32 %v5816, %v5817
      %v5819 = vsel %vm1552, %v5610, 0.0
      %v5820 = vadd.f32 %v5818, %v5819
      %v5821 = vsel %vm1552, %v5611, 0.0
      %v5822 = vadd.f32 %v5820, %v5821
      %v5823 = vsel %vm1552, %v5612, 0.0
      %v5824 = vadd.f32 %v5822, %v5823
      %v5825 = vsel %vm1552, %v5613, 0.0
      %v5826 = vadd.f32 %v5824, %v5825
      %v5827 = vsel %vm1552, %v5614, 0.0
      %v5828 = vadd.f32 %v5826, %v5827
      %v5829 = vsel %vm1552, %v5615, 0.0
      %v5830 = vadd.f32 %v5828, %v5829
      %v5831 = vsel %vm1552, %v5616, 0.0
      %v5832 = vadd.f32 %v5830, %v5831
      %v5833 = vsel %vm1552, %v5617, 0.0
      %v5834 = vadd.f32 %v5832, %v5833
      %v5835 = vsel %vm1552, %v5618, 0.0
      %v5836 = vadd.f32 %v5834, %v5835
      %v5837 = vsel %vm1552, %v5619, 0.0
      %v5838 = vadd.f32 %v5836, %v5837
      %v5839 = vsel %vm1552, %v5620, 0.0
      %v5840 = vadd.f32 %v5838, %v5839
      %v5841 = vsel %vm1552, %v5621, 0.0
      %v5842 = vadd.f32 %v5840, %v5841
      %v5843 = vsel %vm1552, %v5622, 0.0
      %v5844 = vadd.f32 %v5842, %v5843
      %v5845 = vsel %vm1552, %v5623, 0.0
      %v5846 = vadd.f32 %v5844, %v5845
      %v5847 = vrot.slane %v5846, 4
      %v5848 = vadd.f32 %v5846, %v5847
      %v5849 = vrot.slane %v5848, 2
      %v5850 = vadd.f32 %v5848, %v5849
      %v5851 = vrot.slane %v5850, 1
      %v5852 = vadd.f32 %v5850, %v5851
      %v5853 = vmul.f32 %v5852, 0.00390625
      %v5854 = vsub.f32 %v5592, %v5853
      %v5855 = vsub.f32 %v5593, %v5853
      %v5856 = vsub.f32 %v5594, %v5853
      %v5857 = vsub.f32 %v5595, %v5853
      %v5858 = vsub.f32 %v5596, %v5853
      %v5859 = vsub.f32 %v5597, %v5853
      %v5860 = vsub.f32 %v5598, %v5853
      %v5861 = vsub.f32 %v5599, %v5853
      %v5862 = vsub.f32 %v5600, %v5853
      %v5863 = vsub.f32 %v5601, %v5853
      %v5864 = vsub.f32 %v5602, %v5853
      %v5865 = vsub.f32 %v5603, %v5853
      %v5866 = vsub.f32 %v5604, %v5853
      %v5867 = vsub.f32 %v5605, %v5853
      %v5868 = vsub.f32 %v5606, %v5853
      %v5869 = vsub.f32 %v5607, %v5853
      %v5870 = vsub.f32 %v5608, %v5853
      %v5871 = vsub.f32 %v5609, %v5853
      %v5872 = vsub.f32 %v5610, %v5853
      %v5873 = vsub.f32 %v5611, %v5853
      %v5874 = vsub.f32 %v5612, %v5853
      %v5875 = vsub.f32 %v5613, %v5853
      %v5876 = vsub.f32 %v5614, %v5853
      %v5877 = vsub.f32 %v5615, %v5853
      %v5878 = vsub.f32 %v5616, %v5853
      %v5879 = vsub.f32 %v5617, %v5853
      %v5880 = vsub.f32 %v5618, %v5853
      %v5881 = vsub.f32 %v5619, %v5853
      %v5882 = vsub.f32 %v5620, %v5853
      %v5883 = vsub.f32 %v5621, %v5853
      %v5884 = vsub.f32 %v5622, %v5853
      %v5885 = vsub.f32 %v5623, %v5853
      %5886 = vst.msk [vmem:[%s235] sm:$0x1] %vm240, %v5852
      %v5887 = vmul.f32 %v5854, %v5854
      %v5888 = vmul.f32 %v5855, %v5855
      %v5889 = vmul.f32 %v5856, %v5856
      %v5890 = vmul.f32 %v5857, %v5857
      %v5891 = vmul.f32 %v5858, %v5858
      %v5892 = vmul.f32 %v5859, %v5859
      %v5893 = vmul.f32 %v5860, %v5860
      %v5894 = vmul.f32 %v5861, %v5861
      %v5895 = vmul.f32 %v5862, %v5862
      %v5896 = vmul.f32 %v5863, %v5863
      %v5897 = vmul.f32 %v5864, %v5864
      %v5898 = vmul.f32 %v5865, %v5865
      %v5899 = vmul.f32 %v5866, %v5866
      %v5900 = vmul.f32 %v5867, %v5867
      %v5901 = vmul.f32 %v5868, %v5868
      %v5902 = vmul.f32 %v5869, %v5869
      %v5903 = vmul.f32 %v5870, %v5870
      %v5904 = vmul.f32 %v5871, %v5871
      %v5905 = vmul.f32 %v5872, %v5872
      %v5906 = vmul.f32 %v5873, %v5873
      %v5907 = vmul.f32 %v5874, %v5874
      %v5908 = vmul.f32 %v5875, %v5875
      %v5909 = vmul.f32 %v5876, %v5876
      %v5910 = vmul.f32 %v5877, %v5877
      %v5911 = vmul.f32 %v5878, %v5878
      %v5912 = vmul.f32 %v5879, %v5879
      %v5913 = vmul.f32 %v5880, %v5880
      %v5914 = vmul.f32 %v5881, %v5881
      %v5915 = vmul.f32 %v5882, %v5882
      %v5916 = vmul.f32 %v5883, %v5883
      %v5917 = vmul.f32 %v5884, %v5884
      %v5918 = vmul.f32 %v5885, %v5885
      %v5919 = vsel %vm1552, %v5887, 0.0
      %v5920 = vsel %vm1552, %v5888, 0.0
      %v5921 = vadd.f32 %v5919, %v5920
      %v5922 = vsel %vm1552, %v5889, 0.0
      %v5923 = vadd.f32 %v5921, %v5922
      %v5924 = vsel %vm1552, %v5890, 0.0
      %v5925 = vadd.f32 %v5923, %v5924
      %v5926 = vsel %vm1552, %v5891, 0.0
      %v5927 = vadd.f32 %v5925, %v5926
      %v5928 = vsel %vm1552, %v5892, 0.0
      %v5929 = vadd.f32 %v5927, %v5928
      %v5930 = vsel %vm1552, %v5893, 0.0
      %v5931 = vadd.f32 %v5929, %v5930
      %v5932 = vsel %vm1552, %v5894, 0.0
      %v5933 = vadd.f32 %v5931, %v5932
      %v5934 = vsel %vm1552, %v5895, 0.0
      %v5935 = vadd.f32 %v5933, %v5934
      %v5936 = vsel %vm1552, %v5896, 0.0
      %v5937 = vadd.f32 %v5935, %v5936
      %v5938 = vsel %vm1552, %v5897, 0.0
      %v5939 = vadd.f32 %v5937, %v5938
      %v5940 = vsel %vm1552, %v5898, 0.0
      %v5941 = vadd.f32 %v5939, %v5940
      %v5942 = vsel %vm1552, %v5899, 0.0
      %v5943 = vadd.f32 %v5941, %v5942
      %v5944 = vsel %vm1552, %v5900, 0.0
      %v5945 = vadd.f32 %v5943, %v5944
      %v5946 = vsel %vm1552, %v5901, 0.0
      %v5947 = vadd.f32 %v5945, %v5946
      %v5948 = vsel %vm1552, %v5902, 0.0
      %v5949 = vadd.f32 %v5947, %v5948
      %v5950 = vsel %vm1552, %v5903, 0.0
      %v5951 = vadd.f32 %v5949, %v5950
      %v5952 = vsel %vm1552, %v5904, 0.0
      %v5953 = vadd.f32 %v5951, %v5952
      %v5954 = vsel %vm1552, %v5905, 0.0
      %v5955 = vadd.f32 %v5953, %v5954
      %v5956 = vsel %vm1552, %v5906, 0.0
      %v5957 = vadd.f32 %v5955, %v5956
      %v5958 = vsel %vm1552, %v5907, 0.0
      %v5959 = vadd.f32 %v5957, %v5958
      %v5960 = vsel %vm1552, %v5908, 0.0
      %v5961 = vadd.f32 %v5959, %v5960
      %v5962 = vsel %vm1552, %v5909, 0.0
      %v5963 = vadd.f32 %v5961, %v5962
      %v5964 = vsel %vm1552, %v5910, 0.0
      %v5965 = vadd.f32 %v5963, %v5964
      %v5966 = vsel %vm1552, %v5911, 0.0
      %v5967 = vadd.f32 %v5965, %v5966
      %v5968 = vsel %vm1552, %v5912, 0.0
      %v5969 = vadd.f32 %v5967, %v5968
      %v5970 = vsel %vm1552, %v5913, 0.0
      %v5971 = vadd.f32 %v5969, %v5970
      %v5972 = vsel %vm1552, %v5914, 0.0
      %v5973 = vadd.f32 %v5971, %v5972
      %v5974 = vsel %vm1552, %v5915, 0.0
      %v5975 = vadd.f32 %v5973, %v5974
      %v5976 = vsel %vm1552, %v5916, 0.0
      %v5977 = vadd.f32 %v5975, %v5976
      %v5978 = vsel %vm1552, %v5917, 0.0
      %v5979 = vadd.f32 %v5977, %v5978
      %v5980 = vsel %vm1552, %v5918, 0.0
      %v5981 = vadd.f32 %v5979, %v5980
      %v5982 = vrot.slane %v5981, 4
      %v5983 = vadd.f32 %v5981, %v5982
      %v5984 = vrot.slane %v5983, 2
      %v5985 = vadd.f32 %v5983, %v5984
      %v5986 = vrot.slane %v5985, 1
      %v5987 = vadd.f32 %v5985, %v5986
      %5988 = vst.msk [vmem:[%s235 + $0x1] sm:$0x1] %vm240, %v5987
      %p5989 = scmp.lt.s32.totalorder %s17, 1
      %s5990 = scalar_select %p5989, %s17, 1
      %s5991 = smul.addr %s5990, 32
      %s5992 = smul.addr %s5991, 4
      %s5993 = scalar_lea.vmem %s4, %s5992
      %p5994 = scmp.lt.s32.totalorder %s17, 1
      %s5995 = scalar_select %p5994, %s17, 1
      %s5996 = smul.addr %s5995, 2
      %s5997 = scalar_lea.vmem %s5, %s5996
      // Predicated region
      $region37: #{basic_block_forward_nhwc.4} parent=35 // pred_check
        %p5998 = pneg %p124
      $region38: #{basic_block_forward_nhwc.4} parent=35 // pred_check_branch
        %6000 = sbr.rel (%p5998) target = $region40
      $region39: #{basic_block_forward_nhwc.4} parent=35 // pred_region
        _
      $region40: #{basic_block_forward_nhwc.4} parent=35 // pred_fallthru
        _
      // Predicated region
      $region41: #{basic_block_forward_nhwc.4} parent=35 // pred_check
        %p6001 = pneg %p150
      $region42: #{basic_block_forward_nhwc.4} parent=35 // pred_check_branch
        %6003 = sbr.rel (%p6001) target = $region44
      $region43: #{basic_block_forward_nhwc.4} parent=35 // pred_region
        _
      $region44: #{basic_block_forward_nhwc.4} parent=35 // pred_fallthru
        _
    $region36: #{basic_block_forward_nhwc.4} parent=5 // pred_fallthru
      _
    %p6004 = scmp.le.s32.totalorder 2, %s12
    // Predicated region
    $region45: #{basic_block_forward_nhwc.4} parent=5 // pred_check
      %p6005 = pneg %p6004
    $region46: #{basic_block_forward_nhwc.4} parent=5 // pred_check_branch
      %6007 = sbr.rel (%p6005) target = $region48
    $region47: #{basic_block_forward_nhwc.4} parent=5 // pred_region
      %s6008 = ssub.s32 %s12, 2
      // Predicated region
      $region49: #{basic_block_forward_nhwc.4} parent=47 // pred_check
        %p6009 = pneg %p130
      $region50: #{basic_block_forward_nhwc.4} parent=47 // pred_check_branch
        %6011 = sbr.rel (%p6009) target = $region52
      $region51: #{basic_block_forward_nhwc.4} parent=47 // pred_region
        %p6012 = scmp.lt.s32.totalorder %s18, 1
        %s6013 = scalar_select %p6012, %s18, 1
        %s6014 = smul.addr %s6013, 32
        %s6015 = smul.addr %s6014, 4
        %s6016 = scalar_lea.vmem %s4, %s6015
      $region52: #{basic_block_forward_nhwc.4} parent=47 // pred_fallthru
        _
      // Predicated region
      $region53: #{basic_block_forward_nhwc.4} parent=47 // pred_check
        %p6017 = pneg %p156
      $region54: #{basic_block_forward_nhwc.4} parent=47 // pred_check_branch
        %6019 = sbr.rel (%p6017) target = $region56
      $region55: #{basic_block_forward_nhwc.4} parent=47 // pred_region
        %p6020 = scmp.lt.s32.totalorder %s18, 1
        %s6021 = scalar_select %p6020, %s18, 1
        %s6022 = smul.addr %s6021, 2
        %s6023 = scalar_lea.vmem %s5, %s6022
      $region56: #{basic_block_forward_nhwc.4} parent=47 // pred_fallthru
        _
    $region48: #{basic_block_forward_nhwc.4} parent=5 // pred_fallthru
      _
  $region6: #{basic_block_forward_nhwc.4} parent=0 // loop_footer
    %s16 = sadd.s32 1, %s12
  $region7: #{basic_block_forward_nhwc.4} parent=0 // loop_footer_branch
    %11 = sbr.rel target = $region3
  $region8: #{basic_block_forward_nhwc.4} parent=0 // loop_exit
    _

</llo_original>
